<compile_context>
chip_gen: v5e
topology: v5e:2x2
jax: 0.10.0
libtpu: 0.0.40
codegen_flags: <defaults>
</compile_context>

<pallas_src>
import jax
import jax.numpy as jnp
from jax.experimental import pallas as pl
from jax.experimental.pallas import tpu as pltpu

# Small, shape-consistent hyperparameters (module uses module-level constants).
GEN_IN = 16        # latent channels
GEN_HIDDEN = 8     # base hidden channels
CHANNELS = 1       # output image channels
BATCH = 2
KSIZE = 4
BN_EPS = 1e-5
LRELU_SLOPE = 0.2

STRIDES = (1, 2, 2, 2, 2)
PADS = (0, 1, 1, 1, 1)


# ----------------------------- Pallas kernels ------------------------------

def _convt_bn_lrelu_kernel(w_ref, p_ref, gamma_ref, beta_ref, o_ref):
    """Fused ConvTranspose-GEMM + BatchNorm (batch stats) + LeakyReLU(0.2).

    w_ref:     (C_out, K)  bf16  equivalent regular-conv weight, K = C_in*k*k
    p_ref:     (K, M)      bf16  im2col patches^T, M = N*Ho*Wo (lane axis)
    gamma_ref: (C_out, 1)  f32
    beta_ref:  (C_out, 1)  f32
    o_ref:     (C_out, M)  bf16
    """
    y = jnp.dot(w_ref[...], p_ref[...], preferred_element_type=jnp.float32)
    inv_m = 1.0 / y.shape[1]
    mean = jnp.sum(y, axis=1, keepdims=True) * inv_m              # (C_out, 1)
    c = y - mean
    var = jnp.sum(c * c, axis=1, keepdims=True) * inv_m           # biased var (PyTorch BN)
    scale = jax.lax.rsqrt(var + BN_EPS) * gamma_ref[...]          # EUP rsqrt, per channel
    z = c * scale + beta_ref[...]
    o_ref[...] = jnp.where(z >= 0, z, LRELU_SLOPE * z).astype(o_ref.dtype)


def _convt_tanh_kernel(w_ref, p_ref, o_ref):
    """Fused final ConvTranspose-GEMM + Tanh."""
    y = jnp.dot(w_ref[...], p_ref[...], preferred_element_type=jnp.float32)
    o_ref[...] = jnp.tanh(y).astype(o_ref.dtype)


# --------------------------- pallas_call wrappers ---------------------------

def _full_spec(shape):
    return pl.BlockSpec(shape, lambda i, _n=len(shape): (0,) * _n)


def convt_bn_lrelu_pallas(wmat, patches, gamma, beta):
    c_out, k = wmat.shape
    _, m = patches.shape
    return pl.pallas_call(
        _convt_bn_lrelu_kernel,
        out_shape=jax.ShapeDtypeStruct((c_out, m), jnp.bfloat16),
        grid=(1,),
        in_specs=[_full_spec((c_out, k)),
                  _full_spec((k, m)),
                  _full_spec((c_out, 1)),
                  _full_spec((c_out, 1))],
        out_specs=_full_spec((c_out, m)),
        compiler_params=pltpu.CompilerParams(
            dimension_semantics=("arbitrary",)),
    )(wmat, patches, gamma, beta)


def convt_tanh_pallas(wmat, patches):
    c_out, k = wmat.shape
    _, m = patches.shape
    return pl.pallas_call(
        _convt_tanh_kernel,
        out_shape=jax.ShapeDtypeStruct((c_out, m), jnp.float32),
        grid=(1,),
        in_specs=[_full_spec((c_out, k)),
                  _full_spec((k, m))],
        out_specs=_full_spec((c_out, m)),
        compiler_params=pltpu.CompilerParams(
            dimension_semantics=("arbitrary",)),
    )(wmat, patches)


# ------------------------------ XLA-side glue --------------------------------

def _patches_t(x, k, stride, padding):
    """Patches^T for the equivalent regular conv of a ConvTranspose2d.

    x: (C, N, H, W) -> (C*k*k, N*Ho*Wo).  Zero-dilation by `stride` and the
    (k-1-padding) border are fused into a single scatter into a zero buffer.
    K ordering is (ci, ky, kx), matching the pre-flattened weight layout.
    """
    # TODO(synk): a stride-phase (sub-pixel) decomposition or an in-kernel
    # gather could avoid materializing the zero-dilated patches; left as thin
    # XLA glue (fused under jit) since activations here are KB-scale.
    c, n, h, w = x.shape
    pe = k - 1 - padding
    hd = (h - 1) * stride + 1
    wd = (w - 1) * stride + 1
    hp, wp = hd + 2 * pe, wd + 2 * pe
    xp = jnp.zeros((c, n, hp, wp), x.dtype)
    xp = xp.at[:, :, pe:pe + hd:stride, pe:pe + wd:stride].set(x)
    ho, wo = hp - k + 1, wp - k + 1
    taps = [xp[:, :, i:i + ho, j:j + wo] for i in range(k) for j in range(k)]
    p = jnp.stack(taps, axis=1)                      # (C, k*k, N, Ho, Wo)
    return p.reshape(c * k * k, n * ho * wo), ho, wo


# ------------------------------ Generator model -----------------------------

def make_params(key):
    dims = [(GEN_IN, GEN_HIDDEN * 8),
            (GEN_HIDDEN * 8, GEN_HIDDEN * 4),
            (GEN_HIDDEN * 4, GEN_HIDDEN * 2),
            (GEN_HIDDEN * 2, GEN_HIDDEN),
            (GEN_HIDDEN, CHANNELS)]
    params = []
    for cin, cout in dims:
        key, sub = jax.random.split(key)
        # PyTorch ConvTranspose2d weight layout (C_in, C_out, kH, kW), bias=False.
        w = 0.02 * jax.random.normal(sub, (cin, cout, KSIZE, KSIZE), jnp.float32)
        # Precompute the equivalent regular-conv GEMM weight once:
        # swap in/out channels, flip spatially, flatten to (C_out, C_in*k*k), bf16.
        wmat = jnp.transpose(w, (1, 0, 2, 3))[:, :, ::-1, ::-1]
        wmat = wmat.reshape(cout, cin * KSIZE * KSIZE).astype(jnp.bfloat16)
        params.append({
            "w": wmat,
            "gamma": jnp.ones((cout, 1), jnp.float32),   # BatchNorm2d affine init
            "beta": jnp.zeros((cout, 1), jnp.float32),
        })
    return params


def generator_forward(x, params):
    """x: (N, GEN_IN, 1, 1) NCHW f32 -> (N, CHANNELS, 64, 64) f32."""
    n = x.shape[0]
    # Channel-major (C, N, H, W) throughout; bf16 activations between layers.
    h = jnp.transpose(x, (1, 0, 2, 3)).astype(jnp.bfloat16)
    last = len(params) - 1
    for li, layer in enumerate(params):
        pt, ho, wo = _patches_t(h, KSIZE, STRIDES[li], PADS[li])
        c_out = layer["w"].shape[0]
        if li < last:
            y = convt_bn_lrelu_pallas(layer["w"], pt, layer["gamma"], layer["beta"])
        else:
            y = convt_tanh_pallas(layer["w"], pt)          # final layer: Tanh, f32 out
        h = y.reshape(c_out, n, ho, wo)                    # free reshape, stays (C,N,H,W)
    return jnp.transpose(h, (1, 0, 2, 3))                  # single transpose back to NCHW


if __name__ == "__main__":
    key = jax.random.PRNGKey(0)
    pkey, xkey = jax.random.split(key)
    params = make_params(pkey)
    x = jax.random.normal(xkey, (BATCH, GEN_IN, 1, 1), jnp.float32)

    fwd = jax.jit(generator_forward)
    out = jax.block_until_ready(fwd(x, params))

    assert out.shape == (BATCH, CHANNELS, 64, 64), out.shape
    assert out.dtype == jnp.float32, out.dtype
    assert bool(jnp.all(jnp.isfinite(out)))
    print("KERNEL_OK")
</pallas_src>

<mosaic_0001>
module attributes {stable_mosaic.version = 11 : i64} {
  func.func @_convt_bn_lrelu_kernel(%arg0: i32, %arg1: memref<64x256xbf16, #tpu.memory_space<vmem>>, %arg2: memref<256x32xbf16, #tpu.memory_space<vmem>>, %arg3: memref<64x1xf32, #tpu.memory_space<vmem>>, %arg4: memref<64x1xf32, #tpu.memory_space<vmem>>, %arg5: memref<64x32xbf16, #tpu.memory_space<vmem>>) attributes {dimension_semantics = [#tpu.dimension_semantics<arbitrary>], iteration_bounds = array<i64: 1>, scalar_prefetch = 0 : i64, scratch_operands = 0 : i64, tpu.core_type = #tpu.core_type<tc>, window_params = [{pipeline_mode = #tpu.pipeline_mode<synchronous>, transform_indices = @transform_0, window_bounds = array<i64: 64, 256>}, {pipeline_mode = #tpu.pipeline_mode<synchronous>, transform_indices = @transform_1, window_bounds = array<i64: 256, 32>}, {pipeline_mode = #tpu.pipeline_mode<synchronous>, transform_indices = @transform_2, window_bounds = array<i64: 64, 1>}, {pipeline_mode = #tpu.pipeline_mode<synchronous>, transform_indices = @transform_3, window_bounds = array<i64: 64, 1>}, {pipeline_mode = #tpu.pipeline_mode<synchronous>, transform_indices = @transform_4, window_bounds = array<i64: 64, 32>}]} {
    %c0 = arith.constant 0 : index
    %c0_0 = arith.constant 0 : index
    %0 = vector.load %arg1[%c0, %c0_0] : memref<64x256xbf16, #tpu.memory_space<vmem>>, vector<64x256xbf16>
    %c0_1 = arith.constant 0 : index
    %c0_2 = arith.constant 0 : index
    %1 = vector.load %arg2[%c0_1, %c0_2] : memref<256x32xbf16, #tpu.memory_space<vmem>>, vector<256x32xbf16>
    %cst = arith.constant dense<0.000000e+00> : vector<64x32xf32>
    %2 = tpu.matmul %0, %1, %cst {dimension_numbers = #tpu.dot_dimension_numbers<[1], [0], [0], [1], [0, 0, 1, 1], [], []>} : vector<64x256xbf16>, vector<256x32xbf16>, vector<64x32xf32> -> vector<64x32xf32>
    %cst_3 = arith.constant dense<0.000000e+00> : vector<64xf32>
    %3 = vector.multi_reduction <add>, %2, %cst_3 [1] : vector<64x32xf32> to vector<64xf32>
    %4 = vector.shape_cast %3 : vector<64xf32> to vector<64x1xf32>
    %cst_4 = arith.constant 3.125000e-02 : f32
    %5 = vector.broadcast %cst_4 : f32 to vector<64x1xf32>
    %6 = arith.mulf %4, %5 : vector<64x1xf32>
    %7 = vector.broadcast %6 : vector<64x1xf32> to vector<64x32xf32>
    %8 = arith.subf %2, %7 : vector<64x32xf32>
    %9 = arith.mulf %8, %8 : vector<64x32xf32>
    %cst_5 = arith.constant dense<0.000000e+00> : vector<64xf32>
    %10 = vector.multi_reduction <add>, %9, %cst_5 [1] : vector<64x32xf32> to vector<64xf32>
    %11 = vector.shape_cast %10 : vector<64xf32> to vector<64x1xf32>
    %cst_6 = arith.constant 3.125000e-02 : f32
    %12 = vector.broadcast %cst_6 : f32 to vector<64x1xf32>
    %13 = arith.mulf %11, %12 : vector<64x1xf32>
    %cst_7 = arith.constant 9.99999974E-6 : f32
    %14 = vector.broadcast %cst_7 : f32 to vector<64x1xf32>
    %15 = arith.addf %13, %14 : vector<64x1xf32>
    %16 = math.rsqrt %15 : vector<64x1xf32>
    %c0_8 = arith.constant 0 : index
    %c0_9 = arith.constant 0 : index
    %17 = vector.load %arg3[%c0_8, %c0_9] : memref<64x1xf32, #tpu.memory_space<vmem>>, vector<64x1xf32>
    %18 = arith.mulf %16, %17 : vector<64x1xf32>
    %19 = vector.broadcast %18 : vector<64x1xf32> to vector<64x32xf32>
    %20 = arith.mulf %8, %19 : vector<64x32xf32>
    %c0_10 = arith.constant 0 : index
    %c0_11 = arith.constant 0 : index
    %21 = vector.load %arg4[%c0_10, %c0_11] : memref<64x1xf32, #tpu.memory_space<vmem>>, vector<64x1xf32>
    %22 = vector.broadcast %21 : vector<64x1xf32> to vector<64x32xf32>
    %23 = arith.addf %20, %22 : vector<64x32xf32>
    %cst_12 = arith.constant 0.000000e+00 : f32
    %24 = vector.broadcast %cst_12 : f32 to vector<64x32xf32>
    %25 = arith.cmpf oge, %23, %24 : vector<64x32xf32>
    %cst_13 = arith.constant 2.000000e-01 : f32
    %26 = vector.broadcast %cst_13 : f32 to vector<64x32xf32>
    %27 = arith.mulf %26, %23 : vector<64x32xf32>
    %28 = arith.select %25, %23, %27 : vector<64x32xi1>, vector<64x32xf32>
    %29 = arith.truncf %28 : vector<64x32xf32> to vector<64x32xbf16>
    %c0_14 = arith.constant 0 : index
    %c0_15 = arith.constant 0 : index
    %30 = vector.load %arg5[%c0_14, %c0_15] : memref<64x32xbf16, #tpu.memory_space<vmem>>, vector<64x32xbf16>
    tpu.vector_store %arg5[%c0_14, %c0_15], %29 {strides = array<i32>} : memref<64x32xbf16, #tpu.memory_space<vmem>>, vector<64x32xbf16>,
    return
  }
  func.func @transform_0(%arg0: i32) -> (i32, i32) {
    %c0_i32 = arith.constant 0 : i32
    %c0_i32_0 = arith.constant 0 : i32
    %c0_i32_1 = arith.constant 0 : i32
    return %c0_i32, %c0_i32_0 : i32, i32
  }
  func.func @transform_1(%arg0: i32) -> (i32, i32) {
    %c0_i32 = arith.constant 0 : i32
    %c0_i32_0 = arith.constant 0 : i32
    %c0_i32_1 = arith.constant 0 : i32
    return %c0_i32, %c0_i32_0 : i32, i32
  }
  func.func @transform_2(%arg0: i32) -> (i32, i32) {
    %c0_i32 = arith.constant 0 : i32
    %c0_i32_0 = arith.constant 0 : i32
    %c0_i32_1 = arith.constant 0 : i32
    return %c0_i32, %c0_i32_0 : i32, i32
  }
  func.func @transform_3(%arg0: i32) -> (i32, i32) {
    %c0_i32 = arith.constant 0 : i32
    %c0_i32_0 = arith.constant 0 : i32
    %c0_i32_1 = arith.constant 0 : i32
    return %c0_i32, %c0_i32_0 : i32, i32
  }
  func.func @transform_4(%arg0: i32) -> (i32, i32) {
    %c0_i32 = arith.constant 0 : i32
    %c0_i32_0 = arith.constant 0 : i32
    %c0_i32_1 = arith.constant 0 : i32
    return %c0_i32, %c0_i32_0 : i32, i32
  }
}

module attributes {stable_mosaic.version = 11 : i64} {
  func.func @_convt_bn_lrelu_kernel(%arg0: i32, %arg1: memref<32x1024xbf16, #tpu.memory_space<vmem>>, %arg2: memref<1024x128xbf16, #tpu.memory_space<vmem>>, %arg3: memref<32x1xf32, #tpu.memory_space<vmem>>, %arg4: memref<32x1xf32, #tpu.memory_space<vmem>>, %arg5: memref<32x128xbf16, #tpu.memory_space<vmem>>) attributes {dimension_semantics = [#tpu.dimension_semantics<arbitrary>], iteration_bounds = array<i64: 1>, scalar_prefetch = 0 : i64, scratch_operands = 0 : i64, tpu.core_type = #tpu.core_type<tc>, window_params = [{pipeline_mode = #tpu.pipeline_mode<synchronous>, transform_indices = @transform_0, window_bounds = array<i64: 32, 1024>}, {pipeline_mode = #tpu.pipeline_mode<synchronous>, transform_indices = @transform_1, window_bounds = array<i64: 1024, 128>}, {pipeline_mode = #tpu.pipeline_mode<synchronous>, transform_indices = @transform_2, window_bounds = array<i64: 32, 1>}, {pipeline_mode = #tpu.pipeline_mode<synchronous>, transform_indices = @transform_3, window_bounds = array<i64: 32, 1>}, {pipeline_mode = #tpu.pipeline_mode<synchronous>, transform_indices = @transform_4, window_bounds = array<i64: 32, 128>}]} {
    %c0 = arith.constant 0 : index
    %c0_0 = arith.constant 0 : index
    %0 = vector.load %arg1[%c0, %c0_0] : memref<32x1024xbf16, #tpu.memory_space<vmem>>, vector<32x1024xbf16>
    %c0_1 = arith.constant 0 : index
    %c0_2 = arith.constant 0 : index
    %1 = vector.load %arg2[%c0_1, %c0_2] : memref<1024x128xbf16, #tpu.memory_space<vmem>>, vector<1024x128xbf16>
    %cst = arith.constant dense<0.000000e+00> : vector<32x128xf32>
    %2 = tpu.matmul %0, %1, %cst {dimension_numbers = #tpu.dot_dimension_numbers<[1], [0], [0], [1], [0, 0, 1, 1], [], []>} : vector<32x1024xbf16>, vector<1024x128xbf16>, vector<32x128xf32> -> vector<32x128xf32>
    %cst_3 = arith.constant dense<0.000000e+00> : vector<32xf32>
    %3 = vector.multi_reduction <add>, %2, %cst_3 [1] : vector<32x128xf32> to vector<32xf32>
    %4 = vector.shape_cast %3 : vector<32xf32> to vector<32x1xf32>
    %cst_4 = arith.constant 7.812500e-03 : f32
    %5 = vector.broadcast %cst_4 : f32 to vector<32x1xf32>
    %6 = arith.mulf %4, %5 : vector<32x1xf32>
    %7 = vector.broadcast %6 : vector<32x1xf32> to vector<32x128xf32>
    %8 = arith.subf %2, %7 : vector<32x128xf32>
    %9 = arith.mulf %8, %8 : vector<32x128xf32>
    %cst_5 = arith.constant dense<0.000000e+00> : vector<32xf32>
    %10 = vector.multi_reduction <add>, %9, %cst_5 [1] : vector<32x128xf32> to vector<32xf32>
    %11 = vector.shape_cast %10 : vector<32xf32> to vector<32x1xf32>
    %cst_6 = arith.constant 7.812500e-03 : f32
    %12 = vector.broadcast %cst_6 : f32 to vector<32x1xf32>
    %13 = arith.mulf %11, %12 : vector<32x1xf32>
    %cst_7 = arith.constant 9.99999974E-6 : f32
    %14 = vector.broadcast %cst_7 : f32 to vector<32x1xf32>
    %15 = arith.addf %13, %14 : vector<32x1xf32>
    %16 = math.rsqrt %15 : vector<32x1xf32>
    %c0_8 = arith.constant 0 : index
    %c0_9 = arith.constant 0 : index
    %17 = vector.load %arg3[%c0_8, %c0_9] : memref<32x1xf32, #tpu.memory_space<vmem>>, vector<32x1xf32>
    %18 = arith.mulf %16, %17 : vector<32x1xf32>
    %19 = vector.broadcast %18 : vector<32x1xf32> to vector<32x128xf32>
    %20 = arith.mulf %8, %19 : vector<32x128xf32>
    %c0_10 = arith.constant 0 : index
    %c0_11 = arith.constant 0 : index
    %21 = vector.load %arg4[%c0_10, %c0_11] : memref<32x1xf32, #tpu.memory_space<vmem>>, vector<32x1xf32>
    %22 = vector.broadcast %21 : vector<32x1xf32> to vector<32x128xf32>
    %23 = arith.addf %20, %22 : vector<32x128xf32>
    %cst_12 = arith.constant 0.000000e+00 : f32
    %24 = vector.broadcast %cst_12 : f32 to vector<32x128xf32>
    %25 = arith.cmpf oge, %23, %24 : vector<32x128xf32>
    %cst_13 = arith.constant 2.000000e-01 : f32
    %26 = vector.broadcast %cst_13 : f32 to vector<32x128xf32>
    %27 = arith.mulf %26, %23 : vector<32x128xf32>
    %28 = arith.select %25, %23, %27 : vector<32x128xi1>, vector<32x128xf32>
    %29 = arith.truncf %28 : vector<32x128xf32> to vector<32x128xbf16>
    %c0_14 = arith.constant 0 : index
    %c0_15 = arith.constant 0 : index
    %30 = vector.load %arg5[%c0_14, %c0_15] : memref<32x128xbf16, #tpu.memory_space<vmem>>, vector<32x128xbf16>
    tpu.vector_store %arg5[%c0_14, %c0_15], %29 {strides = array<i32>} : memref<32x128xbf16, #tpu.memory_space<vmem>>, vector<32x128xbf16>,
    return
  }
  func.func @transform_0(%arg0: i32) -> (i32, i32) {
    %c0_i32 = arith.constant 0 : i32
    %c0_i32_0 = arith.constant 0 : i32
    %c0_i32_1 = arith.constant 0 : i32
    return %c0_i32, %c0_i32_0 : i32, i32
  }
  func.func @transform_1(%arg0: i32) -> (i32, i32) {
    %c0_i32 = arith.constant 0 : i32
    %c0_i32_0 = arith.constant 0 : i32
    %c0_i32_1 = arith.constant 0 : i32
    return %c0_i32, %c0_i32_0 : i32, i32
  }
  func.func @transform_2(%arg0: i32) -> (i32, i32) {
    %c0_i32 = arith.constant 0 : i32
    %c0_i32_0 = arith.constant 0 : i32
    %c0_i32_1 = arith.constant 0 : i32
    return %c0_i32, %c0_i32_0 : i32, i32
  }
  func.func @transform_3(%arg0: i32) -> (i32, i32) {
    %c0_i32 = arith.constant 0 : i32
    %c0_i32_0 = arith.constant 0 : i32
    %c0_i32_1 = arith.constant 0 : i32
    return %c0_i32, %c0_i32_0 : i32, i32
  }
  func.func @transform_4(%arg0: i32) -> (i32, i32) {
    %c0_i32 = arith.constant 0 : i32
    %c0_i32_0 = arith.constant 0 : i32
    %c0_i32_1 = arith.constant 0 : i32
    return %c0_i32, %c0_i32_0 : i32, i32
  }
}

module attributes {stable_mosaic.version = 11 : i64} {
  func.func @_convt_bn_lrelu_kernel(%arg0: i32, %arg1: memref<16x512xbf16, #tpu.memory_space<vmem>>, %arg2: memref<512x512xbf16, #tpu.memory_space<vmem>>, %arg3: memref<16x1xf32, #tpu.memory_space<vmem>>, %arg4: memref<16x1xf32, #tpu.memory_space<vmem>>, %arg5: memref<16x512xbf16, #tpu.memory_space<vmem>>) attributes {dimension_semantics = [#tpu.dimension_semantics<arbitrary>], iteration_bounds = array<i64: 1>, scalar_prefetch = 0 : i64, scratch_operands = 0 : i64, tpu.core_type = #tpu.core_type<tc>, window_params = [{pipeline_mode = #tpu.pipeline_mode<synchronous>, transform_indices = @transform_0, window_bounds = array<i64: 16, 512>}, {pipeline_mode = #tpu.pipeline_mode<synchronous>, transform_indices = @transform_1, window_bounds = array<i64: 512, 512>}, {pipeline_mode = #tpu.pipeline_mode<synchronous>, transform_indices = @transform_2, window_bounds = array<i64: 16, 1>}, {pipeline_mode = #tpu.pipeline_mode<synchronous>, transform_indices = @transform_3, window_bounds = array<i64: 16, 1>}, {pipeline_mode = #tpu.pipeline_mode<synchronous>, transform_indices = @transform_4, window_bounds = array<i64: 16, 512>}]} {
    %c0 = arith.constant 0 : index
    %c0_0 = arith.constant 0 : index
    %0 = vector.load %arg1[%c0, %c0_0] : memref<16x512xbf16, #tpu.memory_space<vmem>>, vector<16x512xbf16>
    %c0_1 = arith.constant 0 : index
    %c0_2 = arith.constant 0 : index
    %1 = vector.load %arg2[%c0_1, %c0_2] : memref<512x512xbf16, #tpu.memory_space<vmem>>, vector<512x512xbf16>
    %cst = arith.constant dense<0.000000e+00> : vector<16x512xf32>
    %2 = tpu.matmul %0, %1, %cst {dimension_numbers = #tpu.dot_dimension_numbers<[1], [0], [0], [1], [0, 0, 1, 1], [], []>} : vector<16x512xbf16>, vector<512x512xbf16>, vector<16x512xf32> -> vector<16x512xf32>
    %cst_3 = arith.constant dense<0.000000e+00> : vector<16xf32>
    %3 = vector.multi_reduction <add>, %2, %cst_3 [1] : vector<16x512xf32> to vector<16xf32>
    %4 = vector.shape_cast %3 : vector<16xf32> to vector<16x1xf32>
    %cst_4 = arith.constant 0.001953125 : f32
    %5 = vector.broadcast %cst_4 : f32 to vector<16x1xf32>
    %6 = arith.mulf %4, %5 : vector<16x1xf32>
    %7 = vector.broadcast %6 : vector<16x1xf32> to vector<16x512xf32>
    %8 = arith.subf %2, %7 : vector<16x512xf32>
    %9 = arith.mulf %8, %8 : vector<16x512xf32>
    %cst_5 = arith.constant dense<0.000000e+00> : vector<16xf32>
    %10 = vector.multi_reduction <add>, %9, %cst_5 [1] : vector<16x512xf32> to vector<16xf32>
    %11 = vector.shape_cast %10 : vector<16xf32> to vector<16x1xf32>
    %cst_6 = arith.constant 0.001953125 : f32
    %12 = vector.broadcast %cst_6 : f32 to vector<16x1xf32>
    %13 = arith.mulf %11, %12 : vector<16x1xf32>
    %cst_7 = arith.constant 9.99999974E-6 : f32
    %14 = vector.broadcast %cst_7 : f32 to vector<16x1xf32>
    %15 = arith.addf %13, %14 : vector<16x1xf32>
    %16 = math.rsqrt %15 : vector<16x1xf32>
    %c0_8 = arith.constant 0 : index
    %c0_9 = arith.constant 0 : index
    %17 = vector.load %arg3[%c0_8, %c0_9] : memref<16x1xf32, #tpu.memory_space<vmem>>, vector<16x1xf32>
    %18 = arith.mulf %16, %17 : vector<16x1xf32>
    %19 = vector.broadcast %18 : vector<16x1xf32> to vector<16x512xf32>
    %20 = arith.mulf %8, %19 : vector<16x512xf32>
    %c0_10 = arith.constant 0 : index
    %c0_11 = arith.constant 0 : index
    %21 = vector.load %arg4[%c0_10, %c0_11] : memref<16x1xf32, #tpu.memory_space<vmem>>, vector<16x1xf32>
    %22 = vector.broadcast %21 : vector<16x1xf32> to vector<16x512xf32>
    %23 = arith.addf %20, %22 : vector<16x512xf32>
    %cst_12 = arith.constant 0.000000e+00 : f32
    %24 = vector.broadcast %cst_12 : f32 to vector<16x512xf32>
    %25 = arith.cmpf oge, %23, %24 : vector<16x512xf32>
    %cst_13 = arith.constant 2.000000e-01 : f32
    %26 = vector.broadcast %cst_13 : f32 to vector<16x512xf32>
    %27 = arith.mulf %26, %23 : vector<16x512xf32>
    %28 = arith.select %25, %23, %27 : vector<16x512xi1>, vector<16x512xf32>
    %29 = arith.truncf %28 : vector<16x512xf32> to vector<16x512xbf16>
    %c0_14 = arith.constant 0 : index
    %c0_15 = arith.constant 0 : index
    %30 = vector.load %arg5[%c0_14, %c0_15] : memref<16x512xbf16, #tpu.memory_space<vmem>>, vector<16x512xbf16>
    tpu.vector_store %arg5[%c0_14, %c0_15], %29 {strides = array<i32>} : memref<16x512xbf16, #tpu.memory_space<vmem>>, vector<16x512xbf16>,
    return
  }
  func.func @transform_0(%arg0: i32) -> (i32, i32) {
    %c0_i32 = arith.constant 0 : i32
    %c0_i32_0 = arith.constant 0 : i32
    %c0_i32_1 = arith.constant 0 : i32
    return %c0_i32, %c0_i32_0 : i32, i32
  }
  func.func @transform_1(%arg0: i32) -> (i32, i32) {
    %c0_i32 = arith.constant 0 : i32
    %c0_i32_0 = arith.constant 0 : i32
    %c0_i32_1 = arith.constant 0 : i32
    return %c0_i32, %c0_i32_0 : i32, i32
  }
  func.func @transform_2(%arg0: i32) -> (i32, i32) {
    %c0_i32 = arith.constant 0 : i32
    %c0_i32_0 = arith.constant 0 : i32
    %c0_i32_1 = arith.constant 0 : i32
    return %c0_i32, %c0_i32_0 : i32, i32
  }
  func.func @transform_3(%arg0: i32) -> (i32, i32) {
    %c0_i32 = arith.constant 0 : i32
    %c0_i32_0 = arith.constant 0 : i32
    %c0_i32_1 = arith.constant 0 : i32
    return %c0_i32, %c0_i32_0 : i32, i32
  }
  func.func @transform_4(%arg0: i32) -> (i32, i32) {
    %c0_i32 = arith.constant 0 : i32
    %c0_i32_0 = arith.constant 0 : i32
    %c0_i32_1 = arith.constant 0 : i32
    return %c0_i32, %c0_i32_0 : i32, i32
  }
}

module attributes {stable_mosaic.version = 11 : i64} {
  func.func @_convt_bn_lrelu_kernel(%arg0: i32, %arg1: memref<8x256xbf16, #tpu.memory_space<vmem>>, %arg2: memref<256x2048xbf16, #tpu.memory_space<vmem>>, %arg3: memref<8x1xf32, #tpu.memory_space<vmem>>, %arg4: memref<8x1xf32, #tpu.memory_space<vmem>>, %arg5: memref<8x2048xbf16, #tpu.memory_space<vmem>>) attributes {dimension_semantics = [#tpu.dimension_semantics<arbitrary>], iteration_bounds = array<i64: 1>, scalar_prefetch = 0 : i64, scratch_operands = 0 : i64, tpu.core_type = #tpu.core_type<tc>, window_params = [{pipeline_mode = #tpu.pipeline_mode<synchronous>, transform_indices = @transform_0, window_bounds = array<i64: 8, 256>}, {pipeline_mode = #tpu.pipeline_mode<synchronous>, transform_indices = @transform_1, window_bounds = array<i64: 256, 2048>}, {pipeline_mode = #tpu.pipeline_mode<synchronous>, transform_indices = @transform_2, window_bounds = array<i64: 8, 1>}, {pipeline_mode = #tpu.pipeline_mode<synchronous>, transform_indices = @transform_3, window_bounds = array<i64: 8, 1>}, {pipeline_mode = #tpu.pipeline_mode<synchronous>, transform_indices = @transform_4, window_bounds = array<i64: 8, 2048>}]} {
    %c0 = arith.constant 0 : index
    %c0_0 = arith.constant 0 : index
    %0 = vector.load %arg1[%c0, %c0_0] : memref<8x256xbf16, #tpu.memory_space<vmem>>, vector<8x256xbf16>
    %c0_1 = arith.constant 0 : index
    %c0_2 = arith.constant 0 : index
    %1 = vector.load %arg2[%c0_1, %c0_2] : memref<256x2048xbf16, #tpu.memory_space<vmem>>, vector<256x2048xbf16>
    %cst = arith.constant dense<0.000000e+00> : vector<8x2048xf32>
    %2 = tpu.matmul %0, %1, %cst {dimension_numbers = #tpu.dot_dimension_numbers<[1], [0], [0], [1], [0, 0, 1, 1], [], []>} : vector<8x256xbf16>, vector<256x2048xbf16>, vector<8x2048xf32> -> vector<8x2048xf32>
    %cst_3 = arith.constant dense<0.000000e+00> : vector<8xf32>
    %3 = vector.multi_reduction <add>, %2, %cst_3 [1] : vector<8x2048xf32> to vector<8xf32>
    %4 = vector.shape_cast %3 : vector<8xf32> to vector<8x1xf32>
    %cst_4 = arith.constant 4.8828125E-4 : f32
    %5 = vector.broadcast %cst_4 : f32 to vector<8x1xf32>
    %6 = arith.mulf %4, %5 : vector<8x1xf32>
    %7 = vector.broadcast %6 : vector<8x1xf32> to vector<8x2048xf32>
    %8 = arith.subf %2, %7 : vector<8x2048xf32>
    %9 = arith.mulf %8, %8 : vector<8x2048xf32>
    %cst_5 = arith.constant dense<0.000000e+00> : vector<8xf32>
    %10 = vector.multi_reduction <add>, %9, %cst_5 [1] : vector<8x2048xf32> to vector<8xf32>
    %11 = vector.shape_cast %10 : vector<8xf32> to vector<8x1xf32>
    %cst_6 = arith.constant 4.8828125E-4 : f32
    %12 = vector.broadcast %cst_6 : f32 to vector<8x1xf32>
    %13 = arith.mulf %11, %12 : vector<8x1xf32>
    %cst_7 = arith.constant 9.99999974E-6 : f32
    %14 = vector.broadcast %cst_7 : f32 to vector<8x1xf32>
    %15 = arith.addf %13, %14 : vector<8x1xf32>
    %16 = math.rsqrt %15 : vector<8x1xf32>
    %c0_8 = arith.constant 0 : index
    %c0_9 = arith.constant 0 : index
    %17 = vector.load %arg3[%c0_8, %c0_9] : memref<8x1xf32, #tpu.memory_space<vmem>>, vector<8x1xf32>
    %18 = arith.mulf %16, %17 : vector<8x1xf32>
    %19 = vector.broadcast %18 : vector<8x1xf32> to vector<8x2048xf32>
    %20 = arith.mulf %8, %19 : vector<8x2048xf32>
    %c0_10 = arith.constant 0 : index
    %c0_11 = arith.constant 0 : index
    %21 = vector.load %arg4[%c0_10, %c0_11] : memref<8x1xf32, #tpu.memory_space<vmem>>, vector<8x1xf32>
    %22 = vector.broadcast %21 : vector<8x1xf32> to vector<8x2048xf32>
    %23 = arith.addf %20, %22 : vector<8x2048xf32>
    %cst_12 = arith.constant 0.000000e+00 : f32
    %24 = vector.broadcast %cst_12 : f32 to vector<8x2048xf32>
    %25 = arith.cmpf oge, %23, %24 : vector<8x2048xf32>
    %cst_13 = arith.constant 2.000000e-01 : f32
    %26 = vector.broadcast %cst_13 : f32 to vector<8x2048xf32>
    %27 = arith.mulf %26, %23 : vector<8x2048xf32>
    %28 = arith.select %25, %23, %27 : vector<8x2048xi1>, vector<8x2048xf32>
    %29 = arith.truncf %28 : vector<8x2048xf32> to vector<8x2048xbf16>
    %c0_14 = arith.constant 0 : index
    %c0_15 = arith.constant 0 : index
    %30 = vector.load %arg5[%c0_14, %c0_15] : memref<8x2048xbf16, #tpu.memory_space<vmem>>, vector<8x2048xbf16>
    tpu.vector_store %arg5[%c0_14, %c0_15], %29 {strides = array<i32>} : memref<8x2048xbf16, #tpu.memory_space<vmem>>, vector<8x2048xbf16>,
    return
  }
  func.func @transform_0(%arg0: i32) -> (i32, i32) {
    %c0_i32 = arith.constant 0 : i32
    %c0_i32_0 = arith.constant 0 : i32
    %c0_i32_1 = arith.constant 0 : i32
    return %c0_i32, %c0_i32_0 : i32, i32
  }
  func.func @transform_1(%arg0: i32) -> (i32, i32) {
    %c0_i32 = arith.constant 0 : i32
    %c0_i32_0 = arith.constant 0 : i32
    %c0_i32_1 = arith.constant 0 : i32
    return %c0_i32, %c0_i32_0 : i32, i32
  }
  func.func @transform_2(%arg0: i32) -> (i32, i32) {
    %c0_i32 = arith.constant 0 : i32
    %c0_i32_0 = arith.constant 0 : i32
    %c0_i32_1 = arith.constant 0 : i32
    return %c0_i32, %c0_i32_0 : i32, i32
  }
  func.func @transform_3(%arg0: i32) -> (i32, i32) {
    %c0_i32 = arith.constant 0 : i32
    %c0_i32_0 = arith.constant 0 : i32
    %c0_i32_1 = arith.constant 0 : i32
    return %c0_i32, %c0_i32_0 : i32, i32
  }
  func.func @transform_4(%arg0: i32) -> (i32, i32) {
    %c0_i32 = arith.constant 0 : i32
    %c0_i32_0 = arith.constant 0 : i32
    %c0_i32_1 = arith.constant 0 : i32
    return %c0_i32, %c0_i32_0 : i32, i32
  }
}

module attributes {stable_mosaic.version = 11 : i64} {
  func.func @_convt_tanh_kernel(%arg0: i32, %arg1: memref<1x128xbf16, #tpu.memory_space<vmem>>, %arg2: memref<128x8192xbf16, #tpu.memory_space<vmem>>, %arg3: memref<1x8192xf32, #tpu.memory_space<vmem>>) attributes {dimension_semantics = [#tpu.dimension_semantics<arbitrary>], iteration_bounds = array<i64: 1>, scalar_prefetch = 0 : i64, scratch_operands = 0 : i64, tpu.core_type = #tpu.core_type<tc>, window_params = [{pipeline_mode = #tpu.pipeline_mode<synchronous>, transform_indices = @transform_0, window_bounds = array<i64: 1, 128>}, {pipeline_mode = #tpu.pipeline_mode<synchronous>, transform_indices = @transform_1, window_bounds = array<i64: 128, 8192>}, {pipeline_mode = #tpu.pipeline_mode<synchronous>, transform_indices = @transform_2, window_bounds = array<i64: 1, 8192>}]} {
    %c0 = arith.constant 0 : index
    %c0_0 = arith.constant 0 : index
    %0 = vector.load %arg1[%c0, %c0_0] : memref<1x128xbf16, #tpu.memory_space<vmem>>, vector<1x128xbf16>
    %c0_1 = arith.constant 0 : index
    %c0_2 = arith.constant 0 : index
    %1 = vector.load %arg2[%c0_1, %c0_2] : memref<128x8192xbf16, #tpu.memory_space<vmem>>, vector<128x8192xbf16>
    %cst = arith.constant dense<0.000000e+00> : vector<1x8192xf32>
    %2 = tpu.matmul %0, %1, %cst {dimension_numbers = #tpu.dot_dimension_numbers<[1], [0], [0], [1], [0, 0, 1, 1], [], []>} : vector<1x128xbf16>, vector<128x8192xbf16>, vector<1x8192xf32> -> vector<1x8192xf32>
    %3 = math.tanh %2 : vector<1x8192xf32>
    %c0_3 = arith.constant 0 : index
    %c0_4 = arith.constant 0 : index
    %4 = vector.load %arg3[%c0_3, %c0_4] : memref<1x8192xf32, #tpu.memory_space<vmem>>, vector<1x8192xf32>
    tpu.vector_store %arg3[%c0_3, %c0_4], %3 {strides = array<i32>} : memref<1x8192xf32, #tpu.memory_space<vmem>>, vector<1x8192xf32>,
    return
  }
  func.func @transform_0(%arg0: i32) -> (i32, i32) {
    %c0_i32 = arith.constant 0 : i32
    %c0_i32_0 = arith.constant 0 : i32
    %c0_i32_1 = arith.constant 0 : i32
    return %c0_i32, %c0_i32_0 : i32, i32
  }
  func.func @transform_1(%arg0: i32) -> (i32, i32) {
    %c0_i32 = arith.constant 0 : i32
    %c0_i32_0 = arith.constant 0 : i32
    %c0_i32_1 = arith.constant 0 : i32
    return %c0_i32, %c0_i32_0 : i32, i32
  }
  func.func @transform_2(%arg0: i32) -> (i32, i32) {
    %c0_i32 = arith.constant 0 : i32
    %c0_i32_0 = arith.constant 0 : i32
    %c0_i32_1 = arith.constant 0 : i32
    return %c0_i32, %c0_i32_0 : i32, i32
  }
}

</mosaic_0001>

<llo_original>
// kernel: generator_forward.5
$region0: #{generator_forward.5}
  #allocation0 [shape = 'u32[]', space=smem, size = 0x4, offset = 0x4, fixed_abs, tag = 'smem constant byte address 0x4 - core index']
  #allocation1 [shape = 'u32[72,128]{1,0:T(1,128)}', space=vmem, size = 0x9000, scoped, tag = 'internal scratch']
  %s0 = inlined_call_operand.hbm [shape: bf16[64,256], index: 0, kind: input, shape index: {}]
  %s1 = inlined_call_operand.vmem [shape: bf16[256,32], index: 1, kind: input, shape index: {}]
  %s2 = inlined_call_operand.vmem [shape: f32[64,1], index: 2, kind: input, shape index: {}]
  %s3 = inlined_call_operand.vmem [shape: f32[64,1], index: 3, kind: input, shape index: {}]
  %s4 = inlined_call_operand.vmem [shape: bf16[64,32], index: 4, kind: output, shape index: {}]
  %s5 = sld [smem:[#allocation0]]
  $region30: #{generator_forward.5} parent=0
    _
  %s7 = ssub.s32 1, %s5
  %s8 = scalar_select 0, %s7, %s5
  $region1: #{generator_forward.5} parent=0
    #allocation2 [shape = 'u8[32768]{0}', space=vmem, size = 0x8000, scoped, tag = 'input window, operand 0, single buffered']
    #allocation3 [shape = 's32[1]{0}', space=sflag, size = 0x4, scoped, tag = 'scoped memory for generator_forward.5']
    %9 = vsyncpa [#allocation3], 0
    // Predicated region
    $region2: #{generator_forward.5} parent=1 // pred_check
      _
    $region3: #{generator_forward.5} parent=1 // pred_check_branch
      %11 = sbr.rel (0) target = $region5
    $region4: #{generator_forward.5} parent=1 // pred_region
      %13 = vsyncadd [#allocation3], 0
      %s14 = sshll.u32 %s0, 4
      %s15 = int_to_ptr.hbm [resolvable:$true] %s14
      %s16 = sshll.u32 [#allocation2], 4
      %s17 = int_to_ptr.vmem [resolvable:$true] %s16
      %22 = dma.hbm_to_vmem [thread:$0]  %s15, 1024, %s17, [#allocation3], 128, 128, 8
    $region5: #{generator_forward.5} parent=1 // pred_fallthru
      _
    // Predicated region
    $region6: #{generator_forward.5} parent=1 // pred_check
      _
    $region7: #{generator_forward.5} parent=1 // pred_check_branch
      %24 = sbr.rel (0) target = $region9
    $region8: #{generator_forward.5} parent=1 // pred_region
      _
    $region9: #{generator_forward.5} parent=1 // pred_fallthru
      _
    // Predicated region
    $region10: #{generator_forward.5} parent=1 // pred_check
      _
    $region11: #{generator_forward.5} parent=1 // pred_check_branch
      %26 = sbr.rel (0) target = $region13
    $region12: #{generator_forward.5} parent=1 // pred_region
      _
    $region13: #{generator_forward.5} parent=1 // pred_fallthru
      _
    // Predicated region
    $region14: #{generator_forward.5} parent=1 // pred_check
      _
    $region15: #{generator_forward.5} parent=1 // pred_check_branch
      %28 = sbr.rel (0) target = $region17
    $region16: #{generator_forward.5} parent=1 // pred_region
      _
    $region17: #{generator_forward.5} parent=1 // pred_fallthru
      _
    // Predicated region
    $region18: #{generator_forward.5} parent=1 // pred_check
      _
    $region19: #{generator_forward.5} parent=1 // pred_check_branch
      %30 = sbr.rel (0) target = $region21
    $region20: #{generator_forward.5} parent=1 // pred_region
      %32 = dma.done [#allocation3], 1024
    $region21: #{generator_forward.5} parent=1 // pred_fallthru
      _
    %v33 = vld [vmem:[#allocation2] sm:$0xff]
    %v34 = vld [vmem:[#allocation2 + $0x8] sm:$0xff]
    %v35 = vld [vmem:[#allocation2 + $0x10] sm:$0xff]
    %v36 = vld [vmem:[#allocation2 + $0x18] sm:$0xff]
    %v37 = vld [vmem:[#allocation2 + $0x20] sm:$0xff]
    %v38 = vld [vmem:[#allocation2 + $0x28] sm:$0xff]
    %v39 = vld [vmem:[#allocation2 + $0x30] sm:$0xff]
    %v40 = vld [vmem:[#allocation2 + $0x38] sm:$0xff]
    %v41 = vld [vmem:[%s1] sm:$0xf]
    %v42 = vld [vmem:[%s1 + $0x4] sm:$0xf]
    %v43 = vld [vmem:[%s1 + $0x8] sm:$0xf]
    %v44 = vld [vmem:[%s1 + $0xc] sm:$0xf]
    %v45 = vld [vmem:[%s1 + $0x10] sm:$0xf]
    %v46 = vld [vmem:[%s1 + $0x14] sm:$0xf]
    %v47 = vld [vmem:[%s1 + $0x18] sm:$0xf]
    %v48 = vld [vmem:[%s1 + $0x1c] sm:$0xf]
    %v49 = vld [vmem:[%s1 + $0x20] sm:$0xf]
    %v50 = vld [vmem:[%s1 + $0x24] sm:$0xf]
    %v51 = vld [vmem:[%s1 + $0x28] sm:$0xf]
    %v52 = vld [vmem:[%s1 + $0x2c] sm:$0xf]
    %v53 = vld [vmem:[%s1 + $0x30] sm:$0xf]
    %v54 = vld [vmem:[%s1 + $0x34] sm:$0xf]
    %v55 = vld [vmem:[%s1 + $0x38] sm:$0xf]
    %v56 = vld [vmem:[%s1 + $0x3c] sm:$0xf]
    %v57 = vld [vmem:[%s1 + $0x40] sm:$0xf]
    %v58 = vld [vmem:[%s1 + $0x44] sm:$0xf]
    %v59 = vld [vmem:[%s1 + $0x48] sm:$0xf]
    %v60 = vld [vmem:[%s1 + $0x4c] sm:$0xf]
    %v61 = vld [vmem:[%s1 + $0x50] sm:$0xf]
    %v62 = vld [vmem:[%s1 + $0x54] sm:$0xf]
    %v63 = vld [vmem:[%s1 + $0x58] sm:$0xf]
    %v64 = vld [vmem:[%s1 + $0x5c] sm:$0xf]
    %v65 = vld [vmem:[%s1 + $0x60] sm:$0xf]
    %v66 = vld [vmem:[%s1 + $0x64] sm:$0xf]
    %v67 = vld [vmem:[%s1 + $0x68] sm:$0xf]
    %v68 = vld [vmem:[%s1 + $0x6c] sm:$0xf]
    %v69 = vld [vmem:[%s1 + $0x70] sm:$0xf]
    %v70 = vld [vmem:[%s1 + $0x74] sm:$0xf]
    %v71 = vld [vmem:[%s1 + $0x78] sm:$0xf]
    %v72 = vld [vmem:[%s1 + $0x7c] sm:$0xf]
    %v81 = vunpack.c.l.b16 %v33
    %v82 = vunpack.c.h.b16 %v33
    %v83 = vunpack.c.l.b16 %v34
    %v84 = vunpack.c.h.b16 %v34
    %v85 = vunpack.c.l.b16 %v35
    %v86 = vunpack.c.h.b16 %v35
    %v87 = vunpack.c.l.b16 %v36
    %v88 = vunpack.c.h.b16 %v36
    %v89 = vunpack.c.l.b16 %v37
    %v90 = vunpack.c.h.b16 %v37
    %v91 = vunpack.c.l.b16 %v38
    %v92 = vunpack.c.h.b16 %v38
    %v93 = vunpack.c.l.b16 %v39
    %v94 = vunpack.c.h.b16 %v39
    %v95 = vunpack.c.l.b16 %v40
    %v96 = vunpack.c.h.b16 %v40
    %v97 = vpack.c.b16 %v83, %v81
    %v98 = vpack.c.b16 %v84, %v82
    %v99 = vpack.c.b16 %v87, %v85
    %v100 = vpack.c.b16 %v88, %v86
    %v101 = vpack.c.b16 %v91, %v89
    %v102 = vpack.c.b16 %v92, %v90
    %v103 = vpack.c.b16 %v95, %v93
    %v104 = vpack.c.b16 %v96, %v94
    %v145 = vunpack.c.l.b16 %v41
    %v146 = vunpack.c.l.b16 %v42
    %v147 = vunpack.c.l.b16 %v43
    %v148 = vunpack.c.l.b16 %v44
    %v149 = vunpack.c.l.b16 %v45
    %v150 = vunpack.c.l.b16 %v46
    %v151 = vunpack.c.l.b16 %v47
    %v152 = vunpack.c.l.b16 %v48
    %v153 = vunpack.c.l.b16 %v49
    %v154 = vunpack.c.l.b16 %v50
    %v155 = vunpack.c.l.b16 %v51
    %v156 = vunpack.c.l.b16 %v52
    %v157 = vunpack.c.l.b16 %v53
    %v158 = vunpack.c.l.b16 %v54
    %v159 = vunpack.c.l.b16 %v55
    %v160 = vunpack.c.l.b16 %v56
    %v161 = vunpack.c.l.b16 %v57
    %v162 = vunpack.c.l.b16 %v58
    %v163 = vunpack.c.l.b16 %v59
    %v164 = vunpack.c.l.b16 %v60
    %v165 = vunpack.c.l.b16 %v61
    %v166 = vunpack.c.l.b16 %v62
    %v167 = vunpack.c.l.b16 %v63
    %v168 = vunpack.c.l.b16 %v64
    %v169 = vunpack.c.l.b16 %v65
    %v170 = vunpack.c.l.b16 %v66
    %v171 = vunpack.c.l.b16 %v67
    %v172 = vunpack.c.l.b16 %v68
    %v173 = vunpack.c.l.b16 %v69
    %v174 = vunpack.c.l.b16 %v70
    %v175 = vunpack.c.l.b16 %v71
    %v176 = vunpack.c.l.b16 %v72
    %v177 = vpack.c.b16 %v146, %v145
    %v178 = vpack.c.b16 %v148, %v147
    %v179 = vpack.c.b16 %v150, %v149
    %v180 = vpack.c.b16 %v152, %v151
    %v181 = vpack.c.b16 %v154, %v153
    %v182 = vpack.c.b16 %v156, %v155
    %v183 = vpack.c.b16 %v158, %v157
    %v184 = vpack.c.b16 %v160, %v159
    %v185 = vpack.c.b16 %v162, %v161
    %v186 = vpack.c.b16 %v164, %v163
    %v187 = vpack.c.b16 %v166, %v165
    %v188 = vpack.c.b16 %v168, %v167
    %v189 = vpack.c.b16 %v170, %v169
    %v190 = vpack.c.b16 %v172, %v171
    %v191 = vpack.c.b16 %v174, %v173
    %v192 = vpack.c.b16 %v176, %v175
    %209 = vmatpush.bf16.msra.mxu0 %v184
    %210 = vmatpush.bf16.msra.mxu0 %v183
    %211 = vmatpush.bf16.msra.mxu0 %v182
    %212 = vmatpush.bf16.msra.mxu0 %v181
    %213 = vmatpush.bf16.msra.mxu0 %v180
    %214 = vmatpush.bf16.msra.mxu0 %v179
    %215 = vmatpush.bf16.msra.mxu0 %v178
    %216 = vmatpush.bf16.msra.mxu0 %v177
    %217 = vmatmul.bf16.gmra.mxu0 %v97
    %v218 = vpop.f32.mrf.mxu0
    %v219 = vadd.f32 0.0, %v218
    %v220 = vpop.f32.mrf.mxu0
    %v221 = vadd.f32 0.0, %v220
    %222 = vmatmul.bf16.gmra.mxu0 %v99
    %v223 = vpop.f32.mrf.mxu0
    %v224 = vadd.f32 0.0, %v223
    %v225 = vpop.f32.mrf.mxu0
    %v226 = vadd.f32 0.0, %v225
    %227 = vmatmul.bf16.gmra.mxu0 %v101
    %v228 = vpop.f32.mrf.mxu0
    %v229 = vadd.f32 0.0, %v228
    %v230 = vpop.f32.mrf.mxu0
    %v231 = vadd.f32 0.0, %v230
    %232 = vmatmul.bf16.gmra.mxu0 %v103
    %v233 = vpop.f32.mrf.mxu0
    %v234 = vadd.f32 0.0, %v233
    %v235 = vpop.f32.mrf.mxu0
    %v236 = vadd.f32 0.0, %v235
    %237 = vdwg.mxu0
    %238 = vmatpush.bf16.msra.mxu0 %v192
    %239 = vmatpush.bf16.msra.mxu0 %v191
    %240 = vmatpush.bf16.msra.mxu0 %v190
    %241 = vmatpush.bf16.msra.mxu0 %v189
    %242 = vmatpush.bf16.msra.mxu0 %v188
    %243 = vmatpush.bf16.msra.mxu0 %v187
    %244 = vmatpush.bf16.msra.mxu0 %v186
    %245 = vmatpush.bf16.msra.mxu0 %v185
    %246 = vmatmul.bf16.gmra.mxu0 %v98
    %v247 = vpop.f32.mrf.mxu0
    %v248 = vadd.f32 %v219, %v247
    %v249 = vpop.f32.mrf.mxu0
    %v250 = vadd.f32 %v221, %v249
    %251 = vmatmul.bf16.gmra.mxu0 %v100
    %v252 = vpop.f32.mrf.mxu0
    %v253 = vadd.f32 %v224, %v252
    %v254 = vpop.f32.mrf.mxu0
    %v255 = vadd.f32 %v226, %v254
    %256 = vmatmul.bf16.gmra.mxu0 %v102
    %v257 = vpop.f32.mrf.mxu0
    %v258 = vadd.f32 %v229, %v257
    %v259 = vpop.f32.mrf.mxu0
    %v260 = vadd.f32 %v231, %v259
    %261 = vmatmul.bf16.gmra.mxu0 %v104
    %v262 = vpop.f32.mrf.mxu0
    %v263 = vadd.f32 %v234, %v262
    %v264 = vpop.f32.mrf.mxu0
    %v265 = vadd.f32 %v236, %v264
    %266 = vdwg.mxu0
    %vm267 = vcmask 261120
    %v268 = vsel %vm267, %v248, 0.0
    %269 = vadd.xlane.f32.xlu0 %v268
    %v270 = vpop.xlane.xlu0 %269
    %v271 = vsel %vm267, %v250, 0.0
    %272 = vadd.xlane.f32.xlu0 %v271
    %v273 = vpop.xlane.xlu0 %272
    %v274 = vsel %vm267, %v253, 0.0
    %275 = vadd.xlane.f32.xlu0 %v274
    %v276 = vpop.xlane.xlu0 %275
    %v277 = vsel %vm267, %v255, 0.0
    %278 = vadd.xlane.f32.xlu0 %v277
    %v279 = vpop.xlane.xlu0 %278
    %v280 = vsel %vm267, %v258, 0.0
    %281 = vadd.xlane.f32.xlu0 %v280
    %v282 = vpop.xlane.xlu0 %281
    %v283 = vsel %vm267, %v260, 0.0
    %284 = vadd.xlane.f32.xlu0 %v283
    %v285 = vpop.xlane.xlu0 %284
    %v286 = vsel %vm267, %v263, 0.0
    %287 = vadd.xlane.f32.xlu0 %v286
    %v288 = vpop.xlane.xlu0 %287
    %v289 = vsel %vm267, %v265, 0.0
    %290 = vadd.xlane.f32.xlu0 %v289
    %v291 = vpop.xlane.xlu0 %290
    %v292 = vmul.f32 %v270, 0.03125
    %v293 = vmul.f32 %v273, 0.03125
    %v294 = vmul.f32 %v276, 0.03125
    %v295 = vmul.f32 %v279, 0.03125
    %v296 = vmul.f32 %v282, 0.03125
    %v297 = vmul.f32 %v285, 0.03125
    %v298 = vmul.f32 %v288, 0.03125
    %v299 = vmul.f32 %v291, 0.03125
    %v300 = vsub.f32 %v248, %v292
    %v301 = vsub.f32 %v250, %v293
    %v302 = vsub.f32 %v253, %v294
    %v303 = vsub.f32 %v255, %v295
    %v304 = vsub.f32 %v258, %v296
    %v305 = vsub.f32 %v260, %v297
    %v306 = vsub.f32 %v263, %v298
    %v307 = vsub.f32 %v265, %v299
    %v308 = vmul.f32 %v300, %v300
    %v309 = vmul.f32 %v301, %v301
    %v310 = vmul.f32 %v302, %v302
    %v311 = vmul.f32 %v303, %v303
    %v312 = vmul.f32 %v304, %v304
    %v313 = vmul.f32 %v305, %v305
    %v314 = vmul.f32 %v306, %v306
    %v315 = vmul.f32 %v307, %v307
    %v316 = vsel %vm267, %v308, 0.0
    %317 = vadd.xlane.f32.xlu0 %v316
    %v318 = vpop.xlane.xlu0 %317
    %v319 = vsel %vm267, %v309, 0.0
    %320 = vadd.xlane.f32.xlu0 %v319
    %v321 = vpop.xlane.xlu0 %320
    %v322 = vsel %vm267, %v310, 0.0
    %323 = vadd.xlane.f32.xlu0 %v322
    %v324 = vpop.xlane.xlu0 %323
    %v325 = vsel %vm267, %v311, 0.0
    %326 = vadd.xlane.f32.xlu0 %v325
    %v327 = vpop.xlane.xlu0 %326
    %v328 = vsel %vm267, %v312, 0.0
    %329 = vadd.xlane.f32.xlu0 %v328
    %v330 = vpop.xlane.xlu0 %329
    %v331 = vsel %vm267, %v313, 0.0
    %332 = vadd.xlane.f32.xlu0 %v331
    %v333 = vpop.xlane.xlu0 %332
    %v334 = vsel %vm267, %v314, 0.0
    %335 = vadd.xlane.f32.xlu0 %v334
    %v336 = vpop.xlane.xlu0 %335
    %v337 = vsel %vm267, %v315, 0.0
    %338 = vadd.xlane.f32.xlu0 %v337
    %v339 = vpop.xlane.xlu0 %338
    %v340 = vmul.f32 %v318, 0.03125
    %v341 = vmul.f32 %v321, 0.03125
    %v342 = vmul.f32 %v324, 0.03125
    %v343 = vmul.f32 %v327, 0.03125
    %v344 = vmul.f32 %v330, 0.03125
    %v345 = vmul.f32 %v333, 0.03125
    %v346 = vmul.f32 %v336, 0.03125
    %v347 = vmul.f32 %v339, 0.03125
    %v348 = vadd.f32 %v340, 1e-05
    %v349 = vadd.f32 %v341, 1e-05
    %v350 = vadd.f32 %v342, 1e-05
    %v351 = vadd.f32 %v343, 1e-05
    %v352 = vadd.f32 %v344, 1e-05
    %v353 = vadd.f32 %v345, 1e-05
    %v354 = vadd.f32 %v346, 1e-05
    %v355 = vadd.f32 %v347, 1e-05
    %v356 = vrsqrt.pop %v348
    %v357 = vmul.f32 %v356, %v348
    %v358 = vmul.f32 %v357, %v356
    %v359 = vmul.f32 0.5, %v358
    %v360 = vsub.f32 1.5, %v359
    %v361 = vmul.f32 %v356, %v360
    %vm362 = vweird.f32 %v348
    %vm363 = vweird.f32 %v356
    %vm364 = vmor %vm362, %vm363
    %v365 = vsel %vm364, %v356, %v361
    %v366 = vrsqrt.pop %v349
    %v367 = vmul.f32 %v366, %v349
    %v368 = vmul.f32 %v367, %v366
    %v369 = vmul.f32 0.5, %v368
    %v370 = vsub.f32 1.5, %v369
    %v371 = vmul.f32 %v366, %v370
    %vm372 = vweird.f32 %v349
    %vm373 = vweird.f32 %v366
    %vm374 = vmor %vm372, %vm373
    %v375 = vsel %vm374, %v366, %v371
    %v376 = vrsqrt.pop %v350
    %v377 = vmul.f32 %v376, %v350
    %v378 = vmul.f32 %v377, %v376
    %v379 = vmul.f32 0.5, %v378
    %v380 = vsub.f32 1.5, %v379
    %v381 = vmul.f32 %v376, %v380
    %vm382 = vweird.f32 %v350
    %vm383 = vweird.f32 %v376
    %vm384 = vmor %vm382, %vm383
    %v385 = vsel %vm384, %v376, %v381
    %v386 = vrsqrt.pop %v351
    %v387 = vmul.f32 %v386, %v351
    %v388 = vmul.f32 %v387, %v386
    %v389 = vmul.f32 0.5, %v388
    %v390 = vsub.f32 1.5, %v389
    %v391 = vmul.f32 %v386, %v390
    %vm392 = vweird.f32 %v351
    %vm393 = vweird.f32 %v386
    %vm394 = vmor %vm392, %vm393
    %v395 = vsel %vm394, %v386, %v391
    %v396 = vrsqrt.pop %v352
    %v397 = vmul.f32 %v396, %v352
    %v398 = vmul.f32 %v397, %v396
    %v399 = vmul.f32 0.5, %v398
    %v400 = vsub.f32 1.5, %v399
    %v401 = vmul.f32 %v396, %v400
    %vm402 = vweird.f32 %v352
    %vm403 = vweird.f32 %v396
    %vm404 = vmor %vm402, %vm403
    %v405 = vsel %vm404, %v396, %v401
    %v406 = vrsqrt.pop %v353
    %v407 = vmul.f32 %v406, %v353
    %v408 = vmul.f32 %v407, %v406
    %v409 = vmul.f32 0.5, %v408
    %v410 = vsub.f32 1.5, %v409
    %v411 = vmul.f32 %v406, %v410
    %vm412 = vweird.f32 %v353
    %vm413 = vweird.f32 %v406
    %vm414 = vmor %vm412, %vm413
    %v415 = vsel %vm414, %v406, %v411
    %v416 = vrsqrt.pop %v354
    %v417 = vmul.f32 %v416, %v354
    %v418 = vmul.f32 %v417, %v416
    %v419 = vmul.f32 0.5, %v418
    %v420 = vsub.f32 1.5, %v419
    %v421 = vmul.f32 %v416, %v420
    %vm422 = vweird.f32 %v354
    %vm423 = vweird.f32 %v416
    %vm424 = vmor %vm422, %vm423
    %v425 = vsel %vm424, %v416, %v421
    %v426 = vrsqrt.pop %v355
    %v427 = vmul.f32 %v426, %v355
    %v428 = vmul.f32 %v427, %v426
    %v429 = vmul.f32 0.5, %v428
    %v430 = vsub.f32 1.5, %v429
    %v431 = vmul.f32 %v426, %v430
    %vm432 = vweird.f32 %v355
    %vm433 = vweird.f32 %v426
    %vm434 = vmor %vm432, %vm433
    %v435 = vsel %vm434, %v426, %v431
    %v436 = vld [vmem:[%s2] sm:$0xff]
    %v437 = vld [vmem:[%s2 + $0x8] sm:$0xff]
    %v438 = vld [vmem:[%s2 + $0x10] sm:$0xff]
    %v439 = vld [vmem:[%s2 + $0x18] sm:$0xff]
    %v440 = vld [vmem:[%s2 + $0x20] sm:$0xff]
    %v441 = vld [vmem:[%s2 + $0x28] sm:$0xff]
    %v442 = vld [vmem:[%s2 + $0x30] sm:$0xff]
    %v443 = vld [vmem:[%s2 + $0x38] sm:$0xff]
    %v444 = vmul.f32 %v365, %v436
    %v445 = vmul.f32 %v375, %v437
    %v446 = vmul.f32 %v385, %v438
    %v447 = vmul.f32 %v395, %v439
    %v448 = vmul.f32 %v405, %v440
    %v449 = vmul.f32 %v415, %v441
    %v450 = vmul.f32 %v425, %v442
    %v451 = vmul.f32 %v435, %v443
    %453 = vset.pattern.permute.xlu0 0
    %454 = vperm.xlu0 %453, %v444
    %v455 = vpop.permute.xlu0 %454
    %458 = vset.pattern.permute.xlu0 0
    %459 = vperm.xlu0 %458, %v445
    %v460 = vpop.permute.xlu0 %459
    %463 = vset.pattern.permute.xlu0 0
    %464 = vperm.xlu0 %463, %v446
    %v465 = vpop.permute.xlu0 %464
    %468 = vset.pattern.permute.xlu0 0
    %469 = vperm.xlu0 %468, %v447
    %v470 = vpop.permute.xlu0 %469
    %473 = vset.pattern.permute.xlu0 0
    %474 = vperm.xlu0 %473, %v448
    %v475 = vpop.permute.xlu0 %474
    %478 = vset.pattern.permute.xlu0 0
    %479 = vperm.xlu0 %478, %v449
    %v480 = vpop.permute.xlu0 %479
    %483 = vset.pattern.permute.xlu0 0
    %484 = vperm.xlu0 %483, %v450
    %v485 = vpop.permute.xlu0 %484
    %488 = vset.pattern.permute.xlu0 0
    %489 = vperm.xlu0 %488, %v451
    %v490 = vpop.permute.xlu0 %489
    %v492 = vmul.f32 %v300, %v455
    %v493 = vmul.f32 %v301, %v460
    %v494 = vmul.f32 %v302, %v465
    %v495 = vmul.f32 %v303, %v470
    %v496 = vmul.f32 %v304, %v475
    %v497 = vmul.f32 %v305, %v480
    %v498 = vmul.f32 %v306, %v485
    %v499 = vmul.f32 %v307, %v490
    %v500 = vld [vmem:[%s3] sm:$0xff]
    %v501 = vld [vmem:[%s3 + $0x8] sm:$0xff]
    %v502 = vld [vmem:[%s3 + $0x10] sm:$0xff]
    %v503 = vld [vmem:[%s3 + $0x18] sm:$0xff]
    %v504 = vld [vmem:[%s3 + $0x20] sm:$0xff]
    %v505 = vld [vmem:[%s3 + $0x28] sm:$0xff]
    %v506 = vld [vmem:[%s3 + $0x30] sm:$0xff]
    %v507 = vld [vmem:[%s3 + $0x38] sm:$0xff]
    %509 = vset.pattern.permute.xlu0 0
    %510 = vperm.xlu0 %509, %v500
    %v511 = vpop.permute.xlu0 %510
    %514 = vset.pattern.permute.xlu0 0
    %515 = vperm.xlu0 %514, %v501
    %v516 = vpop.permute.xlu0 %515
    %519 = vset.pattern.permute.xlu0 0
    %520 = vperm.xlu0 %519, %v502
    %v521 = vpop.permute.xlu0 %520
    %524 = vset.pattern.permute.xlu0 0
    %525 = vperm.xlu0 %524, %v503
    %v526 = vpop.permute.xlu0 %525
    %529 = vset.pattern.permute.xlu0 0
    %530 = vperm.xlu0 %529, %v504
    %v531 = vpop.permute.xlu0 %530
    %534 = vset.pattern.permute.xlu0 0
    %535 = vperm.xlu0 %534, %v505
    %v536 = vpop.permute.xlu0 %535
    %539 = vset.pattern.permute.xlu0 0
    %540 = vperm.xlu0 %539, %v506
    %v541 = vpop.permute.xlu0 %540
    %544 = vset.pattern.permute.xlu0 0
    %545 = vperm.xlu0 %544, %v507
    %v546 = vpop.permute.xlu0 %545
    %v548 = vadd.f32 %v492, %v511
    %v549 = vadd.f32 %v493, %v516
    %v550 = vadd.f32 %v494, %v521
    %v551 = vadd.f32 %v495, %v526
    %v552 = vadd.f32 %v496, %v531
    %v553 = vadd.f32 %v497, %v536
    %v554 = vadd.f32 %v498, %v541
    %v555 = vadd.f32 %v499, %v546
    %vm556 = vcmp.ge.f32.partialorder %v548, 0.0
    %vm557 = vcmp.ge.f32.partialorder %v549, 0.0
    %vm558 = vcmp.ge.f32.partialorder %v550, 0.0
    %vm559 = vcmp.ge.f32.partialorder %v551, 0.0
    %vm560 = vcmp.ge.f32.partialorder %v552, 0.0
    %vm561 = vcmp.ge.f32.partialorder %v553, 0.0
    %vm562 = vcmp.ge.f32.partialorder %v554, 0.0
    %vm563 = vcmp.ge.f32.partialorder %v555, 0.0
    %v564 = vmul.f32 %v548, 0.2
    %v565 = vmul.f32 %v549, 0.2
    %v566 = vmul.f32 %v550, 0.2
    %v567 = vmul.f32 %v551, 0.2
    %v568 = vmul.f32 %v552, 0.2
    %v569 = vmul.f32 %v553, 0.2
    %v570 = vmul.f32 %v554, 0.2
    %v571 = vmul.f32 %v555, 0.2
    %v572 = vsel %vm556, %v548, %v564
    %v573 = vsel %vm557, %v549, %v565
    %v574 = vsel %vm558, %v550, %v566
    %v575 = vsel %vm559, %v551, %v567
    %v576 = vsel %vm560, %v552, %v568
    %v577 = vsel %vm561, %v553, %v569
    %v578 = vsel %vm562, %v554, %v570
    %v579 = vsel %vm563, %v555, %v571
    %v580 = vpack.c.bf16 %v572, %v572
    %v581 = vpack.c.bf16 %v573, %v573
    %v582 = vpack.c.bf16 %v574, %v574
    %v583 = vpack.c.bf16 %v575, %v575
    %v584 = vpack.c.bf16 %v576, %v576
    %v585 = vpack.c.bf16 %v577, %v577
    %v586 = vpack.c.bf16 %v578, %v578
    %v587 = vpack.c.bf16 %v579, %v579
    %vm588 = vcmask 257024
    %589 = vst.msk [vmem:[%s4] sm:$0xf] %vm588, %v580
    %590 = vst.msk [vmem:[%s4 + $0x4] sm:$0xf] %vm588, %v581
    %591 = vst.msk [vmem:[%s4 + $0x8] sm:$0xf] %vm588, %v582
    %592 = vst.msk [vmem:[%s4 + $0xc] sm:$0xf] %vm588, %v583
    %593 = vst.msk [vmem:[%s4 + $0x10] sm:$0xf] %vm588, %v584
    %594 = vst.msk [vmem:[%s4 + $0x14] sm:$0xf] %vm588, %v585
    %595 = vst.msk [vmem:[%s4 + $0x18] sm:$0xf] %vm588, %v586
    %596 = vst.msk [vmem:[%s4 + $0x1c] sm:$0xf] %vm588, %v587
    // Predicated region
    $region22: #{generator_forward.5} parent=1 // pred_check
      _
    $region23: #{generator_forward.5} parent=1 // pred_check_branch
      %598 = sbr.rel (0) target = $region25
    $region24: #{generator_forward.5} parent=1 // pred_region
      _
    $region25: #{generator_forward.5} parent=1 // pred_fallthru
      _
    // Predicated region
    $region26: #{generator_forward.5} parent=1 // pred_check
      _
    $region27: #{generator_forward.5} parent=1 // pred_check_branch
      %600 = sbr.rel (0) target = $region29
    $region28: #{generator_forward.5} parent=1 // pred_region
      _
    $region29: #{generator_forward.5} parent=1 // pred_fallthru
      _
    %601 = vsyncpa [#allocation3], 1

// kernel: generator_forward.6
$region0: #{generator_forward.6}
  #allocation0 [shape = 'u32[]', space=smem, size = 0x4, offset = 0x4, fixed_abs, tag = 'smem constant byte address 0x4 - core index']
  #allocation1 [shape = 'u32[72,128]{1,0:T(1,128)}', space=vmem, size = 0x9000, scoped, tag = 'internal scratch']
  %s0 = inlined_call_operand.vmem [shape: bf16[32,1024], index: 0, kind: input, shape index: {}]
  %s1 = inlined_call_operand.vmem [shape: bf16[1024,128], index: 1, kind: input, shape index: {}]
  %s2 = inlined_call_operand.vmem [shape: f32[32,1], index: 2, kind: input, shape index: {}]
  %s3 = inlined_call_operand.vmem [shape: f32[32,1], index: 3, kind: input, shape index: {}]
  %s4 = inlined_call_operand.vmem [shape: bf16[32,128], index: 4, kind: output, shape index: {}]
  %s5 = sld [smem:[#allocation0]]
  $region26: #{generator_forward.6} parent=0
    _
  %s7 = ssub.s32 1, %s5
  %s8 = scalar_select 0, %s7, %s5
  // Predicated region
  $region2: #{generator_forward.6} parent=0 // pred_check
    _
  $region3: #{generator_forward.6} parent=0 // pred_check_branch
    %10 = sbr.rel (0) target = $region5
  $region4: #{generator_forward.6} parent=0 // pred_region
    _
  $region5: #{generator_forward.6} parent=0 // pred_fallthru
    _
  // Predicated region
  $region6: #{generator_forward.6} parent=0 // pred_check
    _
  $region7: #{generator_forward.6} parent=0 // pred_check_branch
    %12 = sbr.rel (0) target = $region9
  $region8: #{generator_forward.6} parent=0 // pred_region
    _
  $region9: #{generator_forward.6} parent=0 // pred_fallthru
    _
  // Predicated region
  $region10: #{generator_forward.6} parent=0 // pred_check
    _
  $region11: #{generator_forward.6} parent=0 // pred_check_branch
    %14 = sbr.rel (0) target = $region13
  $region12: #{generator_forward.6} parent=0 // pred_region
    _
  $region13: #{generator_forward.6} parent=0 // pred_fallthru
    _
  // Predicated region
  $region14: #{generator_forward.6} parent=0 // pred_check
    _
  $region15: #{generator_forward.6} parent=0 // pred_check_branch
    %16 = sbr.rel (0) target = $region17
  $region16: #{generator_forward.6} parent=0 // pred_region
    _
  $region17: #{generator_forward.6} parent=0 // pred_fallthru
    _
  %v17 = vld [vmem:[%s0] sm:$0xff]
  %v18 = vld [vmem:[%s0 + $0x8] sm:$0xff]
  %v19 = vld [vmem:[%s0 + $0x10] sm:$0xff]
  %v20 = vld [vmem:[%s0 + $0x18] sm:$0xff]
  %v21 = vld [vmem:[%s0 + $0x20] sm:$0xff]
  %v22 = vld [vmem:[%s0 + $0x28] sm:$0xff]
  %v23 = vld [vmem:[%s0 + $0x30] sm:$0xff]
  %v24 = vld [vmem:[%s0 + $0x38] sm:$0xff]
  %v25 = vld [vmem:[%s0 + $0x40] sm:$0xff]
  %v26 = vld [vmem:[%s0 + $0x48] sm:$0xff]
  %v27 = vld [vmem:[%s0 + $0x50] sm:$0xff]
  %v28 = vld [vmem:[%s0 + $0x58] sm:$0xff]
  %v29 = vld [vmem:[%s0 + $0x60] sm:$0xff]
  %v30 = vld [vmem:[%s0 + $0x68] sm:$0xff]
  %v31 = vld [vmem:[%s0 + $0x70] sm:$0xff]
  %v32 = vld [vmem:[%s0 + $0x78] sm:$0xff]
  %v33 = vld [vmem:[%s1] sm:$0xf]
  %v34 = vld [vmem:[%s1 + $0x4] sm:$0xf]
  %v35 = vld [vmem:[%s1 + $0x8] sm:$0xf]
  %v36 = vld [vmem:[%s1 + $0xc] sm:$0xf]
  %v37 = vld [vmem:[%s1 + $0x10] sm:$0xf]
  %v38 = vld [vmem:[%s1 + $0x14] sm:$0xf]
  %v39 = vld [vmem:[%s1 + $0x18] sm:$0xf]
  %v40 = vld [vmem:[%s1 + $0x1c] sm:$0xf]
  %v41 = vld [vmem:[%s1 + $0x20] sm:$0xf]
  %v42 = vld [vmem:[%s1 + $0x24] sm:$0xf]
  %v43 = vld [vmem:[%s1 + $0x28] sm:$0xf]
  %v44 = vld [vmem:[%s1 + $0x2c] sm:$0xf]
  %v45 = vld [vmem:[%s1 + $0x30] sm:$0xf]
  %v46 = vld [vmem:[%s1 + $0x34] sm:$0xf]
  %v47 = vld [vmem:[%s1 + $0x38] sm:$0xf]
  %v48 = vld [vmem:[%s1 + $0x3c] sm:$0xf]
  %v49 = vld [vmem:[%s1 + $0x40] sm:$0xf]
  %v50 = vld [vmem:[%s1 + $0x44] sm:$0xf]
  %v51 = vld [vmem:[%s1 + $0x48] sm:$0xf]
  %v52 = vld [vmem:[%s1 + $0x4c] sm:$0xf]
  %v53 = vld [vmem:[%s1 + $0x50] sm:$0xf]
  %v54 = vld [vmem:[%s1 + $0x54] sm:$0xf]
  %v55 = vld [vmem:[%s1 + $0x58] sm:$0xf]
  %v56 = vld [vmem:[%s1 + $0x5c] sm:$0xf]
  %v57 = vld [vmem:[%s1 + $0x60] sm:$0xf]
  %v58 = vld [vmem:[%s1 + $0x64] sm:$0xf]
  %v59 = vld [vmem:[%s1 + $0x68] sm:$0xf]
  %v60 = vld [vmem:[%s1 + $0x6c] sm:$0xf]
  %v61 = vld [vmem:[%s1 + $0x70] sm:$0xf]
  %v62 = vld [vmem:[%s1 + $0x74] sm:$0xf]
  %v63 = vld [vmem:[%s1 + $0x78] sm:$0xf]
  %v64 = vld [vmem:[%s1 + $0x7c] sm:$0xf]
  %v65 = vld [vmem:[%s1 + $0x80] sm:$0xf]
  %v66 = vld [vmem:[%s1 + $0x84] sm:$0xf]
  %v67 = vld [vmem:[%s1 + $0x88] sm:$0xf]
  %v68 = vld [vmem:[%s1 + $0x8c] sm:$0xf]
  %v69 = vld [vmem:[%s1 + $0x90] sm:$0xf]
  %v70 = vld [vmem:[%s1 + $0x94] sm:$0xf]
  %v71 = vld [vmem:[%s1 + $0x98] sm:$0xf]
  %v72 = vld [vmem:[%s1 + $0x9c] sm:$0xf]
  %v73 = vld [vmem:[%s1 + $0xa0] sm:$0xf]
  %v74 = vld [vmem:[%s1 + $0xa4] sm:$0xf]
  %v75 = vld [vmem:[%s1 + $0xa8] sm:$0xf]
  %v76 = vld [vmem:[%s1 + $0xac] sm:$0xf]
  %v77 = vld [vmem:[%s1 + $0xb0] sm:$0xf]
  %v78 = vld [vmem:[%s1 + $0xb4] sm:$0xf]
  %v79 = vld [vmem:[%s1 + $0xb8] sm:$0xf]
  %v80 = vld [vmem:[%s1 + $0xbc] sm:$0xf]
  %v81 = vld [vmem:[%s1 + $0xc0] sm:$0xf]
  %v82 = vld [vmem:[%s1 + $0xc4] sm:$0xf]
  %v83 = vld [vmem:[%s1 + $0xc8] sm:$0xf]
  %v84 = vld [vmem:[%s1 + $0xcc] sm:$0xf]
  %v85 = vld [vmem:[%s1 + $0xd0] sm:$0xf]
  %v86 = vld [vmem:[%s1 + $0xd4] sm:$0xf]
  %v87 = vld [vmem:[%s1 + $0xd8] sm:$0xf]
  %v88 = vld [vmem:[%s1 + $0xdc] sm:$0xf]
  %v89 = vld [vmem:[%s1 + $0xe0] sm:$0xf]
  %v90 = vld [vmem:[%s1 + $0xe4] sm:$0xf]
  %v91 = vld [vmem:[%s1 + $0xe8] sm:$0xf]
  %v92 = vld [vmem:[%s1 + $0xec] sm:$0xf]
  %v93 = vld [vmem:[%s1 + $0xf0] sm:$0xf]
  %v94 = vld [vmem:[%s1 + $0xf4] sm:$0xf]
  %v95 = vld [vmem:[%s1 + $0xf8] sm:$0xf]
  %v96 = vld [vmem:[%s1 + $0xfc] sm:$0xf]
  %v97 = vld [vmem:[%s1 + $0x100] sm:$0xf]
  %v98 = vld [vmem:[%s1 + $0x104] sm:$0xf]
  %v99 = vld [vmem:[%s1 + $0x108] sm:$0xf]
  %v100 = vld [vmem:[%s1 + $0x10c] sm:$0xf]
  %v101 = vld [vmem:[%s1 + $0x110] sm:$0xf]
  %v102 = vld [vmem:[%s1 + $0x114] sm:$0xf]
  %v103 = vld [vmem:[%s1 + $0x118] sm:$0xf]
  %v104 = vld [vmem:[%s1 + $0x11c] sm:$0xf]
  %v105 = vld [vmem:[%s1 + $0x120] sm:$0xf]
  %v106 = vld [vmem:[%s1 + $0x124] sm:$0xf]
  %v107 = vld [vmem:[%s1 + $0x128] sm:$0xf]
  %v108 = vld [vmem:[%s1 + $0x12c] sm:$0xf]
  %v109 = vld [vmem:[%s1 + $0x130] sm:$0xf]
  %v110 = vld [vmem:[%s1 + $0x134] sm:$0xf]
  %v111 = vld [vmem:[%s1 + $0x138] sm:$0xf]
  %v112 = vld [vmem:[%s1 + $0x13c] sm:$0xf]
  %v113 = vld [vmem:[%s1 + $0x140] sm:$0xf]
  %v114 = vld [vmem:[%s1 + $0x144] sm:$0xf]
  %v115 = vld [vmem:[%s1 + $0x148] sm:$0xf]
  %v116 = vld [vmem:[%s1 + $0x14c] sm:$0xf]
  %v117 = vld [vmem:[%s1 + $0x150] sm:$0xf]
  %v118 = vld [vmem:[%s1 + $0x154] sm:$0xf]
  %v119 = vld [vmem:[%s1 + $0x158] sm:$0xf]
  %v120 = vld [vmem:[%s1 + $0x15c] sm:$0xf]
  %v121 = vld [vmem:[%s1 + $0x160] sm:$0xf]
  %v122 = vld [vmem:[%s1 + $0x164] sm:$0xf]
  %v123 = vld [vmem:[%s1 + $0x168] sm:$0xf]
  %v124 = vld [vmem:[%s1 + $0x16c] sm:$0xf]
  %v125 = vld [vmem:[%s1 + $0x170] sm:$0xf]
  %v126 = vld [vmem:[%s1 + $0x174] sm:$0xf]
  %v127 = vld [vmem:[%s1 + $0x178] sm:$0xf]
  %v128 = vld [vmem:[%s1 + $0x17c] sm:$0xf]
  %v129 = vld [vmem:[%s1 + $0x180] sm:$0xf]
  %v130 = vld [vmem:[%s1 + $0x184] sm:$0xf]
  %v131 = vld [vmem:[%s1 + $0x188] sm:$0xf]
  %v132 = vld [vmem:[%s1 + $0x18c] sm:$0xf]
  %v133 = vld [vmem:[%s1 + $0x190] sm:$0xf]
  %v134 = vld [vmem:[%s1 + $0x194] sm:$0xf]
  %v135 = vld [vmem:[%s1 + $0x198] sm:$0xf]
  %v136 = vld [vmem:[%s1 + $0x19c] sm:$0xf]
  %v137 = vld [vmem:[%s1 + $0x1a0] sm:$0xf]
  %v138 = vld [vmem:[%s1 + $0x1a4] sm:$0xf]
  %v139 = vld [vmem:[%s1 + $0x1a8] sm:$0xf]
  %v140 = vld [vmem:[%s1 + $0x1ac] sm:$0xf]
  %v141 = vld [vmem:[%s1 + $0x1b0] sm:$0xf]
  %v142 = vld [vmem:[%s1 + $0x1b4] sm:$0xf]
  %v143 = vld [vmem:[%s1 + $0x1b8] sm:$0xf]
  %v144 = vld [vmem:[%s1 + $0x1bc] sm:$0xf]
  %v145 = vld [vmem:[%s1 + $0x1c0] sm:$0xf]
  %v146 = vld [vmem:[%s1 + $0x1c4] sm:$0xf]
  %v147 = vld [vmem:[%s1 + $0x1c8] sm:$0xf]
  %v148 = vld [vmem:[%s1 + $0x1cc] sm:$0xf]
  %v149 = vld [vmem:[%s1 + $0x1d0] sm:$0xf]
  %v150 = vld [vmem:[%s1 + $0x1d4] sm:$0xf]
  %v151 = vld [vmem:[%s1 + $0x1d8] sm:$0xf]
  %v152 = vld [vmem:[%s1 + $0x1dc] sm:$0xf]
  %v153 = vld [vmem:[%s1 + $0x1e0] sm:$0xf]
  %v154 = vld [vmem:[%s1 + $0x1e4] sm:$0xf]
  %v155 = vld [vmem:[%s1 + $0x1e8] sm:$0xf]
  %v156 = vld [vmem:[%s1 + $0x1ec] sm:$0xf]
  %v157 = vld [vmem:[%s1 + $0x1f0] sm:$0xf]
  %v158 = vld [vmem:[%s1 + $0x1f4] sm:$0xf]
  %v159 = vld [vmem:[%s1 + $0x1f8] sm:$0xf]
  %v160 = vld [vmem:[%s1 + $0x1fc] sm:$0xf]
  %v177 = vunpack.c.l.b16 %v17
  %v178 = vunpack.c.h.b16 %v17
  %v179 = vunpack.c.l.b16 %v18
  %v180 = vunpack.c.h.b16 %v18
  %v181 = vunpack.c.l.b16 %v19
  %v182 = vunpack.c.h.b16 %v19
  %v183 = vunpack.c.l.b16 %v20
  %v184 = vunpack.c.h.b16 %v20
  %v185 = vunpack.c.l.b16 %v21
  %v186 = vunpack.c.h.b16 %v21
  %v187 = vunpack.c.l.b16 %v22
  %v188 = vunpack.c.h.b16 %v22
  %v189 = vunpack.c.l.b16 %v23
  %v190 = vunpack.c.h.b16 %v23
  %v191 = vunpack.c.l.b16 %v24
  %v192 = vunpack.c.h.b16 %v24
  %v193 = vunpack.c.l.b16 %v25
  %v194 = vunpack.c.h.b16 %v25
  %v195 = vunpack.c.l.b16 %v26
  %v196 = vunpack.c.h.b16 %v26
  %v197 = vunpack.c.l.b16 %v27
  %v198 = vunpack.c.h.b16 %v27
  %v199 = vunpack.c.l.b16 %v28
  %v200 = vunpack.c.h.b16 %v28
  %v201 = vunpack.c.l.b16 %v29
  %v202 = vunpack.c.h.b16 %v29
  %v203 = vunpack.c.l.b16 %v30
  %v204 = vunpack.c.h.b16 %v30
  %v205 = vunpack.c.l.b16 %v31
  %v206 = vunpack.c.h.b16 %v31
  %v207 = vunpack.c.l.b16 %v32
  %v208 = vunpack.c.h.b16 %v32
  %v209 = vpack.c.b16 %v185, %v177
  %v210 = vpack.c.b16 %v186, %v178
  %v211 = vpack.c.b16 %v187, %v179
  %v212 = vpack.c.b16 %v188, %v180
  %v213 = vpack.c.b16 %v189, %v181
  %v214 = vpack.c.b16 %v190, %v182
  %v215 = vpack.c.b16 %v191, %v183
  %v216 = vpack.c.b16 %v192, %v184
  %v217 = vpack.c.b16 %v201, %v193
  %v218 = vpack.c.b16 %v202, %v194
  %v219 = vpack.c.b16 %v203, %v195
  %v220 = vpack.c.b16 %v204, %v196
  %v221 = vpack.c.b16 %v205, %v197
  %v222 = vpack.c.b16 %v206, %v198
  %v223 = vpack.c.b16 %v207, %v199
  %v224 = vpack.c.b16 %v208, %v200
  %v369 = vunpack.c.l.b16 %v33
  %v370 = vunpack.c.l.b16 %v34
  %v371 = vunpack.c.l.b16 %v35
  %v372 = vunpack.c.l.b16 %v36
  %v373 = vunpack.c.l.b16 %v37
  %v374 = vunpack.c.l.b16 %v38
  %v375 = vunpack.c.l.b16 %v39
  %v376 = vunpack.c.l.b16 %v40
  %v377 = vunpack.c.l.b16 %v41
  %v378 = vunpack.c.l.b16 %v42
  %v379 = vunpack.c.l.b16 %v43
  %v380 = vunpack.c.l.b16 %v44
  %v381 = vunpack.c.l.b16 %v45
  %v382 = vunpack.c.l.b16 %v46
  %v383 = vunpack.c.l.b16 %v47
  %v384 = vunpack.c.l.b16 %v48
  %v385 = vunpack.c.l.b16 %v49
  %v386 = vunpack.c.l.b16 %v50
  %v387 = vunpack.c.l.b16 %v51
  %v388 = vunpack.c.l.b16 %v52
  %v389 = vunpack.c.l.b16 %v53
  %v390 = vunpack.c.l.b16 %v54
  %v391 = vunpack.c.l.b16 %v55
  %v392 = vunpack.c.l.b16 %v56
  %v393 = vunpack.c.l.b16 %v57
  %v394 = vunpack.c.l.b16 %v58
  %v395 = vunpack.c.l.b16 %v59
  %v396 = vunpack.c.l.b16 %v60
  %v397 = vunpack.c.l.b16 %v61
  %v398 = vunpack.c.l.b16 %v62
  %v399 = vunpack.c.l.b16 %v63
  %v400 = vunpack.c.l.b16 %v64
  %v401 = vunpack.c.l.b16 %v65
  %v402 = vunpack.c.l.b16 %v66
  %v403 = vunpack.c.l.b16 %v67
  %v404 = vunpack.c.l.b16 %v68
  %v405 = vunpack.c.l.b16 %v69
  %v406 = vunpack.c.l.b16 %v70
  %v407 = vunpack.c.l.b16 %v71
  %v408 = vunpack.c.l.b16 %v72
  %v409 = vunpack.c.l.b16 %v73
  %v410 = vunpack.c.l.b16 %v74
  %v411 = vunpack.c.l.b16 %v75
  %v412 = vunpack.c.l.b16 %v76
  %v413 = vunpack.c.l.b16 %v77
  %v414 = vunpack.c.l.b16 %v78
  %v415 = vunpack.c.l.b16 %v79
  %v416 = vunpack.c.l.b16 %v80
  %v417 = vunpack.c.l.b16 %v81
  %v418 = vunpack.c.l.b16 %v82
  %v419 = vunpack.c.l.b16 %v83
  %v420 = vunpack.c.l.b16 %v84
  %v421 = vunpack.c.l.b16 %v85
  %v422 = vunpack.c.l.b16 %v86
  %v423 = vunpack.c.l.b16 %v87
  %v424 = vunpack.c.l.b16 %v88
  %v425 = vunpack.c.l.b16 %v89
  %v426 = vunpack.c.l.b16 %v90
  %v427 = vunpack.c.l.b16 %v91
  %v428 = vunpack.c.l.b16 %v92
  %v429 = vunpack.c.l.b16 %v93
  %v430 = vunpack.c.l.b16 %v94
  %v431 = vunpack.c.l.b16 %v95
  %v432 = vunpack.c.l.b16 %v96
  %v433 = vunpack.c.l.b16 %v97
  %v434 = vunpack.c.l.b16 %v98
  %v435 = vunpack.c.l.b16 %v99
  %v436 = vunpack.c.l.b16 %v100
  %v437 = vunpack.c.l.b16 %v101
  %v438 = vunpack.c.l.b16 %v102
  %v439 = vunpack.c.l.b16 %v103
  %v440 = vunpack.c.l.b16 %v104
  %v441 = vunpack.c.l.b16 %v105
  %v442 = vunpack.c.l.b16 %v106
  %v443 = vunpack.c.l.b16 %v107
  %v444 = vunpack.c.l.b16 %v108
  %v445 = vunpack.c.l.b16 %v109
  %v446 = vunpack.c.l.b16 %v110
  %v447 = vunpack.c.l.b16 %v111
  %v448 = vunpack.c.l.b16 %v112
  %v449 = vunpack.c.l.b16 %v113
  %v450 = vunpack.c.l.b16 %v114
  %v451 = vunpack.c.l.b16 %v115
  %v452 = vunpack.c.l.b16 %v116
  %v453 = vunpack.c.l.b16 %v117
  %v454 = vunpack.c.l.b16 %v118
  %v455 = vunpack.c.l.b16 %v119
  %v456 = vunpack.c.l.b16 %v120
  %v457 = vunpack.c.l.b16 %v121
  %v458 = vunpack.c.l.b16 %v122
  %v459 = vunpack.c.l.b16 %v123
  %v460 = vunpack.c.l.b16 %v124
  %v461 = vunpack.c.l.b16 %v125
  %v462 = vunpack.c.l.b16 %v126
  %v463 = vunpack.c.l.b16 %v127
  %v464 = vunpack.c.l.b16 %v128
  %v465 = vunpack.c.l.b16 %v129
  %v466 = vunpack.c.l.b16 %v130
  %v467 = vunpack.c.l.b16 %v131
  %v468 = vunpack.c.l.b16 %v132
  %v469 = vunpack.c.l.b16 %v133
  %v470 = vunpack.c.l.b16 %v134
  %v471 = vunpack.c.l.b16 %v135
  %v472 = vunpack.c.l.b16 %v136
  %v473 = vunpack.c.l.b16 %v137
  %v474 = vunpack.c.l.b16 %v138
  %v475 = vunpack.c.l.b16 %v139
  %v476 = vunpack.c.l.b16 %v140
  %v477 = vunpack.c.l.b16 %v141
  %v478 = vunpack.c.l.b16 %v142
  %v479 = vunpack.c.l.b16 %v143
  %v480 = vunpack.c.l.b16 %v144
  %v481 = vunpack.c.l.b16 %v145
  %v482 = vunpack.c.l.b16 %v146
  %v483 = vunpack.c.l.b16 %v147
  %v484 = vunpack.c.l.b16 %v148
  %v485 = vunpack.c.l.b16 %v149
  %v486 = vunpack.c.l.b16 %v150
  %v487 = vunpack.c.l.b16 %v151
  %v488 = vunpack.c.l.b16 %v152
  %v489 = vunpack.c.l.b16 %v153
  %v490 = vunpack.c.l.b16 %v154
  %v491 = vunpack.c.l.b16 %v155
  %v492 = vunpack.c.l.b16 %v156
  %v493 = vunpack.c.l.b16 %v157
  %v494 = vunpack.c.l.b16 %v158
  %v495 = vunpack.c.l.b16 %v159
  %v496 = vunpack.c.l.b16 %v160
  %v497 = vpack.c.b16 %v370, %v369
  %v498 = vpack.c.b16 %v372, %v371
  %v499 = vpack.c.b16 %v374, %v373
  %v500 = vpack.c.b16 %v376, %v375
  %v501 = vpack.c.b16 %v378, %v377
  %v502 = vpack.c.b16 %v380, %v379
  %v503 = vpack.c.b16 %v382, %v381
  %v504 = vpack.c.b16 %v384, %v383
  %v505 = vpack.c.b16 %v386, %v385
  %v506 = vpack.c.b16 %v388, %v387
  %v507 = vpack.c.b16 %v390, %v389
  %v508 = vpack.c.b16 %v392, %v391
  %v509 = vpack.c.b16 %v394, %v393
  %v510 = vpack.c.b16 %v396, %v395
  %v511 = vpack.c.b16 %v398, %v397
  %v512 = vpack.c.b16 %v400, %v399
  %v513 = vpack.c.b16 %v402, %v401
  %v514 = vpack.c.b16 %v404, %v403
  %v515 = vpack.c.b16 %v406, %v405
  %v516 = vpack.c.b16 %v408, %v407
  %v517 = vpack.c.b16 %v410, %v409
  %v518 = vpack.c.b16 %v412, %v411
  %v519 = vpack.c.b16 %v414, %v413
  %v520 = vpack.c.b16 %v416, %v415
  %v521 = vpack.c.b16 %v418, %v417
  %v522 = vpack.c.b16 %v420, %v419
  %v523 = vpack.c.b16 %v422, %v421
  %v524 = vpack.c.b16 %v424, %v423
  %v525 = vpack.c.b16 %v426, %v425
  %v526 = vpack.c.b16 %v428, %v427
  %v527 = vpack.c.b16 %v430, %v429
  %v528 = vpack.c.b16 %v432, %v431
  %v529 = vpack.c.b16 %v434, %v433
  %v530 = vpack.c.b16 %v436, %v435
  %v531 = vpack.c.b16 %v438, %v437
  %v532 = vpack.c.b16 %v440, %v439
  %v533 = vpack.c.b16 %v442, %v441
  %v534 = vpack.c.b16 %v444, %v443
  %v535 = vpack.c.b16 %v446, %v445
  %v536 = vpack.c.b16 %v448, %v447
  %v537 = vpack.c.b16 %v450, %v449
  %v538 = vpack.c.b16 %v452, %v451
  %v539 = vpack.c.b16 %v454, %v453
  %v540 = vpack.c.b16 %v456, %v455
  %v541 = vpack.c.b16 %v458, %v457
  %v542 = vpack.c.b16 %v460, %v459
  %v543 = vpack.c.b16 %v462, %v461
  %v544 = vpack.c.b16 %v464, %v463
  %v545 = vpack.c.b16 %v466, %v465
  %v546 = vpack.c.b16 %v468, %v467
  %v547 = vpack.c.b16 %v470, %v469
  %v548 = vpack.c.b16 %v472, %v471
  %v549 = vpack.c.b16 %v474, %v473
  %v550 = vpack.c.b16 %v476, %v475
  %v551 = vpack.c.b16 %v478, %v477
  %v552 = vpack.c.b16 %v480, %v479
  %v553 = vpack.c.b16 %v482, %v481
  %v554 = vpack.c.b16 %v484, %v483
  %v555 = vpack.c.b16 %v486, %v485
  %v556 = vpack.c.b16 %v488, %v487
  %v557 = vpack.c.b16 %v490, %v489
  %v558 = vpack.c.b16 %v492, %v491
  %v559 = vpack.c.b16 %v494, %v493
  %v560 = vpack.c.b16 %v496, %v495
  %625 = vmatpush.bf16.msra.mxu0 %v504
  %626 = vmatpush.bf16.msra.mxu0 %v503
  %627 = vmatpush.bf16.msra.mxu0 %v502
  %628 = vmatpush.bf16.msra.mxu0 %v501
  %629 = vmatpush.bf16.msra.mxu0 %v500
  %630 = vmatpush.bf16.msra.mxu0 %v499
  %631 = vmatpush.bf16.msra.mxu0 %v498
  %632 = vmatpush.bf16.msra.mxu0 %v497
  %633 = vmatmul.bf16.gmra.mxu0 %v209
  %v634 = vpop.f32.mrf.mxu0
  %v635 = vadd.f32 0.0, %v634
  %v636 = vpop.f32.mrf.mxu0
  %v637 = vadd.f32 0.0, %v636
  %638 = vmatmul.bf16.gmra.mxu0 %v217
  %v639 = vpop.f32.mrf.mxu0
  %v640 = vadd.f32 0.0, %v639
  %v641 = vpop.f32.mrf.mxu0
  %v642 = vadd.f32 0.0, %v641
  %643 = vdwg.mxu0
  %644 = vmatpush.bf16.msra.mxu0 %v512
  %645 = vmatpush.bf16.msra.mxu0 %v511
  %646 = vmatpush.bf16.msra.mxu0 %v510
  %647 = vmatpush.bf16.msra.mxu0 %v509
  %648 = vmatpush.bf16.msra.mxu0 %v508
  %649 = vmatpush.bf16.msra.mxu0 %v507
  %650 = vmatpush.bf16.msra.mxu0 %v506
  %651 = vmatpush.bf16.msra.mxu0 %v505
  %652 = vmatmul.bf16.gmra.mxu0 %v210
  %v653 = vpop.f32.mrf.mxu0
  %v654 = vadd.f32 %v635, %v653
  %v655 = vpop.f32.mrf.mxu0
  %v656 = vadd.f32 %v637, %v655
  %657 = vmatmul.bf16.gmra.mxu0 %v218
  %v658 = vpop.f32.mrf.mxu0
  %v659 = vadd.f32 %v640, %v658
  %v660 = vpop.f32.mrf.mxu0
  %v661 = vadd.f32 %v642, %v660
  %662 = vdwg.mxu0
  %663 = vmatpush.bf16.msra.mxu0 %v520
  %664 = vmatpush.bf16.msra.mxu0 %v519
  %665 = vmatpush.bf16.msra.mxu0 %v518
  %666 = vmatpush.bf16.msra.mxu0 %v517
  %667 = vmatpush.bf16.msra.mxu0 %v516
  %668 = vmatpush.bf16.msra.mxu0 %v515
  %669 = vmatpush.bf16.msra.mxu0 %v514
  %670 = vmatpush.bf16.msra.mxu0 %v513
  %671 = vmatmul.bf16.gmra.mxu0 %v211
  %v672 = vpop.f32.mrf.mxu0
  %v673 = vadd.f32 %v654, %v672
  %v674 = vpop.f32.mrf.mxu0
  %v675 = vadd.f32 %v656, %v674
  %676 = vmatmul.bf16.gmra.mxu0 %v219
  %v677 = vpop.f32.mrf.mxu0
  %v678 = vadd.f32 %v659, %v677
  %v679 = vpop.f32.mrf.mxu0
  %v680 = vadd.f32 %v661, %v679
  %681 = vdwg.mxu0
  %682 = vmatpush.bf16.msra.mxu0 %v528
  %683 = vmatpush.bf16.msra.mxu0 %v527
  %684 = vmatpush.bf16.msra.mxu0 %v526
  %685 = vmatpush.bf16.msra.mxu0 %v525
  %686 = vmatpush.bf16.msra.mxu0 %v524
  %687 = vmatpush.bf16.msra.mxu0 %v523
  %688 = vmatpush.bf16.msra.mxu0 %v522
  %689 = vmatpush.bf16.msra.mxu0 %v521
  %690 = vmatmul.bf16.gmra.mxu0 %v212
  %v691 = vpop.f32.mrf.mxu0
  %v692 = vadd.f32 %v673, %v691
  %v693 = vpop.f32.mrf.mxu0
  %v694 = vadd.f32 %v675, %v693
  %695 = vmatmul.bf16.gmra.mxu0 %v220
  %v696 = vpop.f32.mrf.mxu0
  %v697 = vadd.f32 %v678, %v696
  %v698 = vpop.f32.mrf.mxu0
  %v699 = vadd.f32 %v680, %v698
  %700 = vdwg.mxu0
  %701 = vmatpush.bf16.msra.mxu0 %v536
  %702 = vmatpush.bf16.msra.mxu0 %v535
  %703 = vmatpush.bf16.msra.mxu0 %v534
  %704 = vmatpush.bf16.msra.mxu0 %v533
  %705 = vmatpush.bf16.msra.mxu0 %v532
  %706 = vmatpush.bf16.msra.mxu0 %v531
  %707 = vmatpush.bf16.msra.mxu0 %v530
  %708 = vmatpush.bf16.msra.mxu0 %v529
  %709 = vmatmul.bf16.gmra.mxu0 %v213
  %v710 = vpop.f32.mrf.mxu0
  %v711 = vadd.f32 %v692, %v710
  %v712 = vpop.f32.mrf.mxu0
  %v713 = vadd.f32 %v694, %v712
  %714 = vmatmul.bf16.gmra.mxu0 %v221
  %v715 = vpop.f32.mrf.mxu0
  %v716 = vadd.f32 %v697, %v715
  %v717 = vpop.f32.mrf.mxu0
  %v718 = vadd.f32 %v699, %v717
  %719 = vdwg.mxu0
  %720 = vmatpush.bf16.msra.mxu0 %v544
  %721 = vmatpush.bf16.msra.mxu0 %v543
  %722 = vmatpush.bf16.msra.mxu0 %v542
  %723 = vmatpush.bf16.msra.mxu0 %v541
  %724 = vmatpush.bf16.msra.mxu0 %v540
  %725 = vmatpush.bf16.msra.mxu0 %v539
  %726 = vmatpush.bf16.msra.mxu0 %v538
  %727 = vmatpush.bf16.msra.mxu0 %v537
  %728 = vmatmul.bf16.gmra.mxu0 %v214
  %v729 = vpop.f32.mrf.mxu0
  %v730 = vadd.f32 %v711, %v729
  %v731 = vpop.f32.mrf.mxu0
  %v732 = vadd.f32 %v713, %v731
  %733 = vmatmul.bf16.gmra.mxu0 %v222
  %v734 = vpop.f32.mrf.mxu0
  %v735 = vadd.f32 %v716, %v734
  %v736 = vpop.f32.mrf.mxu0
  %v737 = vadd.f32 %v718, %v736
  %738 = vdwg.mxu0
  %739 = vmatpush.bf16.msra.mxu0 %v552
  %740 = vmatpush.bf16.msra.mxu0 %v551
  %741 = vmatpush.bf16.msra.mxu0 %v550
  %742 = vmatpush.bf16.msra.mxu0 %v549
  %743 = vmatpush.bf16.msra.mxu0 %v548
  %744 = vmatpush.bf16.msra.mxu0 %v547
  %745 = vmatpush.bf16.msra.mxu0 %v546
  %746 = vmatpush.bf16.msra.mxu0 %v545
  %747 = vmatmul.bf16.gmra.mxu0 %v215
  %v748 = vpop.f32.mrf.mxu0
  %v749 = vadd.f32 %v730, %v748
  %v750 = vpop.f32.mrf.mxu0
  %v751 = vadd.f32 %v732, %v750
  %752 = vmatmul.bf16.gmra.mxu0 %v223
  %v753 = vpop.f32.mrf.mxu0
  %v754 = vadd.f32 %v735, %v753
  %v755 = vpop.f32.mrf.mxu0
  %v756 = vadd.f32 %v737, %v755
  %757 = vdwg.mxu0
  %758 = vmatpush.bf16.msra.mxu0 %v560
  %759 = vmatpush.bf16.msra.mxu0 %v559
  %760 = vmatpush.bf16.msra.mxu0 %v558
  %761 = vmatpush.bf16.msra.mxu0 %v557
  %762 = vmatpush.bf16.msra.mxu0 %v556
  %763 = vmatpush.bf16.msra.mxu0 %v555
  %764 = vmatpush.bf16.msra.mxu0 %v554
  %765 = vmatpush.bf16.msra.mxu0 %v553
  %766 = vmatmul.bf16.gmra.mxu0 %v216
  %v767 = vpop.f32.mrf.mxu0
  %v768 = vadd.f32 %v749, %v767
  %v769 = vpop.f32.mrf.mxu0
  %v770 = vadd.f32 %v751, %v769
  %771 = vmatmul.bf16.gmra.mxu0 %v224
  %v772 = vpop.f32.mrf.mxu0
  %v773 = vadd.f32 %v754, %v772
  %v774 = vpop.f32.mrf.mxu0
  %v775 = vadd.f32 %v756, %v774
  %776 = vdwg.mxu0
  %777 = vadd.xlane.f32.xlu0 %v768
  %v778 = vpop.xlane.xlu0 %777
  %779 = vadd.xlane.f32.xlu0 %v770
  %v780 = vpop.xlane.xlu0 %779
  %781 = vadd.xlane.f32.xlu0 %v773
  %v782 = vpop.xlane.xlu0 %781
  %783 = vadd.xlane.f32.xlu0 %v775
  %v784 = vpop.xlane.xlu0 %783
  %v785 = vmul.f32 %v778, 0.0078125
  %v786 = vmul.f32 %v780, 0.0078125
  %v787 = vmul.f32 %v782, 0.0078125
  %v788 = vmul.f32 %v784, 0.0078125
  %v789 = vsub.f32 %v768, %v785
  %v790 = vsub.f32 %v770, %v786
  %v791 = vsub.f32 %v773, %v787
  %v792 = vsub.f32 %v775, %v788
  %v793 = vmul.f32 %v789, %v789
  %v794 = vmul.f32 %v790, %v790
  %v795 = vmul.f32 %v791, %v791
  %v796 = vmul.f32 %v792, %v792
  %797 = vadd.xlane.f32.xlu0 %v793
  %v798 = vpop.xlane.xlu0 %797
  %799 = vadd.xlane.f32.xlu0 %v794
  %v800 = vpop.xlane.xlu0 %799
  %801 = vadd.xlane.f32.xlu0 %v795
  %v802 = vpop.xlane.xlu0 %801
  %803 = vadd.xlane.f32.xlu0 %v796
  %v804 = vpop.xlane.xlu0 %803
  %v805 = vmul.f32 %v798, 0.0078125
  %v806 = vmul.f32 %v800, 0.0078125
  %v807 = vmul.f32 %v802, 0.0078125
  %v808 = vmul.f32 %v804, 0.0078125
  %v809 = vadd.f32 %v805, 1e-05
  %v810 = vadd.f32 %v806, 1e-05
  %v811 = vadd.f32 %v807, 1e-05
  %v812 = vadd.f32 %v808, 1e-05
  %v813 = vrsqrt.pop %v809
  %v814 = vmul.f32 %v813, %v809
  %v815 = vmul.f32 %v814, %v813
  %v816 = vmul.f32 0.5, %v815
  %v817 = vsub.f32 1.5, %v816
  %v818 = vmul.f32 %v813, %v817
  %vm819 = vweird.f32 %v809
  %vm820 = vweird.f32 %v813
  %vm821 = vmor %vm819, %vm820
  %v822 = vsel %vm821, %v813, %v818
  %v823 = vrsqrt.pop %v810
  %v824 = vmul.f32 %v823, %v810
  %v825 = vmul.f32 %v824, %v823
  %v826 = vmul.f32 0.5, %v825
  %v827 = vsub.f32 1.5, %v826
  %v828 = vmul.f32 %v823, %v827
  %vm829 = vweird.f32 %v810
  %vm830 = vweird.f32 %v823
  %vm831 = vmor %vm829, %vm830
  %v832 = vsel %vm831, %v823, %v828
  %v833 = vrsqrt.pop %v811
  %v834 = vmul.f32 %v833, %v811
  %v835 = vmul.f32 %v834, %v833
  %v836 = vmul.f32 0.5, %v835
  %v837 = vsub.f32 1.5, %v836
  %v838 = vmul.f32 %v833, %v837
  %vm839 = vweird.f32 %v811
  %vm840 = vweird.f32 %v833
  %vm841 = vmor %vm839, %vm840
  %v842 = vsel %vm841, %v833, %v838
  %v843 = vrsqrt.pop %v812
  %v844 = vmul.f32 %v843, %v812
  %v845 = vmul.f32 %v844, %v843
  %v846 = vmul.f32 0.5, %v845
  %v847 = vsub.f32 1.5, %v846
  %v848 = vmul.f32 %v843, %v847
  %vm849 = vweird.f32 %v812
  %vm850 = vweird.f32 %v843
  %vm851 = vmor %vm849, %vm850
  %v852 = vsel %vm851, %v843, %v848
  %v853 = vld [vmem:[%s2] sm:$0xff]
  %v854 = vld [vmem:[%s2 + $0x8] sm:$0xff]
  %v855 = vld [vmem:[%s2 + $0x10] sm:$0xff]
  %v856 = vld [vmem:[%s2 + $0x18] sm:$0xff]
  %v857 = vmul.f32 %v822, %v853
  %v858 = vmul.f32 %v832, %v854
  %v859 = vmul.f32 %v842, %v855
  %v860 = vmul.f32 %v852, %v856
  %862 = vset.pattern.permute.xlu0 0
  %863 = vperm.xlu0 %862, %v857
  %v864 = vpop.permute.xlu0 %863
  %867 = vset.pattern.permute.xlu0 0
  %868 = vperm.xlu0 %867, %v858
  %v869 = vpop.permute.xlu0 %868
  %872 = vset.pattern.permute.xlu0 0
  %873 = vperm.xlu0 %872, %v859
  %v874 = vpop.permute.xlu0 %873
  %877 = vset.pattern.permute.xlu0 0
  %878 = vperm.xlu0 %877, %v860
  %v879 = vpop.permute.xlu0 %878
  %v881 = vmul.f32 %v789, %v864
  %v882 = vmul.f32 %v790, %v869
  %v883 = vmul.f32 %v791, %v874
  %v884 = vmul.f32 %v792, %v879
  %v885 = vld [vmem:[%s3] sm:$0xff]
  %v886 = vld [vmem:[%s3 + $0x8] sm:$0xff]
  %v887 = vld [vmem:[%s3 + $0x10] sm:$0xff]
  %v888 = vld [vmem:[%s3 + $0x18] sm:$0xff]
  %890 = vset.pattern.permute.xlu0 0
  %891 = vperm.xlu0 %890, %v885
  %v892 = vpop.permute.xlu0 %891
  %895 = vset.pattern.permute.xlu0 0
  %896 = vperm.xlu0 %895, %v886
  %v897 = vpop.permute.xlu0 %896
  %900 = vset.pattern.permute.xlu0 0
  %901 = vperm.xlu0 %900, %v887
  %v902 = vpop.permute.xlu0 %901
  %905 = vset.pattern.permute.xlu0 0
  %906 = vperm.xlu0 %905, %v888
  %v907 = vpop.permute.xlu0 %906
  %v909 = vadd.f32 %v881, %v892
  %v910 = vadd.f32 %v882, %v897
  %v911 = vadd.f32 %v883, %v902
  %v912 = vadd.f32 %v884, %v907
  %vm913 = vcmp.ge.f32.partialorder %v909, 0.0
  %vm914 = vcmp.ge.f32.partialorder %v910, 0.0
  %vm915 = vcmp.ge.f32.partialorder %v911, 0.0
  %vm916 = vcmp.ge.f32.partialorder %v912, 0.0
  %v917 = vmul.f32 %v909, 0.2
  %v918 = vmul.f32 %v910, 0.2
  %v919 = vmul.f32 %v911, 0.2
  %v920 = vmul.f32 %v912, 0.2
  %v921 = vsel %vm913, %v909, %v917
  %v922 = vsel %vm914, %v910, %v918
  %v923 = vsel %vm915, %v911, %v919
  %v924 = vsel %vm916, %v912, %v920
  %v925 = vpack.c.bf16 %v921, %v921
  %v926 = vpack.c.bf16 %v922, %v922
  %v927 = vpack.c.bf16 %v923, %v923
  %v928 = vpack.c.bf16 %v924, %v924
  %929 = vst [vmem:[%s4] sm:$0xf] %v925
  %930 = vst [vmem:[%s4 + $0x4] sm:$0xf] %v926
  %931 = vst [vmem:[%s4 + $0x8] sm:$0xf] %v927
  %932 = vst [vmem:[%s4 + $0xc] sm:$0xf] %v928
  // Predicated region
  $region18: #{generator_forward.6} parent=0 // pred_check
    _
  $region19: #{generator_forward.6} parent=0 // pred_check_branch
    %934 = sbr.rel (0) target = $region21
  $region20: #{generator_forward.6} parent=0 // pred_region
    _
  $region21: #{generator_forward.6} parent=0 // pred_fallthru
    _
  // Predicated region
  $region22: #{generator_forward.6} parent=0 // pred_check
    _
  $region23: #{generator_forward.6} parent=0 // pred_check_branch
    %936 = sbr.rel (0) target = $region25
  $region24: #{generator_forward.6} parent=0 // pred_region
    _
  $region25: #{generator_forward.6} parent=0 // pred_fallthru
    _

// kernel: generator_forward.7
$region0: #{generator_forward.7}
  #allocation0 [shape = 'u32[]', space=smem, size = 0x4, offset = 0x4, fixed_abs, tag = 'smem constant byte address 0x4 - core index']
  #allocation1 [shape = 'u32[72,128]{1,0:T(1,128)}', space=vmem, size = 0x9000, scoped, tag = 'internal scratch']
  %s0 = inlined_call_operand.vmem [shape: bf16[16,512], index: 0, kind: input, shape index: {}]
  %s1 = inlined_call_operand.vmem [shape: bf16[512,512], index: 1, kind: input, shape index: {}]
  %s2 = inlined_call_operand.vmem [shape: f32[16,1], index: 2, kind: input, shape index: {}]
  %s3 = inlined_call_operand.vmem [shape: f32[16,1], index: 3, kind: input, shape index: {}]
  %s4 = inlined_call_operand.vmem [shape: bf16[16,512], index: 4, kind: output, shape index: {}]
  %s5 = sld [smem:[#allocation0]]
  $region26: #{generator_forward.7} parent=0
    _
  %s7 = ssub.s32 1, %s5
  %s8 = scalar_select 0, %s7, %s5
  // Predicated region
  $region2: #{generator_forward.7} parent=0 // pred_check
    _
  $region3: #{generator_forward.7} parent=0 // pred_check_branch
    %10 = sbr.rel (0) target = $region5
  $region4: #{generator_forward.7} parent=0 // pred_region
    _
  $region5: #{generator_forward.7} parent=0 // pred_fallthru
    _
  // Predicated region
  $region6: #{generator_forward.7} parent=0 // pred_check
    _
  $region7: #{generator_forward.7} parent=0 // pred_check_branch
    %12 = sbr.rel (0) target = $region9
  $region8: #{generator_forward.7} parent=0 // pred_region
    _
  $region9: #{generator_forward.7} parent=0 // pred_fallthru
    _
  // Predicated region
  $region10: #{generator_forward.7} parent=0 // pred_check
    _
  $region11: #{generator_forward.7} parent=0 // pred_check_branch
    %14 = sbr.rel (0) target = $region13
  $region12: #{generator_forward.7} parent=0 // pred_region
    _
  $region13: #{generator_forward.7} parent=0 // pred_fallthru
    _
  // Predicated region
  $region14: #{generator_forward.7} parent=0 // pred_check
    _
  $region15: #{generator_forward.7} parent=0 // pred_check_branch
    %16 = sbr.rel (0) target = $region17
  $region16: #{generator_forward.7} parent=0 // pred_region
    _
  $region17: #{generator_forward.7} parent=0 // pred_fallthru
    _
  %v17 = vld [vmem:[%s0] sm:$0xff]
  %v18 = vld [vmem:[%s0 + $0x8] sm:$0xff]
  %v19 = vld [vmem:[%s0 + $0x10] sm:$0xff]
  %v20 = vld [vmem:[%s0 + $0x18] sm:$0xff]
  %v21 = vld [vmem:[%s1] sm:$0xff]
  %v22 = vld [vmem:[%s1 + $0x8] sm:$0xff]
  %v23 = vld [vmem:[%s1 + $0x10] sm:$0xff]
  %v24 = vld [vmem:[%s1 + $0x18] sm:$0xff]
  %v25 = vld [vmem:[%s1 + $0x20] sm:$0xff]
  %v26 = vld [vmem:[%s1 + $0x28] sm:$0xff]
  %v27 = vld [vmem:[%s1 + $0x30] sm:$0xff]
  %v28 = vld [vmem:[%s1 + $0x38] sm:$0xff]
  %v29 = vld [vmem:[%s1 + $0x40] sm:$0xff]
  %v30 = vld [vmem:[%s1 + $0x48] sm:$0xff]
  %v31 = vld [vmem:[%s1 + $0x50] sm:$0xff]
  %v32 = vld [vmem:[%s1 + $0x58] sm:$0xff]
  %v33 = vld [vmem:[%s1 + $0x60] sm:$0xff]
  %v34 = vld [vmem:[%s1 + $0x68] sm:$0xff]
  %v35 = vld [vmem:[%s1 + $0x70] sm:$0xff]
  %v36 = vld [vmem:[%s1 + $0x78] sm:$0xff]
  %v37 = vld [vmem:[%s1 + $0x80] sm:$0xff]
  %v38 = vld [vmem:[%s1 + $0x88] sm:$0xff]
  %v39 = vld [vmem:[%s1 + $0x90] sm:$0xff]
  %v40 = vld [vmem:[%s1 + $0x98] sm:$0xff]
  %v41 = vld [vmem:[%s1 + $0xa0] sm:$0xff]
  %v42 = vld [vmem:[%s1 + $0xa8] sm:$0xff]
  %v43 = vld [vmem:[%s1 + $0xb0] sm:$0xff]
  %v44 = vld [vmem:[%s1 + $0xb8] sm:$0xff]
  %v45 = vld [vmem:[%s1 + $0xc0] sm:$0xff]
  %v46 = vld [vmem:[%s1 + $0xc8] sm:$0xff]
  %v47 = vld [vmem:[%s1 + $0xd0] sm:$0xff]
  %v48 = vld [vmem:[%s1 + $0xd8] sm:$0xff]
  %v49 = vld [vmem:[%s1 + $0xe0] sm:$0xff]
  %v50 = vld [vmem:[%s1 + $0xe8] sm:$0xff]
  %v51 = vld [vmem:[%s1 + $0xf0] sm:$0xff]
  %v52 = vld [vmem:[%s1 + $0xf8] sm:$0xff]
  %v53 = vld [vmem:[%s1 + $0x100] sm:$0xff]
  %v54 = vld [vmem:[%s1 + $0x108] sm:$0xff]
  %v55 = vld [vmem:[%s1 + $0x110] sm:$0xff]
  %v56 = vld [vmem:[%s1 + $0x118] sm:$0xff]
  %v57 = vld [vmem:[%s1 + $0x120] sm:$0xff]
  %v58 = vld [vmem:[%s1 + $0x128] sm:$0xff]
  %v59 = vld [vmem:[%s1 + $0x130] sm:$0xff]
  %v60 = vld [vmem:[%s1 + $0x138] sm:$0xff]
  %v61 = vld [vmem:[%s1 + $0x140] sm:$0xff]
  %v62 = vld [vmem:[%s1 + $0x148] sm:$0xff]
  %v63 = vld [vmem:[%s1 + $0x150] sm:$0xff]
  %v64 = vld [vmem:[%s1 + $0x158] sm:$0xff]
  %v65 = vld [vmem:[%s1 + $0x160] sm:$0xff]
  %v66 = vld [vmem:[%s1 + $0x168] sm:$0xff]
  %v67 = vld [vmem:[%s1 + $0x170] sm:$0xff]
  %v68 = vld [vmem:[%s1 + $0x178] sm:$0xff]
  %v69 = vld [vmem:[%s1 + $0x180] sm:$0xff]
  %v70 = vld [vmem:[%s1 + $0x188] sm:$0xff]
  %v71 = vld [vmem:[%s1 + $0x190] sm:$0xff]
  %v72 = vld [vmem:[%s1 + $0x198] sm:$0xff]
  %v73 = vld [vmem:[%s1 + $0x1a0] sm:$0xff]
  %v74 = vld [vmem:[%s1 + $0x1a8] sm:$0xff]
  %v75 = vld [vmem:[%s1 + $0x1b0] sm:$0xff]
  %v76 = vld [vmem:[%s1 + $0x1b8] sm:$0xff]
  %v77 = vld [vmem:[%s1 + $0x1c0] sm:$0xff]
  %v78 = vld [vmem:[%s1 + $0x1c8] sm:$0xff]
  %v79 = vld [vmem:[%s1 + $0x1d0] sm:$0xff]
  %v80 = vld [vmem:[%s1 + $0x1d8] sm:$0xff]
  %v81 = vld [vmem:[%s1 + $0x1e0] sm:$0xff]
  %v82 = vld [vmem:[%s1 + $0x1e8] sm:$0xff]
  %v83 = vld [vmem:[%s1 + $0x1f0] sm:$0xff]
  %v84 = vld [vmem:[%s1 + $0x1f8] sm:$0xff]
  %v85 = vld [vmem:[%s1 + $0x200] sm:$0xff]
  %v86 = vld [vmem:[%s1 + $0x208] sm:$0xff]
  %v87 = vld [vmem:[%s1 + $0x210] sm:$0xff]
  %v88 = vld [vmem:[%s1 + $0x218] sm:$0xff]
  %v89 = vld [vmem:[%s1 + $0x220] sm:$0xff]
  %v90 = vld [vmem:[%s1 + $0x228] sm:$0xff]
  %v91 = vld [vmem:[%s1 + $0x230] sm:$0xff]
  %v92 = vld [vmem:[%s1 + $0x238] sm:$0xff]
  %v93 = vld [vmem:[%s1 + $0x240] sm:$0xff]
  %v94 = vld [vmem:[%s1 + $0x248] sm:$0xff]
  %v95 = vld [vmem:[%s1 + $0x250] sm:$0xff]
  %v96 = vld [vmem:[%s1 + $0x258] sm:$0xff]
  %v97 = vld [vmem:[%s1 + $0x260] sm:$0xff]
  %v98 = vld [vmem:[%s1 + $0x268] sm:$0xff]
  %v99 = vld [vmem:[%s1 + $0x270] sm:$0xff]
  %v100 = vld [vmem:[%s1 + $0x278] sm:$0xff]
  %v101 = vld [vmem:[%s1 + $0x280] sm:$0xff]
  %v102 = vld [vmem:[%s1 + $0x288] sm:$0xff]
  %v103 = vld [vmem:[%s1 + $0x290] sm:$0xff]
  %v104 = vld [vmem:[%s1 + $0x298] sm:$0xff]
  %v105 = vld [vmem:[%s1 + $0x2a0] sm:$0xff]
  %v106 = vld [vmem:[%s1 + $0x2a8] sm:$0xff]
  %v107 = vld [vmem:[%s1 + $0x2b0] sm:$0xff]
  %v108 = vld [vmem:[%s1 + $0x2b8] sm:$0xff]
  %v109 = vld [vmem:[%s1 + $0x2c0] sm:$0xff]
  %v110 = vld [vmem:[%s1 + $0x2c8] sm:$0xff]
  %v111 = vld [vmem:[%s1 + $0x2d0] sm:$0xff]
  %v112 = vld [vmem:[%s1 + $0x2d8] sm:$0xff]
  %v113 = vld [vmem:[%s1 + $0x2e0] sm:$0xff]
  %v114 = vld [vmem:[%s1 + $0x2e8] sm:$0xff]
  %v115 = vld [vmem:[%s1 + $0x2f0] sm:$0xff]
  %v116 = vld [vmem:[%s1 + $0x2f8] sm:$0xff]
  %v117 = vld [vmem:[%s1 + $0x300] sm:$0xff]
  %v118 = vld [vmem:[%s1 + $0x308] sm:$0xff]
  %v119 = vld [vmem:[%s1 + $0x310] sm:$0xff]
  %v120 = vld [vmem:[%s1 + $0x318] sm:$0xff]
  %v121 = vld [vmem:[%s1 + $0x320] sm:$0xff]
  %v122 = vld [vmem:[%s1 + $0x328] sm:$0xff]
  %v123 = vld [vmem:[%s1 + $0x330] sm:$0xff]
  %v124 = vld [vmem:[%s1 + $0x338] sm:$0xff]
  %v125 = vld [vmem:[%s1 + $0x340] sm:$0xff]
  %v126 = vld [vmem:[%s1 + $0x348] sm:$0xff]
  %v127 = vld [vmem:[%s1 + $0x350] sm:$0xff]
  %v128 = vld [vmem:[%s1 + $0x358] sm:$0xff]
  %v129 = vld [vmem:[%s1 + $0x360] sm:$0xff]
  %v130 = vld [vmem:[%s1 + $0x368] sm:$0xff]
  %v131 = vld [vmem:[%s1 + $0x370] sm:$0xff]
  %v132 = vld [vmem:[%s1 + $0x378] sm:$0xff]
  %v133 = vld [vmem:[%s1 + $0x380] sm:$0xff]
  %v134 = vld [vmem:[%s1 + $0x388] sm:$0xff]
  %v135 = vld [vmem:[%s1 + $0x390] sm:$0xff]
  %v136 = vld [vmem:[%s1 + $0x398] sm:$0xff]
  %v137 = vld [vmem:[%s1 + $0x3a0] sm:$0xff]
  %v138 = vld [vmem:[%s1 + $0x3a8] sm:$0xff]
  %v139 = vld [vmem:[%s1 + $0x3b0] sm:$0xff]
  %v140 = vld [vmem:[%s1 + $0x3b8] sm:$0xff]
  %v141 = vld [vmem:[%s1 + $0x3c0] sm:$0xff]
  %v142 = vld [vmem:[%s1 + $0x3c8] sm:$0xff]
  %v143 = vld [vmem:[%s1 + $0x3d0] sm:$0xff]
  %v144 = vld [vmem:[%s1 + $0x3d8] sm:$0xff]
  %v145 = vld [vmem:[%s1 + $0x3e0] sm:$0xff]
  %v146 = vld [vmem:[%s1 + $0x3e8] sm:$0xff]
  %v147 = vld [vmem:[%s1 + $0x3f0] sm:$0xff]
  %v148 = vld [vmem:[%s1 + $0x3f8] sm:$0xff]
  %v153 = vunpack.c.l.b16 %v17
  %v154 = vunpack.c.h.b16 %v17
  %v155 = vunpack.c.l.b16 %v18
  %v156 = vunpack.c.h.b16 %v18
  %v157 = vunpack.c.l.b16 %v19
  %v158 = vunpack.c.h.b16 %v19
  %v159 = vunpack.c.l.b16 %v20
  %v160 = vunpack.c.h.b16 %v20
  %v161 = vpack.c.b16 %v157, %v153
  %v162 = vpack.c.b16 %v158, %v154
  %v163 = vpack.c.b16 %v159, %v155
  %v164 = vpack.c.b16 %v160, %v156
  %v297 = vunpack.c.l.b16 %v21
  %v298 = vunpack.c.h.b16 %v21
  %v299 = vunpack.c.l.b16 %v22
  %v300 = vunpack.c.h.b16 %v22
  %v301 = vunpack.c.l.b16 %v23
  %v302 = vunpack.c.h.b16 %v23
  %v303 = vunpack.c.l.b16 %v24
  %v304 = vunpack.c.h.b16 %v24
  %v305 = vunpack.c.l.b16 %v25
  %v306 = vunpack.c.h.b16 %v25
  %v307 = vunpack.c.l.b16 %v26
  %v308 = vunpack.c.h.b16 %v26
  %v309 = vunpack.c.l.b16 %v27
  %v310 = vunpack.c.h.b16 %v27
  %v311 = vunpack.c.l.b16 %v28
  %v312 = vunpack.c.h.b16 %v28
  %v313 = vunpack.c.l.b16 %v29
  %v314 = vunpack.c.h.b16 %v29
  %v315 = vunpack.c.l.b16 %v30
  %v316 = vunpack.c.h.b16 %v30
  %v317 = vunpack.c.l.b16 %v31
  %v318 = vunpack.c.h.b16 %v31
  %v319 = vunpack.c.l.b16 %v32
  %v320 = vunpack.c.h.b16 %v32
  %v321 = vunpack.c.l.b16 %v33
  %v322 = vunpack.c.h.b16 %v33
  %v323 = vunpack.c.l.b16 %v34
  %v324 = vunpack.c.h.b16 %v34
  %v325 = vunpack.c.l.b16 %v35
  %v326 = vunpack.c.h.b16 %v35
  %v327 = vunpack.c.l.b16 %v36
  %v328 = vunpack.c.h.b16 %v36
  %v329 = vunpack.c.l.b16 %v37
  %v330 = vunpack.c.h.b16 %v37
  %v331 = vunpack.c.l.b16 %v38
  %v332 = vunpack.c.h.b16 %v38
  %v333 = vunpack.c.l.b16 %v39
  %v334 = vunpack.c.h.b16 %v39
  %v335 = vunpack.c.l.b16 %v40
  %v336 = vunpack.c.h.b16 %v40
  %v337 = vunpack.c.l.b16 %v41
  %v338 = vunpack.c.h.b16 %v41
  %v339 = vunpack.c.l.b16 %v42
  %v340 = vunpack.c.h.b16 %v42
  %v341 = vunpack.c.l.b16 %v43
  %v342 = vunpack.c.h.b16 %v43
  %v343 = vunpack.c.l.b16 %v44
  %v344 = vunpack.c.h.b16 %v44
  %v345 = vunpack.c.l.b16 %v45
  %v346 = vunpack.c.h.b16 %v45
  %v347 = vunpack.c.l.b16 %v46
  %v348 = vunpack.c.h.b16 %v46
  %v349 = vunpack.c.l.b16 %v47
  %v350 = vunpack.c.h.b16 %v47
  %v351 = vunpack.c.l.b16 %v48
  %v352 = vunpack.c.h.b16 %v48
  %v353 = vunpack.c.l.b16 %v49
  %v354 = vunpack.c.h.b16 %v49
  %v355 = vunpack.c.l.b16 %v50
  %v356 = vunpack.c.h.b16 %v50
  %v357 = vunpack.c.l.b16 %v51
  %v358 = vunpack.c.h.b16 %v51
  %v359 = vunpack.c.l.b16 %v52
  %v360 = vunpack.c.h.b16 %v52
  %v361 = vunpack.c.l.b16 %v53
  %v362 = vunpack.c.h.b16 %v53
  %v363 = vunpack.c.l.b16 %v54
  %v364 = vunpack.c.h.b16 %v54
  %v365 = vunpack.c.l.b16 %v55
  %v366 = vunpack.c.h.b16 %v55
  %v367 = vunpack.c.l.b16 %v56
  %v368 = vunpack.c.h.b16 %v56
  %v369 = vunpack.c.l.b16 %v57
  %v370 = vunpack.c.h.b16 %v57
  %v371 = vunpack.c.l.b16 %v58
  %v372 = vunpack.c.h.b16 %v58
  %v373 = vunpack.c.l.b16 %v59
  %v374 = vunpack.c.h.b16 %v59
  %v375 = vunpack.c.l.b16 %v60
  %v376 = vunpack.c.h.b16 %v60
  %v377 = vunpack.c.l.b16 %v61
  %v378 = vunpack.c.h.b16 %v61
  %v379 = vunpack.c.l.b16 %v62
  %v380 = vunpack.c.h.b16 %v62
  %v381 = vunpack.c.l.b16 %v63
  %v382 = vunpack.c.h.b16 %v63
  %v383 = vunpack.c.l.b16 %v64
  %v384 = vunpack.c.h.b16 %v64
  %v385 = vunpack.c.l.b16 %v65
  %v386 = vunpack.c.h.b16 %v65
  %v387 = vunpack.c.l.b16 %v66
  %v388 = vunpack.c.h.b16 %v66
  %v389 = vunpack.c.l.b16 %v67
  %v390 = vunpack.c.h.b16 %v67
  %v391 = vunpack.c.l.b16 %v68
  %v392 = vunpack.c.h.b16 %v68
  %v393 = vunpack.c.l.b16 %v69
  %v394 = vunpack.c.h.b16 %v69
  %v395 = vunpack.c.l.b16 %v70
  %v396 = vunpack.c.h.b16 %v70
  %v397 = vunpack.c.l.b16 %v71
  %v398 = vunpack.c.h.b16 %v71
  %v399 = vunpack.c.l.b16 %v72
  %v400 = vunpack.c.h.b16 %v72
  %v401 = vunpack.c.l.b16 %v73
  %v402 = vunpack.c.h.b16 %v73
  %v403 = vunpack.c.l.b16 %v74
  %v404 = vunpack.c.h.b16 %v74
  %v405 = vunpack.c.l.b16 %v75
  %v406 = vunpack.c.h.b16 %v75
  %v407 = vunpack.c.l.b16 %v76
  %v408 = vunpack.c.h.b16 %v76
  %v409 = vunpack.c.l.b16 %v77
  %v410 = vunpack.c.h.b16 %v77
  %v411 = vunpack.c.l.b16 %v78
  %v412 = vunpack.c.h.b16 %v78
  %v413 = vunpack.c.l.b16 %v79
  %v414 = vunpack.c.h.b16 %v79
  %v415 = vunpack.c.l.b16 %v80
  %v416 = vunpack.c.h.b16 %v80
  %v417 = vunpack.c.l.b16 %v81
  %v418 = vunpack.c.h.b16 %v81
  %v419 = vunpack.c.l.b16 %v82
  %v420 = vunpack.c.h.b16 %v82
  %v421 = vunpack.c.l.b16 %v83
  %v422 = vunpack.c.h.b16 %v83
  %v423 = vunpack.c.l.b16 %v84
  %v424 = vunpack.c.h.b16 %v84
  %v425 = vunpack.c.l.b16 %v85
  %v426 = vunpack.c.h.b16 %v85
  %v427 = vunpack.c.l.b16 %v86
  %v428 = vunpack.c.h.b16 %v86
  %v429 = vunpack.c.l.b16 %v87
  %v430 = vunpack.c.h.b16 %v87
  %v431 = vunpack.c.l.b16 %v88
  %v432 = vunpack.c.h.b16 %v88
  %v433 = vunpack.c.l.b16 %v89
  %v434 = vunpack.c.h.b16 %v89
  %v435 = vunpack.c.l.b16 %v90
  %v436 = vunpack.c.h.b16 %v90
  %v437 = vunpack.c.l.b16 %v91
  %v438 = vunpack.c.h.b16 %v91
  %v439 = vunpack.c.l.b16 %v92
  %v440 = vunpack.c.h.b16 %v92
  %v441 = vunpack.c.l.b16 %v93
  %v442 = vunpack.c.h.b16 %v93
  %v443 = vunpack.c.l.b16 %v94
  %v444 = vunpack.c.h.b16 %v94
  %v445 = vunpack.c.l.b16 %v95
  %v446 = vunpack.c.h.b16 %v95
  %v447 = vunpack.c.l.b16 %v96
  %v448 = vunpack.c.h.b16 %v96
  %v449 = vunpack.c.l.b16 %v97
  %v450 = vunpack.c.h.b16 %v97
  %v451 = vunpack.c.l.b16 %v98
  %v452 = vunpack.c.h.b16 %v98
  %v453 = vunpack.c.l.b16 %v99
  %v454 = vunpack.c.h.b16 %v99
  %v455 = vunpack.c.l.b16 %v100
  %v456 = vunpack.c.h.b16 %v100
  %v457 = vunpack.c.l.b16 %v101
  %v458 = vunpack.c.h.b16 %v101
  %v459 = vunpack.c.l.b16 %v102
  %v460 = vunpack.c.h.b16 %v102
  %v461 = vunpack.c.l.b16 %v103
  %v462 = vunpack.c.h.b16 %v103
  %v463 = vunpack.c.l.b16 %v104
  %v464 = vunpack.c.h.b16 %v104
  %v465 = vunpack.c.l.b16 %v105
  %v466 = vunpack.c.h.b16 %v105
  %v467 = vunpack.c.l.b16 %v106
  %v468 = vunpack.c.h.b16 %v106
  %v469 = vunpack.c.l.b16 %v107
  %v470 = vunpack.c.h.b16 %v107
  %v471 = vunpack.c.l.b16 %v108
  %v472 = vunpack.c.h.b16 %v108
  %v473 = vunpack.c.l.b16 %v109
  %v474 = vunpack.c.h.b16 %v109
  %v475 = vunpack.c.l.b16 %v110
  %v476 = vunpack.c.h.b16 %v110
  %v477 = vunpack.c.l.b16 %v111
  %v478 = vunpack.c.h.b16 %v111
  %v479 = vunpack.c.l.b16 %v112
  %v480 = vunpack.c.h.b16 %v112
  %v481 = vunpack.c.l.b16 %v113
  %v482 = vunpack.c.h.b16 %v113
  %v483 = vunpack.c.l.b16 %v114
  %v484 = vunpack.c.h.b16 %v114
  %v485 = vunpack.c.l.b16 %v115
  %v486 = vunpack.c.h.b16 %v115
  %v487 = vunpack.c.l.b16 %v116
  %v488 = vunpack.c.h.b16 %v116
  %v489 = vunpack.c.l.b16 %v117
  %v490 = vunpack.c.h.b16 %v117
  %v491 = vunpack.c.l.b16 %v118
  %v492 = vunpack.c.h.b16 %v118
  %v493 = vunpack.c.l.b16 %v119
  %v494 = vunpack.c.h.b16 %v119
  %v495 = vunpack.c.l.b16 %v120
  %v496 = vunpack.c.h.b16 %v120
  %v497 = vunpack.c.l.b16 %v121
  %v498 = vunpack.c.h.b16 %v121
  %v499 = vunpack.c.l.b16 %v122
  %v500 = vunpack.c.h.b16 %v122
  %v501 = vunpack.c.l.b16 %v123
  %v502 = vunpack.c.h.b16 %v123
  %v503 = vunpack.c.l.b16 %v124
  %v504 = vunpack.c.h.b16 %v124
  %v505 = vunpack.c.l.b16 %v125
  %v506 = vunpack.c.h.b16 %v125
  %v507 = vunpack.c.l.b16 %v126
  %v508 = vunpack.c.h.b16 %v126
  %v509 = vunpack.c.l.b16 %v127
  %v510 = vunpack.c.h.b16 %v127
  %v511 = vunpack.c.l.b16 %v128
  %v512 = vunpack.c.h.b16 %v128
  %v513 = vunpack.c.l.b16 %v129
  %v514 = vunpack.c.h.b16 %v129
  %v515 = vunpack.c.l.b16 %v130
  %v516 = vunpack.c.h.b16 %v130
  %v517 = vunpack.c.l.b16 %v131
  %v518 = vunpack.c.h.b16 %v131
  %v519 = vunpack.c.l.b16 %v132
  %v520 = vunpack.c.h.b16 %v132
  %v521 = vunpack.c.l.b16 %v133
  %v522 = vunpack.c.h.b16 %v133
  %v523 = vunpack.c.l.b16 %v134
  %v524 = vunpack.c.h.b16 %v134
  %v525 = vunpack.c.l.b16 %v135
  %v526 = vunpack.c.h.b16 %v135
  %v527 = vunpack.c.l.b16 %v136
  %v528 = vunpack.c.h.b16 %v136
  %v529 = vunpack.c.l.b16 %v137
  %v530 = vunpack.c.h.b16 %v137
  %v531 = vunpack.c.l.b16 %v138
  %v532 = vunpack.c.h.b16 %v138
  %v533 = vunpack.c.l.b16 %v139
  %v534 = vunpack.c.h.b16 %v139
  %v535 = vunpack.c.l.b16 %v140
  %v536 = vunpack.c.h.b16 %v140
  %v537 = vunpack.c.l.b16 %v141
  %v538 = vunpack.c.h.b16 %v141
  %v539 = vunpack.c.l.b16 %v142
  %v540 = vunpack.c.h.b16 %v142
  %v541 = vunpack.c.l.b16 %v143
  %v542 = vunpack.c.h.b16 %v143
  %v543 = vunpack.c.l.b16 %v144
  %v544 = vunpack.c.h.b16 %v144
  %v545 = vunpack.c.l.b16 %v145
  %v546 = vunpack.c.h.b16 %v145
  %v547 = vunpack.c.l.b16 %v146
  %v548 = vunpack.c.h.b16 %v146
  %v549 = vunpack.c.l.b16 %v147
  %v550 = vunpack.c.h.b16 %v147
  %v551 = vunpack.c.l.b16 %v148
  %v552 = vunpack.c.h.b16 %v148
  %v553 = vpack.c.b16 %v301, %v297
  %v554 = vpack.c.b16 %v302, %v298
  %v555 = vpack.c.b16 %v303, %v299
  %v556 = vpack.c.b16 %v304, %v300
  %v557 = vpack.c.b16 %v309, %v305
  %v558 = vpack.c.b16 %v310, %v306
  %v559 = vpack.c.b16 %v311, %v307
  %v560 = vpack.c.b16 %v312, %v308
  %v561 = vpack.c.b16 %v317, %v313
  %v562 = vpack.c.b16 %v318, %v314
  %v563 = vpack.c.b16 %v319, %v315
  %v564 = vpack.c.b16 %v320, %v316
  %v565 = vpack.c.b16 %v325, %v321
  %v566 = vpack.c.b16 %v326, %v322
  %v567 = vpack.c.b16 %v327, %v323
  %v568 = vpack.c.b16 %v328, %v324
  %v569 = vpack.c.b16 %v333, %v329
  %v570 = vpack.c.b16 %v334, %v330
  %v571 = vpack.c.b16 %v335, %v331
  %v572 = vpack.c.b16 %v336, %v332
  %v573 = vpack.c.b16 %v341, %v337
  %v574 = vpack.c.b16 %v342, %v338
  %v575 = vpack.c.b16 %v343, %v339
  %v576 = vpack.c.b16 %v344, %v340
  %v577 = vpack.c.b16 %v349, %v345
  %v578 = vpack.c.b16 %v350, %v346
  %v579 = vpack.c.b16 %v351, %v347
  %v580 = vpack.c.b16 %v352, %v348
  %v581 = vpack.c.b16 %v357, %v353
  %v582 = vpack.c.b16 %v358, %v354
  %v583 = vpack.c.b16 %v359, %v355
  %v584 = vpack.c.b16 %v360, %v356
  %v585 = vpack.c.b16 %v365, %v361
  %v586 = vpack.c.b16 %v366, %v362
  %v587 = vpack.c.b16 %v367, %v363
  %v588 = vpack.c.b16 %v368, %v364
  %v589 = vpack.c.b16 %v373, %v369
  %v590 = vpack.c.b16 %v374, %v370
  %v591 = vpack.c.b16 %v375, %v371
  %v592 = vpack.c.b16 %v376, %v372
  %v593 = vpack.c.b16 %v381, %v377
  %v594 = vpack.c.b16 %v382, %v378
  %v595 = vpack.c.b16 %v383, %v379
  %v596 = vpack.c.b16 %v384, %v380
  %v597 = vpack.c.b16 %v389, %v385
  %v598 = vpack.c.b16 %v390, %v386
  %v599 = vpack.c.b16 %v391, %v387
  %v600 = vpack.c.b16 %v392, %v388
  %v601 = vpack.c.b16 %v397, %v393
  %v602 = vpack.c.b16 %v398, %v394
  %v603 = vpack.c.b16 %v399, %v395
  %v604 = vpack.c.b16 %v400, %v396
  %v605 = vpack.c.b16 %v405, %v401
  %v606 = vpack.c.b16 %v406, %v402
  %v607 = vpack.c.b16 %v407, %v403
  %v608 = vpack.c.b16 %v408, %v404
  %v609 = vpack.c.b16 %v413, %v409
  %v610 = vpack.c.b16 %v414, %v410
  %v611 = vpack.c.b16 %v415, %v411
  %v612 = vpack.c.b16 %v416, %v412
  %v613 = vpack.c.b16 %v421, %v417
  %v614 = vpack.c.b16 %v422, %v418
  %v615 = vpack.c.b16 %v423, %v419
  %v616 = vpack.c.b16 %v424, %v420
  %v617 = vpack.c.b16 %v429, %v425
  %v618 = vpack.c.b16 %v430, %v426
  %v619 = vpack.c.b16 %v431, %v427
  %v620 = vpack.c.b16 %v432, %v428
  %v621 = vpack.c.b16 %v437, %v433
  %v622 = vpack.c.b16 %v438, %v434
  %v623 = vpack.c.b16 %v439, %v435
  %v624 = vpack.c.b16 %v440, %v436
  %v625 = vpack.c.b16 %v445, %v441
  %v626 = vpack.c.b16 %v446, %v442
  %v627 = vpack.c.b16 %v447, %v443
  %v628 = vpack.c.b16 %v448, %v444
  %v629 = vpack.c.b16 %v453, %v449
  %v630 = vpack.c.b16 %v454, %v450
  %v631 = vpack.c.b16 %v455, %v451
  %v632 = vpack.c.b16 %v456, %v452
  %v633 = vpack.c.b16 %v461, %v457
  %v634 = vpack.c.b16 %v462, %v458
  %v635 = vpack.c.b16 %v463, %v459
  %v636 = vpack.c.b16 %v464, %v460
  %v637 = vpack.c.b16 %v469, %v465
  %v638 = vpack.c.b16 %v470, %v466
  %v639 = vpack.c.b16 %v471, %v467
  %v640 = vpack.c.b16 %v472, %v468
  %v641 = vpack.c.b16 %v477, %v473
  %v642 = vpack.c.b16 %v478, %v474
  %v643 = vpack.c.b16 %v479, %v475
  %v644 = vpack.c.b16 %v480, %v476
  %v645 = vpack.c.b16 %v485, %v481
  %v646 = vpack.c.b16 %v486, %v482
  %v647 = vpack.c.b16 %v487, %v483
  %v648 = vpack.c.b16 %v488, %v484
  %v649 = vpack.c.b16 %v493, %v489
  %v650 = vpack.c.b16 %v494, %v490
  %v651 = vpack.c.b16 %v495, %v491
  %v652 = vpack.c.b16 %v496, %v492
  %v653 = vpack.c.b16 %v501, %v497
  %v654 = vpack.c.b16 %v502, %v498
  %v655 = vpack.c.b16 %v503, %v499
  %v656 = vpack.c.b16 %v504, %v500
  %v657 = vpack.c.b16 %v509, %v505
  %v658 = vpack.c.b16 %v510, %v506
  %v659 = vpack.c.b16 %v511, %v507
  %v660 = vpack.c.b16 %v512, %v508
  %v661 = vpack.c.b16 %v517, %v513
  %v662 = vpack.c.b16 %v518, %v514
  %v663 = vpack.c.b16 %v519, %v515
  %v664 = vpack.c.b16 %v520, %v516
  %v665 = vpack.c.b16 %v525, %v521
  %v666 = vpack.c.b16 %v526, %v522
  %v667 = vpack.c.b16 %v527, %v523
  %v668 = vpack.c.b16 %v528, %v524
  %v669 = vpack.c.b16 %v533, %v529
  %v670 = vpack.c.b16 %v534, %v530
  %v671 = vpack.c.b16 %v535, %v531
  %v672 = vpack.c.b16 %v536, %v532
  %v673 = vpack.c.b16 %v541, %v537
  %v674 = vpack.c.b16 %v542, %v538
  %v675 = vpack.c.b16 %v543, %v539
  %v676 = vpack.c.b16 %v544, %v540
  %v677 = vpack.c.b16 %v549, %v545
  %v678 = vpack.c.b16 %v550, %v546
  %v679 = vpack.c.b16 %v551, %v547
  %v680 = vpack.c.b16 %v552, %v548
  %809 = vmatpush.bf16.msra.mxu0 %v581
  %810 = vmatpush.bf16.msra.mxu0 %v577
  %811 = vmatpush.bf16.msra.mxu0 %v573
  %812 = vmatpush.bf16.msra.mxu0 %v569
  %813 = vmatpush.bf16.msra.mxu0 %v565
  %814 = vmatpush.bf16.msra.mxu0 %v561
  %815 = vmatpush.bf16.msra.mxu0 %v557
  %816 = vmatpush.bf16.msra.mxu0 %v553
  %817 = vmatmul.bf16.gmra.mxu0 %v161
  %v818 = vpop.f32.mrf.mxu0
  %v819 = vadd.f32 0.0, %v818
  %v820 = vpop.f32.mrf.mxu0
  %v821 = vadd.f32 0.0, %v820
  %822 = vdwg.mxu0
  %823 = vmatpush.bf16.msra.mxu0 %v613
  %824 = vmatpush.bf16.msra.mxu0 %v609
  %825 = vmatpush.bf16.msra.mxu0 %v605
  %826 = vmatpush.bf16.msra.mxu0 %v601
  %827 = vmatpush.bf16.msra.mxu0 %v597
  %828 = vmatpush.bf16.msra.mxu0 %v593
  %829 = vmatpush.bf16.msra.mxu0 %v589
  %830 = vmatpush.bf16.msra.mxu0 %v585
  %831 = vmatmul.bf16.gmra.mxu0 %v162
  %v832 = vpop.f32.mrf.mxu0
  %v833 = vadd.f32 %v819, %v832
  %v834 = vpop.f32.mrf.mxu0
  %v835 = vadd.f32 %v821, %v834
  %836 = vdwg.mxu0
  %837 = vmatpush.bf16.msra.mxu0 %v645
  %838 = vmatpush.bf16.msra.mxu0 %v641
  %839 = vmatpush.bf16.msra.mxu0 %v637
  %840 = vmatpush.bf16.msra.mxu0 %v633
  %841 = vmatpush.bf16.msra.mxu0 %v629
  %842 = vmatpush.bf16.msra.mxu0 %v625
  %843 = vmatpush.bf16.msra.mxu0 %v621
  %844 = vmatpush.bf16.msra.mxu0 %v617
  %845 = vmatmul.bf16.gmra.mxu0 %v163
  %v846 = vpop.f32.mrf.mxu0
  %v847 = vadd.f32 %v833, %v846
  %v848 = vpop.f32.mrf.mxu0
  %v849 = vadd.f32 %v835, %v848
  %850 = vdwg.mxu0
  %851 = vmatpush.bf16.msra.mxu0 %v677
  %852 = vmatpush.bf16.msra.mxu0 %v673
  %853 = vmatpush.bf16.msra.mxu0 %v669
  %854 = vmatpush.bf16.msra.mxu0 %v665
  %855 = vmatpush.bf16.msra.mxu0 %v661
  %856 = vmatpush.bf16.msra.mxu0 %v657
  %857 = vmatpush.bf16.msra.mxu0 %v653
  %858 = vmatpush.bf16.msra.mxu0 %v649
  %859 = vmatmul.bf16.gmra.mxu0 %v164
  %v860 = vpop.f32.mrf.mxu0
  %v861 = vadd.f32 %v847, %v860
  %v862 = vpop.f32.mrf.mxu0
  %v863 = vadd.f32 %v849, %v862
  %864 = vdwg.mxu0
  %865 = vmatpush.bf16.msra.mxu0 %v582
  %866 = vmatpush.bf16.msra.mxu0 %v578
  %867 = vmatpush.bf16.msra.mxu0 %v574
  %868 = vmatpush.bf16.msra.mxu0 %v570
  %869 = vmatpush.bf16.msra.mxu0 %v566
  %870 = vmatpush.bf16.msra.mxu0 %v562
  %871 = vmatpush.bf16.msra.mxu0 %v558
  %872 = vmatpush.bf16.msra.mxu0 %v554
  %873 = vmatmul.bf16.gmra.mxu0 %v161
  %v874 = vpop.f32.mrf.mxu0
  %v875 = vadd.f32 0.0, %v874
  %v876 = vpop.f32.mrf.mxu0
  %v877 = vadd.f32 0.0, %v876
  %878 = vdwg.mxu0
  %879 = vmatpush.bf16.msra.mxu0 %v614
  %880 = vmatpush.bf16.msra.mxu0 %v610
  %881 = vmatpush.bf16.msra.mxu0 %v606
  %882 = vmatpush.bf16.msra.mxu0 %v602
  %883 = vmatpush.bf16.msra.mxu0 %v598
  %884 = vmatpush.bf16.msra.mxu0 %v594
  %885 = vmatpush.bf16.msra.mxu0 %v590
  %886 = vmatpush.bf16.msra.mxu0 %v586
  %887 = vmatmul.bf16.gmra.mxu0 %v162
  %v888 = vpop.f32.mrf.mxu0
  %v889 = vadd.f32 %v875, %v888
  %v890 = vpop.f32.mrf.mxu0
  %v891 = vadd.f32 %v877, %v890
  %892 = vdwg.mxu0
  %893 = vmatpush.bf16.msra.mxu0 %v646
  %894 = vmatpush.bf16.msra.mxu0 %v642
  %895 = vmatpush.bf16.msra.mxu0 %v638
  %896 = vmatpush.bf16.msra.mxu0 %v634
  %897 = vmatpush.bf16.msra.mxu0 %v630
  %898 = vmatpush.bf16.msra.mxu0 %v626
  %899 = vmatpush.bf16.msra.mxu0 %v622
  %900 = vmatpush.bf16.msra.mxu0 %v618
  %901 = vmatmul.bf16.gmra.mxu0 %v163
  %v902 = vpop.f32.mrf.mxu0
  %v903 = vadd.f32 %v889, %v902
  %v904 = vpop.f32.mrf.mxu0
  %v905 = vadd.f32 %v891, %v904
  %906 = vdwg.mxu0
  %907 = vmatpush.bf16.msra.mxu0 %v678
  %908 = vmatpush.bf16.msra.mxu0 %v674
  %909 = vmatpush.bf16.msra.mxu0 %v670
  %910 = vmatpush.bf16.msra.mxu0 %v666
  %911 = vmatpush.bf16.msra.mxu0 %v662
  %912 = vmatpush.bf16.msra.mxu0 %v658
  %913 = vmatpush.bf16.msra.mxu0 %v654
  %914 = vmatpush.bf16.msra.mxu0 %v650
  %915 = vmatmul.bf16.gmra.mxu0 %v164
  %v916 = vpop.f32.mrf.mxu0
  %v917 = vadd.f32 %v903, %v916
  %v918 = vpop.f32.mrf.mxu0
  %v919 = vadd.f32 %v905, %v918
  %920 = vdwg.mxu0
  %921 = vmatpush.bf16.msra.mxu0 %v583
  %922 = vmatpush.bf16.msra.mxu0 %v579
  %923 = vmatpush.bf16.msra.mxu0 %v575
  %924 = vmatpush.bf16.msra.mxu0 %v571
  %925 = vmatpush.bf16.msra.mxu0 %v567
  %926 = vmatpush.bf16.msra.mxu0 %v563
  %927 = vmatpush.bf16.msra.mxu0 %v559
  %928 = vmatpush.bf16.msra.mxu0 %v555
  %929 = vmatmul.bf16.gmra.mxu0 %v161
  %v930 = vpop.f32.mrf.mxu0
  %v931 = vadd.f32 0.0, %v930
  %v932 = vpop.f32.mrf.mxu0
  %v933 = vadd.f32 0.0, %v932
  %934 = vdwg.mxu0
  %935 = vmatpush.bf16.msra.mxu0 %v615
  %936 = vmatpush.bf16.msra.mxu0 %v611
  %937 = vmatpush.bf16.msra.mxu0 %v607
  %938 = vmatpush.bf16.msra.mxu0 %v603
  %939 = vmatpush.bf16.msra.mxu0 %v599
  %940 = vmatpush.bf16.msra.mxu0 %v595
  %941 = vmatpush.bf16.msra.mxu0 %v591
  %942 = vmatpush.bf16.msra.mxu0 %v587
  %943 = vmatmul.bf16.gmra.mxu0 %v162
  %v944 = vpop.f32.mrf.mxu0
  %v945 = vadd.f32 %v931, %v944
  %v946 = vpop.f32.mrf.mxu0
  %v947 = vadd.f32 %v933, %v946
  %948 = vdwg.mxu0
  %949 = vmatpush.bf16.msra.mxu0 %v647
  %950 = vmatpush.bf16.msra.mxu0 %v643
  %951 = vmatpush.bf16.msra.mxu0 %v639
  %952 = vmatpush.bf16.msra.mxu0 %v635
  %953 = vmatpush.bf16.msra.mxu0 %v631
  %954 = vmatpush.bf16.msra.mxu0 %v627
  %955 = vmatpush.bf16.msra.mxu0 %v623
  %956 = vmatpush.bf16.msra.mxu0 %v619
  %957 = vmatmul.bf16.gmra.mxu0 %v163
  %v958 = vpop.f32.mrf.mxu0
  %v959 = vadd.f32 %v945, %v958
  %v960 = vpop.f32.mrf.mxu0
  %v961 = vadd.f32 %v947, %v960
  %962 = vdwg.mxu0
  %963 = vmatpush.bf16.msra.mxu0 %v679
  %964 = vmatpush.bf16.msra.mxu0 %v675
  %965 = vmatpush.bf16.msra.mxu0 %v671
  %966 = vmatpush.bf16.msra.mxu0 %v667
  %967 = vmatpush.bf16.msra.mxu0 %v663
  %968 = vmatpush.bf16.msra.mxu0 %v659
  %969 = vmatpush.bf16.msra.mxu0 %v655
  %970 = vmatpush.bf16.msra.mxu0 %v651
  %971 = vmatmul.bf16.gmra.mxu0 %v164
  %v972 = vpop.f32.mrf.mxu0
  %v973 = vadd.f32 %v959, %v972
  %v974 = vpop.f32.mrf.mxu0
  %v975 = vadd.f32 %v961, %v974
  %976 = vdwg.mxu0
  %977 = vmatpush.bf16.msra.mxu0 %v584
  %978 = vmatpush.bf16.msra.mxu0 %v580
  %979 = vmatpush.bf16.msra.mxu0 %v576
  %980 = vmatpush.bf16.msra.mxu0 %v572
  %981 = vmatpush.bf16.msra.mxu0 %v568
  %982 = vmatpush.bf16.msra.mxu0 %v564
  %983 = vmatpush.bf16.msra.mxu0 %v560
  %984 = vmatpush.bf16.msra.mxu0 %v556
  %985 = vmatmul.bf16.gmra.mxu0 %v161
  %v986 = vpop.f32.mrf.mxu0
  %v987 = vadd.f32 0.0, %v986
  %v988 = vpop.f32.mrf.mxu0
  %v989 = vadd.f32 0.0, %v988
  %990 = vdwg.mxu0
  %991 = vmatpush.bf16.msra.mxu0 %v616
  %992 = vmatpush.bf16.msra.mxu0 %v612
  %993 = vmatpush.bf16.msra.mxu0 %v608
  %994 = vmatpush.bf16.msra.mxu0 %v604
  %995 = vmatpush.bf16.msra.mxu0 %v600
  %996 = vmatpush.bf16.msra.mxu0 %v596
  %997 = vmatpush.bf16.msra.mxu0 %v592
  %998 = vmatpush.bf16.msra.mxu0 %v588
  %999 = vmatmul.bf16.gmra.mxu0 %v162
  %v1000 = vpop.f32.mrf.mxu0
  %v1001 = vadd.f32 %v987, %v1000
  %v1002 = vpop.f32.mrf.mxu0
  %v1003 = vadd.f32 %v989, %v1002
  %1004 = vdwg.mxu0
  %1005 = vmatpush.bf16.msra.mxu0 %v648
  %1006 = vmatpush.bf16.msra.mxu0 %v644
  %1007 = vmatpush.bf16.msra.mxu0 %v640
  %1008 = vmatpush.bf16.msra.mxu0 %v636
  %1009 = vmatpush.bf16.msra.mxu0 %v632
  %1010 = vmatpush.bf16.msra.mxu0 %v628
  %1011 = vmatpush.bf16.msra.mxu0 %v624
  %1012 = vmatpush.bf16.msra.mxu0 %v620
  %1013 = vmatmul.bf16.gmra.mxu0 %v163
  %v1014 = vpop.f32.mrf.mxu0
  %v1015 = vadd.f32 %v1001, %v1014
  %v1016 = vpop.f32.mrf.mxu0
  %v1017 = vadd.f32 %v1003, %v1016
  %1018 = vdwg.mxu0
  %1019 = vmatpush.bf16.msra.mxu0 %v680
  %1020 = vmatpush.bf16.msra.mxu0 %v676
  %1021 = vmatpush.bf16.msra.mxu0 %v672
  %1022 = vmatpush.bf16.msra.mxu0 %v668
  %1023 = vmatpush.bf16.msra.mxu0 %v664
  %1024 = vmatpush.bf16.msra.mxu0 %v660
  %1025 = vmatpush.bf16.msra.mxu0 %v656
  %1026 = vmatpush.bf16.msra.mxu0 %v652
  %1027 = vmatmul.bf16.gmra.mxu0 %v164
  %v1028 = vpop.f32.mrf.mxu0
  %v1029 = vadd.f32 %v1015, %v1028
  %v1030 = vpop.f32.mrf.mxu0
  %v1031 = vadd.f32 %v1017, %v1030
  %1032 = vdwg.mxu0
  %v1033 = vadd.f32 %v861, %v917
  %v1034 = vadd.f32 %v1033, %v973
  %v1035 = vadd.f32 %v1034, %v1029
  %1036 = vadd.xlane.f32.xlu0 %v1035
  %v1037 = vpop.xlane.xlu0 %1036
  %v1038 = vadd.f32 %v863, %v919
  %v1039 = vadd.f32 %v1038, %v975
  %v1040 = vadd.f32 %v1039, %v1031
  %1041 = vadd.xlane.f32.xlu0 %v1040
  %v1042 = vpop.xlane.xlu0 %1041
  %v1043 = vmul.f32 %v1037, 0.001953125
  %v1044 = vmul.f32 %v1042, 0.001953125
  %v1045 = vsub.f32 %v861, %v1043
  %v1046 = vsub.f32 %v917, %v1043
  %v1047 = vsub.f32 %v973, %v1043
  %v1048 = vsub.f32 %v1029, %v1043
  %v1049 = vsub.f32 %v863, %v1044
  %v1050 = vsub.f32 %v919, %v1044
  %v1051 = vsub.f32 %v975, %v1044
  %v1052 = vsub.f32 %v1031, %v1044
  %v1053 = vmul.f32 %v1045, %v1045
  %v1054 = vmul.f32 %v1046, %v1046
  %v1055 = vmul.f32 %v1047, %v1047
  %v1056 = vmul.f32 %v1048, %v1048
  %v1057 = vmul.f32 %v1049, %v1049
  %v1058 = vmul.f32 %v1050, %v1050
  %v1059 = vmul.f32 %v1051, %v1051
  %v1060 = vmul.f32 %v1052, %v1052
  %v1061 = vadd.f32 %v1053, %v1054
  %v1062 = vadd.f32 %v1061, %v1055
  %v1063 = vadd.f32 %v1062, %v1056
  %1064 = vadd.xlane.f32.xlu0 %v1063
  %v1065 = vpop.xlane.xlu0 %1064
  %v1066 = vadd.f32 %v1057, %v1058
  %v1067 = vadd.f32 %v1066, %v1059
  %v1068 = vadd.f32 %v1067, %v1060
  %1069 = vadd.xlane.f32.xlu0 %v1068
  %v1070 = vpop.xlane.xlu0 %1069
  %v1071 = vmul.f32 %v1065, 0.001953125
  %v1072 = vmul.f32 %v1070, 0.001953125
  %v1073 = vadd.f32 %v1071, 1e-05
  %v1074 = vadd.f32 %v1072, 1e-05
  %v1075 = vrsqrt.pop %v1073
  %v1076 = vmul.f32 %v1075, %v1073
  %v1077 = vmul.f32 %v1076, %v1075
  %v1078 = vmul.f32 0.5, %v1077
  %v1079 = vsub.f32 1.5, %v1078
  %v1080 = vmul.f32 %v1075, %v1079
  %vm1081 = vweird.f32 %v1073
  %vm1082 = vweird.f32 %v1075
  %vm1083 = vmor %vm1081, %vm1082
  %v1084 = vsel %vm1083, %v1075, %v1080
  %v1085 = vrsqrt.pop %v1074
  %v1086 = vmul.f32 %v1085, %v1074
  %v1087 = vmul.f32 %v1086, %v1085
  %v1088 = vmul.f32 0.5, %v1087
  %v1089 = vsub.f32 1.5, %v1088
  %v1090 = vmul.f32 %v1085, %v1089
  %vm1091 = vweird.f32 %v1074
  %vm1092 = vweird.f32 %v1085
  %vm1093 = vmor %vm1091, %vm1092
  %v1094 = vsel %vm1093, %v1085, %v1090
  %v1095 = vld [vmem:[%s2] sm:$0xff]
  %v1096 = vld [vmem:[%s2 + $0x8] sm:$0xff]
  %v1097 = vmul.f32 %v1084, %v1095
  %v1098 = vmul.f32 %v1094, %v1096
  %1100 = vset.pattern.permute.xlu0 0
  %1101 = vperm.xlu0 %1100, %v1097
  %v1102 = vpop.permute.xlu0 %1101
  %1105 = vset.pattern.permute.xlu0 0
  %1106 = vperm.xlu0 %1105, %v1098
  %v1107 = vpop.permute.xlu0 %1106
  %v1109 = vmul.f32 %v1045, %v1102
  %v1110 = vmul.f32 %v1046, %v1102
  %v1111 = vmul.f32 %v1047, %v1102
  %v1112 = vmul.f32 %v1048, %v1102
  %v1113 = vmul.f32 %v1049, %v1107
  %v1114 = vmul.f32 %v1050, %v1107
  %v1115 = vmul.f32 %v1051, %v1107
  %v1116 = vmul.f32 %v1052, %v1107
  %v1117 = vld [vmem:[%s3] sm:$0xff]
  %v1118 = vld [vmem:[%s3 + $0x8] sm:$0xff]
  %1120 = vset.pattern.permute.xlu0 0
  %1121 = vperm.xlu0 %1120, %v1117
  %v1122 = vpop.permute.xlu0 %1121
  %1125 = vset.pattern.permute.xlu0 0
  %1126 = vperm.xlu0 %1125, %v1118
  %v1127 = vpop.permute.xlu0 %1126
  %v1129 = vadd.f32 %v1109, %v1122
  %v1130 = vadd.f32 %v1110, %v1122
  %v1131 = vadd.f32 %v1111, %v1122
  %v1132 = vadd.f32 %v1112, %v1122
  %v1133 = vadd.f32 %v1113, %v1127
  %v1134 = vadd.f32 %v1114, %v1127
  %v1135 = vadd.f32 %v1115, %v1127
  %v1136 = vadd.f32 %v1116, %v1127
  %vm1137 = vcmp.ge.f32.partialorder %v1129, 0.0
  %vm1138 = vcmp.ge.f32.partialorder %v1130, 0.0
  %vm1139 = vcmp.ge.f32.partialorder %v1131, 0.0
  %vm1140 = vcmp.ge.f32.partialorder %v1132, 0.0
  %vm1141 = vcmp.ge.f32.partialorder %v1133, 0.0
  %vm1142 = vcmp.ge.f32.partialorder %v1134, 0.0
  %vm1143 = vcmp.ge.f32.partialorder %v1135, 0.0
  %vm1144 = vcmp.ge.f32.partialorder %v1136, 0.0
  %v1145 = vmul.f32 %v1129, 0.2
  %v1146 = vmul.f32 %v1130, 0.2
  %v1147 = vmul.f32 %v1131, 0.2
  %v1148 = vmul.f32 %v1132, 0.2
  %v1149 = vmul.f32 %v1133, 0.2
  %v1150 = vmul.f32 %v1134, 0.2
  %v1151 = vmul.f32 %v1135, 0.2
  %v1152 = vmul.f32 %v1136, 0.2
  %v1153 = vsel %vm1137, %v1129, %v1145
  %v1154 = vsel %vm1138, %v1130, %v1146
  %v1155 = vsel %vm1139, %v1131, %v1147
  %v1156 = vsel %vm1140, %v1132, %v1148
  %v1157 = vsel %vm1141, %v1133, %v1149
  %v1158 = vsel %vm1142, %v1134, %v1150
  %v1159 = vsel %vm1143, %v1135, %v1151
  %v1160 = vsel %vm1144, %v1136, %v1152
  %v1161 = vpack.c.bf16 %v1154, %v1153
  %v1162 = vpack.c.bf16 %v1156, %v1155
  %v1163 = vpack.c.bf16 %v1158, %v1157
  %v1164 = vpack.c.bf16 %v1160, %v1159
  %1165 = vst [vmem:[%s4] sm:$0xff] %v1161
  %1166 = vst [vmem:[%s4 + $0x8] sm:$0xff] %v1162
  %1167 = vst [vmem:[%s4 + $0x10] sm:$0xff] %v1163
  %1168 = vst [vmem:[%s4 + $0x18] sm:$0xff] %v1164
  // Predicated region
  $region18: #{generator_forward.7} parent=0 // pred_check
    _
  $region19: #{generator_forward.7} parent=0 // pred_check_branch
    %1170 = sbr.rel (0) target = $region21
  $region20: #{generator_forward.7} parent=0 // pred_region
    _
  $region21: #{generator_forward.7} parent=0 // pred_fallthru
    _
  // Predicated region
  $region22: #{generator_forward.7} parent=0 // pred_check
    _
  $region23: #{generator_forward.7} parent=0 // pred_check_branch
    %1172 = sbr.rel (0) target = $region25
  $region24: #{generator_forward.7} parent=0 // pred_region
    _
  $region25: #{generator_forward.7} parent=0 // pred_fallthru
    _

// kernel: generator_forward.8
$region0: #{generator_forward.8}
  #allocation0 [shape = 'u32[]', space=smem, size = 0x4, offset = 0x4, fixed_abs, tag = 'smem constant byte address 0x4 - core index']
  #allocation1 [shape = 'u32[72,128]{1,0:T(1,128)}', space=vmem, size = 0x9000, scoped, tag = 'internal scratch']
  %s0 = inlined_call_operand.vmem [shape: bf16[8,256], index: 0, kind: input, shape index: {}]
  %s1 = inlined_call_operand.vmem [shape: bf16[256,2048], index: 1, kind: input, shape index: {}]
  %s2 = inlined_call_operand.vmem [shape: f32[8,1], index: 2, kind: input, shape index: {}]
  %s3 = inlined_call_operand.vmem [shape: f32[8,1], index: 3, kind: input, shape index: {}]
  %s4 = inlined_call_operand.vmem [shape: bf16[8,2048], index: 4, kind: output, shape index: {}]
  %s5 = sld [smem:[#allocation0]]
  $region26: #{generator_forward.8} parent=0
    _
  %s7 = ssub.s32 1, %s5
  %s8 = scalar_select 0, %s7, %s5
  // Predicated region
  $region2: #{generator_forward.8} parent=0 // pred_check
    _
  $region3: #{generator_forward.8} parent=0 // pred_check_branch
    %10 = sbr.rel (0) target = $region5
  $region4: #{generator_forward.8} parent=0 // pred_region
    _
  $region5: #{generator_forward.8} parent=0 // pred_fallthru
    _
  // Predicated region
  $region6: #{generator_forward.8} parent=0 // pred_check
    _
  $region7: #{generator_forward.8} parent=0 // pred_check_branch
    %12 = sbr.rel (0) target = $region9
  $region8: #{generator_forward.8} parent=0 // pred_region
    _
  $region9: #{generator_forward.8} parent=0 // pred_fallthru
    _
  // Predicated region
  $region10: #{generator_forward.8} parent=0 // pred_check
    _
  $region11: #{generator_forward.8} parent=0 // pred_check_branch
    %14 = sbr.rel (0) target = $region13
  $region12: #{generator_forward.8} parent=0 // pred_region
    _
  $region13: #{generator_forward.8} parent=0 // pred_fallthru
    _
  // Predicated region
  $region14: #{generator_forward.8} parent=0 // pred_check
    _
  $region15: #{generator_forward.8} parent=0 // pred_check_branch
    %16 = sbr.rel (0) target = $region17
  $region16: #{generator_forward.8} parent=0 // pred_region
    _
  $region17: #{generator_forward.8} parent=0 // pred_fallthru
    _
  %v17 = vld [vmem:[%s0] sm:$0xff]
  %v18 = vld [vmem:[%s1] sm:$0xff]
  %v19 = vld [vmem:[%s1 + $0x8] sm:$0xff]
  %v20 = vld [vmem:[%s1 + $0x10] sm:$0xff]
  %v21 = vld [vmem:[%s1 + $0x18] sm:$0xff]
  %v22 = vld [vmem:[%s1 + $0x20] sm:$0xff]
  %v23 = vld [vmem:[%s1 + $0x28] sm:$0xff]
  %v24 = vld [vmem:[%s1 + $0x30] sm:$0xff]
  %v25 = vld [vmem:[%s1 + $0x38] sm:$0xff]
  %v26 = vld [vmem:[%s1 + $0x40] sm:$0xff]
  %v27 = vld [vmem:[%s1 + $0x48] sm:$0xff]
  %v28 = vld [vmem:[%s1 + $0x50] sm:$0xff]
  %v29 = vld [vmem:[%s1 + $0x58] sm:$0xff]
  %v30 = vld [vmem:[%s1 + $0x60] sm:$0xff]
  %v31 = vld [vmem:[%s1 + $0x68] sm:$0xff]
  %v32 = vld [vmem:[%s1 + $0x70] sm:$0xff]
  %v33 = vld [vmem:[%s1 + $0x78] sm:$0xff]
  %v34 = vld [vmem:[%s1 + $0x80] sm:$0xff]
  %v35 = vld [vmem:[%s1 + $0x88] sm:$0xff]
  %v36 = vld [vmem:[%s1 + $0x90] sm:$0xff]
  %v37 = vld [vmem:[%s1 + $0x98] sm:$0xff]
  %v38 = vld [vmem:[%s1 + $0xa0] sm:$0xff]
  %v39 = vld [vmem:[%s1 + $0xa8] sm:$0xff]
  %v40 = vld [vmem:[%s1 + $0xb0] sm:$0xff]
  %v41 = vld [vmem:[%s1 + $0xb8] sm:$0xff]
  %v42 = vld [vmem:[%s1 + $0xc0] sm:$0xff]
  %v43 = vld [vmem:[%s1 + $0xc8] sm:$0xff]
  %v44 = vld [vmem:[%s1 + $0xd0] sm:$0xff]
  %v45 = vld [vmem:[%s1 + $0xd8] sm:$0xff]
  %v46 = vld [vmem:[%s1 + $0xe0] sm:$0xff]
  %v47 = vld [vmem:[%s1 + $0xe8] sm:$0xff]
  %v48 = vld [vmem:[%s1 + $0xf0] sm:$0xff]
  %v49 = vld [vmem:[%s1 + $0xf8] sm:$0xff]
  %v50 = vld [vmem:[%s1 + $0x100] sm:$0xff]
  %v51 = vld [vmem:[%s1 + $0x108] sm:$0xff]
  %v52 = vld [vmem:[%s1 + $0x110] sm:$0xff]
  %v53 = vld [vmem:[%s1 + $0x118] sm:$0xff]
  %v54 = vld [vmem:[%s1 + $0x120] sm:$0xff]
  %v55 = vld [vmem:[%s1 + $0x128] sm:$0xff]
  %v56 = vld [vmem:[%s1 + $0x130] sm:$0xff]
  %v57 = vld [vmem:[%s1 + $0x138] sm:$0xff]
  %v58 = vld [vmem:[%s1 + $0x140] sm:$0xff]
  %v59 = vld [vmem:[%s1 + $0x148] sm:$0xff]
  %v60 = vld [vmem:[%s1 + $0x150] sm:$0xff]
  %v61 = vld [vmem:[%s1 + $0x158] sm:$0xff]
  %v62 = vld [vmem:[%s1 + $0x160] sm:$0xff]
  %v63 = vld [vmem:[%s1 + $0x168] sm:$0xff]
  %v64 = vld [vmem:[%s1 + $0x170] sm:$0xff]
  %v65 = vld [vmem:[%s1 + $0x178] sm:$0xff]
  %v66 = vld [vmem:[%s1 + $0x180] sm:$0xff]
  %v67 = vld [vmem:[%s1 + $0x188] sm:$0xff]
  %v68 = vld [vmem:[%s1 + $0x190] sm:$0xff]
  %v69 = vld [vmem:[%s1 + $0x198] sm:$0xff]
  %v70 = vld [vmem:[%s1 + $0x1a0] sm:$0xff]
  %v71 = vld [vmem:[%s1 + $0x1a8] sm:$0xff]
  %v72 = vld [vmem:[%s1 + $0x1b0] sm:$0xff]
  %v73 = vld [vmem:[%s1 + $0x1b8] sm:$0xff]
  %v74 = vld [vmem:[%s1 + $0x1c0] sm:$0xff]
  %v75 = vld [vmem:[%s1 + $0x1c8] sm:$0xff]
  %v76 = vld [vmem:[%s1 + $0x1d0] sm:$0xff]
  %v77 = vld [vmem:[%s1 + $0x1d8] sm:$0xff]
  %v78 = vld [vmem:[%s1 + $0x1e0] sm:$0xff]
  %v79 = vld [vmem:[%s1 + $0x1e8] sm:$0xff]
  %v80 = vld [vmem:[%s1 + $0x1f0] sm:$0xff]
  %v81 = vld [vmem:[%s1 + $0x1f8] sm:$0xff]
  %v82 = vld [vmem:[%s1 + $0x200] sm:$0xff]
  %v83 = vld [vmem:[%s1 + $0x208] sm:$0xff]
  %v84 = vld [vmem:[%s1 + $0x210] sm:$0xff]
  %v85 = vld [vmem:[%s1 + $0x218] sm:$0xff]
  %v86 = vld [vmem:[%s1 + $0x220] sm:$0xff]
  %v87 = vld [vmem:[%s1 + $0x228] sm:$0xff]
  %v88 = vld [vmem:[%s1 + $0x230] sm:$0xff]
  %v89 = vld [vmem:[%s1 + $0x238] sm:$0xff]
  %v90 = vld [vmem:[%s1 + $0x240] sm:$0xff]
  %v91 = vld [vmem:[%s1 + $0x248] sm:$0xff]
  %v92 = vld [vmem:[%s1 + $0x250] sm:$0xff]
  %v93 = vld [vmem:[%s1 + $0x258] sm:$0xff]
  %v94 = vld [vmem:[%s1 + $0x260] sm:$0xff]
  %v95 = vld [vmem:[%s1 + $0x268] sm:$0xff]
  %v96 = vld [vmem:[%s1 + $0x270] sm:$0xff]
  %v97 = vld [vmem:[%s1 + $0x278] sm:$0xff]
  %v98 = vld [vmem:[%s1 + $0x280] sm:$0xff]
  %v99 = vld [vmem:[%s1 + $0x288] sm:$0xff]
  %v100 = vld [vmem:[%s1 + $0x290] sm:$0xff]
  %v101 = vld [vmem:[%s1 + $0x298] sm:$0xff]
  %v102 = vld [vmem:[%s1 + $0x2a0] sm:$0xff]
  %v103 = vld [vmem:[%s1 + $0x2a8] sm:$0xff]
  %v104 = vld [vmem:[%s1 + $0x2b0] sm:$0xff]
  %v105 = vld [vmem:[%s1 + $0x2b8] sm:$0xff]
  %v106 = vld [vmem:[%s1 + $0x2c0] sm:$0xff]
  %v107 = vld [vmem:[%s1 + $0x2c8] sm:$0xff]
  %v108 = vld [vmem:[%s1 + $0x2d0] sm:$0xff]
  %v109 = vld [vmem:[%s1 + $0x2d8] sm:$0xff]
  %v110 = vld [vmem:[%s1 + $0x2e0] sm:$0xff]
  %v111 = vld [vmem:[%s1 + $0x2e8] sm:$0xff]
  %v112 = vld [vmem:[%s1 + $0x2f0] sm:$0xff]
  %v113 = vld [vmem:[%s1 + $0x2f8] sm:$0xff]
  %v114 = vld [vmem:[%s1 + $0x300] sm:$0xff]
  %v115 = vld [vmem:[%s1 + $0x308] sm:$0xff]
  %v116 = vld [vmem:[%s1 + $0x310] sm:$0xff]
  %v117 = vld [vmem:[%s1 + $0x318] sm:$0xff]
  %v118 = vld [vmem:[%s1 + $0x320] sm:$0xff]
  %v119 = vld [vmem:[%s1 + $0x328] sm:$0xff]
  %v120 = vld [vmem:[%s1 + $0x330] sm:$0xff]
  %v121 = vld [vmem:[%s1 + $0x338] sm:$0xff]
  %v122 = vld [vmem:[%s1 + $0x340] sm:$0xff]
  %v123 = vld [vmem:[%s1 + $0x348] sm:$0xff]
  %v124 = vld [vmem:[%s1 + $0x350] sm:$0xff]
  %v125 = vld [vmem:[%s1 + $0x358] sm:$0xff]
  %v126 = vld [vmem:[%s1 + $0x360] sm:$0xff]
  %v127 = vld [vmem:[%s1 + $0x368] sm:$0xff]
  %v128 = vld [vmem:[%s1 + $0x370] sm:$0xff]
  %v129 = vld [vmem:[%s1 + $0x378] sm:$0xff]
  %v130 = vld [vmem:[%s1 + $0x380] sm:$0xff]
  %v131 = vld [vmem:[%s1 + $0x388] sm:$0xff]
  %v132 = vld [vmem:[%s1 + $0x390] sm:$0xff]
  %v133 = vld [vmem:[%s1 + $0x398] sm:$0xff]
  %v134 = vld [vmem:[%s1 + $0x3a0] sm:$0xff]
  %v135 = vld [vmem:[%s1 + $0x3a8] sm:$0xff]
  %v136 = vld [vmem:[%s1 + $0x3b0] sm:$0xff]
  %v137 = vld [vmem:[%s1 + $0x3b8] sm:$0xff]
  %v138 = vld [vmem:[%s1 + $0x3c0] sm:$0xff]
  %v139 = vld [vmem:[%s1 + $0x3c8] sm:$0xff]
  %v140 = vld [vmem:[%s1 + $0x3d0] sm:$0xff]
  %v141 = vld [vmem:[%s1 + $0x3d8] sm:$0xff]
  %v142 = vld [vmem:[%s1 + $0x3e0] sm:$0xff]
  %v143 = vld [vmem:[%s1 + $0x3e8] sm:$0xff]
  %v144 = vld [vmem:[%s1 + $0x3f0] sm:$0xff]
  %v145 = vld [vmem:[%s1 + $0x3f8] sm:$0xff]
  %v146 = vld [vmem:[%s1 + $0x400] sm:$0xff]
  %v147 = vld [vmem:[%s1 + $0x408] sm:$0xff]
  %v148 = vld [vmem:[%s1 + $0x410] sm:$0xff]
  %v149 = vld [vmem:[%s1 + $0x418] sm:$0xff]
  %v150 = vld [vmem:[%s1 + $0x420] sm:$0xff]
  %v151 = vld [vmem:[%s1 + $0x428] sm:$0xff]
  %v152 = vld [vmem:[%s1 + $0x430] sm:$0xff]
  %v153 = vld [vmem:[%s1 + $0x438] sm:$0xff]
  %v154 = vld [vmem:[%s1 + $0x440] sm:$0xff]
  %v155 = vld [vmem:[%s1 + $0x448] sm:$0xff]
  %v156 = vld [vmem:[%s1 + $0x450] sm:$0xff]
  %v157 = vld [vmem:[%s1 + $0x458] sm:$0xff]
  %v158 = vld [vmem:[%s1 + $0x460] sm:$0xff]
  %v159 = vld [vmem:[%s1 + $0x468] sm:$0xff]
  %v160 = vld [vmem:[%s1 + $0x470] sm:$0xff]
  %v161 = vld [vmem:[%s1 + $0x478] sm:$0xff]
  %v162 = vld [vmem:[%s1 + $0x480] sm:$0xff]
  %v163 = vld [vmem:[%s1 + $0x488] sm:$0xff]
  %v164 = vld [vmem:[%s1 + $0x490] sm:$0xff]
  %v165 = vld [vmem:[%s1 + $0x498] sm:$0xff]
  %v166 = vld [vmem:[%s1 + $0x4a0] sm:$0xff]
  %v167 = vld [vmem:[%s1 + $0x4a8] sm:$0xff]
  %v168 = vld [vmem:[%s1 + $0x4b0] sm:$0xff]
  %v169 = vld [vmem:[%s1 + $0x4b8] sm:$0xff]
  %v170 = vld [vmem:[%s1 + $0x4c0] sm:$0xff]
  %v171 = vld [vmem:[%s1 + $0x4c8] sm:$0xff]
  %v172 = vld [vmem:[%s1 + $0x4d0] sm:$0xff]
  %v173 = vld [vmem:[%s1 + $0x4d8] sm:$0xff]
  %v174 = vld [vmem:[%s1 + $0x4e0] sm:$0xff]
  %v175 = vld [vmem:[%s1 + $0x4e8] sm:$0xff]
  %v176 = vld [vmem:[%s1 + $0x4f0] sm:$0xff]
  %v177 = vld [vmem:[%s1 + $0x4f8] sm:$0xff]
  %v178 = vld [vmem:[%s1 + $0x500] sm:$0xff]
  %v179 = vld [vmem:[%s1 + $0x508] sm:$0xff]
  %v180 = vld [vmem:[%s1 + $0x510] sm:$0xff]
  %v181 = vld [vmem:[%s1 + $0x518] sm:$0xff]
  %v182 = vld [vmem:[%s1 + $0x520] sm:$0xff]
  %v183 = vld [vmem:[%s1 + $0x528] sm:$0xff]
  %v184 = vld [vmem:[%s1 + $0x530] sm:$0xff]
  %v185 = vld [vmem:[%s1 + $0x538] sm:$0xff]
  %v186 = vld [vmem:[%s1 + $0x540] sm:$0xff]
  %v187 = vld [vmem:[%s1 + $0x548] sm:$0xff]
  %v188 = vld [vmem:[%s1 + $0x550] sm:$0xff]
  %v189 = vld [vmem:[%s1 + $0x558] sm:$0xff]
  %v190 = vld [vmem:[%s1 + $0x560] sm:$0xff]
  %v191 = vld [vmem:[%s1 + $0x568] sm:$0xff]
  %v192 = vld [vmem:[%s1 + $0x570] sm:$0xff]
  %v193 = vld [vmem:[%s1 + $0x578] sm:$0xff]
  %v194 = vld [vmem:[%s1 + $0x580] sm:$0xff]
  %v195 = vld [vmem:[%s1 + $0x588] sm:$0xff]
  %v196 = vld [vmem:[%s1 + $0x590] sm:$0xff]
  %v197 = vld [vmem:[%s1 + $0x598] sm:$0xff]
  %v198 = vld [vmem:[%s1 + $0x5a0] sm:$0xff]
  %v199 = vld [vmem:[%s1 + $0x5a8] sm:$0xff]
  %v200 = vld [vmem:[%s1 + $0x5b0] sm:$0xff]
  %v201 = vld [vmem:[%s1 + $0x5b8] sm:$0xff]
  %v202 = vld [vmem:[%s1 + $0x5c0] sm:$0xff]
  %v203 = vld [vmem:[%s1 + $0x5c8] sm:$0xff]
  %v204 = vld [vmem:[%s1 + $0x5d0] sm:$0xff]
  %v205 = vld [vmem:[%s1 + $0x5d8] sm:$0xff]
  %v206 = vld [vmem:[%s1 + $0x5e0] sm:$0xff]
  %v207 = vld [vmem:[%s1 + $0x5e8] sm:$0xff]
  %v208 = vld [vmem:[%s1 + $0x5f0] sm:$0xff]
  %v209 = vld [vmem:[%s1 + $0x5f8] sm:$0xff]
  %v210 = vld [vmem:[%s1 + $0x600] sm:$0xff]
  %v211 = vld [vmem:[%s1 + $0x608] sm:$0xff]
  %v212 = vld [vmem:[%s1 + $0x610] sm:$0xff]
  %v213 = vld [vmem:[%s1 + $0x618] sm:$0xff]
  %v214 = vld [vmem:[%s1 + $0x620] sm:$0xff]
  %v215 = vld [vmem:[%s1 + $0x628] sm:$0xff]
  %v216 = vld [vmem:[%s1 + $0x630] sm:$0xff]
  %v217 = vld [vmem:[%s1 + $0x638] sm:$0xff]
  %v218 = vld [vmem:[%s1 + $0x640] sm:$0xff]
  %v219 = vld [vmem:[%s1 + $0x648] sm:$0xff]
  %v220 = vld [vmem:[%s1 + $0x650] sm:$0xff]
  %v221 = vld [vmem:[%s1 + $0x658] sm:$0xff]
  %v222 = vld [vmem:[%s1 + $0x660] sm:$0xff]
  %v223 = vld [vmem:[%s1 + $0x668] sm:$0xff]
  %v224 = vld [vmem:[%s1 + $0x670] sm:$0xff]
  %v225 = vld [vmem:[%s1 + $0x678] sm:$0xff]
  %v226 = vld [vmem:[%s1 + $0x680] sm:$0xff]
  %v227 = vld [vmem:[%s1 + $0x688] sm:$0xff]
  %v228 = vld [vmem:[%s1 + $0x690] sm:$0xff]
  %v229 = vld [vmem:[%s1 + $0x698] sm:$0xff]
  %v230 = vld [vmem:[%s1 + $0x6a0] sm:$0xff]
  %v231 = vld [vmem:[%s1 + $0x6a8] sm:$0xff]
  %v232 = vld [vmem:[%s1 + $0x6b0] sm:$0xff]
  %v233 = vld [vmem:[%s1 + $0x6b8] sm:$0xff]
  %v234 = vld [vmem:[%s1 + $0x6c0] sm:$0xff]
  %v235 = vld [vmem:[%s1 + $0x6c8] sm:$0xff]
  %v236 = vld [vmem:[%s1 + $0x6d0] sm:$0xff]
  %v237 = vld [vmem:[%s1 + $0x6d8] sm:$0xff]
  %v238 = vld [vmem:[%s1 + $0x6e0] sm:$0xff]
  %v239 = vld [vmem:[%s1 + $0x6e8] sm:$0xff]
  %v240 = vld [vmem:[%s1 + $0x6f0] sm:$0xff]
  %v241 = vld [vmem:[%s1 + $0x6f8] sm:$0xff]
  %v242 = vld [vmem:[%s1 + $0x700] sm:$0xff]
  %v243 = vld [vmem:[%s1 + $0x708] sm:$0xff]
  %v244 = vld [vmem:[%s1 + $0x710] sm:$0xff]
  %v245 = vld [vmem:[%s1 + $0x718] sm:$0xff]
  %v246 = vld [vmem:[%s1 + $0x720] sm:$0xff]
  %v247 = vld [vmem:[%s1 + $0x728] sm:$0xff]
  %v248 = vld [vmem:[%s1 + $0x730] sm:$0xff]
  %v249 = vld [vmem:[%s1 + $0x738] sm:$0xff]
  %v250 = vld [vmem:[%s1 + $0x740] sm:$0xff]
  %v251 = vld [vmem:[%s1 + $0x748] sm:$0xff]
  %v252 = vld [vmem:[%s1 + $0x750] sm:$0xff]
  %v253 = vld [vmem:[%s1 + $0x758] sm:$0xff]
  %v254 = vld [vmem:[%s1 + $0x760] sm:$0xff]
  %v255 = vld [vmem:[%s1 + $0x768] sm:$0xff]
  %v256 = vld [vmem:[%s1 + $0x770] sm:$0xff]
  %v257 = vld [vmem:[%s1 + $0x778] sm:$0xff]
  %v258 = vld [vmem:[%s1 + $0x780] sm:$0xff]
  %v259 = vld [vmem:[%s1 + $0x788] sm:$0xff]
  %v260 = vld [vmem:[%s1 + $0x790] sm:$0xff]
  %v261 = vld [vmem:[%s1 + $0x798] sm:$0xff]
  %v262 = vld [vmem:[%s1 + $0x7a0] sm:$0xff]
  %v263 = vld [vmem:[%s1 + $0x7a8] sm:$0xff]
  %v264 = vld [vmem:[%s1 + $0x7b0] sm:$0xff]
  %v265 = vld [vmem:[%s1 + $0x7b8] sm:$0xff]
  %v266 = vld [vmem:[%s1 + $0x7c0] sm:$0xff]
  %v267 = vld [vmem:[%s1 + $0x7c8] sm:$0xff]
  %v268 = vld [vmem:[%s1 + $0x7d0] sm:$0xff]
  %v269 = vld [vmem:[%s1 + $0x7d8] sm:$0xff]
  %v270 = vld [vmem:[%s1 + $0x7e0] sm:$0xff]
  %v271 = vld [vmem:[%s1 + $0x7e8] sm:$0xff]
  %v272 = vld [vmem:[%s1 + $0x7f0] sm:$0xff]
  %v273 = vld [vmem:[%s1 + $0x7f8] sm:$0xff]
  %v275 = vunpack.c.l.b16 %v17
  %v276 = vunpack.c.h.b16 %v17
  %v277 = vpack.c.b16 %v275, %v275
  %v278 = vpack.c.b16 %v276, %v276
  %v537 = vunpack.c.l.b16 %v18
  %v538 = vunpack.c.h.b16 %v18
  %v539 = vunpack.c.l.b16 %v19
  %v540 = vunpack.c.h.b16 %v19
  %v541 = vunpack.c.l.b16 %v20
  %v542 = vunpack.c.h.b16 %v20
  %v543 = vunpack.c.l.b16 %v21
  %v544 = vunpack.c.h.b16 %v21
  %v545 = vunpack.c.l.b16 %v22
  %v546 = vunpack.c.h.b16 %v22
  %v547 = vunpack.c.l.b16 %v23
  %v548 = vunpack.c.h.b16 %v23
  %v549 = vunpack.c.l.b16 %v24
  %v550 = vunpack.c.h.b16 %v24
  %v551 = vunpack.c.l.b16 %v25
  %v552 = vunpack.c.h.b16 %v25
  %v553 = vunpack.c.l.b16 %v26
  %v554 = vunpack.c.h.b16 %v26
  %v555 = vunpack.c.l.b16 %v27
  %v556 = vunpack.c.h.b16 %v27
  %v557 = vunpack.c.l.b16 %v28
  %v558 = vunpack.c.h.b16 %v28
  %v559 = vunpack.c.l.b16 %v29
  %v560 = vunpack.c.h.b16 %v29
  %v561 = vunpack.c.l.b16 %v30
  %v562 = vunpack.c.h.b16 %v30
  %v563 = vunpack.c.l.b16 %v31
  %v564 = vunpack.c.h.b16 %v31
  %v565 = vunpack.c.l.b16 %v32
  %v566 = vunpack.c.h.b16 %v32
  %v567 = vunpack.c.l.b16 %v33
  %v568 = vunpack.c.h.b16 %v33
  %v569 = vunpack.c.l.b16 %v34
  %v570 = vunpack.c.h.b16 %v34
  %v571 = vunpack.c.l.b16 %v35
  %v572 = vunpack.c.h.b16 %v35
  %v573 = vunpack.c.l.b16 %v36
  %v574 = vunpack.c.h.b16 %v36
  %v575 = vunpack.c.l.b16 %v37
  %v576 = vunpack.c.h.b16 %v37
  %v577 = vunpack.c.l.b16 %v38
  %v578 = vunpack.c.h.b16 %v38
  %v579 = vunpack.c.l.b16 %v39
  %v580 = vunpack.c.h.b16 %v39
  %v581 = vunpack.c.l.b16 %v40
  %v582 = vunpack.c.h.b16 %v40
  %v583 = vunpack.c.l.b16 %v41
  %v584 = vunpack.c.h.b16 %v41
  %v585 = vunpack.c.l.b16 %v42
  %v586 = vunpack.c.h.b16 %v42
  %v587 = vunpack.c.l.b16 %v43
  %v588 = vunpack.c.h.b16 %v43
  %v589 = vunpack.c.l.b16 %v44
  %v590 = vunpack.c.h.b16 %v44
  %v591 = vunpack.c.l.b16 %v45
  %v592 = vunpack.c.h.b16 %v45
  %v593 = vunpack.c.l.b16 %v46
  %v594 = vunpack.c.h.b16 %v46
  %v595 = vunpack.c.l.b16 %v47
  %v596 = vunpack.c.h.b16 %v47
  %v597 = vunpack.c.l.b16 %v48
  %v598 = vunpack.c.h.b16 %v48
  %v599 = vunpack.c.l.b16 %v49
  %v600 = vunpack.c.h.b16 %v49
  %v601 = vunpack.c.l.b16 %v50
  %v602 = vunpack.c.h.b16 %v50
  %v603 = vunpack.c.l.b16 %v51
  %v604 = vunpack.c.h.b16 %v51
  %v605 = vunpack.c.l.b16 %v52
  %v606 = vunpack.c.h.b16 %v52
  %v607 = vunpack.c.l.b16 %v53
  %v608 = vunpack.c.h.b16 %v53
  %v609 = vunpack.c.l.b16 %v54
  %v610 = vunpack.c.h.b16 %v54
  %v611 = vunpack.c.l.b16 %v55
  %v612 = vunpack.c.h.b16 %v55
  %v613 = vunpack.c.l.b16 %v56
  %v614 = vunpack.c.h.b16 %v56
  %v615 = vunpack.c.l.b16 %v57
  %v616 = vunpack.c.h.b16 %v57
  %v617 = vunpack.c.l.b16 %v58
  %v618 = vunpack.c.h.b16 %v58
  %v619 = vunpack.c.l.b16 %v59
  %v620 = vunpack.c.h.b16 %v59
  %v621 = vunpack.c.l.b16 %v60
  %v622 = vunpack.c.h.b16 %v60
  %v623 = vunpack.c.l.b16 %v61
  %v624 = vunpack.c.h.b16 %v61
  %v625 = vunpack.c.l.b16 %v62
  %v626 = vunpack.c.h.b16 %v62
  %v627 = vunpack.c.l.b16 %v63
  %v628 = vunpack.c.h.b16 %v63
  %v629 = vunpack.c.l.b16 %v64
  %v630 = vunpack.c.h.b16 %v64
  %v631 = vunpack.c.l.b16 %v65
  %v632 = vunpack.c.h.b16 %v65
  %v633 = vunpack.c.l.b16 %v66
  %v634 = vunpack.c.h.b16 %v66
  %v635 = vunpack.c.l.b16 %v67
  %v636 = vunpack.c.h.b16 %v67
  %v637 = vunpack.c.l.b16 %v68
  %v638 = vunpack.c.h.b16 %v68
  %v639 = vunpack.c.l.b16 %v69
  %v640 = vunpack.c.h.b16 %v69
  %v641 = vunpack.c.l.b16 %v70
  %v642 = vunpack.c.h.b16 %v70
  %v643 = vunpack.c.l.b16 %v71
  %v644 = vunpack.c.h.b16 %v71
  %v645 = vunpack.c.l.b16 %v72
  %v646 = vunpack.c.h.b16 %v72
  %v647 = vunpack.c.l.b16 %v73
  %v648 = vunpack.c.h.b16 %v73
  %v649 = vunpack.c.l.b16 %v74
  %v650 = vunpack.c.h.b16 %v74
  %v651 = vunpack.c.l.b16 %v75
  %v652 = vunpack.c.h.b16 %v75
  %v653 = vunpack.c.l.b16 %v76
  %v654 = vunpack.c.h.b16 %v76
  %v655 = vunpack.c.l.b16 %v77
  %v656 = vunpack.c.h.b16 %v77
  %v657 = vunpack.c.l.b16 %v78
  %v658 = vunpack.c.h.b16 %v78
  %v659 = vunpack.c.l.b16 %v79
  %v660 = vunpack.c.h.b16 %v79
  %v661 = vunpack.c.l.b16 %v80
  %v662 = vunpack.c.h.b16 %v80
  %v663 = vunpack.c.l.b16 %v81
  %v664 = vunpack.c.h.b16 %v81
  %v665 = vunpack.c.l.b16 %v82
  %v666 = vunpack.c.h.b16 %v82
  %v667 = vunpack.c.l.b16 %v83
  %v668 = vunpack.c.h.b16 %v83
  %v669 = vunpack.c.l.b16 %v84
  %v670 = vunpack.c.h.b16 %v84
  %v671 = vunpack.c.l.b16 %v85
  %v672 = vunpack.c.h.b16 %v85
  %v673 = vunpack.c.l.b16 %v86
  %v674 = vunpack.c.h.b16 %v86
  %v675 = vunpack.c.l.b16 %v87
  %v676 = vunpack.c.h.b16 %v87
  %v677 = vunpack.c.l.b16 %v88
  %v678 = vunpack.c.h.b16 %v88
  %v679 = vunpack.c.l.b16 %v89
  %v680 = vunpack.c.h.b16 %v89
  %v681 = vunpack.c.l.b16 %v90
  %v682 = vunpack.c.h.b16 %v90
  %v683 = vunpack.c.l.b16 %v91
  %v684 = vunpack.c.h.b16 %v91
  %v685 = vunpack.c.l.b16 %v92
  %v686 = vunpack.c.h.b16 %v92
  %v687 = vunpack.c.l.b16 %v93
  %v688 = vunpack.c.h.b16 %v93
  %v689 = vunpack.c.l.b16 %v94
  %v690 = vunpack.c.h.b16 %v94
  %v691 = vunpack.c.l.b16 %v95
  %v692 = vunpack.c.h.b16 %v95
  %v693 = vunpack.c.l.b16 %v96
  %v694 = vunpack.c.h.b16 %v96
  %v695 = vunpack.c.l.b16 %v97
  %v696 = vunpack.c.h.b16 %v97
  %v697 = vunpack.c.l.b16 %v98
  %v698 = vunpack.c.h.b16 %v98
  %v699 = vunpack.c.l.b16 %v99
  %v700 = vunpack.c.h.b16 %v99
  %v701 = vunpack.c.l.b16 %v100
  %v702 = vunpack.c.h.b16 %v100
  %v703 = vunpack.c.l.b16 %v101
  %v704 = vunpack.c.h.b16 %v101
  %v705 = vunpack.c.l.b16 %v102
  %v706 = vunpack.c.h.b16 %v102
  %v707 = vunpack.c.l.b16 %v103
  %v708 = vunpack.c.h.b16 %v103
  %v709 = vunpack.c.l.b16 %v104
  %v710 = vunpack.c.h.b16 %v104
  %v711 = vunpack.c.l.b16 %v105
  %v712 = vunpack.c.h.b16 %v105
  %v713 = vunpack.c.l.b16 %v106
  %v714 = vunpack.c.h.b16 %v106
  %v715 = vunpack.c.l.b16 %v107
  %v716 = vunpack.c.h.b16 %v107
  %v717 = vunpack.c.l.b16 %v108
  %v718 = vunpack.c.h.b16 %v108
  %v719 = vunpack.c.l.b16 %v109
  %v720 = vunpack.c.h.b16 %v109
  %v721 = vunpack.c.l.b16 %v110
  %v722 = vunpack.c.h.b16 %v110
  %v723 = vunpack.c.l.b16 %v111
  %v724 = vunpack.c.h.b16 %v111
  %v725 = vunpack.c.l.b16 %v112
  %v726 = vunpack.c.h.b16 %v112
  %v727 = vunpack.c.l.b16 %v113
  %v728 = vunpack.c.h.b16 %v113
  %v729 = vunpack.c.l.b16 %v114
  %v730 = vunpack.c.h.b16 %v114
  %v731 = vunpack.c.l.b16 %v115
  %v732 = vunpack.c.h.b16 %v115
  %v733 = vunpack.c.l.b16 %v116
  %v734 = vunpack.c.h.b16 %v116
  %v735 = vunpack.c.l.b16 %v117
  %v736 = vunpack.c.h.b16 %v117
  %v737 = vunpack.c.l.b16 %v118
  %v738 = vunpack.c.h.b16 %v118
  %v739 = vunpack.c.l.b16 %v119
  %v740 = vunpack.c.h.b16 %v119
  %v741 = vunpack.c.l.b16 %v120
  %v742 = vunpack.c.h.b16 %v120
  %v743 = vunpack.c.l.b16 %v121
  %v744 = vunpack.c.h.b16 %v121
  %v745 = vunpack.c.l.b16 %v122
  %v746 = vunpack.c.h.b16 %v122
  %v747 = vunpack.c.l.b16 %v123
  %v748 = vunpack.c.h.b16 %v123
  %v749 = vunpack.c.l.b16 %v124
  %v750 = vunpack.c.h.b16 %v124
  %v751 = vunpack.c.l.b16 %v125
  %v752 = vunpack.c.h.b16 %v125
  %v753 = vunpack.c.l.b16 %v126
  %v754 = vunpack.c.h.b16 %v126
  %v755 = vunpack.c.l.b16 %v127
  %v756 = vunpack.c.h.b16 %v127
  %v757 = vunpack.c.l.b16 %v128
  %v758 = vunpack.c.h.b16 %v128
  %v759 = vunpack.c.l.b16 %v129
  %v760 = vunpack.c.h.b16 %v129
  %v761 = vunpack.c.l.b16 %v130
  %v762 = vunpack.c.h.b16 %v130
  %v763 = vunpack.c.l.b16 %v131
  %v764 = vunpack.c.h.b16 %v131
  %v765 = vunpack.c.l.b16 %v132
  %v766 = vunpack.c.h.b16 %v132
  %v767 = vunpack.c.l.b16 %v133
  %v768 = vunpack.c.h.b16 %v133
  %v769 = vunpack.c.l.b16 %v134
  %v770 = vunpack.c.h.b16 %v134
  %v771 = vunpack.c.l.b16 %v135
  %v772 = vunpack.c.h.b16 %v135
  %v773 = vunpack.c.l.b16 %v136
  %v774 = vunpack.c.h.b16 %v136
  %v775 = vunpack.c.l.b16 %v137
  %v776 = vunpack.c.h.b16 %v137
  %v777 = vunpack.c.l.b16 %v138
  %v778 = vunpack.c.h.b16 %v138
  %v779 = vunpack.c.l.b16 %v139
  %v780 = vunpack.c.h.b16 %v139
  %v781 = vunpack.c.l.b16 %v140
  %v782 = vunpack.c.h.b16 %v140
  %v783 = vunpack.c.l.b16 %v141
  %v784 = vunpack.c.h.b16 %v141
  %v785 = vunpack.c.l.b16 %v142
  %v786 = vunpack.c.h.b16 %v142
  %v787 = vunpack.c.l.b16 %v143
  %v788 = vunpack.c.h.b16 %v143
  %v789 = vunpack.c.l.b16 %v144
  %v790 = vunpack.c.h.b16 %v144
  %v791 = vunpack.c.l.b16 %v145
  %v792 = vunpack.c.h.b16 %v145
  %v793 = vunpack.c.l.b16 %v146
  %v794 = vunpack.c.h.b16 %v146
  %v795 = vunpack.c.l.b16 %v147
  %v796 = vunpack.c.h.b16 %v147
  %v797 = vunpack.c.l.b16 %v148
  %v798 = vunpack.c.h.b16 %v148
  %v799 = vunpack.c.l.b16 %v149
  %v800 = vunpack.c.h.b16 %v149
  %v801 = vunpack.c.l.b16 %v150
  %v802 = vunpack.c.h.b16 %v150
  %v803 = vunpack.c.l.b16 %v151
  %v804 = vunpack.c.h.b16 %v151
  %v805 = vunpack.c.l.b16 %v152
  %v806 = vunpack.c.h.b16 %v152
  %v807 = vunpack.c.l.b16 %v153
  %v808 = vunpack.c.h.b16 %v153
  %v809 = vunpack.c.l.b16 %v154
  %v810 = vunpack.c.h.b16 %v154
  %v811 = vunpack.c.l.b16 %v155
  %v812 = vunpack.c.h.b16 %v155
  %v813 = vunpack.c.l.b16 %v156
  %v814 = vunpack.c.h.b16 %v156
  %v815 = vunpack.c.l.b16 %v157
  %v816 = vunpack.c.h.b16 %v157
  %v817 = vunpack.c.l.b16 %v158
  %v818 = vunpack.c.h.b16 %v158
  %v819 = vunpack.c.l.b16 %v159
  %v820 = vunpack.c.h.b16 %v159
  %v821 = vunpack.c.l.b16 %v160
  %v822 = vunpack.c.h.b16 %v160
  %v823 = vunpack.c.l.b16 %v161
  %v824 = vunpack.c.h.b16 %v161
  %v825 = vunpack.c.l.b16 %v162
  %v826 = vunpack.c.h.b16 %v162
  %v827 = vunpack.c.l.b16 %v163
  %v828 = vunpack.c.h.b16 %v163
  %v829 = vunpack.c.l.b16 %v164
  %v830 = vunpack.c.h.b16 %v164
  %v831 = vunpack.c.l.b16 %v165
  %v832 = vunpack.c.h.b16 %v165
  %v833 = vunpack.c.l.b16 %v166
  %v834 = vunpack.c.h.b16 %v166
  %v835 = vunpack.c.l.b16 %v167
  %v836 = vunpack.c.h.b16 %v167
  %v837 = vunpack.c.l.b16 %v168
  %v838 = vunpack.c.h.b16 %v168
  %v839 = vunpack.c.l.b16 %v169
  %v840 = vunpack.c.h.b16 %v169
  %v841 = vunpack.c.l.b16 %v170
  %v842 = vunpack.c.h.b16 %v170
  %v843 = vunpack.c.l.b16 %v171
  %v844 = vunpack.c.h.b16 %v171
  %v845 = vunpack.c.l.b16 %v172
  %v846 = vunpack.c.h.b16 %v172
  %v847 = vunpack.c.l.b16 %v173
  %v848 = vunpack.c.h.b16 %v173
  %v849 = vunpack.c.l.b16 %v174
  %v850 = vunpack.c.h.b16 %v174
  %v851 = vunpack.c.l.b16 %v175
  %v852 = vunpack.c.h.b16 %v175
  %v853 = vunpack.c.l.b16 %v176
  %v854 = vunpack.c.h.b16 %v176
  %v855 = vunpack.c.l.b16 %v177
  %v856 = vunpack.c.h.b16 %v177
  %v857 = vunpack.c.l.b16 %v178
  %v858 = vunpack.c.h.b16 %v178
  %v859 = vunpack.c.l.b16 %v179
  %v860 = vunpack.c.h.b16 %v179
  %v861 = vunpack.c.l.b16 %v180
  %v862 = vunpack.c.h.b16 %v180
  %v863 = vunpack.c.l.b16 %v181
  %v864 = vunpack.c.h.b16 %v181
  %v865 = vunpack.c.l.b16 %v182
  %v866 = vunpack.c.h.b16 %v182
  %v867 = vunpack.c.l.b16 %v183
  %v868 = vunpack.c.h.b16 %v183
  %v869 = vunpack.c.l.b16 %v184
  %v870 = vunpack.c.h.b16 %v184
  %v871 = vunpack.c.l.b16 %v185
  %v872 = vunpack.c.h.b16 %v185
  %v873 = vunpack.c.l.b16 %v186
  %v874 = vunpack.c.h.b16 %v186
  %v875 = vunpack.c.l.b16 %v187
  %v876 = vunpack.c.h.b16 %v187
  %v877 = vunpack.c.l.b16 %v188
  %v878 = vunpack.c.h.b16 %v188
  %v879 = vunpack.c.l.b16 %v189
  %v880 = vunpack.c.h.b16 %v189
  %v881 = vunpack.c.l.b16 %v190
  %v882 = vunpack.c.h.b16 %v190
  %v883 = vunpack.c.l.b16 %v191
  %v884 = vunpack.c.h.b16 %v191
  %v885 = vunpack.c.l.b16 %v192
  %v886 = vunpack.c.h.b16 %v192
  %v887 = vunpack.c.l.b16 %v193
  %v888 = vunpack.c.h.b16 %v193
  %v889 = vunpack.c.l.b16 %v194
  %v890 = vunpack.c.h.b16 %v194
  %v891 = vunpack.c.l.b16 %v195
  %v892 = vunpack.c.h.b16 %v195
  %v893 = vunpack.c.l.b16 %v196
  %v894 = vunpack.c.h.b16 %v196
  %v895 = vunpack.c.l.b16 %v197
  %v896 = vunpack.c.h.b16 %v197
  %v897 = vunpack.c.l.b16 %v198
  %v898 = vunpack.c.h.b16 %v198
  %v899 = vunpack.c.l.b16 %v199
  %v900 = vunpack.c.h.b16 %v199
  %v901 = vunpack.c.l.b16 %v200
  %v902 = vunpack.c.h.b16 %v200
  %v903 = vunpack.c.l.b16 %v201
  %v904 = vunpack.c.h.b16 %v201
  %v905 = vunpack.c.l.b16 %v202
  %v906 = vunpack.c.h.b16 %v202
  %v907 = vunpack.c.l.b16 %v203
  %v908 = vunpack.c.h.b16 %v203
  %v909 = vunpack.c.l.b16 %v204
  %v910 = vunpack.c.h.b16 %v204
  %v911 = vunpack.c.l.b16 %v205
  %v912 = vunpack.c.h.b16 %v205
  %v913 = vunpack.c.l.b16 %v206
  %v914 = vunpack.c.h.b16 %v206
  %v915 = vunpack.c.l.b16 %v207
  %v916 = vunpack.c.h.b16 %v207
  %v917 = vunpack.c.l.b16 %v208
  %v918 = vunpack.c.h.b16 %v208
  %v919 = vunpack.c.l.b16 %v209
  %v920 = vunpack.c.h.b16 %v209
  %v921 = vunpack.c.l.b16 %v210
  %v922 = vunpack.c.h.b16 %v210
  %v923 = vunpack.c.l.b16 %v211
  %v924 = vunpack.c.h.b16 %v211
  %v925 = vunpack.c.l.b16 %v212
  %v926 = vunpack.c.h.b16 %v212
  %v927 = vunpack.c.l.b16 %v213
  %v928 = vunpack.c.h.b16 %v213
  %v929 = vunpack.c.l.b16 %v214
  %v930 = vunpack.c.h.b16 %v214
  %v931 = vunpack.c.l.b16 %v215
  %v932 = vunpack.c.h.b16 %v215
  %v933 = vunpack.c.l.b16 %v216
  %v934 = vunpack.c.h.b16 %v216
  %v935 = vunpack.c.l.b16 %v217
  %v936 = vunpack.c.h.b16 %v217
  %v937 = vunpack.c.l.b16 %v218
  %v938 = vunpack.c.h.b16 %v218
  %v939 = vunpack.c.l.b16 %v219
  %v940 = vunpack.c.h.b16 %v219
  %v941 = vunpack.c.l.b16 %v220
  %v942 = vunpack.c.h.b16 %v220
  %v943 = vunpack.c.l.b16 %v221
  %v944 = vunpack.c.h.b16 %v221
  %v945 = vunpack.c.l.b16 %v222
  %v946 = vunpack.c.h.b16 %v222
  %v947 = vunpack.c.l.b16 %v223
  %v948 = vunpack.c.h.b16 %v223
  %v949 = vunpack.c.l.b16 %v224
  %v950 = vunpack.c.h.b16 %v224
  %v951 = vunpack.c.l.b16 %v225
  %v952 = vunpack.c.h.b16 %v225
  %v953 = vunpack.c.l.b16 %v226
  %v954 = vunpack.c.h.b16 %v226
  %v955 = vunpack.c.l.b16 %v227
  %v956 = vunpack.c.h.b16 %v227
  %v957 = vunpack.c.l.b16 %v228
  %v958 = vunpack.c.h.b16 %v228
  %v959 = vunpack.c.l.b16 %v229
  %v960 = vunpack.c.h.b16 %v229
  %v961 = vunpack.c.l.b16 %v230
  %v962 = vunpack.c.h.b16 %v230
  %v963 = vunpack.c.l.b16 %v231
  %v964 = vunpack.c.h.b16 %v231
  %v965 = vunpack.c.l.b16 %v232
  %v966 = vunpack.c.h.b16 %v232
  %v967 = vunpack.c.l.b16 %v233
  %v968 = vunpack.c.h.b16 %v233
  %v969 = vunpack.c.l.b16 %v234
  %v970 = vunpack.c.h.b16 %v234
  %v971 = vunpack.c.l.b16 %v235
  %v972 = vunpack.c.h.b16 %v235
  %v973 = vunpack.c.l.b16 %v236
  %v974 = vunpack.c.h.b16 %v236
  %v975 = vunpack.c.l.b16 %v237
  %v976 = vunpack.c.h.b16 %v237
  %v977 = vunpack.c.l.b16 %v238
  %v978 = vunpack.c.h.b16 %v238
  %v979 = vunpack.c.l.b16 %v239
  %v980 = vunpack.c.h.b16 %v239
  %v981 = vunpack.c.l.b16 %v240
  %v982 = vunpack.c.h.b16 %v240
  %v983 = vunpack.c.l.b16 %v241
  %v984 = vunpack.c.h.b16 %v241
  %v985 = vunpack.c.l.b16 %v242
  %v986 = vunpack.c.h.b16 %v242
  %v987 = vunpack.c.l.b16 %v243
  %v988 = vunpack.c.h.b16 %v243
  %v989 = vunpack.c.l.b16 %v244
  %v990 = vunpack.c.h.b16 %v244
  %v991 = vunpack.c.l.b16 %v245
  %v992 = vunpack.c.h.b16 %v245
  %v993 = vunpack.c.l.b16 %v246
  %v994 = vunpack.c.h.b16 %v246
  %v995 = vunpack.c.l.b16 %v247
  %v996 = vunpack.c.h.b16 %v247
  %v997 = vunpack.c.l.b16 %v248
  %v998 = vunpack.c.h.b16 %v248
  %v999 = vunpack.c.l.b16 %v249
  %v1000 = vunpack.c.h.b16 %v249
  %v1001 = vunpack.c.l.b16 %v250
  %v1002 = vunpack.c.h.b16 %v250
  %v1003 = vunpack.c.l.b16 %v251
  %v1004 = vunpack.c.h.b16 %v251
  %v1005 = vunpack.c.l.b16 %v252
  %v1006 = vunpack.c.h.b16 %v252
  %v1007 = vunpack.c.l.b16 %v253
  %v1008 = vunpack.c.h.b16 %v253
  %v1009 = vunpack.c.l.b16 %v254
  %v1010 = vunpack.c.h.b16 %v254
  %v1011 = vunpack.c.l.b16 %v255
  %v1012 = vunpack.c.h.b16 %v255
  %v1013 = vunpack.c.l.b16 %v256
  %v1014 = vunpack.c.h.b16 %v256
  %v1015 = vunpack.c.l.b16 %v257
  %v1016 = vunpack.c.h.b16 %v257
  %v1017 = vunpack.c.l.b16 %v258
  %v1018 = vunpack.c.h.b16 %v258
  %v1019 = vunpack.c.l.b16 %v259
  %v1020 = vunpack.c.h.b16 %v259
  %v1021 = vunpack.c.l.b16 %v260
  %v1022 = vunpack.c.h.b16 %v260
  %v1023 = vunpack.c.l.b16 %v261
  %v1024 = vunpack.c.h.b16 %v261
  %v1025 = vunpack.c.l.b16 %v262
  %v1026 = vunpack.c.h.b16 %v262
  %v1027 = vunpack.c.l.b16 %v263
  %v1028 = vunpack.c.h.b16 %v263
  %v1029 = vunpack.c.l.b16 %v264
  %v1030 = vunpack.c.h.b16 %v264
  %v1031 = vunpack.c.l.b16 %v265
  %v1032 = vunpack.c.h.b16 %v265
  %v1033 = vunpack.c.l.b16 %v266
  %v1034 = vunpack.c.h.b16 %v266
  %v1035 = vunpack.c.l.b16 %v267
  %v1036 = vunpack.c.h.b16 %v267
  %v1037 = vunpack.c.l.b16 %v268
  %v1038 = vunpack.c.h.b16 %v268
  %v1039 = vunpack.c.l.b16 %v269
  %v1040 = vunpack.c.h.b16 %v269
  %v1041 = vunpack.c.l.b16 %v270
  %v1042 = vunpack.c.h.b16 %v270
  %v1043 = vunpack.c.l.b16 %v271
  %v1044 = vunpack.c.h.b16 %v271
  %v1045 = vunpack.c.l.b16 %v272
  %v1046 = vunpack.c.h.b16 %v272
  %v1047 = vunpack.c.l.b16 %v273
  %v1048 = vunpack.c.h.b16 %v273
  %v1049 = vpack.c.b16 %v553, %v537
  %v1050 = vpack.c.b16 %v554, %v538
  %v1051 = vpack.c.b16 %v555, %v539
  %v1052 = vpack.c.b16 %v556, %v540
  %v1053 = vpack.c.b16 %v557, %v541
  %v1054 = vpack.c.b16 %v558, %v542
  %v1055 = vpack.c.b16 %v559, %v543
  %v1056 = vpack.c.b16 %v560, %v544
  %v1057 = vpack.c.b16 %v561, %v545
  %v1058 = vpack.c.b16 %v562, %v546
  %v1059 = vpack.c.b16 %v563, %v547
  %v1060 = vpack.c.b16 %v564, %v548
  %v1061 = vpack.c.b16 %v565, %v549
  %v1062 = vpack.c.b16 %v566, %v550
  %v1063 = vpack.c.b16 %v567, %v551
  %v1064 = vpack.c.b16 %v568, %v552
  %v1065 = vpack.c.b16 %v585, %v569
  %v1066 = vpack.c.b16 %v586, %v570
  %v1067 = vpack.c.b16 %v587, %v571
  %v1068 = vpack.c.b16 %v588, %v572
  %v1069 = vpack.c.b16 %v589, %v573
  %v1070 = vpack.c.b16 %v590, %v574
  %v1071 = vpack.c.b16 %v591, %v575
  %v1072 = vpack.c.b16 %v592, %v576
  %v1073 = vpack.c.b16 %v593, %v577
  %v1074 = vpack.c.b16 %v594, %v578
  %v1075 = vpack.c.b16 %v595, %v579
  %v1076 = vpack.c.b16 %v596, %v580
  %v1077 = vpack.c.b16 %v597, %v581
  %v1078 = vpack.c.b16 %v598, %v582
  %v1079 = vpack.c.b16 %v599, %v583
  %v1080 = vpack.c.b16 %v600, %v584
  %v1081 = vpack.c.b16 %v617, %v601
  %v1082 = vpack.c.b16 %v618, %v602
  %v1083 = vpack.c.b16 %v619, %v603
  %v1084 = vpack.c.b16 %v620, %v604
  %v1085 = vpack.c.b16 %v621, %v605
  %v1086 = vpack.c.b16 %v622, %v606
  %v1087 = vpack.c.b16 %v623, %v607
  %v1088 = vpack.c.b16 %v624, %v608
  %v1089 = vpack.c.b16 %v625, %v609
  %v1090 = vpack.c.b16 %v626, %v610
  %v1091 = vpack.c.b16 %v627, %v611
  %v1092 = vpack.c.b16 %v628, %v612
  %v1093 = vpack.c.b16 %v629, %v613
  %v1094 = vpack.c.b16 %v630, %v614
  %v1095 = vpack.c.b16 %v631, %v615
  %v1096 = vpack.c.b16 %v632, %v616
  %v1097 = vpack.c.b16 %v649, %v633
  %v1098 = vpack.c.b16 %v650, %v634
  %v1099 = vpack.c.b16 %v651, %v635
  %v1100 = vpack.c.b16 %v652, %v636
  %v1101 = vpack.c.b16 %v653, %v637
  %v1102 = vpack.c.b16 %v654, %v638
  %v1103 = vpack.c.b16 %v655, %v639
  %v1104 = vpack.c.b16 %v656, %v640
  %v1105 = vpack.c.b16 %v657, %v641
  %v1106 = vpack.c.b16 %v658, %v642
  %v1107 = vpack.c.b16 %v659, %v643
  %v1108 = vpack.c.b16 %v660, %v644
  %v1109 = vpack.c.b16 %v661, %v645
  %v1110 = vpack.c.b16 %v662, %v646
  %v1111 = vpack.c.b16 %v663, %v647
  %v1112 = vpack.c.b16 %v664, %v648
  %v1113 = vpack.c.b16 %v681, %v665
  %v1114 = vpack.c.b16 %v682, %v666
  %v1115 = vpack.c.b16 %v683, %v667
  %v1116 = vpack.c.b16 %v684, %v668
  %v1117 = vpack.c.b16 %v685, %v669
  %v1118 = vpack.c.b16 %v686, %v670
  %v1119 = vpack.c.b16 %v687, %v671
  %v1120 = vpack.c.b16 %v688, %v672
  %v1121 = vpack.c.b16 %v689, %v673
  %v1122 = vpack.c.b16 %v690, %v674
  %v1123 = vpack.c.b16 %v691, %v675
  %v1124 = vpack.c.b16 %v692, %v676
  %v1125 = vpack.c.b16 %v693, %v677
  %v1126 = vpack.c.b16 %v694, %v678
  %v1127 = vpack.c.b16 %v695, %v679
  %v1128 = vpack.c.b16 %v696, %v680
  %v1129 = vpack.c.b16 %v713, %v697
  %v1130 = vpack.c.b16 %v714, %v698
  %v1131 = vpack.c.b16 %v715, %v699
  %v1132 = vpack.c.b16 %v716, %v700
  %v1133 = vpack.c.b16 %v717, %v701
  %v1134 = vpack.c.b16 %v718, %v702
  %v1135 = vpack.c.b16 %v719, %v703
  %v1136 = vpack.c.b16 %v720, %v704
  %v1137 = vpack.c.b16 %v721, %v705
  %v1138 = vpack.c.b16 %v722, %v706
  %v1139 = vpack.c.b16 %v723, %v707
  %v1140 = vpack.c.b16 %v724, %v708
  %v1141 = vpack.c.b16 %v725, %v709
  %v1142 = vpack.c.b16 %v726, %v710
  %v1143 = vpack.c.b16 %v727, %v711
  %v1144 = vpack.c.b16 %v728, %v712
  %v1145 = vpack.c.b16 %v745, %v729
  %v1146 = vpack.c.b16 %v746, %v730
  %v1147 = vpack.c.b16 %v747, %v731
  %v1148 = vpack.c.b16 %v748, %v732
  %v1149 = vpack.c.b16 %v749, %v733
  %v1150 = vpack.c.b16 %v750, %v734
  %v1151 = vpack.c.b16 %v751, %v735
  %v1152 = vpack.c.b16 %v752, %v736
  %v1153 = vpack.c.b16 %v753, %v737
  %v1154 = vpack.c.b16 %v754, %v738
  %v1155 = vpack.c.b16 %v755, %v739
  %v1156 = vpack.c.b16 %v756, %v740
  %v1157 = vpack.c.b16 %v757, %v741
  %v1158 = vpack.c.b16 %v758, %v742
  %v1159 = vpack.c.b16 %v759, %v743
  %v1160 = vpack.c.b16 %v760, %v744
  %v1161 = vpack.c.b16 %v777, %v761
  %v1162 = vpack.c.b16 %v778, %v762
  %v1163 = vpack.c.b16 %v779, %v763
  %v1164 = vpack.c.b16 %v780, %v764
  %v1165 = vpack.c.b16 %v781, %v765
  %v1166 = vpack.c.b16 %v782, %v766
  %v1167 = vpack.c.b16 %v783, %v767
  %v1168 = vpack.c.b16 %v784, %v768
  %v1169 = vpack.c.b16 %v785, %v769
  %v1170 = vpack.c.b16 %v786, %v770
  %v1171 = vpack.c.b16 %v787, %v771
  %v1172 = vpack.c.b16 %v788, %v772
  %v1173 = vpack.c.b16 %v789, %v773
  %v1174 = vpack.c.b16 %v790, %v774
  %v1175 = vpack.c.b16 %v791, %v775
  %v1176 = vpack.c.b16 %v792, %v776
  %v1177 = vpack.c.b16 %v809, %v793
  %v1178 = vpack.c.b16 %v810, %v794
  %v1179 = vpack.c.b16 %v811, %v795
  %v1180 = vpack.c.b16 %v812, %v796
  %v1181 = vpack.c.b16 %v813, %v797
  %v1182 = vpack.c.b16 %v814, %v798
  %v1183 = vpack.c.b16 %v815, %v799
  %v1184 = vpack.c.b16 %v816, %v800
  %v1185 = vpack.c.b16 %v817, %v801
  %v1186 = vpack.c.b16 %v818, %v802
  %v1187 = vpack.c.b16 %v819, %v803
  %v1188 = vpack.c.b16 %v820, %v804
  %v1189 = vpack.c.b16 %v821, %v805
  %v1190 = vpack.c.b16 %v822, %v806
  %v1191 = vpack.c.b16 %v823, %v807
  %v1192 = vpack.c.b16 %v824, %v808
  %v1193 = vpack.c.b16 %v841, %v825
  %v1194 = vpack.c.b16 %v842, %v826
  %v1195 = vpack.c.b16 %v843, %v827
  %v1196 = vpack.c.b16 %v844, %v828
  %v1197 = vpack.c.b16 %v845, %v829
  %v1198 = vpack.c.b16 %v846, %v830
  %v1199 = vpack.c.b16 %v847, %v831
  %v1200 = vpack.c.b16 %v848, %v832
  %v1201 = vpack.c.b16 %v849, %v833
  %v1202 = vpack.c.b16 %v850, %v834
  %v1203 = vpack.c.b16 %v851, %v835
  %v1204 = vpack.c.b16 %v852, %v836
  %v1205 = vpack.c.b16 %v853, %v837
  %v1206 = vpack.c.b16 %v854, %v838
  %v1207 = vpack.c.b16 %v855, %v839
  %v1208 = vpack.c.b16 %v856, %v840
  %v1209 = vpack.c.b16 %v873, %v857
  %v1210 = vpack.c.b16 %v874, %v858
  %v1211 = vpack.c.b16 %v875, %v859
  %v1212 = vpack.c.b16 %v876, %v860
  %v1213 = vpack.c.b16 %v877, %v861
  %v1214 = vpack.c.b16 %v878, %v862
  %v1215 = vpack.c.b16 %v879, %v863
  %v1216 = vpack.c.b16 %v880, %v864
  %v1217 = vpack.c.b16 %v881, %v865
  %v1218 = vpack.c.b16 %v882, %v866
  %v1219 = vpack.c.b16 %v883, %v867
  %v1220 = vpack.c.b16 %v884, %v868
  %v1221 = vpack.c.b16 %v885, %v869
  %v1222 = vpack.c.b16 %v886, %v870
  %v1223 = vpack.c.b16 %v887, %v871
  %v1224 = vpack.c.b16 %v888, %v872
  %v1225 = vpack.c.b16 %v905, %v889
  %v1226 = vpack.c.b16 %v906, %v890
  %v1227 = vpack.c.b16 %v907, %v891
  %v1228 = vpack.c.b16 %v908, %v892
  %v1229 = vpack.c.b16 %v909, %v893
  %v1230 = vpack.c.b16 %v910, %v894
  %v1231 = vpack.c.b16 %v911, %v895
  %v1232 = vpack.c.b16 %v912, %v896
  %v1233 = vpack.c.b16 %v913, %v897
  %v1234 = vpack.c.b16 %v914, %v898
  %v1235 = vpack.c.b16 %v915, %v899
  %v1236 = vpack.c.b16 %v916, %v900
  %v1237 = vpack.c.b16 %v917, %v901
  %v1238 = vpack.c.b16 %v918, %v902
  %v1239 = vpack.c.b16 %v919, %v903
  %v1240 = vpack.c.b16 %v920, %v904
  %v1241 = vpack.c.b16 %v937, %v921
  %v1242 = vpack.c.b16 %v938, %v922
  %v1243 = vpack.c.b16 %v939, %v923
  %v1244 = vpack.c.b16 %v940, %v924
  %v1245 = vpack.c.b16 %v941, %v925
  %v1246 = vpack.c.b16 %v942, %v926
  %v1247 = vpack.c.b16 %v943, %v927
  %v1248 = vpack.c.b16 %v944, %v928
  %v1249 = vpack.c.b16 %v945, %v929
  %v1250 = vpack.c.b16 %v946, %v930
  %v1251 = vpack.c.b16 %v947, %v931
  %v1252 = vpack.c.b16 %v948, %v932
  %v1253 = vpack.c.b16 %v949, %v933
  %v1254 = vpack.c.b16 %v950, %v934
  %v1255 = vpack.c.b16 %v951, %v935
  %v1256 = vpack.c.b16 %v952, %v936
  %v1257 = vpack.c.b16 %v969, %v953
  %v1258 = vpack.c.b16 %v970, %v954
  %v1259 = vpack.c.b16 %v971, %v955
  %v1260 = vpack.c.b16 %v972, %v956
  %v1261 = vpack.c.b16 %v973, %v957
  %v1262 = vpack.c.b16 %v974, %v958
  %v1263 = vpack.c.b16 %v975, %v959
  %v1264 = vpack.c.b16 %v976, %v960
  %v1265 = vpack.c.b16 %v977, %v961
  %v1266 = vpack.c.b16 %v978, %v962
  %v1267 = vpack.c.b16 %v979, %v963
  %v1268 = vpack.c.b16 %v980, %v964
  %v1269 = vpack.c.b16 %v981, %v965
  %v1270 = vpack.c.b16 %v982, %v966
  %v1271 = vpack.c.b16 %v983, %v967
  %v1272 = vpack.c.b16 %v984, %v968
  %v1273 = vpack.c.b16 %v1001, %v985
  %v1274 = vpack.c.b16 %v1002, %v986
  %v1275 = vpack.c.b16 %v1003, %v987
  %v1276 = vpack.c.b16 %v1004, %v988
  %v1277 = vpack.c.b16 %v1005, %v989
  %v1278 = vpack.c.b16 %v1006, %v990
  %v1279 = vpack.c.b16 %v1007, %v991
  %v1280 = vpack.c.b16 %v1008, %v992
  %v1281 = vpack.c.b16 %v1009, %v993
  %v1282 = vpack.c.b16 %v1010, %v994
  %v1283 = vpack.c.b16 %v1011, %v995
  %v1284 = vpack.c.b16 %v1012, %v996
  %v1285 = vpack.c.b16 %v1013, %v997
  %v1286 = vpack.c.b16 %v1014, %v998
  %v1287 = vpack.c.b16 %v1015, %v999
  %v1288 = vpack.c.b16 %v1016, %v1000
  %v1289 = vpack.c.b16 %v1033, %v1017
  %v1290 = vpack.c.b16 %v1034, %v1018
  %v1291 = vpack.c.b16 %v1035, %v1019
  %v1292 = vpack.c.b16 %v1036, %v1020
  %v1293 = vpack.c.b16 %v1037, %v1021
  %v1294 = vpack.c.b16 %v1038, %v1022
  %v1295 = vpack.c.b16 %v1039, %v1023
  %v1296 = vpack.c.b16 %v1040, %v1024
  %v1297 = vpack.c.b16 %v1041, %v1025
  %v1298 = vpack.c.b16 %v1042, %v1026
  %v1299 = vpack.c.b16 %v1043, %v1027
  %v1300 = vpack.c.b16 %v1044, %v1028
  %v1301 = vpack.c.b16 %v1045, %v1029
  %v1302 = vpack.c.b16 %v1046, %v1030
  %v1303 = vpack.c.b16 %v1047, %v1031
  %v1304 = vpack.c.b16 %v1048, %v1032
  %1561 = vmatpush.bf16.msra.mxu0 %v1161
  %1562 = vmatpush.bf16.msra.mxu0 %v1145
  %1563 = vmatpush.bf16.msra.mxu0 %v1129
  %1564 = vmatpush.bf16.msra.mxu0 %v1113
  %1565 = vmatpush.bf16.msra.mxu0 %v1097
  %1566 = vmatpush.bf16.msra.mxu0 %v1081
  %1567 = vmatpush.bf16.msra.mxu0 %v1065
  %1568 = vmatpush.bf16.msra.mxu0 %v1049
  %1569 = vmatmul.bf16.gmra.mxu0 %v277
  %v1570 = vpop.f32.mrf.mxu0
  %v1571 = vadd.f32 0.0, %v1570
  %v1572 = vpop.f32.mrf.mxu0
  %1573 = vdwg.mxu0
  %1574 = vmatpush.bf16.msra.mxu0 %v1289
  %1575 = vmatpush.bf16.msra.mxu0 %v1273
  %1576 = vmatpush.bf16.msra.mxu0 %v1257
  %1577 = vmatpush.bf16.msra.mxu0 %v1241
  %1578 = vmatpush.bf16.msra.mxu0 %v1225
  %1579 = vmatpush.bf16.msra.mxu0 %v1209
  %1580 = vmatpush.bf16.msra.mxu0 %v1193
  %1581 = vmatpush.bf16.msra.mxu0 %v1177
  %1582 = vmatmul.bf16.gmra.mxu0 %v278
  %v1583 = vpop.f32.mrf.mxu0
  %v1584 = vadd.f32 %v1571, %v1583
  %v1585 = vpop.f32.mrf.mxu0
  %1586 = vdwg.mxu0
  %1587 = vmatpush.bf16.msra.mxu0 %v1162
  %1588 = vmatpush.bf16.msra.mxu0 %v1146
  %1589 = vmatpush.bf16.msra.mxu0 %v1130
  %1590 = vmatpush.bf16.msra.mxu0 %v1114
  %1591 = vmatpush.bf16.msra.mxu0 %v1098
  %1592 = vmatpush.bf16.msra.mxu0 %v1082
  %1593 = vmatpush.bf16.msra.mxu0 %v1066
  %1594 = vmatpush.bf16.msra.mxu0 %v1050
  %1595 = vmatmul.bf16.gmra.mxu0 %v277
  %v1596 = vpop.f32.mrf.mxu0
  %v1597 = vadd.f32 0.0, %v1596
  %v1598 = vpop.f32.mrf.mxu0
  %1599 = vdwg.mxu0
  %1600 = vmatpush.bf16.msra.mxu0 %v1290
  %1601 = vmatpush.bf16.msra.mxu0 %v1274
  %1602 = vmatpush.bf16.msra.mxu0 %v1258
  %1603 = vmatpush.bf16.msra.mxu0 %v1242
  %1604 = vmatpush.bf16.msra.mxu0 %v1226
  %1605 = vmatpush.bf16.msra.mxu0 %v1210
  %1606 = vmatpush.bf16.msra.mxu0 %v1194
  %1607 = vmatpush.bf16.msra.mxu0 %v1178
  %1608 = vmatmul.bf16.gmra.mxu0 %v278
  %v1609 = vpop.f32.mrf.mxu0
  %v1610 = vadd.f32 %v1597, %v1609
  %v1611 = vpop.f32.mrf.mxu0
  %1612 = vdwg.mxu0
  %1613 = vmatpush.bf16.msra.mxu0 %v1163
  %1614 = vmatpush.bf16.msra.mxu0 %v1147
  %1615 = vmatpush.bf16.msra.mxu0 %v1131
  %1616 = vmatpush.bf16.msra.mxu0 %v1115
  %1617 = vmatpush.bf16.msra.mxu0 %v1099
  %1618 = vmatpush.bf16.msra.mxu0 %v1083
  %1619 = vmatpush.bf16.msra.mxu0 %v1067
  %1620 = vmatpush.bf16.msra.mxu0 %v1051
  %1621 = vmatmul.bf16.gmra.mxu0 %v277
  %v1622 = vpop.f32.mrf.mxu0
  %v1623 = vadd.f32 0.0, %v1622
  %v1624 = vpop.f32.mrf.mxu0
  %1625 = vdwg.mxu0
  %1626 = vmatpush.bf16.msra.mxu0 %v1291
  %1627 = vmatpush.bf16.msra.mxu0 %v1275
  %1628 = vmatpush.bf16.msra.mxu0 %v1259
  %1629 = vmatpush.bf16.msra.mxu0 %v1243
  %1630 = vmatpush.bf16.msra.mxu0 %v1227
  %1631 = vmatpush.bf16.msra.mxu0 %v1211
  %1632 = vmatpush.bf16.msra.mxu0 %v1195
  %1633 = vmatpush.bf16.msra.mxu0 %v1179
  %1634 = vmatmul.bf16.gmra.mxu0 %v278
  %v1635 = vpop.f32.mrf.mxu0
  %v1636 = vadd.f32 %v1623, %v1635
  %v1637 = vpop.f32.mrf.mxu0
  %1638 = vdwg.mxu0
  %1639 = vmatpush.bf16.msra.mxu0 %v1164
  %1640 = vmatpush.bf16.msra.mxu0 %v1148
  %1641 = vmatpush.bf16.msra.mxu0 %v1132
  %1642 = vmatpush.bf16.msra.mxu0 %v1116
  %1643 = vmatpush.bf16.msra.mxu0 %v1100
  %1644 = vmatpush.bf16.msra.mxu0 %v1084
  %1645 = vmatpush.bf16.msra.mxu0 %v1068
  %1646 = vmatpush.bf16.msra.mxu0 %v1052
  %1647 = vmatmul.bf16.gmra.mxu0 %v277
  %v1648 = vpop.f32.mrf.mxu0
  %v1649 = vadd.f32 0.0, %v1648
  %v1650 = vpop.f32.mrf.mxu0
  %1651 = vdwg.mxu0
  %1652 = vmatpush.bf16.msra.mxu0 %v1292
  %1653 = vmatpush.bf16.msra.mxu0 %v1276
  %1654 = vmatpush.bf16.msra.mxu0 %v1260
  %1655 = vmatpush.bf16.msra.mxu0 %v1244
  %1656 = vmatpush.bf16.msra.mxu0 %v1228
  %1657 = vmatpush.bf16.msra.mxu0 %v1212
  %1658 = vmatpush.bf16.msra.mxu0 %v1196
  %1659 = vmatpush.bf16.msra.mxu0 %v1180
  %1660 = vmatmul.bf16.gmra.mxu0 %v278
  %v1661 = vpop.f32.mrf.mxu0
  %v1662 = vadd.f32 %v1649, %v1661
  %v1663 = vpop.f32.mrf.mxu0
  %1664 = vdwg.mxu0
  %1665 = vmatpush.bf16.msra.mxu0 %v1165
  %1666 = vmatpush.bf16.msra.mxu0 %v1149
  %1667 = vmatpush.bf16.msra.mxu0 %v1133
  %1668 = vmatpush.bf16.msra.mxu0 %v1117
  %1669 = vmatpush.bf16.msra.mxu0 %v1101
  %1670 = vmatpush.bf16.msra.mxu0 %v1085
  %1671 = vmatpush.bf16.msra.mxu0 %v1069
  %1672 = vmatpush.bf16.msra.mxu0 %v1053
  %1673 = vmatmul.bf16.gmra.mxu0 %v277
  %v1674 = vpop.f32.mrf.mxu0
  %v1675 = vadd.f32 0.0, %v1674
  %v1676 = vpop.f32.mrf.mxu0
  %1677 = vdwg.mxu0
  %1678 = vmatpush.bf16.msra.mxu0 %v1293
  %1679 = vmatpush.bf16.msra.mxu0 %v1277
  %1680 = vmatpush.bf16.msra.mxu0 %v1261
  %1681 = vmatpush.bf16.msra.mxu0 %v1245
  %1682 = vmatpush.bf16.msra.mxu0 %v1229
  %1683 = vmatpush.bf16.msra.mxu0 %v1213
  %1684 = vmatpush.bf16.msra.mxu0 %v1197
  %1685 = vmatpush.bf16.msra.mxu0 %v1181
  %1686 = vmatmul.bf16.gmra.mxu0 %v278
  %v1687 = vpop.f32.mrf.mxu0
  %v1688 = vadd.f32 %v1675, %v1687
  %v1689 = vpop.f32.mrf.mxu0
  %1690 = vdwg.mxu0
  %1691 = vmatpush.bf16.msra.mxu0 %v1166
  %1692 = vmatpush.bf16.msra.mxu0 %v1150
  %1693 = vmatpush.bf16.msra.mxu0 %v1134
  %1694 = vmatpush.bf16.msra.mxu0 %v1118
  %1695 = vmatpush.bf16.msra.mxu0 %v1102
  %1696 = vmatpush.bf16.msra.mxu0 %v1086
  %1697 = vmatpush.bf16.msra.mxu0 %v1070
  %1698 = vmatpush.bf16.msra.mxu0 %v1054
  %1699 = vmatmul.bf16.gmra.mxu0 %v277
  %v1700 = vpop.f32.mrf.mxu0
  %v1701 = vadd.f32 0.0, %v1700
  %v1702 = vpop.f32.mrf.mxu0
  %1703 = vdwg.mxu0
  %1704 = vmatpush.bf16.msra.mxu0 %v1294
  %1705 = vmatpush.bf16.msra.mxu0 %v1278
  %1706 = vmatpush.bf16.msra.mxu0 %v1262
  %1707 = vmatpush.bf16.msra.mxu0 %v1246
  %1708 = vmatpush.bf16.msra.mxu0 %v1230
  %1709 = vmatpush.bf16.msra.mxu0 %v1214
  %1710 = vmatpush.bf16.msra.mxu0 %v1198
  %1711 = vmatpush.bf16.msra.mxu0 %v1182
  %1712 = vmatmul.bf16.gmra.mxu0 %v278
  %v1713 = vpop.f32.mrf.mxu0
  %v1714 = vadd.f32 %v1701, %v1713
  %v1715 = vpop.f32.mrf.mxu0
  %1716 = vdwg.mxu0
  %1717 = vmatpush.bf16.msra.mxu0 %v1167
  %1718 = vmatpush.bf16.msra.mxu0 %v1151
  %1719 = vmatpush.bf16.msra.mxu0 %v1135
  %1720 = vmatpush.bf16.msra.mxu0 %v1119
  %1721 = vmatpush.bf16.msra.mxu0 %v1103
  %1722 = vmatpush.bf16.msra.mxu0 %v1087
  %1723 = vmatpush.bf16.msra.mxu0 %v1071
  %1724 = vmatpush.bf16.msra.mxu0 %v1055
  %1725 = vmatmul.bf16.gmra.mxu0 %v277
  %v1726 = vpop.f32.mrf.mxu0
  %v1727 = vadd.f32 0.0, %v1726
  %v1728 = vpop.f32.mrf.mxu0
  %1729 = vdwg.mxu0
  %1730 = vmatpush.bf16.msra.mxu0 %v1295
  %1731 = vmatpush.bf16.msra.mxu0 %v1279
  %1732 = vmatpush.bf16.msra.mxu0 %v1263
  %1733 = vmatpush.bf16.msra.mxu0 %v1247
  %1734 = vmatpush.bf16.msra.mxu0 %v1231
  %1735 = vmatpush.bf16.msra.mxu0 %v1215
  %1736 = vmatpush.bf16.msra.mxu0 %v1199
  %1737 = vmatpush.bf16.msra.mxu0 %v1183
  %1738 = vmatmul.bf16.gmra.mxu0 %v278
  %v1739 = vpop.f32.mrf.mxu0
  %v1740 = vadd.f32 %v1727, %v1739
  %v1741 = vpop.f32.mrf.mxu0
  %1742 = vdwg.mxu0
  %1743 = vmatpush.bf16.msra.mxu0 %v1168
  %1744 = vmatpush.bf16.msra.mxu0 %v1152
  %1745 = vmatpush.bf16.msra.mxu0 %v1136
  %1746 = vmatpush.bf16.msra.mxu0 %v1120
  %1747 = vmatpush.bf16.msra.mxu0 %v1104
  %1748 = vmatpush.bf16.msra.mxu0 %v1088
  %1749 = vmatpush.bf16.msra.mxu0 %v1072
  %1750 = vmatpush.bf16.msra.mxu0 %v1056
  %1751 = vmatmul.bf16.gmra.mxu0 %v277
  %v1752 = vpop.f32.mrf.mxu0
  %v1753 = vadd.f32 0.0, %v1752
  %v1754 = vpop.f32.mrf.mxu0
  %1755 = vdwg.mxu0
  %1756 = vmatpush.bf16.msra.mxu0 %v1296
  %1757 = vmatpush.bf16.msra.mxu0 %v1280
  %1758 = vmatpush.bf16.msra.mxu0 %v1264
  %1759 = vmatpush.bf16.msra.mxu0 %v1248
  %1760 = vmatpush.bf16.msra.mxu0 %v1232
  %1761 = vmatpush.bf16.msra.mxu0 %v1216
  %1762 = vmatpush.bf16.msra.mxu0 %v1200
  %1763 = vmatpush.bf16.msra.mxu0 %v1184
  %1764 = vmatmul.bf16.gmra.mxu0 %v278
  %v1765 = vpop.f32.mrf.mxu0
  %v1766 = vadd.f32 %v1753, %v1765
  %v1767 = vpop.f32.mrf.mxu0
  %1768 = vdwg.mxu0
  %1769 = vmatpush.bf16.msra.mxu0 %v1169
  %1770 = vmatpush.bf16.msra.mxu0 %v1153
  %1771 = vmatpush.bf16.msra.mxu0 %v1137
  %1772 = vmatpush.bf16.msra.mxu0 %v1121
  %1773 = vmatpush.bf16.msra.mxu0 %v1105
  %1774 = vmatpush.bf16.msra.mxu0 %v1089
  %1775 = vmatpush.bf16.msra.mxu0 %v1073
  %1776 = vmatpush.bf16.msra.mxu0 %v1057
  %1777 = vmatmul.bf16.gmra.mxu0 %v277
  %v1778 = vpop.f32.mrf.mxu0
  %v1779 = vadd.f32 0.0, %v1778
  %v1780 = vpop.f32.mrf.mxu0
  %1781 = vdwg.mxu0
  %1782 = vmatpush.bf16.msra.mxu0 %v1297
  %1783 = vmatpush.bf16.msra.mxu0 %v1281
  %1784 = vmatpush.bf16.msra.mxu0 %v1265
  %1785 = vmatpush.bf16.msra.mxu0 %v1249
  %1786 = vmatpush.bf16.msra.mxu0 %v1233
  %1787 = vmatpush.bf16.msra.mxu0 %v1217
  %1788 = vmatpush.bf16.msra.mxu0 %v1201
  %1789 = vmatpush.bf16.msra.mxu0 %v1185
  %1790 = vmatmul.bf16.gmra.mxu0 %v278
  %v1791 = vpop.f32.mrf.mxu0
  %v1792 = vadd.f32 %v1779, %v1791
  %v1793 = vpop.f32.mrf.mxu0
  %1794 = vdwg.mxu0
  %1795 = vmatpush.bf16.msra.mxu0 %v1170
  %1796 = vmatpush.bf16.msra.mxu0 %v1154
  %1797 = vmatpush.bf16.msra.mxu0 %v1138
  %1798 = vmatpush.bf16.msra.mxu0 %v1122
  %1799 = vmatpush.bf16.msra.mxu0 %v1106
  %1800 = vmatpush.bf16.msra.mxu0 %v1090
  %1801 = vmatpush.bf16.msra.mxu0 %v1074
  %1802 = vmatpush.bf16.msra.mxu0 %v1058
  %1803 = vmatmul.bf16.gmra.mxu0 %v277
  %v1804 = vpop.f32.mrf.mxu0
  %v1805 = vadd.f32 0.0, %v1804
  %v1806 = vpop.f32.mrf.mxu0
  %1807 = vdwg.mxu0
  %1808 = vmatpush.bf16.msra.mxu0 %v1298
  %1809 = vmatpush.bf16.msra.mxu0 %v1282
  %1810 = vmatpush.bf16.msra.mxu0 %v1266
  %1811 = vmatpush.bf16.msra.mxu0 %v1250
  %1812 = vmatpush.bf16.msra.mxu0 %v1234
  %1813 = vmatpush.bf16.msra.mxu0 %v1218
  %1814 = vmatpush.bf16.msra.mxu0 %v1202
  %1815 = vmatpush.bf16.msra.mxu0 %v1186
  %1816 = vmatmul.bf16.gmra.mxu0 %v278
  %v1817 = vpop.f32.mrf.mxu0
  %v1818 = vadd.f32 %v1805, %v1817
  %v1819 = vpop.f32.mrf.mxu0
  %1820 = vdwg.mxu0
  %1821 = vmatpush.bf16.msra.mxu0 %v1171
  %1822 = vmatpush.bf16.msra.mxu0 %v1155
  %1823 = vmatpush.bf16.msra.mxu0 %v1139
  %1824 = vmatpush.bf16.msra.mxu0 %v1123
  %1825 = vmatpush.bf16.msra.mxu0 %v1107
  %1826 = vmatpush.bf16.msra.mxu0 %v1091
  %1827 = vmatpush.bf16.msra.mxu0 %v1075
  %1828 = vmatpush.bf16.msra.mxu0 %v1059
  %1829 = vmatmul.bf16.gmra.mxu0 %v277
  %v1830 = vpop.f32.mrf.mxu0
  %v1831 = vadd.f32 0.0, %v1830
  %v1832 = vpop.f32.mrf.mxu0
  %1833 = vdwg.mxu0
  %1834 = vmatpush.bf16.msra.mxu0 %v1299
  %1835 = vmatpush.bf16.msra.mxu0 %v1283
  %1836 = vmatpush.bf16.msra.mxu0 %v1267
  %1837 = vmatpush.bf16.msra.mxu0 %v1251
  %1838 = vmatpush.bf16.msra.mxu0 %v1235
  %1839 = vmatpush.bf16.msra.mxu0 %v1219
  %1840 = vmatpush.bf16.msra.mxu0 %v1203
  %1841 = vmatpush.bf16.msra.mxu0 %v1187
  %1842 = vmatmul.bf16.gmra.mxu0 %v278
  %v1843 = vpop.f32.mrf.mxu0
  %v1844 = vadd.f32 %v1831, %v1843
  %v1845 = vpop.f32.mrf.mxu0
  %1846 = vdwg.mxu0
  %1847 = vmatpush.bf16.msra.mxu0 %v1172
  %1848 = vmatpush.bf16.msra.mxu0 %v1156
  %1849 = vmatpush.bf16.msra.mxu0 %v1140
  %1850 = vmatpush.bf16.msra.mxu0 %v1124
  %1851 = vmatpush.bf16.msra.mxu0 %v1108
  %1852 = vmatpush.bf16.msra.mxu0 %v1092
  %1853 = vmatpush.bf16.msra.mxu0 %v1076
  %1854 = vmatpush.bf16.msra.mxu0 %v1060
  %1855 = vmatmul.bf16.gmra.mxu0 %v277
  %v1856 = vpop.f32.mrf.mxu0
  %v1857 = vadd.f32 0.0, %v1856
  %v1858 = vpop.f32.mrf.mxu0
  %1859 = vdwg.mxu0
  %1860 = vmatpush.bf16.msra.mxu0 %v1300
  %1861 = vmatpush.bf16.msra.mxu0 %v1284
  %1862 = vmatpush.bf16.msra.mxu0 %v1268
  %1863 = vmatpush.bf16.msra.mxu0 %v1252
  %1864 = vmatpush.bf16.msra.mxu0 %v1236
  %1865 = vmatpush.bf16.msra.mxu0 %v1220
  %1866 = vmatpush.bf16.msra.mxu0 %v1204
  %1867 = vmatpush.bf16.msra.mxu0 %v1188
  %1868 = vmatmul.bf16.gmra.mxu0 %v278
  %v1869 = vpop.f32.mrf.mxu0
  %v1870 = vadd.f32 %v1857, %v1869
  %v1871 = vpop.f32.mrf.mxu0
  %1872 = vdwg.mxu0
  %1873 = vmatpush.bf16.msra.mxu0 %v1173
  %1874 = vmatpush.bf16.msra.mxu0 %v1157
  %1875 = vmatpush.bf16.msra.mxu0 %v1141
  %1876 = vmatpush.bf16.msra.mxu0 %v1125
  %1877 = vmatpush.bf16.msra.mxu0 %v1109
  %1878 = vmatpush.bf16.msra.mxu0 %v1093
  %1879 = vmatpush.bf16.msra.mxu0 %v1077
  %1880 = vmatpush.bf16.msra.mxu0 %v1061
  %1881 = vmatmul.bf16.gmra.mxu0 %v277
  %v1882 = vpop.f32.mrf.mxu0
  %v1883 = vadd.f32 0.0, %v1882
  %v1884 = vpop.f32.mrf.mxu0
  %1885 = vdwg.mxu0
  %1886 = vmatpush.bf16.msra.mxu0 %v1301
  %1887 = vmatpush.bf16.msra.mxu0 %v1285
  %1888 = vmatpush.bf16.msra.mxu0 %v1269
  %1889 = vmatpush.bf16.msra.mxu0 %v1253
  %1890 = vmatpush.bf16.msra.mxu0 %v1237
  %1891 = vmatpush.bf16.msra.mxu0 %v1221
  %1892 = vmatpush.bf16.msra.mxu0 %v1205
  %1893 = vmatpush.bf16.msra.mxu0 %v1189
  %1894 = vmatmul.bf16.gmra.mxu0 %v278
  %v1895 = vpop.f32.mrf.mxu0
  %v1896 = vadd.f32 %v1883, %v1895
  %v1897 = vpop.f32.mrf.mxu0
  %1898 = vdwg.mxu0
  %1899 = vmatpush.bf16.msra.mxu0 %v1174
  %1900 = vmatpush.bf16.msra.mxu0 %v1158
  %1901 = vmatpush.bf16.msra.mxu0 %v1142
  %1902 = vmatpush.bf16.msra.mxu0 %v1126
  %1903 = vmatpush.bf16.msra.mxu0 %v1110
  %1904 = vmatpush.bf16.msra.mxu0 %v1094
  %1905 = vmatpush.bf16.msra.mxu0 %v1078
  %1906 = vmatpush.bf16.msra.mxu0 %v1062
  %1907 = vmatmul.bf16.gmra.mxu0 %v277
  %v1908 = vpop.f32.mrf.mxu0
  %v1909 = vadd.f32 0.0, %v1908
  %v1910 = vpop.f32.mrf.mxu0
  %1911 = vdwg.mxu0
  %1912 = vmatpush.bf16.msra.mxu0 %v1302
  %1913 = vmatpush.bf16.msra.mxu0 %v1286
  %1914 = vmatpush.bf16.msra.mxu0 %v1270
  %1915 = vmatpush.bf16.msra.mxu0 %v1254
  %1916 = vmatpush.bf16.msra.mxu0 %v1238
  %1917 = vmatpush.bf16.msra.mxu0 %v1222
  %1918 = vmatpush.bf16.msra.mxu0 %v1206
  %1919 = vmatpush.bf16.msra.mxu0 %v1190
  %1920 = vmatmul.bf16.gmra.mxu0 %v278
  %v1921 = vpop.f32.mrf.mxu0
  %v1922 = vadd.f32 %v1909, %v1921
  %v1923 = vpop.f32.mrf.mxu0
  %1924 = vdwg.mxu0
  %1925 = vmatpush.bf16.msra.mxu0 %v1175
  %1926 = vmatpush.bf16.msra.mxu0 %v1159
  %1927 = vmatpush.bf16.msra.mxu0 %v1143
  %1928 = vmatpush.bf16.msra.mxu0 %v1127
  %1929 = vmatpush.bf16.msra.mxu0 %v1111
  %1930 = vmatpush.bf16.msra.mxu0 %v1095
  %1931 = vmatpush.bf16.msra.mxu0 %v1079
  %1932 = vmatpush.bf16.msra.mxu0 %v1063
  %1933 = vmatmul.bf16.gmra.mxu0 %v277
  %v1934 = vpop.f32.mrf.mxu0
  %v1935 = vadd.f32 0.0, %v1934
  %v1936 = vpop.f32.mrf.mxu0
  %1937 = vdwg.mxu0
  %1938 = vmatpush.bf16.msra.mxu0 %v1303
  %1939 = vmatpush.bf16.msra.mxu0 %v1287
  %1940 = vmatpush.bf16.msra.mxu0 %v1271
  %1941 = vmatpush.bf16.msra.mxu0 %v1255
  %1942 = vmatpush.bf16.msra.mxu0 %v1239
  %1943 = vmatpush.bf16.msra.mxu0 %v1223
  %1944 = vmatpush.bf16.msra.mxu0 %v1207
  %1945 = vmatpush.bf16.msra.mxu0 %v1191
  %1946 = vmatmul.bf16.gmra.mxu0 %v278
  %v1947 = vpop.f32.mrf.mxu0
  %v1948 = vadd.f32 %v1935, %v1947
  %v1949 = vpop.f32.mrf.mxu0
  %1950 = vdwg.mxu0
  %1951 = vmatpush.bf16.msra.mxu0 %v1176
  %1952 = vmatpush.bf16.msra.mxu0 %v1160
  %1953 = vmatpush.bf16.msra.mxu0 %v1144
  %1954 = vmatpush.bf16.msra.mxu0 %v1128
  %1955 = vmatpush.bf16.msra.mxu0 %v1112
  %1956 = vmatpush.bf16.msra.mxu0 %v1096
  %1957 = vmatpush.bf16.msra.mxu0 %v1080
  %1958 = vmatpush.bf16.msra.mxu0 %v1064
  %1959 = vmatmul.bf16.gmra.mxu0 %v277
  %v1960 = vpop.f32.mrf.mxu0
  %v1961 = vadd.f32 0.0, %v1960
  %v1962 = vpop.f32.mrf.mxu0
  %1963 = vdwg.mxu0
  %1964 = vmatpush.bf16.msra.mxu0 %v1304
  %1965 = vmatpush.bf16.msra.mxu0 %v1288
  %1966 = vmatpush.bf16.msra.mxu0 %v1272
  %1967 = vmatpush.bf16.msra.mxu0 %v1256
  %1968 = vmatpush.bf16.msra.mxu0 %v1240
  %1969 = vmatpush.bf16.msra.mxu0 %v1224
  %1970 = vmatpush.bf16.msra.mxu0 %v1208
  %1971 = vmatpush.bf16.msra.mxu0 %v1192
  %1972 = vmatmul.bf16.gmra.mxu0 %v278
  %v1973 = vpop.f32.mrf.mxu0
  %v1974 = vadd.f32 %v1961, %v1973
  %v1975 = vpop.f32.mrf.mxu0
  %1976 = vdwg.mxu0
  %v1977 = vadd.f32 %v1584, %v1610
  %v1978 = vadd.f32 %v1977, %v1636
  %v1979 = vadd.f32 %v1978, %v1662
  %v1980 = vadd.f32 %v1979, %v1688
  %v1981 = vadd.f32 %v1980, %v1714
  %v1982 = vadd.f32 %v1981, %v1740
  %v1983 = vadd.f32 %v1982, %v1766
  %v1984 = vadd.f32 %v1983, %v1792
  %v1985 = vadd.f32 %v1984, %v1818
  %v1986 = vadd.f32 %v1985, %v1844
  %v1987 = vadd.f32 %v1986, %v1870
  %v1988 = vadd.f32 %v1987, %v1896
  %v1989 = vadd.f32 %v1988, %v1922
  %v1990 = vadd.f32 %v1989, %v1948
  %v1991 = vadd.f32 %v1990, %v1974
  %1992 = vadd.xlane.f32.xlu0 %v1991
  %v1993 = vpop.xlane.xlu0 %1992
  %v1994 = vmul.f32 %v1993, 0.00048828125
  %v1995 = vsub.f32 %v1584, %v1994
  %v1996 = vsub.f32 %v1610, %v1994
  %v1997 = vsub.f32 %v1636, %v1994
  %v1998 = vsub.f32 %v1662, %v1994
  %v1999 = vsub.f32 %v1688, %v1994
  %v2000 = vsub.f32 %v1714, %v1994
  %v2001 = vsub.f32 %v1740, %v1994
  %v2002 = vsub.f32 %v1766, %v1994
  %v2003 = vsub.f32 %v1792, %v1994
  %v2004 = vsub.f32 %v1818, %v1994
  %v2005 = vsub.f32 %v1844, %v1994
  %v2006 = vsub.f32 %v1870, %v1994
  %v2007 = vsub.f32 %v1896, %v1994
  %v2008 = vsub.f32 %v1922, %v1994
  %v2009 = vsub.f32 %v1948, %v1994
  %v2010 = vsub.f32 %v1974, %v1994
  %v2011 = vmul.f32 %v1995, %v1995
  %v2012 = vmul.f32 %v1996, %v1996
  %v2013 = vmul.f32 %v1997, %v1997
  %v2014 = vmul.f32 %v1998, %v1998
  %v2015 = vmul.f32 %v1999, %v1999
  %v2016 = vmul.f32 %v2000, %v2000
  %v2017 = vmul.f32 %v2001, %v2001
  %v2018 = vmul.f32 %v2002, %v2002
  %v2019 = vmul.f32 %v2003, %v2003
  %v2020 = vmul.f32 %v2004, %v2004
  %v2021 = vmul.f32 %v2005, %v2005
  %v2022 = vmul.f32 %v2006, %v2006
  %v2023 = vmul.f32 %v2007, %v2007
  %v2024 = vmul.f32 %v2008, %v2008
  %v2025 = vmul.f32 %v2009, %v2009
  %v2026 = vmul.f32 %v2010, %v2010
  %v2027 = vadd.f32 %v2011, %v2012
  %v2028 = vadd.f32 %v2027, %v2013
  %v2029 = vadd.f32 %v2028, %v2014
  %v2030 = vadd.f32 %v2029, %v2015
  %v2031 = vadd.f32 %v2030, %v2016
  %v2032 = vadd.f32 %v2031, %v2017
  %v2033 = vadd.f32 %v2032, %v2018
  %v2034 = vadd.f32 %v2033, %v2019
  %v2035 = vadd.f32 %v2034, %v2020
  %v2036 = vadd.f32 %v2035, %v2021
  %v2037 = vadd.f32 %v2036, %v2022
  %v2038 = vadd.f32 %v2037, %v2023
  %v2039 = vadd.f32 %v2038, %v2024
  %v2040 = vadd.f32 %v2039, %v2025
  %v2041 = vadd.f32 %v2040, %v2026
  %2042 = vadd.xlane.f32.xlu0 %v2041
  %v2043 = vpop.xlane.xlu0 %2042
  %v2044 = vmul.f32 %v2043, 0.00048828125
  %v2045 = vadd.f32 %v2044, 1e-05
  %v2046 = vrsqrt.pop %v2045
  %v2047 = vmul.f32 %v2046, %v2045
  %v2048 = vmul.f32 %v2047, %v2046
  %v2049 = vmul.f32 0.5, %v2048
  %v2050 = vsub.f32 1.5, %v2049
  %v2051 = vmul.f32 %v2046, %v2050
  %vm2052 = vweird.f32 %v2045
  %vm2053 = vweird.f32 %v2046
  %vm2054 = vmor %vm2052, %vm2053
  %v2055 = vsel %vm2054, %v2046, %v2051
  %v2056 = vld [vmem:[%s2] sm:$0xff]
  %v2057 = vmul.f32 %v2055, %v2056
  %2059 = vset.pattern.permute.xlu0 0
  %2060 = vperm.xlu0 %2059, %v2057
  %v2061 = vpop.permute.xlu0 %2060
  %v2063 = vmul.f32 %v1995, %v2061
  %v2064 = vmul.f32 %v1996, %v2061
  %v2065 = vmul.f32 %v1997, %v2061
  %v2066 = vmul.f32 %v1998, %v2061
  %v2067 = vmul.f32 %v1999, %v2061
  %v2068 = vmul.f32 %v2000, %v2061
  %v2069 = vmul.f32 %v2001, %v2061
  %v2070 = vmul.f32 %v2002, %v2061
  %v2071 = vmul.f32 %v2003, %v2061
  %v2072 = vmul.f32 %v2004, %v2061
  %v2073 = vmul.f32 %v2005, %v2061
  %v2074 = vmul.f32 %v2006, %v2061
  %v2075 = vmul.f32 %v2007, %v2061
  %v2076 = vmul.f32 %v2008, %v2061
  %v2077 = vmul.f32 %v2009, %v2061
  %v2078 = vmul.f32 %v2010, %v2061
  %v2079 = vld [vmem:[%s3] sm:$0xff]
  %2081 = vset.pattern.permute.xlu0 0
  %2082 = vperm.xlu0 %2081, %v2079
  %v2083 = vpop.permute.xlu0 %2082
  %v2085 = vadd.f32 %v2063, %v2083
  %v2086 = vadd.f32 %v2064, %v2083
  %v2087 = vadd.f32 %v2065, %v2083
  %v2088 = vadd.f32 %v2066, %v2083
  %v2089 = vadd.f32 %v2067, %v2083
  %v2090 = vadd.f32 %v2068, %v2083
  %v2091 = vadd.f32 %v2069, %v2083
  %v2092 = vadd.f32 %v2070, %v2083
  %v2093 = vadd.f32 %v2071, %v2083
  %v2094 = vadd.f32 %v2072, %v2083
  %v2095 = vadd.f32 %v2073, %v2083
  %v2096 = vadd.f32 %v2074, %v2083
  %v2097 = vadd.f32 %v2075, %v2083
  %v2098 = vadd.f32 %v2076, %v2083
  %v2099 = vadd.f32 %v2077, %v2083
  %v2100 = vadd.f32 %v2078, %v2083
  %vm2101 = vcmp.ge.f32.partialorder %v2085, 0.0
  %vm2102 = vcmp.ge.f32.partialorder %v2086, 0.0
  %vm2103 = vcmp.ge.f32.partialorder %v2087, 0.0
  %vm2104 = vcmp.ge.f32.partialorder %v2088, 0.0
  %vm2105 = vcmp.ge.f32.partialorder %v2089, 0.0
  %vm2106 = vcmp.ge.f32.partialorder %v2090, 0.0
  %vm2107 = vcmp.ge.f32.partialorder %v2091, 0.0
  %vm2108 = vcmp.ge.f32.partialorder %v2092, 0.0
  %vm2109 = vcmp.ge.f32.partialorder %v2093, 0.0
  %vm2110 = vcmp.ge.f32.partialorder %v2094, 0.0
  %vm2111 = vcmp.ge.f32.partialorder %v2095, 0.0
  %vm2112 = vcmp.ge.f32.partialorder %v2096, 0.0
  %vm2113 = vcmp.ge.f32.partialorder %v2097, 0.0
  %vm2114 = vcmp.ge.f32.partialorder %v2098, 0.0
  %vm2115 = vcmp.ge.f32.partialorder %v2099, 0.0
  %vm2116 = vcmp.ge.f32.partialorder %v2100, 0.0
  %v2117 = vmul.f32 %v2085, 0.2
  %v2118 = vmul.f32 %v2086, 0.2
  %v2119 = vmul.f32 %v2087, 0.2
  %v2120 = vmul.f32 %v2088, 0.2
  %v2121 = vmul.f32 %v2089, 0.2
  %v2122 = vmul.f32 %v2090, 0.2
  %v2123 = vmul.f32 %v2091, 0.2
  %v2124 = vmul.f32 %v2092, 0.2
  %v2125 = vmul.f32 %v2093, 0.2
  %v2126 = vmul.f32 %v2094, 0.2
  %v2127 = vmul.f32 %v2095, 0.2
  %v2128 = vmul.f32 %v2096, 0.2
  %v2129 = vmul.f32 %v2097, 0.2
  %v2130 = vmul.f32 %v2098, 0.2
  %v2131 = vmul.f32 %v2099, 0.2
  %v2132 = vmul.f32 %v2100, 0.2
  %v2133 = vsel %vm2101, %v2085, %v2117
  %v2134 = vsel %vm2102, %v2086, %v2118
  %v2135 = vsel %vm2103, %v2087, %v2119
  %v2136 = vsel %vm2104, %v2088, %v2120
  %v2137 = vsel %vm2105, %v2089, %v2121
  %v2138 = vsel %vm2106, %v2090, %v2122
  %v2139 = vsel %vm2107, %v2091, %v2123
  %v2140 = vsel %vm2108, %v2092, %v2124
  %v2141 = vsel %vm2109, %v2093, %v2125
  %v2142 = vsel %vm2110, %v2094, %v2126
  %v2143 = vsel %vm2111, %v2095, %v2127
  %v2144 = vsel %vm2112, %v2096, %v2128
  %v2145 = vsel %vm2113, %v2097, %v2129
  %v2146 = vsel %vm2114, %v2098, %v2130
  %v2147 = vsel %vm2115, %v2099, %v2131
  %v2148 = vsel %vm2116, %v2100, %v2132
  %v2149 = vpack.c.bf16 %v2134, %v2133
  %v2150 = vpack.c.bf16 %v2136, %v2135
  %v2151 = vpack.c.bf16 %v2138, %v2137
  %v2152 = vpack.c.bf16 %v2140, %v2139
  %v2153 = vpack.c.bf16 %v2142, %v2141
  %v2154 = vpack.c.bf16 %v2144, %v2143
  %v2155 = vpack.c.bf16 %v2146, %v2145
  %v2156 = vpack.c.bf16 %v2148, %v2147
  %2157 = vst [vmem:[%s4] sm:$0xff] %v2149
  %2158 = vst [vmem:[%s4 + $0x8] sm:$0xff] %v2150
  %2159 = vst [vmem:[%s4 + $0x10] sm:$0xff] %v2151
  %2160 = vst [vmem:[%s4 + $0x18] sm:$0xff] %v2152
  %2161 = vst [vmem:[%s4 + $0x20] sm:$0xff] %v2153
  %2162 = vst [vmem:[%s4 + $0x28] sm:$0xff] %v2154
  %2163 = vst [vmem:[%s4 + $0x30] sm:$0xff] %v2155
  %2164 = vst [vmem:[%s4 + $0x38] sm:$0xff] %v2156
  // Predicated region
  $region18: #{generator_forward.8} parent=0 // pred_check
    _
  $region19: #{generator_forward.8} parent=0 // pred_check_branch
    %2166 = sbr.rel (0) target = $region21
  $region20: #{generator_forward.8} parent=0 // pred_region
    _
  $region21: #{generator_forward.8} parent=0 // pred_fallthru
    _
  // Predicated region
  $region22: #{generator_forward.8} parent=0 // pred_check
    _
  $region23: #{generator_forward.8} parent=0 // pred_check_branch
    %2168 = sbr.rel (0) target = $region25
  $region24: #{generator_forward.8} parent=0 // pred_region
    _
  $region25: #{generator_forward.8} parent=0 // pred_fallthru
    _

// kernel: generator_forward.9
$region0: #{generator_forward.9}
  #allocation0 [shape = 'u32[]', space=smem, size = 0x4, offset = 0x4, fixed_abs, tag = 'smem constant byte address 0x4 - core index']
  #allocation1 [shape = 'u32[72,128]{1,0:T(1,128)}', space=vmem, size = 0x9000, scoped, tag = 'internal scratch']
  %s0 = inlined_call_operand.vmem [shape: bf16[1,128], index: 0, kind: input, shape index: {}]
  %s1 = inlined_call_operand.vmem [shape: bf16[128,8192], index: 1, kind: input, shape index: {}]
  %s2 = inlined_call_operand.vmem [shape: f32[1,8192], index: 2, kind: output, shape index: {}]
  %s3 = sld [smem:[#allocation0]]
  $region18: #{generator_forward.9} parent=0
    _
  %s5 = ssub.s32 1, %s3
  %s6 = scalar_select 0, %s5, %s3
  // Predicated region
  $region2: #{generator_forward.9} parent=0 // pred_check
    _
  $region3: #{generator_forward.9} parent=0 // pred_check_branch
    %8 = sbr.rel (0) target = $region5
  $region4: #{generator_forward.9} parent=0 // pred_region
    _
  $region5: #{generator_forward.9} parent=0 // pred_fallthru
    _
  // Predicated region
  $region6: #{generator_forward.9} parent=0 // pred_check
    _
  $region7: #{generator_forward.9} parent=0 // pred_check_branch
    %10 = sbr.rel (0) target = $region9
  $region8: #{generator_forward.9} parent=0 // pred_region
    _
  $region9: #{generator_forward.9} parent=0 // pred_fallthru
    _
  %v11 = vld [vmem:[%s0] sm:$0x1]
  %v12 = vld [vmem:[%s1] sm:$0xff]
  %v13 = vld [vmem:[%s1 + $0x8] sm:$0xff]
  %v14 = vld [vmem:[%s1 + $0x10] sm:$0xff]
  %v15 = vld [vmem:[%s1 + $0x18] sm:$0xff]
  %v16 = vld [vmem:[%s1 + $0x20] sm:$0xff]
  %v17 = vld [vmem:[%s1 + $0x28] sm:$0xff]
  %v18 = vld [vmem:[%s1 + $0x30] sm:$0xff]
  %v19 = vld [vmem:[%s1 + $0x38] sm:$0xff]
  %v20 = vld [vmem:[%s1 + $0x40] sm:$0xff]
  %v21 = vld [vmem:[%s1 + $0x48] sm:$0xff]
  %v22 = vld [vmem:[%s1 + $0x50] sm:$0xff]
  %v23 = vld [vmem:[%s1 + $0x58] sm:$0xff]
  %v24 = vld [vmem:[%s1 + $0x60] sm:$0xff]
  %v25 = vld [vmem:[%s1 + $0x68] sm:$0xff]
  %v26 = vld [vmem:[%s1 + $0x70] sm:$0xff]
  %v27 = vld [vmem:[%s1 + $0x78] sm:$0xff]
  %v28 = vld [vmem:[%s1 + $0x80] sm:$0xff]
  %v29 = vld [vmem:[%s1 + $0x88] sm:$0xff]
  %v30 = vld [vmem:[%s1 + $0x90] sm:$0xff]
  %v31 = vld [vmem:[%s1 + $0x98] sm:$0xff]
  %v32 = vld [vmem:[%s1 + $0xa0] sm:$0xff]
  %v33 = vld [vmem:[%s1 + $0xa8] sm:$0xff]
  %v34 = vld [vmem:[%s1 + $0xb0] sm:$0xff]
  %v35 = vld [vmem:[%s1 + $0xb8] sm:$0xff]
  %v36 = vld [vmem:[%s1 + $0xc0] sm:$0xff]
  %v37 = vld [vmem:[%s1 + $0xc8] sm:$0xff]
  %v38 = vld [vmem:[%s1 + $0xd0] sm:$0xff]
  %v39 = vld [vmem:[%s1 + $0xd8] sm:$0xff]
  %v40 = vld [vmem:[%s1 + $0xe0] sm:$0xff]
  %v41 = vld [vmem:[%s1 + $0xe8] sm:$0xff]
  %v42 = vld [vmem:[%s1 + $0xf0] sm:$0xff]
  %v43 = vld [vmem:[%s1 + $0xf8] sm:$0xff]
  %v44 = vld [vmem:[%s1 + $0x100] sm:$0xff]
  %v45 = vld [vmem:[%s1 + $0x108] sm:$0xff]
  %v46 = vld [vmem:[%s1 + $0x110] sm:$0xff]
  %v47 = vld [vmem:[%s1 + $0x118] sm:$0xff]
  %v48 = vld [vmem:[%s1 + $0x120] sm:$0xff]
  %v49 = vld [vmem:[%s1 + $0x128] sm:$0xff]
  %v50 = vld [vmem:[%s1 + $0x130] sm:$0xff]
  %v51 = vld [vmem:[%s1 + $0x138] sm:$0xff]
  %v52 = vld [vmem:[%s1 + $0x140] sm:$0xff]
  %v53 = vld [vmem:[%s1 + $0x148] sm:$0xff]
  %v54 = vld [vmem:[%s1 + $0x150] sm:$0xff]
  %v55 = vld [vmem:[%s1 + $0x158] sm:$0xff]
  %v56 = vld [vmem:[%s1 + $0x160] sm:$0xff]
  %v57 = vld [vmem:[%s1 + $0x168] sm:$0xff]
  %v58 = vld [vmem:[%s1 + $0x170] sm:$0xff]
  %v59 = vld [vmem:[%s1 + $0x178] sm:$0xff]
  %v60 = vld [vmem:[%s1 + $0x180] sm:$0xff]
  %v61 = vld [vmem:[%s1 + $0x188] sm:$0xff]
  %v62 = vld [vmem:[%s1 + $0x190] sm:$0xff]
  %v63 = vld [vmem:[%s1 + $0x198] sm:$0xff]
  %v64 = vld [vmem:[%s1 + $0x1a0] sm:$0xff]
  %v65 = vld [vmem:[%s1 + $0x1a8] sm:$0xff]
  %v66 = vld [vmem:[%s1 + $0x1b0] sm:$0xff]
  %v67 = vld [vmem:[%s1 + $0x1b8] sm:$0xff]
  %v68 = vld [vmem:[%s1 + $0x1c0] sm:$0xff]
  %v69 = vld [vmem:[%s1 + $0x1c8] sm:$0xff]
  %v70 = vld [vmem:[%s1 + $0x1d0] sm:$0xff]
  %v71 = vld [vmem:[%s1 + $0x1d8] sm:$0xff]
  %v72 = vld [vmem:[%s1 + $0x1e0] sm:$0xff]
  %v73 = vld [vmem:[%s1 + $0x1e8] sm:$0xff]
  %v74 = vld [vmem:[%s1 + $0x1f0] sm:$0xff]
  %v75 = vld [vmem:[%s1 + $0x1f8] sm:$0xff]
  %v76 = vld [vmem:[%s1 + $0x200] sm:$0xff]
  %v77 = vld [vmem:[%s1 + $0x208] sm:$0xff]
  %v78 = vld [vmem:[%s1 + $0x210] sm:$0xff]
  %v79 = vld [vmem:[%s1 + $0x218] sm:$0xff]
  %v80 = vld [vmem:[%s1 + $0x220] sm:$0xff]
  %v81 = vld [vmem:[%s1 + $0x228] sm:$0xff]
  %v82 = vld [vmem:[%s1 + $0x230] sm:$0xff]
  %v83 = vld [vmem:[%s1 + $0x238] sm:$0xff]
  %v84 = vld [vmem:[%s1 + $0x240] sm:$0xff]
  %v85 = vld [vmem:[%s1 + $0x248] sm:$0xff]
  %v86 = vld [vmem:[%s1 + $0x250] sm:$0xff]
  %v87 = vld [vmem:[%s1 + $0x258] sm:$0xff]
  %v88 = vld [vmem:[%s1 + $0x260] sm:$0xff]
  %v89 = vld [vmem:[%s1 + $0x268] sm:$0xff]
  %v90 = vld [vmem:[%s1 + $0x270] sm:$0xff]
  %v91 = vld [vmem:[%s1 + $0x278] sm:$0xff]
  %v92 = vld [vmem:[%s1 + $0x280] sm:$0xff]
  %v93 = vld [vmem:[%s1 + $0x288] sm:$0xff]
  %v94 = vld [vmem:[%s1 + $0x290] sm:$0xff]
  %v95 = vld [vmem:[%s1 + $0x298] sm:$0xff]
  %v96 = vld [vmem:[%s1 + $0x2a0] sm:$0xff]
  %v97 = vld [vmem:[%s1 + $0x2a8] sm:$0xff]
  %v98 = vld [vmem:[%s1 + $0x2b0] sm:$0xff]
  %v99 = vld [vmem:[%s1 + $0x2b8] sm:$0xff]
  %v100 = vld [vmem:[%s1 + $0x2c0] sm:$0xff]
  %v101 = vld [vmem:[%s1 + $0x2c8] sm:$0xff]
  %v102 = vld [vmem:[%s1 + $0x2d0] sm:$0xff]
  %v103 = vld [vmem:[%s1 + $0x2d8] sm:$0xff]
  %v104 = vld [vmem:[%s1 + $0x2e0] sm:$0xff]
  %v105 = vld [vmem:[%s1 + $0x2e8] sm:$0xff]
  %v106 = vld [vmem:[%s1 + $0x2f0] sm:$0xff]
  %v107 = vld [vmem:[%s1 + $0x2f8] sm:$0xff]
  %v108 = vld [vmem:[%s1 + $0x300] sm:$0xff]
  %v109 = vld [vmem:[%s1 + $0x308] sm:$0xff]
  %v110 = vld [vmem:[%s1 + $0x310] sm:$0xff]
  %v111 = vld [vmem:[%s1 + $0x318] sm:$0xff]
  %v112 = vld [vmem:[%s1 + $0x320] sm:$0xff]
  %v113 = vld [vmem:[%s1 + $0x328] sm:$0xff]
  %v114 = vld [vmem:[%s1 + $0x330] sm:$0xff]
  %v115 = vld [vmem:[%s1 + $0x338] sm:$0xff]
  %v116 = vld [vmem:[%s1 + $0x340] sm:$0xff]
  %v117 = vld [vmem:[%s1 + $0x348] sm:$0xff]
  %v118 = vld [vmem:[%s1 + $0x350] sm:$0xff]
  %v119 = vld [vmem:[%s1 + $0x358] sm:$0xff]
  %v120 = vld [vmem:[%s1 + $0x360] sm:$0xff]
  %v121 = vld [vmem:[%s1 + $0x368] sm:$0xff]
  %v122 = vld [vmem:[%s1 + $0x370] sm:$0xff]
  %v123 = vld [vmem:[%s1 + $0x378] sm:$0xff]
  %v124 = vld [vmem:[%s1 + $0x380] sm:$0xff]
  %v125 = vld [vmem:[%s1 + $0x388] sm:$0xff]
  %v126 = vld [vmem:[%s1 + $0x390] sm:$0xff]
  %v127 = vld [vmem:[%s1 + $0x398] sm:$0xff]
  %v128 = vld [vmem:[%s1 + $0x3a0] sm:$0xff]
  %v129 = vld [vmem:[%s1 + $0x3a8] sm:$0xff]
  %v130 = vld [vmem:[%s1 + $0x3b0] sm:$0xff]
  %v131 = vld [vmem:[%s1 + $0x3b8] sm:$0xff]
  %v132 = vld [vmem:[%s1 + $0x3c0] sm:$0xff]
  %v133 = vld [vmem:[%s1 + $0x3c8] sm:$0xff]
  %v134 = vld [vmem:[%s1 + $0x3d0] sm:$0xff]
  %v135 = vld [vmem:[%s1 + $0x3d8] sm:$0xff]
  %v136 = vld [vmem:[%s1 + $0x3e0] sm:$0xff]
  %v137 = vld [vmem:[%s1 + $0x3e8] sm:$0xff]
  %v138 = vld [vmem:[%s1 + $0x3f0] sm:$0xff]
  %v139 = vld [vmem:[%s1 + $0x3f8] sm:$0xff]
  %v140 = vld [vmem:[%s1 + $0x400] sm:$0xff]
  %v141 = vld [vmem:[%s1 + $0x408] sm:$0xff]
  %v142 = vld [vmem:[%s1 + $0x410] sm:$0xff]
  %v143 = vld [vmem:[%s1 + $0x418] sm:$0xff]
  %v144 = vld [vmem:[%s1 + $0x420] sm:$0xff]
  %v145 = vld [vmem:[%s1 + $0x428] sm:$0xff]
  %v146 = vld [vmem:[%s1 + $0x430] sm:$0xff]
  %v147 = vld [vmem:[%s1 + $0x438] sm:$0xff]
  %v148 = vld [vmem:[%s1 + $0x440] sm:$0xff]
  %v149 = vld [vmem:[%s1 + $0x448] sm:$0xff]
  %v150 = vld [vmem:[%s1 + $0x450] sm:$0xff]
  %v151 = vld [vmem:[%s1 + $0x458] sm:$0xff]
  %v152 = vld [vmem:[%s1 + $0x460] sm:$0xff]
  %v153 = vld [vmem:[%s1 + $0x468] sm:$0xff]
  %v154 = vld [vmem:[%s1 + $0x470] sm:$0xff]
  %v155 = vld [vmem:[%s1 + $0x478] sm:$0xff]
  %v156 = vld [vmem:[%s1 + $0x480] sm:$0xff]
  %v157 = vld [vmem:[%s1 + $0x488] sm:$0xff]
  %v158 = vld [vmem:[%s1 + $0x490] sm:$0xff]
  %v159 = vld [vmem:[%s1 + $0x498] sm:$0xff]
  %v160 = vld [vmem:[%s1 + $0x4a0] sm:$0xff]
  %v161 = vld [vmem:[%s1 + $0x4a8] sm:$0xff]
  %v162 = vld [vmem:[%s1 + $0x4b0] sm:$0xff]
  %v163 = vld [vmem:[%s1 + $0x4b8] sm:$0xff]
  %v164 = vld [vmem:[%s1 + $0x4c0] sm:$0xff]
  %v165 = vld [vmem:[%s1 + $0x4c8] sm:$0xff]
  %v166 = vld [vmem:[%s1 + $0x4d0] sm:$0xff]
  %v167 = vld [vmem:[%s1 + $0x4d8] sm:$0xff]
  %v168 = vld [vmem:[%s1 + $0x4e0] sm:$0xff]
  %v169 = vld [vmem:[%s1 + $0x4e8] sm:$0xff]
  %v170 = vld [vmem:[%s1 + $0x4f0] sm:$0xff]
  %v171 = vld [vmem:[%s1 + $0x4f8] sm:$0xff]
  %v172 = vld [vmem:[%s1 + $0x500] sm:$0xff]
  %v173 = vld [vmem:[%s1 + $0x508] sm:$0xff]
  %v174 = vld [vmem:[%s1 + $0x510] sm:$0xff]
  %v175 = vld [vmem:[%s1 + $0x518] sm:$0xff]
  %v176 = vld [vmem:[%s1 + $0x520] sm:$0xff]
  %v177 = vld [vmem:[%s1 + $0x528] sm:$0xff]
  %v178 = vld [vmem:[%s1 + $0x530] sm:$0xff]
  %v179 = vld [vmem:[%s1 + $0x538] sm:$0xff]
  %v180 = vld [vmem:[%s1 + $0x540] sm:$0xff]
  %v181 = vld [vmem:[%s1 + $0x548] sm:$0xff]
  %v182 = vld [vmem:[%s1 + $0x550] sm:$0xff]
  %v183 = vld [vmem:[%s1 + $0x558] sm:$0xff]
  %v184 = vld [vmem:[%s1 + $0x560] sm:$0xff]
  %v185 = vld [vmem:[%s1 + $0x568] sm:$0xff]
  %v186 = vld [vmem:[%s1 + $0x570] sm:$0xff]
  %v187 = vld [vmem:[%s1 + $0x578] sm:$0xff]
  %v188 = vld [vmem:[%s1 + $0x580] sm:$0xff]
  %v189 = vld [vmem:[%s1 + $0x588] sm:$0xff]
  %v190 = vld [vmem:[%s1 + $0x590] sm:$0xff]
  %v191 = vld [vmem:[%s1 + $0x598] sm:$0xff]
  %v192 = vld [vmem:[%s1 + $0x5a0] sm:$0xff]
  %v193 = vld [vmem:[%s1 + $0x5a8] sm:$0xff]
  %v194 = vld [vmem:[%s1 + $0x5b0] sm:$0xff]
  %v195 = vld [vmem:[%s1 + $0x5b8] sm:$0xff]
  %v196 = vld [vmem:[%s1 + $0x5c0] sm:$0xff]
  %v197 = vld [vmem:[%s1 + $0x5c8] sm:$0xff]
  %v198 = vld [vmem:[%s1 + $0x5d0] sm:$0xff]
  %v199 = vld [vmem:[%s1 + $0x5d8] sm:$0xff]
  %v200 = vld [vmem:[%s1 + $0x5e0] sm:$0xff]
  %v201 = vld [vmem:[%s1 + $0x5e8] sm:$0xff]
  %v202 = vld [vmem:[%s1 + $0x5f0] sm:$0xff]
  %v203 = vld [vmem:[%s1 + $0x5f8] sm:$0xff]
  %v204 = vld [vmem:[%s1 + $0x600] sm:$0xff]
  %v205 = vld [vmem:[%s1 + $0x608] sm:$0xff]
  %v206 = vld [vmem:[%s1 + $0x610] sm:$0xff]
  %v207 = vld [vmem:[%s1 + $0x618] sm:$0xff]
  %v208 = vld [vmem:[%s1 + $0x620] sm:$0xff]
  %v209 = vld [vmem:[%s1 + $0x628] sm:$0xff]
  %v210 = vld [vmem:[%s1 + $0x630] sm:$0xff]
  %v211 = vld [vmem:[%s1 + $0x638] sm:$0xff]
  %v212 = vld [vmem:[%s1 + $0x640] sm:$0xff]
  %v213 = vld [vmem:[%s1 + $0x648] sm:$0xff]
  %v214 = vld [vmem:[%s1 + $0x650] sm:$0xff]
  %v215 = vld [vmem:[%s1 + $0x658] sm:$0xff]
  %v216 = vld [vmem:[%s1 + $0x660] sm:$0xff]
  %v217 = vld [vmem:[%s1 + $0x668] sm:$0xff]
  %v218 = vld [vmem:[%s1 + $0x670] sm:$0xff]
  %v219 = vld [vmem:[%s1 + $0x678] sm:$0xff]
  %v220 = vld [vmem:[%s1 + $0x680] sm:$0xff]
  %v221 = vld [vmem:[%s1 + $0x688] sm:$0xff]
  %v222 = vld [vmem:[%s1 + $0x690] sm:$0xff]
  %v223 = vld [vmem:[%s1 + $0x698] sm:$0xff]
  %v224 = vld [vmem:[%s1 + $0x6a0] sm:$0xff]
  %v225 = vld [vmem:[%s1 + $0x6a8] sm:$0xff]
  %v226 = vld [vmem:[%s1 + $0x6b0] sm:$0xff]
  %v227 = vld [vmem:[%s1 + $0x6b8] sm:$0xff]
  %v228 = vld [vmem:[%s1 + $0x6c0] sm:$0xff]
  %v229 = vld [vmem:[%s1 + $0x6c8] sm:$0xff]
  %v230 = vld [vmem:[%s1 + $0x6d0] sm:$0xff]
  %v231 = vld [vmem:[%s1 + $0x6d8] sm:$0xff]
  %v232 = vld [vmem:[%s1 + $0x6e0] sm:$0xff]
  %v233 = vld [vmem:[%s1 + $0x6e8] sm:$0xff]
  %v234 = vld [vmem:[%s1 + $0x6f0] sm:$0xff]
  %v235 = vld [vmem:[%s1 + $0x6f8] sm:$0xff]
  %v236 = vld [vmem:[%s1 + $0x700] sm:$0xff]
  %v237 = vld [vmem:[%s1 + $0x708] sm:$0xff]
  %v238 = vld [vmem:[%s1 + $0x710] sm:$0xff]
  %v239 = vld [vmem:[%s1 + $0x718] sm:$0xff]
  %v240 = vld [vmem:[%s1 + $0x720] sm:$0xff]
  %v241 = vld [vmem:[%s1 + $0x728] sm:$0xff]
  %v242 = vld [vmem:[%s1 + $0x730] sm:$0xff]
  %v243 = vld [vmem:[%s1 + $0x738] sm:$0xff]
  %v244 = vld [vmem:[%s1 + $0x740] sm:$0xff]
  %v245 = vld [vmem:[%s1 + $0x748] sm:$0xff]
  %v246 = vld [vmem:[%s1 + $0x750] sm:$0xff]
  %v247 = vld [vmem:[%s1 + $0x758] sm:$0xff]
  %v248 = vld [vmem:[%s1 + $0x760] sm:$0xff]
  %v249 = vld [vmem:[%s1 + $0x768] sm:$0xff]
  %v250 = vld [vmem:[%s1 + $0x770] sm:$0xff]
  %v251 = vld [vmem:[%s1 + $0x778] sm:$0xff]
  %v252 = vld [vmem:[%s1 + $0x780] sm:$0xff]
  %v253 = vld [vmem:[%s1 + $0x788] sm:$0xff]
  %v254 = vld [vmem:[%s1 + $0x790] sm:$0xff]
  %v255 = vld [vmem:[%s1 + $0x798] sm:$0xff]
  %v256 = vld [vmem:[%s1 + $0x7a0] sm:$0xff]
  %v257 = vld [vmem:[%s1 + $0x7a8] sm:$0xff]
  %v258 = vld [vmem:[%s1 + $0x7b0] sm:$0xff]
  %v259 = vld [vmem:[%s1 + $0x7b8] sm:$0xff]
  %v260 = vld [vmem:[%s1 + $0x7c0] sm:$0xff]
  %v261 = vld [vmem:[%s1 + $0x7c8] sm:$0xff]
  %v262 = vld [vmem:[%s1 + $0x7d0] sm:$0xff]
  %v263 = vld [vmem:[%s1 + $0x7d8] sm:$0xff]
  %v264 = vld [vmem:[%s1 + $0x7e0] sm:$0xff]
  %v265 = vld [vmem:[%s1 + $0x7e8] sm:$0xff]
  %v266 = vld [vmem:[%s1 + $0x7f0] sm:$0xff]
  %v267 = vld [vmem:[%s1 + $0x7f8] sm:$0xff]
  %v268 = vld [vmem:[%s1 + $0x800] sm:$0xff]
  %v269 = vld [vmem:[%s1 + $0x808] sm:$0xff]
  %v270 = vld [vmem:[%s1 + $0x810] sm:$0xff]
  %v271 = vld [vmem:[%s1 + $0x818] sm:$0xff]
  %v272 = vld [vmem:[%s1 + $0x820] sm:$0xff]
  %v273 = vld [vmem:[%s1 + $0x828] sm:$0xff]
  %v274 = vld [vmem:[%s1 + $0x830] sm:$0xff]
  %v275 = vld [vmem:[%s1 + $0x838] sm:$0xff]
  %v276 = vld [vmem:[%s1 + $0x840] sm:$0xff]
  %v277 = vld [vmem:[%s1 + $0x848] sm:$0xff]
  %v278 = vld [vmem:[%s1 + $0x850] sm:$0xff]
  %v279 = vld [vmem:[%s1 + $0x858] sm:$0xff]
  %v280 = vld [vmem:[%s1 + $0x860] sm:$0xff]
  %v281 = vld [vmem:[%s1 + $0x868] sm:$0xff]
  %v282 = vld [vmem:[%s1 + $0x870] sm:$0xff]
  %v283 = vld [vmem:[%s1 + $0x878] sm:$0xff]
  %v284 = vld [vmem:[%s1 + $0x880] sm:$0xff]
  %v285 = vld [vmem:[%s1 + $0x888] sm:$0xff]
  %v286 = vld [vmem:[%s1 + $0x890] sm:$0xff]
  %v287 = vld [vmem:[%s1 + $0x898] sm:$0xff]
  %v288 = vld [vmem:[%s1 + $0x8a0] sm:$0xff]
  %v289 = vld [vmem:[%s1 + $0x8a8] sm:$0xff]
  %v290 = vld [vmem:[%s1 + $0x8b0] sm:$0xff]
  %v291 = vld [vmem:[%s1 + $0x8b8] sm:$0xff]
  %v292 = vld [vmem:[%s1 + $0x8c0] sm:$0xff]
  %v293 = vld [vmem:[%s1 + $0x8c8] sm:$0xff]
  %v294 = vld [vmem:[%s1 + $0x8d0] sm:$0xff]
  %v295 = vld [vmem:[%s1 + $0x8d8] sm:$0xff]
  %v296 = vld [vmem:[%s1 + $0x8e0] sm:$0xff]
  %v297 = vld [vmem:[%s1 + $0x8e8] sm:$0xff]
  %v298 = vld [vmem:[%s1 + $0x8f0] sm:$0xff]
  %v299 = vld [vmem:[%s1 + $0x8f8] sm:$0xff]
  %v300 = vld [vmem:[%s1 + $0x900] sm:$0xff]
  %v301 = vld [vmem:[%s1 + $0x908] sm:$0xff]
  %v302 = vld [vmem:[%s1 + $0x910] sm:$0xff]
  %v303 = vld [vmem:[%s1 + $0x918] sm:$0xff]
  %v304 = vld [vmem:[%s1 + $0x920] sm:$0xff]
  %v305 = vld [vmem:[%s1 + $0x928] sm:$0xff]
  %v306 = vld [vmem:[%s1 + $0x930] sm:$0xff]
  %v307 = vld [vmem:[%s1 + $0x938] sm:$0xff]
  %v308 = vld [vmem:[%s1 + $0x940] sm:$0xff]
  %v309 = vld [vmem:[%s1 + $0x948] sm:$0xff]
  %v310 = vld [vmem:[%s1 + $0x950] sm:$0xff]
  %v311 = vld [vmem:[%s1 + $0x958] sm:$0xff]
  %v312 = vld [vmem:[%s1 + $0x960] sm:$0xff]
  %v313 = vld [vmem:[%s1 + $0x968] sm:$0xff]
  %v314 = vld [vmem:[%s1 + $0x970] sm:$0xff]
  %v315 = vld [vmem:[%s1 + $0x978] sm:$0xff]
  %v316 = vld [vmem:[%s1 + $0x980] sm:$0xff]
  %v317 = vld [vmem:[%s1 + $0x988] sm:$0xff]
  %v318 = vld [vmem:[%s1 + $0x990] sm:$0xff]
  %v319 = vld [vmem:[%s1 + $0x998] sm:$0xff]
  %v320 = vld [vmem:[%s1 + $0x9a0] sm:$0xff]
  %v321 = vld [vmem:[%s1 + $0x9a8] sm:$0xff]
  %v322 = vld [vmem:[%s1 + $0x9b0] sm:$0xff]
  %v323 = vld [vmem:[%s1 + $0x9b8] sm:$0xff]
  %v324 = vld [vmem:[%s1 + $0x9c0] sm:$0xff]
  %v325 = vld [vmem:[%s1 + $0x9c8] sm:$0xff]
  %v326 = vld [vmem:[%s1 + $0x9d0] sm:$0xff]
  %v327 = vld [vmem:[%s1 + $0x9d8] sm:$0xff]
  %v328 = vld [vmem:[%s1 + $0x9e0] sm:$0xff]
  %v329 = vld [vmem:[%s1 + $0x9e8] sm:$0xff]
  %v330 = vld [vmem:[%s1 + $0x9f0] sm:$0xff]
  %v331 = vld [vmem:[%s1 + $0x9f8] sm:$0xff]
  %v332 = vld [vmem:[%s1 + $0xa00] sm:$0xff]
  %v333 = vld [vmem:[%s1 + $0xa08] sm:$0xff]
  %v334 = vld [vmem:[%s1 + $0xa10] sm:$0xff]
  %v335 = vld [vmem:[%s1 + $0xa18] sm:$0xff]
  %v336 = vld [vmem:[%s1 + $0xa20] sm:$0xff]
  %v337 = vld [vmem:[%s1 + $0xa28] sm:$0xff]
  %v338 = vld [vmem:[%s1 + $0xa30] sm:$0xff]
  %v339 = vld [vmem:[%s1 + $0xa38] sm:$0xff]
  %v340 = vld [vmem:[%s1 + $0xa40] sm:$0xff]
  %v341 = vld [vmem:[%s1 + $0xa48] sm:$0xff]
  %v342 = vld [vmem:[%s1 + $0xa50] sm:$0xff]
  %v343 = vld [vmem:[%s1 + $0xa58] sm:$0xff]
  %v344 = vld [vmem:[%s1 + $0xa60] sm:$0xff]
  %v345 = vld [vmem:[%s1 + $0xa68] sm:$0xff]
  %v346 = vld [vmem:[%s1 + $0xa70] sm:$0xff]
  %v347 = vld [vmem:[%s1 + $0xa78] sm:$0xff]
  %v348 = vld [vmem:[%s1 + $0xa80] sm:$0xff]
  %v349 = vld [vmem:[%s1 + $0xa88] sm:$0xff]
  %v350 = vld [vmem:[%s1 + $0xa90] sm:$0xff]
  %v351 = vld [vmem:[%s1 + $0xa98] sm:$0xff]
  %v352 = vld [vmem:[%s1 + $0xaa0] sm:$0xff]
  %v353 = vld [vmem:[%s1 + $0xaa8] sm:$0xff]
  %v354 = vld [vmem:[%s1 + $0xab0] sm:$0xff]
  %v355 = vld [vmem:[%s1 + $0xab8] sm:$0xff]
  %v356 = vld [vmem:[%s1 + $0xac0] sm:$0xff]
  %v357 = vld [vmem:[%s1 + $0xac8] sm:$0xff]
  %v358 = vld [vmem:[%s1 + $0xad0] sm:$0xff]
  %v359 = vld [vmem:[%s1 + $0xad8] sm:$0xff]
  %v360 = vld [vmem:[%s1 + $0xae0] sm:$0xff]
  %v361 = vld [vmem:[%s1 + $0xae8] sm:$0xff]
  %v362 = vld [vmem:[%s1 + $0xaf0] sm:$0xff]
  %v363 = vld [vmem:[%s1 + $0xaf8] sm:$0xff]
  %v364 = vld [vmem:[%s1 + $0xb00] sm:$0xff]
  %v365 = vld [vmem:[%s1 + $0xb08] sm:$0xff]
  %v366 = vld [vmem:[%s1 + $0xb10] sm:$0xff]
  %v367 = vld [vmem:[%s1 + $0xb18] sm:$0xff]
  %v368 = vld [vmem:[%s1 + $0xb20] sm:$0xff]
  %v369 = vld [vmem:[%s1 + $0xb28] sm:$0xff]
  %v370 = vld [vmem:[%s1 + $0xb30] sm:$0xff]
  %v371 = vld [vmem:[%s1 + $0xb38] sm:$0xff]
  %v372 = vld [vmem:[%s1 + $0xb40] sm:$0xff]
  %v373 = vld [vmem:[%s1 + $0xb48] sm:$0xff]
  %v374 = vld [vmem:[%s1 + $0xb50] sm:$0xff]
  %v375 = vld [vmem:[%s1 + $0xb58] sm:$0xff]
  %v376 = vld [vmem:[%s1 + $0xb60] sm:$0xff]
  %v377 = vld [vmem:[%s1 + $0xb68] sm:$0xff]
  %v378 = vld [vmem:[%s1 + $0xb70] sm:$0xff]
  %v379 = vld [vmem:[%s1 + $0xb78] sm:$0xff]
  %v380 = vld [vmem:[%s1 + $0xb80] sm:$0xff]
  %v381 = vld [vmem:[%s1 + $0xb88] sm:$0xff]
  %v382 = vld [vmem:[%s1 + $0xb90] sm:$0xff]
  %v383 = vld [vmem:[%s1 + $0xb98] sm:$0xff]
  %v384 = vld [vmem:[%s1 + $0xba0] sm:$0xff]
  %v385 = vld [vmem:[%s1 + $0xba8] sm:$0xff]
  %v386 = vld [vmem:[%s1 + $0xbb0] sm:$0xff]
  %v387 = vld [vmem:[%s1 + $0xbb8] sm:$0xff]
  %v388 = vld [vmem:[%s1 + $0xbc0] sm:$0xff]
  %v389 = vld [vmem:[%s1 + $0xbc8] sm:$0xff]
  %v390 = vld [vmem:[%s1 + $0xbd0] sm:$0xff]
  %v391 = vld [vmem:[%s1 + $0xbd8] sm:$0xff]
  %v392 = vld [vmem:[%s1 + $0xbe0] sm:$0xff]
  %v393 = vld [vmem:[%s1 + $0xbe8] sm:$0xff]
  %v394 = vld [vmem:[%s1 + $0xbf0] sm:$0xff]
  %v395 = vld [vmem:[%s1 + $0xbf8] sm:$0xff]
  %v396 = vld [vmem:[%s1 + $0xc00] sm:$0xff]
  %v397 = vld [vmem:[%s1 + $0xc08] sm:$0xff]
  %v398 = vld [vmem:[%s1 + $0xc10] sm:$0xff]
  %v399 = vld [vmem:[%s1 + $0xc18] sm:$0xff]
  %v400 = vld [vmem:[%s1 + $0xc20] sm:$0xff]
  %v401 = vld [vmem:[%s1 + $0xc28] sm:$0xff]
  %v402 = vld [vmem:[%s1 + $0xc30] sm:$0xff]
  %v403 = vld [vmem:[%s1 + $0xc38] sm:$0xff]
  %v404 = vld [vmem:[%s1 + $0xc40] sm:$0xff]
  %v405 = vld [vmem:[%s1 + $0xc48] sm:$0xff]
  %v406 = vld [vmem:[%s1 + $0xc50] sm:$0xff]
  %v407 = vld [vmem:[%s1 + $0xc58] sm:$0xff]
  %v408 = vld [vmem:[%s1 + $0xc60] sm:$0xff]
  %v409 = vld [vmem:[%s1 + $0xc68] sm:$0xff]
  %v410 = vld [vmem:[%s1 + $0xc70] sm:$0xff]
  %v411 = vld [vmem:[%s1 + $0xc78] sm:$0xff]
  %v412 = vld [vmem:[%s1 + $0xc80] sm:$0xff]
  %v413 = vld [vmem:[%s1 + $0xc88] sm:$0xff]
  %v414 = vld [vmem:[%s1 + $0xc90] sm:$0xff]
  %v415 = vld [vmem:[%s1 + $0xc98] sm:$0xff]
  %v416 = vld [vmem:[%s1 + $0xca0] sm:$0xff]
  %v417 = vld [vmem:[%s1 + $0xca8] sm:$0xff]
  %v418 = vld [vmem:[%s1 + $0xcb0] sm:$0xff]
  %v419 = vld [vmem:[%s1 + $0xcb8] sm:$0xff]
  %v420 = vld [vmem:[%s1 + $0xcc0] sm:$0xff]
  %v421 = vld [vmem:[%s1 + $0xcc8] sm:$0xff]
  %v422 = vld [vmem:[%s1 + $0xcd0] sm:$0xff]
  %v423 = vld [vmem:[%s1 + $0xcd8] sm:$0xff]
  %v424 = vld [vmem:[%s1 + $0xce0] sm:$0xff]
  %v425 = vld [vmem:[%s1 + $0xce8] sm:$0xff]
  %v426 = vld [vmem:[%s1 + $0xcf0] sm:$0xff]
  %v427 = vld [vmem:[%s1 + $0xcf8] sm:$0xff]
  %v428 = vld [vmem:[%s1 + $0xd00] sm:$0xff]
  %v429 = vld [vmem:[%s1 + $0xd08] sm:$0xff]
  %v430 = vld [vmem:[%s1 + $0xd10] sm:$0xff]
  %v431 = vld [vmem:[%s1 + $0xd18] sm:$0xff]
  %v432 = vld [vmem:[%s1 + $0xd20] sm:$0xff]
  %v433 = vld [vmem:[%s1 + $0xd28] sm:$0xff]
  %v434 = vld [vmem:[%s1 + $0xd30] sm:$0xff]
  %v435 = vld [vmem:[%s1 + $0xd38] sm:$0xff]
  %v436 = vld [vmem:[%s1 + $0xd40] sm:$0xff]
  %v437 = vld [vmem:[%s1 + $0xd48] sm:$0xff]
  %v438 = vld [vmem:[%s1 + $0xd50] sm:$0xff]
  %v439 = vld [vmem:[%s1 + $0xd58] sm:$0xff]
  %v440 = vld [vmem:[%s1 + $0xd60] sm:$0xff]
  %v441 = vld [vmem:[%s1 + $0xd68] sm:$0xff]
  %v442 = vld [vmem:[%s1 + $0xd70] sm:$0xff]
  %v443 = vld [vmem:[%s1 + $0xd78] sm:$0xff]
  %v444 = vld [vmem:[%s1 + $0xd80] sm:$0xff]
  %v445 = vld [vmem:[%s1 + $0xd88] sm:$0xff]
  %v446 = vld [vmem:[%s1 + $0xd90] sm:$0xff]
  %v447 = vld [vmem:[%s1 + $0xd98] sm:$0xff]
  %v448 = vld [vmem:[%s1 + $0xda0] sm:$0xff]
  %v449 = vld [vmem:[%s1 + $0xda8] sm:$0xff]
  %v450 = vld [vmem:[%s1 + $0xdb0] sm:$0xff]
  %v451 = vld [vmem:[%s1 + $0xdb8] sm:$0xff]
  %v452 = vld [vmem:[%s1 + $0xdc0] sm:$0xff]
  %v453 = vld [vmem:[%s1 + $0xdc8] sm:$0xff]
  %v454 = vld [vmem:[%s1 + $0xdd0] sm:$0xff]
  %v455 = vld [vmem:[%s1 + $0xdd8] sm:$0xff]
  %v456 = vld [vmem:[%s1 + $0xde0] sm:$0xff]
  %v457 = vld [vmem:[%s1 + $0xde8] sm:$0xff]
  %v458 = vld [vmem:[%s1 + $0xdf0] sm:$0xff]
  %v459 = vld [vmem:[%s1 + $0xdf8] sm:$0xff]
  %v460 = vld [vmem:[%s1 + $0xe00] sm:$0xff]
  %v461 = vld [vmem:[%s1 + $0xe08] sm:$0xff]
  %v462 = vld [vmem:[%s1 + $0xe10] sm:$0xff]
  %v463 = vld [vmem:[%s1 + $0xe18] sm:$0xff]
  %v464 = vld [vmem:[%s1 + $0xe20] sm:$0xff]
  %v465 = vld [vmem:[%s1 + $0xe28] sm:$0xff]
  %v466 = vld [vmem:[%s1 + $0xe30] sm:$0xff]
  %v467 = vld [vmem:[%s1 + $0xe38] sm:$0xff]
  %v468 = vld [vmem:[%s1 + $0xe40] sm:$0xff]
  %v469 = vld [vmem:[%s1 + $0xe48] sm:$0xff]
  %v470 = vld [vmem:[%s1 + $0xe50] sm:$0xff]
  %v471 = vld [vmem:[%s1 + $0xe58] sm:$0xff]
  %v472 = vld [vmem:[%s1 + $0xe60] sm:$0xff]
  %v473 = vld [vmem:[%s1 + $0xe68] sm:$0xff]
  %v474 = vld [vmem:[%s1 + $0xe70] sm:$0xff]
  %v475 = vld [vmem:[%s1 + $0xe78] sm:$0xff]
  %v476 = vld [vmem:[%s1 + $0xe80] sm:$0xff]
  %v477 = vld [vmem:[%s1 + $0xe88] sm:$0xff]
  %v478 = vld [vmem:[%s1 + $0xe90] sm:$0xff]
  %v479 = vld [vmem:[%s1 + $0xe98] sm:$0xff]
  %v480 = vld [vmem:[%s1 + $0xea0] sm:$0xff]
  %v481 = vld [vmem:[%s1 + $0xea8] sm:$0xff]
  %v482 = vld [vmem:[%s1 + $0xeb0] sm:$0xff]
  %v483 = vld [vmem:[%s1 + $0xeb8] sm:$0xff]
  %v484 = vld [vmem:[%s1 + $0xec0] sm:$0xff]
  %v485 = vld [vmem:[%s1 + $0xec8] sm:$0xff]
  %v486 = vld [vmem:[%s1 + $0xed0] sm:$0xff]
  %v487 = vld [vmem:[%s1 + $0xed8] sm:$0xff]
  %v488 = vld [vmem:[%s1 + $0xee0] sm:$0xff]
  %v489 = vld [vmem:[%s1 + $0xee8] sm:$0xff]
  %v490 = vld [vmem:[%s1 + $0xef0] sm:$0xff]
  %v491 = vld [vmem:[%s1 + $0xef8] sm:$0xff]
  %v492 = vld [vmem:[%s1 + $0xf00] sm:$0xff]
  %v493 = vld [vmem:[%s1 + $0xf08] sm:$0xff]
  %v494 = vld [vmem:[%s1 + $0xf10] sm:$0xff]
  %v495 = vld [vmem:[%s1 + $0xf18] sm:$0xff]
  %v496 = vld [vmem:[%s1 + $0xf20] sm:$0xff]
  %v497 = vld [vmem:[%s1 + $0xf28] sm:$0xff]
  %v498 = vld [vmem:[%s1 + $0xf30] sm:$0xff]
  %v499 = vld [vmem:[%s1 + $0xf38] sm:$0xff]
  %v500 = vld [vmem:[%s1 + $0xf40] sm:$0xff]
  %v501 = vld [vmem:[%s1 + $0xf48] sm:$0xff]
  %v502 = vld [vmem:[%s1 + $0xf50] sm:$0xff]
  %v503 = vld [vmem:[%s1 + $0xf58] sm:$0xff]
  %v504 = vld [vmem:[%s1 + $0xf60] sm:$0xff]
  %v505 = vld [vmem:[%s1 + $0xf68] sm:$0xff]
  %v506 = vld [vmem:[%s1 + $0xf70] sm:$0xff]
  %v507 = vld [vmem:[%s1 + $0xf78] sm:$0xff]
  %v508 = vld [vmem:[%s1 + $0xf80] sm:$0xff]
  %v509 = vld [vmem:[%s1 + $0xf88] sm:$0xff]
  %v510 = vld [vmem:[%s1 + $0xf90] sm:$0xff]
  %v511 = vld [vmem:[%s1 + $0xf98] sm:$0xff]
  %v512 = vld [vmem:[%s1 + $0xfa0] sm:$0xff]
  %v513 = vld [vmem:[%s1 + $0xfa8] sm:$0xff]
  %v514 = vld [vmem:[%s1 + $0xfb0] sm:$0xff]
  %v515 = vld [vmem:[%s1 + $0xfb8] sm:$0xff]
  %v516 = vld [vmem:[%s1 + $0xfc0] sm:$0xff]
  %v517 = vld [vmem:[%s1 + $0xfc8] sm:$0xff]
  %v518 = vld [vmem:[%s1 + $0xfd0] sm:$0xff]
  %v519 = vld [vmem:[%s1 + $0xfd8] sm:$0xff]
  %v520 = vld [vmem:[%s1 + $0xfe0] sm:$0xff]
  %v521 = vld [vmem:[%s1 + $0xfe8] sm:$0xff]
  %v522 = vld [vmem:[%s1 + $0xff0] sm:$0xff]
  %v523 = vld [vmem:[%s1 + $0xff8] sm:$0xff]
  %v1036 = vunpack.c.l.b16 %v12
  %v1037 = vunpack.c.h.b16 %v12
  %v1038 = vunpack.c.l.b16 %v13
  %v1039 = vunpack.c.h.b16 %v13
  %v1040 = vunpack.c.l.b16 %v14
  %v1041 = vunpack.c.h.b16 %v14
  %v1042 = vunpack.c.l.b16 %v15
  %v1043 = vunpack.c.h.b16 %v15
  %v1044 = vunpack.c.l.b16 %v16
  %v1045 = vunpack.c.h.b16 %v16
  %v1046 = vunpack.c.l.b16 %v17
  %v1047 = vunpack.c.h.b16 %v17
  %v1048 = vunpack.c.l.b16 %v18
  %v1049 = vunpack.c.h.b16 %v18
  %v1050 = vunpack.c.l.b16 %v19
  %v1051 = vunpack.c.h.b16 %v19
  %v1052 = vunpack.c.l.b16 %v20
  %v1053 = vunpack.c.h.b16 %v20
  %v1054 = vunpack.c.l.b16 %v21
  %v1055 = vunpack.c.h.b16 %v21
  %v1056 = vunpack.c.l.b16 %v22
  %v1057 = vunpack.c.h.b16 %v22
  %v1058 = vunpack.c.l.b16 %v23
  %v1059 = vunpack.c.h.b16 %v23
  %v1060 = vunpack.c.l.b16 %v24
  %v1061 = vunpack.c.h.b16 %v24
  %v1062 = vunpack.c.l.b16 %v25
  %v1063 = vunpack.c.h.b16 %v25
  %v1064 = vunpack.c.l.b16 %v26
  %v1065 = vunpack.c.h.b16 %v26
  %v1066 = vunpack.c.l.b16 %v27
  %v1067 = vunpack.c.h.b16 %v27
  %v1068 = vunpack.c.l.b16 %v28
  %v1069 = vunpack.c.h.b16 %v28
  %v1070 = vunpack.c.l.b16 %v29
  %v1071 = vunpack.c.h.b16 %v29
  %v1072 = vunpack.c.l.b16 %v30
  %v1073 = vunpack.c.h.b16 %v30
  %v1074 = vunpack.c.l.b16 %v31
  %v1075 = vunpack.c.h.b16 %v31
  %v1076 = vunpack.c.l.b16 %v32
  %v1077 = vunpack.c.h.b16 %v32
  %v1078 = vunpack.c.l.b16 %v33
  %v1079 = vunpack.c.h.b16 %v33
  %v1080 = vunpack.c.l.b16 %v34
  %v1081 = vunpack.c.h.b16 %v34
  %v1082 = vunpack.c.l.b16 %v35
  %v1083 = vunpack.c.h.b16 %v35
  %v1084 = vunpack.c.l.b16 %v36
  %v1085 = vunpack.c.h.b16 %v36
  %v1086 = vunpack.c.l.b16 %v37
  %v1087 = vunpack.c.h.b16 %v37
  %v1088 = vunpack.c.l.b16 %v38
  %v1089 = vunpack.c.h.b16 %v38
  %v1090 = vunpack.c.l.b16 %v39
  %v1091 = vunpack.c.h.b16 %v39
  %v1092 = vunpack.c.l.b16 %v40
  %v1093 = vunpack.c.h.b16 %v40
  %v1094 = vunpack.c.l.b16 %v41
  %v1095 = vunpack.c.h.b16 %v41
  %v1096 = vunpack.c.l.b16 %v42
  %v1097 = vunpack.c.h.b16 %v42
  %v1098 = vunpack.c.l.b16 %v43
  %v1099 = vunpack.c.h.b16 %v43
  %v1100 = vunpack.c.l.b16 %v44
  %v1101 = vunpack.c.h.b16 %v44
  %v1102 = vunpack.c.l.b16 %v45
  %v1103 = vunpack.c.h.b16 %v45
  %v1104 = vunpack.c.l.b16 %v46
  %v1105 = vunpack.c.h.b16 %v46
  %v1106 = vunpack.c.l.b16 %v47
  %v1107 = vunpack.c.h.b16 %v47
  %v1108 = vunpack.c.l.b16 %v48
  %v1109 = vunpack.c.h.b16 %v48
  %v1110 = vunpack.c.l.b16 %v49
  %v1111 = vunpack.c.h.b16 %v49
  %v1112 = vunpack.c.l.b16 %v50
  %v1113 = vunpack.c.h.b16 %v50
  %v1114 = vunpack.c.l.b16 %v51
  %v1115 = vunpack.c.h.b16 %v51
  %v1116 = vunpack.c.l.b16 %v52
  %v1117 = vunpack.c.h.b16 %v52
  %v1118 = vunpack.c.l.b16 %v53
  %v1119 = vunpack.c.h.b16 %v53
  %v1120 = vunpack.c.l.b16 %v54
  %v1121 = vunpack.c.h.b16 %v54
  %v1122 = vunpack.c.l.b16 %v55
  %v1123 = vunpack.c.h.b16 %v55
  %v1124 = vunpack.c.l.b16 %v56
  %v1125 = vunpack.c.h.b16 %v56
  %v1126 = vunpack.c.l.b16 %v57
  %v1127 = vunpack.c.h.b16 %v57
  %v1128 = vunpack.c.l.b16 %v58
  %v1129 = vunpack.c.h.b16 %v58
  %v1130 = vunpack.c.l.b16 %v59
  %v1131 = vunpack.c.h.b16 %v59
  %v1132 = vunpack.c.l.b16 %v60
  %v1133 = vunpack.c.h.b16 %v60
  %v1134 = vunpack.c.l.b16 %v61
  %v1135 = vunpack.c.h.b16 %v61
  %v1136 = vunpack.c.l.b16 %v62
  %v1137 = vunpack.c.h.b16 %v62
  %v1138 = vunpack.c.l.b16 %v63
  %v1139 = vunpack.c.h.b16 %v63
  %v1140 = vunpack.c.l.b16 %v64
  %v1141 = vunpack.c.h.b16 %v64
  %v1142 = vunpack.c.l.b16 %v65
  %v1143 = vunpack.c.h.b16 %v65
  %v1144 = vunpack.c.l.b16 %v66
  %v1145 = vunpack.c.h.b16 %v66
  %v1146 = vunpack.c.l.b16 %v67
  %v1147 = vunpack.c.h.b16 %v67
  %v1148 = vunpack.c.l.b16 %v68
  %v1149 = vunpack.c.h.b16 %v68
  %v1150 = vunpack.c.l.b16 %v69
  %v1151 = vunpack.c.h.b16 %v69
  %v1152 = vunpack.c.l.b16 %v70
  %v1153 = vunpack.c.h.b16 %v70
  %v1154 = vunpack.c.l.b16 %v71
  %v1155 = vunpack.c.h.b16 %v71
  %v1156 = vunpack.c.l.b16 %v72
  %v1157 = vunpack.c.h.b16 %v72
  %v1158 = vunpack.c.l.b16 %v73
  %v1159 = vunpack.c.h.b16 %v73
  %v1160 = vunpack.c.l.b16 %v74
  %v1161 = vunpack.c.h.b16 %v74
  %v1162 = vunpack.c.l.b16 %v75
  %v1163 = vunpack.c.h.b16 %v75
  %v1164 = vunpack.c.l.b16 %v76
  %v1165 = vunpack.c.h.b16 %v76
  %v1166 = vunpack.c.l.b16 %v77
  %v1167 = vunpack.c.h.b16 %v77
  %v1168 = vunpack.c.l.b16 %v78
  %v1169 = vunpack.c.h.b16 %v78
  %v1170 = vunpack.c.l.b16 %v79
  %v1171 = vunpack.c.h.b16 %v79
  %v1172 = vunpack.c.l.b16 %v80
  %v1173 = vunpack.c.h.b16 %v80
  %v1174 = vunpack.c.l.b16 %v81
  %v1175 = vunpack.c.h.b16 %v81
  %v1176 = vunpack.c.l.b16 %v82
  %v1177 = vunpack.c.h.b16 %v82
  %v1178 = vunpack.c.l.b16 %v83
  %v1179 = vunpack.c.h.b16 %v83
  %v1180 = vunpack.c.l.b16 %v84
  %v1181 = vunpack.c.h.b16 %v84
  %v1182 = vunpack.c.l.b16 %v85
  %v1183 = vunpack.c.h.b16 %v85
  %v1184 = vunpack.c.l.b16 %v86
  %v1185 = vunpack.c.h.b16 %v86
  %v1186 = vunpack.c.l.b16 %v87
  %v1187 = vunpack.c.h.b16 %v87
  %v1188 = vunpack.c.l.b16 %v88
  %v1189 = vunpack.c.h.b16 %v88
  %v1190 = vunpack.c.l.b16 %v89
  %v1191 = vunpack.c.h.b16 %v89
  %v1192 = vunpack.c.l.b16 %v90
  %v1193 = vunpack.c.h.b16 %v90
  %v1194 = vunpack.c.l.b16 %v91
  %v1195 = vunpack.c.h.b16 %v91
  %v1196 = vunpack.c.l.b16 %v92
  %v1197 = vunpack.c.h.b16 %v92
  %v1198 = vunpack.c.l.b16 %v93
  %v1199 = vunpack.c.h.b16 %v93
  %v1200 = vunpack.c.l.b16 %v94
  %v1201 = vunpack.c.h.b16 %v94
  %v1202 = vunpack.c.l.b16 %v95
  %v1203 = vunpack.c.h.b16 %v95
  %v1204 = vunpack.c.l.b16 %v96
  %v1205 = vunpack.c.h.b16 %v96
  %v1206 = vunpack.c.l.b16 %v97
  %v1207 = vunpack.c.h.b16 %v97
  %v1208 = vunpack.c.l.b16 %v98
  %v1209 = vunpack.c.h.b16 %v98
  %v1210 = vunpack.c.l.b16 %v99
  %v1211 = vunpack.c.h.b16 %v99
  %v1212 = vunpack.c.l.b16 %v100
  %v1213 = vunpack.c.h.b16 %v100
  %v1214 = vunpack.c.l.b16 %v101
  %v1215 = vunpack.c.h.b16 %v101
  %v1216 = vunpack.c.l.b16 %v102
  %v1217 = vunpack.c.h.b16 %v102
  %v1218 = vunpack.c.l.b16 %v103
  %v1219 = vunpack.c.h.b16 %v103
  %v1220 = vunpack.c.l.b16 %v104
  %v1221 = vunpack.c.h.b16 %v104
  %v1222 = vunpack.c.l.b16 %v105
  %v1223 = vunpack.c.h.b16 %v105
  %v1224 = vunpack.c.l.b16 %v106
  %v1225 = vunpack.c.h.b16 %v106
  %v1226 = vunpack.c.l.b16 %v107
  %v1227 = vunpack.c.h.b16 %v107
  %v1228 = vunpack.c.l.b16 %v108
  %v1229 = vunpack.c.h.b16 %v108
  %v1230 = vunpack.c.l.b16 %v109
  %v1231 = vunpack.c.h.b16 %v109
  %v1232 = vunpack.c.l.b16 %v110
  %v1233 = vunpack.c.h.b16 %v110
  %v1234 = vunpack.c.l.b16 %v111
  %v1235 = vunpack.c.h.b16 %v111
  %v1236 = vunpack.c.l.b16 %v112
  %v1237 = vunpack.c.h.b16 %v112
  %v1238 = vunpack.c.l.b16 %v113
  %v1239 = vunpack.c.h.b16 %v113
  %v1240 = vunpack.c.l.b16 %v114
  %v1241 = vunpack.c.h.b16 %v114
  %v1242 = vunpack.c.l.b16 %v115
  %v1243 = vunpack.c.h.b16 %v115
  %v1244 = vunpack.c.l.b16 %v116
  %v1245 = vunpack.c.h.b16 %v116
  %v1246 = vunpack.c.l.b16 %v117
  %v1247 = vunpack.c.h.b16 %v117
  %v1248 = vunpack.c.l.b16 %v118
  %v1249 = vunpack.c.h.b16 %v118
  %v1250 = vunpack.c.l.b16 %v119
  %v1251 = vunpack.c.h.b16 %v119
  %v1252 = vunpack.c.l.b16 %v120
  %v1253 = vunpack.c.h.b16 %v120
  %v1254 = vunpack.c.l.b16 %v121
  %v1255 = vunpack.c.h.b16 %v121
  %v1256 = vunpack.c.l.b16 %v122
  %v1257 = vunpack.c.h.b16 %v122
  %v1258 = vunpack.c.l.b16 %v123
  %v1259 = vunpack.c.h.b16 %v123
  %v1260 = vunpack.c.l.b16 %v124
  %v1261 = vunpack.c.h.b16 %v124
  %v1262 = vunpack.c.l.b16 %v125
  %v1263 = vunpack.c.h.b16 %v125
  %v1264 = vunpack.c.l.b16 %v126
  %v1265 = vunpack.c.h.b16 %v126
  %v1266 = vunpack.c.l.b16 %v127
  %v1267 = vunpack.c.h.b16 %v127
  %v1268 = vunpack.c.l.b16 %v128
  %v1269 = vunpack.c.h.b16 %v128
  %v1270 = vunpack.c.l.b16 %v129
  %v1271 = vunpack.c.h.b16 %v129
  %v1272 = vunpack.c.l.b16 %v130
  %v1273 = vunpack.c.h.b16 %v130
  %v1274 = vunpack.c.l.b16 %v131
  %v1275 = vunpack.c.h.b16 %v131
  %v1276 = vunpack.c.l.b16 %v132
  %v1277 = vunpack.c.h.b16 %v132
  %v1278 = vunpack.c.l.b16 %v133
  %v1279 = vunpack.c.h.b16 %v133
  %v1280 = vunpack.c.l.b16 %v134
  %v1281 = vunpack.c.h.b16 %v134
  %v1282 = vunpack.c.l.b16 %v135
  %v1283 = vunpack.c.h.b16 %v135
  %v1284 = vunpack.c.l.b16 %v136
  %v1285 = vunpack.c.h.b16 %v136
  %v1286 = vunpack.c.l.b16 %v137
  %v1287 = vunpack.c.h.b16 %v137
  %v1288 = vunpack.c.l.b16 %v138
  %v1289 = vunpack.c.h.b16 %v138
  %v1290 = vunpack.c.l.b16 %v139
  %v1291 = vunpack.c.h.b16 %v139
  %v1292 = vunpack.c.l.b16 %v140
  %v1293 = vunpack.c.h.b16 %v140
  %v1294 = vunpack.c.l.b16 %v141
  %v1295 = vunpack.c.h.b16 %v141
  %v1296 = vunpack.c.l.b16 %v142
  %v1297 = vunpack.c.h.b16 %v142
  %v1298 = vunpack.c.l.b16 %v143
  %v1299 = vunpack.c.h.b16 %v143
  %v1300 = vunpack.c.l.b16 %v144
  %v1301 = vunpack.c.h.b16 %v144
  %v1302 = vunpack.c.l.b16 %v145
  %v1303 = vunpack.c.h.b16 %v145
  %v1304 = vunpack.c.l.b16 %v146
  %v1305 = vunpack.c.h.b16 %v146
  %v1306 = vunpack.c.l.b16 %v147
  %v1307 = vunpack.c.h.b16 %v147
  %v1308 = vunpack.c.l.b16 %v148
  %v1309 = vunpack.c.h.b16 %v148
  %v1310 = vunpack.c.l.b16 %v149
  %v1311 = vunpack.c.h.b16 %v149
  %v1312 = vunpack.c.l.b16 %v150
  %v1313 = vunpack.c.h.b16 %v150
  %v1314 = vunpack.c.l.b16 %v151
  %v1315 = vunpack.c.h.b16 %v151
  %v1316 = vunpack.c.l.b16 %v152
  %v1317 = vunpack.c.h.b16 %v152
  %v1318 = vunpack.c.l.b16 %v153
  %v1319 = vunpack.c.h.b16 %v153
  %v1320 = vunpack.c.l.b16 %v154
  %v1321 = vunpack.c.h.b16 %v154
  %v1322 = vunpack.c.l.b16 %v155
  %v1323 = vunpack.c.h.b16 %v155
  %v1324 = vunpack.c.l.b16 %v156
  %v1325 = vunpack.c.h.b16 %v156
  %v1326 = vunpack.c.l.b16 %v157
  %v1327 = vunpack.c.h.b16 %v157
  %v1328 = vunpack.c.l.b16 %v158
  %v1329 = vunpack.c.h.b16 %v158
  %v1330 = vunpack.c.l.b16 %v159
  %v1331 = vunpack.c.h.b16 %v159
  %v1332 = vunpack.c.l.b16 %v160
  %v1333 = vunpack.c.h.b16 %v160
  %v1334 = vunpack.c.l.b16 %v161
  %v1335 = vunpack.c.h.b16 %v161
  %v1336 = vunpack.c.l.b16 %v162
  %v1337 = vunpack.c.h.b16 %v162
  %v1338 = vunpack.c.l.b16 %v163
  %v1339 = vunpack.c.h.b16 %v163
  %v1340 = vunpack.c.l.b16 %v164
  %v1341 = vunpack.c.h.b16 %v164
  %v1342 = vunpack.c.l.b16 %v165
  %v1343 = vunpack.c.h.b16 %v165
  %v1344 = vunpack.c.l.b16 %v166
  %v1345 = vunpack.c.h.b16 %v166
  %v1346 = vunpack.c.l.b16 %v167
  %v1347 = vunpack.c.h.b16 %v167
  %v1348 = vunpack.c.l.b16 %v168
  %v1349 = vunpack.c.h.b16 %v168
  %v1350 = vunpack.c.l.b16 %v169
  %v1351 = vunpack.c.h.b16 %v169
  %v1352 = vunpack.c.l.b16 %v170
  %v1353 = vunpack.c.h.b16 %v170
  %v1354 = vunpack.c.l.b16 %v171
  %v1355 = vunpack.c.h.b16 %v171
  %v1356 = vunpack.c.l.b16 %v172
  %v1357 = vunpack.c.h.b16 %v172
  %v1358 = vunpack.c.l.b16 %v173
  %v1359 = vunpack.c.h.b16 %v173
  %v1360 = vunpack.c.l.b16 %v174
  %v1361 = vunpack.c.h.b16 %v174
  %v1362 = vunpack.c.l.b16 %v175
  %v1363 = vunpack.c.h.b16 %v175
  %v1364 = vunpack.c.l.b16 %v176
  %v1365 = vunpack.c.h.b16 %v176
  %v1366 = vunpack.c.l.b16 %v177
  %v1367 = vunpack.c.h.b16 %v177
  %v1368 = vunpack.c.l.b16 %v178
  %v1369 = vunpack.c.h.b16 %v178
  %v1370 = vunpack.c.l.b16 %v179
  %v1371 = vunpack.c.h.b16 %v179
  %v1372 = vunpack.c.l.b16 %v180
  %v1373 = vunpack.c.h.b16 %v180
  %v1374 = vunpack.c.l.b16 %v181
  %v1375 = vunpack.c.h.b16 %v181
  %v1376 = vunpack.c.l.b16 %v182
  %v1377 = vunpack.c.h.b16 %v182
  %v1378 = vunpack.c.l.b16 %v183
  %v1379 = vunpack.c.h.b16 %v183
  %v1380 = vunpack.c.l.b16 %v184
  %v1381 = vunpack.c.h.b16 %v184
  %v1382 = vunpack.c.l.b16 %v185
  %v1383 = vunpack.c.h.b16 %v185
  %v1384 = vunpack.c.l.b16 %v186
  %v1385 = vunpack.c.h.b16 %v186
  %v1386 = vunpack.c.l.b16 %v187
  %v1387 = vunpack.c.h.b16 %v187
  %v1388 = vunpack.c.l.b16 %v188
  %v1389 = vunpack.c.h.b16 %v188
  %v1390 = vunpack.c.l.b16 %v189
  %v1391 = vunpack.c.h.b16 %v189
  %v1392 = vunpack.c.l.b16 %v190
  %v1393 = vunpack.c.h.b16 %v190
  %v1394 = vunpack.c.l.b16 %v191
  %v1395 = vunpack.c.h.b16 %v191
  %v1396 = vunpack.c.l.b16 %v192
  %v1397 = vunpack.c.h.b16 %v192
  %v1398 = vunpack.c.l.b16 %v193
  %v1399 = vunpack.c.h.b16 %v193
  %v1400 = vunpack.c.l.b16 %v194
  %v1401 = vunpack.c.h.b16 %v194
  %v1402 = vunpack.c.l.b16 %v195
  %v1403 = vunpack.c.h.b16 %v195
  %v1404 = vunpack.c.l.b16 %v196
  %v1405 = vunpack.c.h.b16 %v196
  %v1406 = vunpack.c.l.b16 %v197
  %v1407 = vunpack.c.h.b16 %v197
  %v1408 = vunpack.c.l.b16 %v198
  %v1409 = vunpack.c.h.b16 %v198
  %v1410 = vunpack.c.l.b16 %v199
  %v1411 = vunpack.c.h.b16 %v199
  %v1412 = vunpack.c.l.b16 %v200
  %v1413 = vunpack.c.h.b16 %v200
  %v1414 = vunpack.c.l.b16 %v201
  %v1415 = vunpack.c.h.b16 %v201
  %v1416 = vunpack.c.l.b16 %v202
  %v1417 = vunpack.c.h.b16 %v202
  %v1418 = vunpack.c.l.b16 %v203
  %v1419 = vunpack.c.h.b16 %v203
  %v1420 = vunpack.c.l.b16 %v204
  %v1421 = vunpack.c.h.b16 %v204
  %v1422 = vunpack.c.l.b16 %v205
  %v1423 = vunpack.c.h.b16 %v205
  %v1424 = vunpack.c.l.b16 %v206
  %v1425 = vunpack.c.h.b16 %v206
  %v1426 = vunpack.c.l.b16 %v207
  %v1427 = vunpack.c.h.b16 %v207
  %v1428 = vunpack.c.l.b16 %v208
  %v1429 = vunpack.c.h.b16 %v208
  %v1430 = vunpack.c.l.b16 %v209
  %v1431 = vunpack.c.h.b16 %v209
  %v1432 = vunpack.c.l.b16 %v210
  %v1433 = vunpack.c.h.b16 %v210
  %v1434 = vunpack.c.l.b16 %v211
  %v1435 = vunpack.c.h.b16 %v211
  %v1436 = vunpack.c.l.b16 %v212
  %v1437 = vunpack.c.h.b16 %v212
  %v1438 = vunpack.c.l.b16 %v213
  %v1439 = vunpack.c.h.b16 %v213
  %v1440 = vunpack.c.l.b16 %v214
  %v1441 = vunpack.c.h.b16 %v214
  %v1442 = vunpack.c.l.b16 %v215
  %v1443 = vunpack.c.h.b16 %v215
  %v1444 = vunpack.c.l.b16 %v216
  %v1445 = vunpack.c.h.b16 %v216
  %v1446 = vunpack.c.l.b16 %v217
  %v1447 = vunpack.c.h.b16 %v217
  %v1448 = vunpack.c.l.b16 %v218
  %v1449 = vunpack.c.h.b16 %v218
  %v1450 = vunpack.c.l.b16 %v219
  %v1451 = vunpack.c.h.b16 %v219
  %v1452 = vunpack.c.l.b16 %v220
  %v1453 = vunpack.c.h.b16 %v220
  %v1454 = vunpack.c.l.b16 %v221
  %v1455 = vunpack.c.h.b16 %v221
  %v1456 = vunpack.c.l.b16 %v222
  %v1457 = vunpack.c.h.b16 %v222
  %v1458 = vunpack.c.l.b16 %v223
  %v1459 = vunpack.c.h.b16 %v223
  %v1460 = vunpack.c.l.b16 %v224
  %v1461 = vunpack.c.h.b16 %v224
  %v1462 = vunpack.c.l.b16 %v225
  %v1463 = vunpack.c.h.b16 %v225
  %v1464 = vunpack.c.l.b16 %v226
  %v1465 = vunpack.c.h.b16 %v226
  %v1466 = vunpack.c.l.b16 %v227
  %v1467 = vunpack.c.h.b16 %v227
  %v1468 = vunpack.c.l.b16 %v228
  %v1469 = vunpack.c.h.b16 %v228
  %v1470 = vunpack.c.l.b16 %v229
  %v1471 = vunpack.c.h.b16 %v229
  %v1472 = vunpack.c.l.b16 %v230
  %v1473 = vunpack.c.h.b16 %v230
  %v1474 = vunpack.c.l.b16 %v231
  %v1475 = vunpack.c.h.b16 %v231
  %v1476 = vunpack.c.l.b16 %v232
  %v1477 = vunpack.c.h.b16 %v232
  %v1478 = vunpack.c.l.b16 %v233
  %v1479 = vunpack.c.h.b16 %v233
  %v1480 = vunpack.c.l.b16 %v234
  %v1481 = vunpack.c.h.b16 %v234
  %v1482 = vunpack.c.l.b16 %v235
  %v1483 = vunpack.c.h.b16 %v235
  %v1484 = vunpack.c.l.b16 %v236
  %v1485 = vunpack.c.h.b16 %v236
  %v1486 = vunpack.c.l.b16 %v237
  %v1487 = vunpack.c.h.b16 %v237
  %v1488 = vunpack.c.l.b16 %v238
  %v1489 = vunpack.c.h.b16 %v238
  %v1490 = vunpack.c.l.b16 %v239
  %v1491 = vunpack.c.h.b16 %v239
  %v1492 = vunpack.c.l.b16 %v240
  %v1493 = vunpack.c.h.b16 %v240
  %v1494 = vunpack.c.l.b16 %v241
  %v1495 = vunpack.c.h.b16 %v241
  %v1496 = vunpack.c.l.b16 %v242
  %v1497 = vunpack.c.h.b16 %v242
  %v1498 = vunpack.c.l.b16 %v243
  %v1499 = vunpack.c.h.b16 %v243
  %v1500 = vunpack.c.l.b16 %v244
  %v1501 = vunpack.c.h.b16 %v244
  %v1502 = vunpack.c.l.b16 %v245
  %v1503 = vunpack.c.h.b16 %v245
  %v1504 = vunpack.c.l.b16 %v246
  %v1505 = vunpack.c.h.b16 %v246
  %v1506 = vunpack.c.l.b16 %v247
  %v1507 = vunpack.c.h.b16 %v247
  %v1508 = vunpack.c.l.b16 %v248
  %v1509 = vunpack.c.h.b16 %v248
  %v1510 = vunpack.c.l.b16 %v249
  %v1511 = vunpack.c.h.b16 %v249
  %v1512 = vunpack.c.l.b16 %v250
  %v1513 = vunpack.c.h.b16 %v250
  %v1514 = vunpack.c.l.b16 %v251
  %v1515 = vunpack.c.h.b16 %v251
  %v1516 = vunpack.c.l.b16 %v252
  %v1517 = vunpack.c.h.b16 %v252
  %v1518 = vunpack.c.l.b16 %v253
  %v1519 = vunpack.c.h.b16 %v253
  %v1520 = vunpack.c.l.b16 %v254
  %v1521 = vunpack.c.h.b16 %v254
  %v1522 = vunpack.c.l.b16 %v255
  %v1523 = vunpack.c.h.b16 %v255
  %v1524 = vunpack.c.l.b16 %v256
  %v1525 = vunpack.c.h.b16 %v256
  %v1526 = vunpack.c.l.b16 %v257
  %v1527 = vunpack.c.h.b16 %v257
  %v1528 = vunpack.c.l.b16 %v258
  %v1529 = vunpack.c.h.b16 %v258
  %v1530 = vunpack.c.l.b16 %v259
  %v1531 = vunpack.c.h.b16 %v259
  %v1532 = vunpack.c.l.b16 %v260
  %v1533 = vunpack.c.h.b16 %v260
  %v1534 = vunpack.c.l.b16 %v261
  %v1535 = vunpack.c.h.b16 %v261
  %v1536 = vunpack.c.l.b16 %v262
  %v1537 = vunpack.c.h.b16 %v262
  %v1538 = vunpack.c.l.b16 %v263
  %v1539 = vunpack.c.h.b16 %v263
  %v1540 = vunpack.c.l.b16 %v264
  %v1541 = vunpack.c.h.b16 %v264
  %v1542 = vunpack.c.l.b16 %v265
  %v1543 = vunpack.c.h.b16 %v265
  %v1544 = vunpack.c.l.b16 %v266
  %v1545 = vunpack.c.h.b16 %v266
  %v1546 = vunpack.c.l.b16 %v267
  %v1547 = vunpack.c.h.b16 %v267
  %v1548 = vunpack.c.l.b16 %v268
  %v1549 = vunpack.c.h.b16 %v268
  %v1550 = vunpack.c.l.b16 %v269
  %v1551 = vunpack.c.h.b16 %v269
  %v1552 = vunpack.c.l.b16 %v270
  %v1553 = vunpack.c.h.b16 %v270
  %v1554 = vunpack.c.l.b16 %v271
  %v1555 = vunpack.c.h.b16 %v271
  %v1556 = vunpack.c.l.b16 %v272
  %v1557 = vunpack.c.h.b16 %v272
  %v1558 = vunpack.c.l.b16 %v273
  %v1559 = vunpack.c.h.b16 %v273
  %v1560 = vunpack.c.l.b16 %v274
  %v1561 = vunpack.c.h.b16 %v274
  %v1562 = vunpack.c.l.b16 %v275
  %v1563 = vunpack.c.h.b16 %v275
  %v1564 = vunpack.c.l.b16 %v276
  %v1565 = vunpack.c.h.b16 %v276
  %v1566 = vunpack.c.l.b16 %v277
  %v1567 = vunpack.c.h.b16 %v277
  %v1568 = vunpack.c.l.b16 %v278
  %v1569 = vunpack.c.h.b16 %v278
  %v1570 = vunpack.c.l.b16 %v279
  %v1571 = vunpack.c.h.b16 %v279
  %v1572 = vunpack.c.l.b16 %v280
  %v1573 = vunpack.c.h.b16 %v280
  %v1574 = vunpack.c.l.b16 %v281
  %v1575 = vunpack.c.h.b16 %v281
  %v1576 = vunpack.c.l.b16 %v282
  %v1577 = vunpack.c.h.b16 %v282
  %v1578 = vunpack.c.l.b16 %v283
  %v1579 = vunpack.c.h.b16 %v283
  %v1580 = vunpack.c.l.b16 %v284
  %v1581 = vunpack.c.h.b16 %v284
  %v1582 = vunpack.c.l.b16 %v285
  %v1583 = vunpack.c.h.b16 %v285
  %v1584 = vunpack.c.l.b16 %v286
  %v1585 = vunpack.c.h.b16 %v286
  %v1586 = vunpack.c.l.b16 %v287
  %v1587 = vunpack.c.h.b16 %v287
  %v1588 = vunpack.c.l.b16 %v288
  %v1589 = vunpack.c.h.b16 %v288
  %v1590 = vunpack.c.l.b16 %v289
  %v1591 = vunpack.c.h.b16 %v289
  %v1592 = vunpack.c.l.b16 %v290
  %v1593 = vunpack.c.h.b16 %v290
  %v1594 = vunpack.c.l.b16 %v291
  %v1595 = vunpack.c.h.b16 %v291
  %v1596 = vunpack.c.l.b16 %v292
  %v1597 = vunpack.c.h.b16 %v292
  %v1598 = vunpack.c.l.b16 %v293
  %v1599 = vunpack.c.h.b16 %v293
  %v1600 = vunpack.c.l.b16 %v294
  %v1601 = vunpack.c.h.b16 %v294
  %v1602 = vunpack.c.l.b16 %v295
  %v1603 = vunpack.c.h.b16 %v295
  %v1604 = vunpack.c.l.b16 %v296
  %v1605 = vunpack.c.h.b16 %v296
  %v1606 = vunpack.c.l.b16 %v297
  %v1607 = vunpack.c.h.b16 %v297
  %v1608 = vunpack.c.l.b16 %v298
  %v1609 = vunpack.c.h.b16 %v298
  %v1610 = vunpack.c.l.b16 %v299
  %v1611 = vunpack.c.h.b16 %v299
  %v1612 = vunpack.c.l.b16 %v300
  %v1613 = vunpack.c.h.b16 %v300
  %v1614 = vunpack.c.l.b16 %v301
  %v1615 = vunpack.c.h.b16 %v301
  %v1616 = vunpack.c.l.b16 %v302
  %v1617 = vunpack.c.h.b16 %v302
  %v1618 = vunpack.c.l.b16 %v303
  %v1619 = vunpack.c.h.b16 %v303
  %v1620 = vunpack.c.l.b16 %v304
  %v1621 = vunpack.c.h.b16 %v304
  %v1622 = vunpack.c.l.b16 %v305
  %v1623 = vunpack.c.h.b16 %v305
  %v1624 = vunpack.c.l.b16 %v306
  %v1625 = vunpack.c.h.b16 %v306
  %v1626 = vunpack.c.l.b16 %v307
  %v1627 = vunpack.c.h.b16 %v307
  %v1628 = vunpack.c.l.b16 %v308
  %v1629 = vunpack.c.h.b16 %v308
  %v1630 = vunpack.c.l.b16 %v309
  %v1631 = vunpack.c.h.b16 %v309
  %v1632 = vunpack.c.l.b16 %v310
  %v1633 = vunpack.c.h.b16 %v310
  %v1634 = vunpack.c.l.b16 %v311
  %v1635 = vunpack.c.h.b16 %v311
  %v1636 = vunpack.c.l.b16 %v312
  %v1637 = vunpack.c.h.b16 %v312
  %v1638 = vunpack.c.l.b16 %v313
  %v1639 = vunpack.c.h.b16 %v313
  %v1640 = vunpack.c.l.b16 %v314
  %v1641 = vunpack.c.h.b16 %v314
  %v1642 = vunpack.c.l.b16 %v315
  %v1643 = vunpack.c.h.b16 %v315
  %v1644 = vunpack.c.l.b16 %v316
  %v1645 = vunpack.c.h.b16 %v316
  %v1646 = vunpack.c.l.b16 %v317
  %v1647 = vunpack.c.h.b16 %v317
  %v1648 = vunpack.c.l.b16 %v318
  %v1649 = vunpack.c.h.b16 %v318
  %v1650 = vunpack.c.l.b16 %v319
  %v1651 = vunpack.c.h.b16 %v319
  %v1652 = vunpack.c.l.b16 %v320
  %v1653 = vunpack.c.h.b16 %v320
  %v1654 = vunpack.c.l.b16 %v321
  %v1655 = vunpack.c.h.b16 %v321
  %v1656 = vunpack.c.l.b16 %v322
  %v1657 = vunpack.c.h.b16 %v322
  %v1658 = vunpack.c.l.b16 %v323
  %v1659 = vunpack.c.h.b16 %v323
  %v1660 = vunpack.c.l.b16 %v324
  %v1661 = vunpack.c.h.b16 %v324
  %v1662 = vunpack.c.l.b16 %v325
  %v1663 = vunpack.c.h.b16 %v325
  %v1664 = vunpack.c.l.b16 %v326
  %v1665 = vunpack.c.h.b16 %v326
  %v1666 = vunpack.c.l.b16 %v327
  %v1667 = vunpack.c.h.b16 %v327
  %v1668 = vunpack.c.l.b16 %v328
  %v1669 = vunpack.c.h.b16 %v328
  %v1670 = vunpack.c.l.b16 %v329
  %v1671 = vunpack.c.h.b16 %v329
  %v1672 = vunpack.c.l.b16 %v330
  %v1673 = vunpack.c.h.b16 %v330
  %v1674 = vunpack.c.l.b16 %v331
  %v1675 = vunpack.c.h.b16 %v331
  %v1676 = vunpack.c.l.b16 %v332
  %v1677 = vunpack.c.h.b16 %v332
  %v1678 = vunpack.c.l.b16 %v333
  %v1679 = vunpack.c.h.b16 %v333
  %v1680 = vunpack.c.l.b16 %v334
  %v1681 = vunpack.c.h.b16 %v334
  %v1682 = vunpack.c.l.b16 %v335
  %v1683 = vunpack.c.h.b16 %v335
  %v1684 = vunpack.c.l.b16 %v336
  %v1685 = vunpack.c.h.b16 %v336
  %v1686 = vunpack.c.l.b16 %v337
  %v1687 = vunpack.c.h.b16 %v337
  %v1688 = vunpack.c.l.b16 %v338
  %v1689 = vunpack.c.h.b16 %v338
  %v1690 = vunpack.c.l.b16 %v339
  %v1691 = vunpack.c.h.b16 %v339
  %v1692 = vunpack.c.l.b16 %v340
  %v1693 = vunpack.c.h.b16 %v340
  %v1694 = vunpack.c.l.b16 %v341
  %v1695 = vunpack.c.h.b16 %v341
  %v1696 = vunpack.c.l.b16 %v342
  %v1697 = vunpack.c.h.b16 %v342
  %v1698 = vunpack.c.l.b16 %v343
  %v1699 = vunpack.c.h.b16 %v343
  %v1700 = vunpack.c.l.b16 %v344
  %v1701 = vunpack.c.h.b16 %v344
  %v1702 = vunpack.c.l.b16 %v345
  %v1703 = vunpack.c.h.b16 %v345
  %v1704 = vunpack.c.l.b16 %v346
  %v1705 = vunpack.c.h.b16 %v346
  %v1706 = vunpack.c.l.b16 %v347
  %v1707 = vunpack.c.h.b16 %v347
  %v1708 = vunpack.c.l.b16 %v348
  %v1709 = vunpack.c.h.b16 %v348
  %v1710 = vunpack.c.l.b16 %v349
  %v1711 = vunpack.c.h.b16 %v349
  %v1712 = vunpack.c.l.b16 %v350
  %v1713 = vunpack.c.h.b16 %v350
  %v1714 = vunpack.c.l.b16 %v351
  %v1715 = vunpack.c.h.b16 %v351
  %v1716 = vunpack.c.l.b16 %v352
  %v1717 = vunpack.c.h.b16 %v352
  %v1718 = vunpack.c.l.b16 %v353
  %v1719 = vunpack.c.h.b16 %v353
  %v1720 = vunpack.c.l.b16 %v354
  %v1721 = vunpack.c.h.b16 %v354
  %v1722 = vunpack.c.l.b16 %v355
  %v1723 = vunpack.c.h.b16 %v355
  %v1724 = vunpack.c.l.b16 %v356
  %v1725 = vunpack.c.h.b16 %v356
  %v1726 = vunpack.c.l.b16 %v357
  %v1727 = vunpack.c.h.b16 %v357
  %v1728 = vunpack.c.l.b16 %v358
  %v1729 = vunpack.c.h.b16 %v358
  %v1730 = vunpack.c.l.b16 %v359
  %v1731 = vunpack.c.h.b16 %v359
  %v1732 = vunpack.c.l.b16 %v360
  %v1733 = vunpack.c.h.b16 %v360
  %v1734 = vunpack.c.l.b16 %v361
  %v1735 = vunpack.c.h.b16 %v361
  %v1736 = vunpack.c.l.b16 %v362
  %v1737 = vunpack.c.h.b16 %v362
  %v1738 = vunpack.c.l.b16 %v363
  %v1739 = vunpack.c.h.b16 %v363
  %v1740 = vunpack.c.l.b16 %v364
  %v1741 = vunpack.c.h.b16 %v364
  %v1742 = vunpack.c.l.b16 %v365
  %v1743 = vunpack.c.h.b16 %v365
  %v1744 = vunpack.c.l.b16 %v366
  %v1745 = vunpack.c.h.b16 %v366
  %v1746 = vunpack.c.l.b16 %v367
  %v1747 = vunpack.c.h.b16 %v367
  %v1748 = vunpack.c.l.b16 %v368
  %v1749 = vunpack.c.h.b16 %v368
  %v1750 = vunpack.c.l.b16 %v369
  %v1751 = vunpack.c.h.b16 %v369
  %v1752 = vunpack.c.l.b16 %v370
  %v1753 = vunpack.c.h.b16 %v370
  %v1754 = vunpack.c.l.b16 %v371
  %v1755 = vunpack.c.h.b16 %v371
  %v1756 = vunpack.c.l.b16 %v372
  %v1757 = vunpack.c.h.b16 %v372
  %v1758 = vunpack.c.l.b16 %v373
  %v1759 = vunpack.c.h.b16 %v373
  %v1760 = vunpack.c.l.b16 %v374
  %v1761 = vunpack.c.h.b16 %v374
  %v1762 = vunpack.c.l.b16 %v375
  %v1763 = vunpack.c.h.b16 %v375
  %v1764 = vunpack.c.l.b16 %v376
  %v1765 = vunpack.c.h.b16 %v376
  %v1766 = vunpack.c.l.b16 %v377
  %v1767 = vunpack.c.h.b16 %v377
  %v1768 = vunpack.c.l.b16 %v378
  %v1769 = vunpack.c.h.b16 %v378
  %v1770 = vunpack.c.l.b16 %v379
  %v1771 = vunpack.c.h.b16 %v379
  %v1772 = vunpack.c.l.b16 %v380
  %v1773 = vunpack.c.h.b16 %v380
  %v1774 = vunpack.c.l.b16 %v381
  %v1775 = vunpack.c.h.b16 %v381
  %v1776 = vunpack.c.l.b16 %v382
  %v1777 = vunpack.c.h.b16 %v382
  %v1778 = vunpack.c.l.b16 %v383
  %v1779 = vunpack.c.h.b16 %v383
  %v1780 = vunpack.c.l.b16 %v384
  %v1781 = vunpack.c.h.b16 %v384
  %v1782 = vunpack.c.l.b16 %v385
  %v1783 = vunpack.c.h.b16 %v385
  %v1784 = vunpack.c.l.b16 %v386
  %v1785 = vunpack.c.h.b16 %v386
  %v1786 = vunpack.c.l.b16 %v387
  %v1787 = vunpack.c.h.b16 %v387
  %v1788 = vunpack.c.l.b16 %v388
  %v1789 = vunpack.c.h.b16 %v388
  %v1790 = vunpack.c.l.b16 %v389
  %v1791 = vunpack.c.h.b16 %v389
  %v1792 = vunpack.c.l.b16 %v390
  %v1793 = vunpack.c.h.b16 %v390
  %v1794 = vunpack.c.l.b16 %v391
  %v1795 = vunpack.c.h.b16 %v391
  %v1796 = vunpack.c.l.b16 %v392
  %v1797 = vunpack.c.h.b16 %v392
  %v1798 = vunpack.c.l.b16 %v393
  %v1799 = vunpack.c.h.b16 %v393
  %v1800 = vunpack.c.l.b16 %v394
  %v1801 = vunpack.c.h.b16 %v394
  %v1802 = vunpack.c.l.b16 %v395
  %v1803 = vunpack.c.h.b16 %v395
  %v1804 = vunpack.c.l.b16 %v396
  %v1805 = vunpack.c.h.b16 %v396
  %v1806 = vunpack.c.l.b16 %v397
  %v1807 = vunpack.c.h.b16 %v397
  %v1808 = vunpack.c.l.b16 %v398
  %v1809 = vunpack.c.h.b16 %v398
  %v1810 = vunpack.c.l.b16 %v399
  %v1811 = vunpack.c.h.b16 %v399
  %v1812 = vunpack.c.l.b16 %v400
  %v1813 = vunpack.c.h.b16 %v400
  %v1814 = vunpack.c.l.b16 %v401
  %v1815 = vunpack.c.h.b16 %v401
  %v1816 = vunpack.c.l.b16 %v402
  %v1817 = vunpack.c.h.b16 %v402
  %v1818 = vunpack.c.l.b16 %v403
  %v1819 = vunpack.c.h.b16 %v403
  %v1820 = vunpack.c.l.b16 %v404
  %v1821 = vunpack.c.h.b16 %v404
  %v1822 = vunpack.c.l.b16 %v405
  %v1823 = vunpack.c.h.b16 %v405
  %v1824 = vunpack.c.l.b16 %v406
  %v1825 = vunpack.c.h.b16 %v406
  %v1826 = vunpack.c.l.b16 %v407
  %v1827 = vunpack.c.h.b16 %v407
  %v1828 = vunpack.c.l.b16 %v408
  %v1829 = vunpack.c.h.b16 %v408
  %v1830 = vunpack.c.l.b16 %v409
  %v1831 = vunpack.c.h.b16 %v409
  %v1832 = vunpack.c.l.b16 %v410
  %v1833 = vunpack.c.h.b16 %v410
  %v1834 = vunpack.c.l.b16 %v411
  %v1835 = vunpack.c.h.b16 %v411
  %v1836 = vunpack.c.l.b16 %v412
  %v1837 = vunpack.c.h.b16 %v412
  %v1838 = vunpack.c.l.b16 %v413
  %v1839 = vunpack.c.h.b16 %v413
  %v1840 = vunpack.c.l.b16 %v414
  %v1841 = vunpack.c.h.b16 %v414
  %v1842 = vunpack.c.l.b16 %v415
  %v1843 = vunpack.c.h.b16 %v415
  %v1844 = vunpack.c.l.b16 %v416
  %v1845 = vunpack.c.h.b16 %v416
  %v1846 = vunpack.c.l.b16 %v417
  %v1847 = vunpack.c.h.b16 %v417
  %v1848 = vunpack.c.l.b16 %v418
  %v1849 = vunpack.c.h.b16 %v418
  %v1850 = vunpack.c.l.b16 %v419
  %v1851 = vunpack.c.h.b16 %v419
  %v1852 = vunpack.c.l.b16 %v420
  %v1853 = vunpack.c.h.b16 %v420
  %v1854 = vunpack.c.l.b16 %v421
  %v1855 = vunpack.c.h.b16 %v421
  %v1856 = vunpack.c.l.b16 %v422
  %v1857 = vunpack.c.h.b16 %v422
  %v1858 = vunpack.c.l.b16 %v423
  %v1859 = vunpack.c.h.b16 %v423
  %v1860 = vunpack.c.l.b16 %v424
  %v1861 = vunpack.c.h.b16 %v424
  %v1862 = vunpack.c.l.b16 %v425
  %v1863 = vunpack.c.h.b16 %v425
  %v1864 = vunpack.c.l.b16 %v426
  %v1865 = vunpack.c.h.b16 %v426
  %v1866 = vunpack.c.l.b16 %v427
  %v1867 = vunpack.c.h.b16 %v427
  %v1868 = vunpack.c.l.b16 %v428
  %v1869 = vunpack.c.h.b16 %v428
  %v1870 = vunpack.c.l.b16 %v429
  %v1871 = vunpack.c.h.b16 %v429
  %v1872 = vunpack.c.l.b16 %v430
  %v1873 = vunpack.c.h.b16 %v430
  %v1874 = vunpack.c.l.b16 %v431
  %v1875 = vunpack.c.h.b16 %v431
  %v1876 = vunpack.c.l.b16 %v432
  %v1877 = vunpack.c.h.b16 %v432
  %v1878 = vunpack.c.l.b16 %v433
  %v1879 = vunpack.c.h.b16 %v433
  %v1880 = vunpack.c.l.b16 %v434
  %v1881 = vunpack.c.h.b16 %v434
  %v1882 = vunpack.c.l.b16 %v435
  %v1883 = vunpack.c.h.b16 %v435
  %v1884 = vunpack.c.l.b16 %v436
  %v1885 = vunpack.c.h.b16 %v436
  %v1886 = vunpack.c.l.b16 %v437
  %v1887 = vunpack.c.h.b16 %v437
  %v1888 = vunpack.c.l.b16 %v438
  %v1889 = vunpack.c.h.b16 %v438
  %v1890 = vunpack.c.l.b16 %v439
  %v1891 = vunpack.c.h.b16 %v439
  %v1892 = vunpack.c.l.b16 %v440
  %v1893 = vunpack.c.h.b16 %v440
  %v1894 = vunpack.c.l.b16 %v441
  %v1895 = vunpack.c.h.b16 %v441
  %v1896 = vunpack.c.l.b16 %v442
  %v1897 = vunpack.c.h.b16 %v442
  %v1898 = vunpack.c.l.b16 %v443
  %v1899 = vunpack.c.h.b16 %v443
  %v1900 = vunpack.c.l.b16 %v444
  %v1901 = vunpack.c.h.b16 %v444
  %v1902 = vunpack.c.l.b16 %v445
  %v1903 = vunpack.c.h.b16 %v445
  %v1904 = vunpack.c.l.b16 %v446
  %v1905 = vunpack.c.h.b16 %v446
  %v1906 = vunpack.c.l.b16 %v447
  %v1907 = vunpack.c.h.b16 %v447
  %v1908 = vunpack.c.l.b16 %v448
  %v1909 = vunpack.c.h.b16 %v448
  %v1910 = vunpack.c.l.b16 %v449
  %v1911 = vunpack.c.h.b16 %v449
  %v1912 = vunpack.c.l.b16 %v450
  %v1913 = vunpack.c.h.b16 %v450
  %v1914 = vunpack.c.l.b16 %v451
  %v1915 = vunpack.c.h.b16 %v451
  %v1916 = vunpack.c.l.b16 %v452
  %v1917 = vunpack.c.h.b16 %v452
  %v1918 = vunpack.c.l.b16 %v453
  %v1919 = vunpack.c.h.b16 %v453
  %v1920 = vunpack.c.l.b16 %v454
  %v1921 = vunpack.c.h.b16 %v454
  %v1922 = vunpack.c.l.b16 %v455
  %v1923 = vunpack.c.h.b16 %v455
  %v1924 = vunpack.c.l.b16 %v456
  %v1925 = vunpack.c.h.b16 %v456
  %v1926 = vunpack.c.l.b16 %v457
  %v1927 = vunpack.c.h.b16 %v457
  %v1928 = vunpack.c.l.b16 %v458
  %v1929 = vunpack.c.h.b16 %v458
  %v1930 = vunpack.c.l.b16 %v459
  %v1931 = vunpack.c.h.b16 %v459
  %v1932 = vunpack.c.l.b16 %v460
  %v1933 = vunpack.c.h.b16 %v460
  %v1934 = vunpack.c.l.b16 %v461
  %v1935 = vunpack.c.h.b16 %v461
  %v1936 = vunpack.c.l.b16 %v462
  %v1937 = vunpack.c.h.b16 %v462
  %v1938 = vunpack.c.l.b16 %v463
  %v1939 = vunpack.c.h.b16 %v463
  %v1940 = vunpack.c.l.b16 %v464
  %v1941 = vunpack.c.h.b16 %v464
  %v1942 = vunpack.c.l.b16 %v465
  %v1943 = vunpack.c.h.b16 %v465
  %v1944 = vunpack.c.l.b16 %v466
  %v1945 = vunpack.c.h.b16 %v466
  %v1946 = vunpack.c.l.b16 %v467
  %v1947 = vunpack.c.h.b16 %v467
  %v1948 = vunpack.c.l.b16 %v468
  %v1949 = vunpack.c.h.b16 %v468
  %v1950 = vunpack.c.l.b16 %v469
  %v1951 = vunpack.c.h.b16 %v469
  %v1952 = vunpack.c.l.b16 %v470
  %v1953 = vunpack.c.h.b16 %v470
  %v1954 = vunpack.c.l.b16 %v471
  %v1955 = vunpack.c.h.b16 %v471
  %v1956 = vunpack.c.l.b16 %v472
  %v1957 = vunpack.c.h.b16 %v472
  %v1958 = vunpack.c.l.b16 %v473
  %v1959 = vunpack.c.h.b16 %v473
  %v1960 = vunpack.c.l.b16 %v474
  %v1961 = vunpack.c.h.b16 %v474
  %v1962 = vunpack.c.l.b16 %v475
  %v1963 = vunpack.c.h.b16 %v475
  %v1964 = vunpack.c.l.b16 %v476
  %v1965 = vunpack.c.h.b16 %v476
  %v1966 = vunpack.c.l.b16 %v477
  %v1967 = vunpack.c.h.b16 %v477
  %v1968 = vunpack.c.l.b16 %v478
  %v1969 = vunpack.c.h.b16 %v478
  %v1970 = vunpack.c.l.b16 %v479
  %v1971 = vunpack.c.h.b16 %v479
  %v1972 = vunpack.c.l.b16 %v480
  %v1973 = vunpack.c.h.b16 %v480
  %v1974 = vunpack.c.l.b16 %v481
  %v1975 = vunpack.c.h.b16 %v481
  %v1976 = vunpack.c.l.b16 %v482
  %v1977 = vunpack.c.h.b16 %v482
  %v1978 = vunpack.c.l.b16 %v483
  %v1979 = vunpack.c.h.b16 %v483
  %v1980 = vunpack.c.l.b16 %v484
  %v1981 = vunpack.c.h.b16 %v484
  %v1982 = vunpack.c.l.b16 %v485
  %v1983 = vunpack.c.h.b16 %v485
  %v1984 = vunpack.c.l.b16 %v486
  %v1985 = vunpack.c.h.b16 %v486
  %v1986 = vunpack.c.l.b16 %v487
  %v1987 = vunpack.c.h.b16 %v487
  %v1988 = vunpack.c.l.b16 %v488
  %v1989 = vunpack.c.h.b16 %v488
  %v1990 = vunpack.c.l.b16 %v489
  %v1991 = vunpack.c.h.b16 %v489
  %v1992 = vunpack.c.l.b16 %v490
  %v1993 = vunpack.c.h.b16 %v490
  %v1994 = vunpack.c.l.b16 %v491
  %v1995 = vunpack.c.h.b16 %v491
  %v1996 = vunpack.c.l.b16 %v492
  %v1997 = vunpack.c.h.b16 %v492
  %v1998 = vunpack.c.l.b16 %v493
  %v1999 = vunpack.c.h.b16 %v493
  %v2000 = vunpack.c.l.b16 %v494
  %v2001 = vunpack.c.h.b16 %v494
  %v2002 = vunpack.c.l.b16 %v495
  %v2003 = vunpack.c.h.b16 %v495
  %v2004 = vunpack.c.l.b16 %v496
  %v2005 = vunpack.c.h.b16 %v496
  %v2006 = vunpack.c.l.b16 %v497
  %v2007 = vunpack.c.h.b16 %v497
  %v2008 = vunpack.c.l.b16 %v498
  %v2009 = vunpack.c.h.b16 %v498
  %v2010 = vunpack.c.l.b16 %v499
  %v2011 = vunpack.c.h.b16 %v499
  %v2012 = vunpack.c.l.b16 %v500
  %v2013 = vunpack.c.h.b16 %v500
  %v2014 = vunpack.c.l.b16 %v501
  %v2015 = vunpack.c.h.b16 %v501
  %v2016 = vunpack.c.l.b16 %v502
  %v2017 = vunpack.c.h.b16 %v502
  %v2018 = vunpack.c.l.b16 %v503
  %v2019 = vunpack.c.h.b16 %v503
  %v2020 = vunpack.c.l.b16 %v504
  %v2021 = vunpack.c.h.b16 %v504
  %v2022 = vunpack.c.l.b16 %v505
  %v2023 = vunpack.c.h.b16 %v505
  %v2024 = vunpack.c.l.b16 %v506
  %v2025 = vunpack.c.h.b16 %v506
  %v2026 = vunpack.c.l.b16 %v507
  %v2027 = vunpack.c.h.b16 %v507
  %v2028 = vunpack.c.l.b16 %v508
  %v2029 = vunpack.c.h.b16 %v508
  %v2030 = vunpack.c.l.b16 %v509
  %v2031 = vunpack.c.h.b16 %v509
  %v2032 = vunpack.c.l.b16 %v510
  %v2033 = vunpack.c.h.b16 %v510
  %v2034 = vunpack.c.l.b16 %v511
  %v2035 = vunpack.c.h.b16 %v511
  %v2036 = vunpack.c.l.b16 %v512
  %v2037 = vunpack.c.h.b16 %v512
  %v2038 = vunpack.c.l.b16 %v513
  %v2039 = vunpack.c.h.b16 %v513
  %v2040 = vunpack.c.l.b16 %v514
  %v2041 = vunpack.c.h.b16 %v514
  %v2042 = vunpack.c.l.b16 %v515
  %v2043 = vunpack.c.h.b16 %v515
  %v2044 = vunpack.c.l.b16 %v516
  %v2045 = vunpack.c.h.b16 %v516
  %v2046 = vunpack.c.l.b16 %v517
  %v2047 = vunpack.c.h.b16 %v517
  %v2048 = vunpack.c.l.b16 %v518
  %v2049 = vunpack.c.h.b16 %v518
  %v2050 = vunpack.c.l.b16 %v519
  %v2051 = vunpack.c.h.b16 %v519
  %v2052 = vunpack.c.l.b16 %v520
  %v2053 = vunpack.c.h.b16 %v520
  %v2054 = vunpack.c.l.b16 %v521
  %v2055 = vunpack.c.h.b16 %v521
  %v2056 = vunpack.c.l.b16 %v522
  %v2057 = vunpack.c.h.b16 %v522
  %v2058 = vunpack.c.l.b16 %v523
  %v2059 = vunpack.c.h.b16 %v523
  %v2060 = vpack.c.b16 %v1100, %v1036
  %v2061 = vpack.c.b16 %v1101, %v1037
  %v2062 = vpack.c.b16 %v1102, %v1038
  %v2063 = vpack.c.b16 %v1103, %v1039
  %v2064 = vpack.c.b16 %v1104, %v1040
  %v2065 = vpack.c.b16 %v1105, %v1041
  %v2066 = vpack.c.b16 %v1106, %v1042
  %v2067 = vpack.c.b16 %v1107, %v1043
  %v2068 = vpack.c.b16 %v1108, %v1044
  %v2069 = vpack.c.b16 %v1109, %v1045
  %v2070 = vpack.c.b16 %v1110, %v1046
  %v2071 = vpack.c.b16 %v1111, %v1047
  %v2072 = vpack.c.b16 %v1112, %v1048
  %v2073 = vpack.c.b16 %v1113, %v1049
  %v2074 = vpack.c.b16 %v1114, %v1050
  %v2075 = vpack.c.b16 %v1115, %v1051
  %v2076 = vpack.c.b16 %v1116, %v1052
  %v2077 = vpack.c.b16 %v1117, %v1053
  %v2078 = vpack.c.b16 %v1118, %v1054
  %v2079 = vpack.c.b16 %v1119, %v1055
  %v2080 = vpack.c.b16 %v1120, %v1056
  %v2081 = vpack.c.b16 %v1121, %v1057
  %v2082 = vpack.c.b16 %v1122, %v1058
  %v2083 = vpack.c.b16 %v1123, %v1059
  %v2084 = vpack.c.b16 %v1124, %v1060
  %v2085 = vpack.c.b16 %v1125, %v1061
  %v2086 = vpack.c.b16 %v1126, %v1062
  %v2087 = vpack.c.b16 %v1127, %v1063
  %v2088 = vpack.c.b16 %v1128, %v1064
  %v2089 = vpack.c.b16 %v1129, %v1065
  %v2090 = vpack.c.b16 %v1130, %v1066
  %v2091 = vpack.c.b16 %v1131, %v1067
  %v2092 = vpack.c.b16 %v1132, %v1068
  %v2093 = vpack.c.b16 %v1133, %v1069
  %v2094 = vpack.c.b16 %v1134, %v1070
  %v2095 = vpack.c.b16 %v1135, %v1071
  %v2096 = vpack.c.b16 %v1136, %v1072
  %v2097 = vpack.c.b16 %v1137, %v1073
  %v2098 = vpack.c.b16 %v1138, %v1074
  %v2099 = vpack.c.b16 %v1139, %v1075
  %v2100 = vpack.c.b16 %v1140, %v1076
  %v2101 = vpack.c.b16 %v1141, %v1077
  %v2102 = vpack.c.b16 %v1142, %v1078
  %v2103 = vpack.c.b16 %v1143, %v1079
  %v2104 = vpack.c.b16 %v1144, %v1080
  %v2105 = vpack.c.b16 %v1145, %v1081
  %v2106 = vpack.c.b16 %v1146, %v1082
  %v2107 = vpack.c.b16 %v1147, %v1083
  %v2108 = vpack.c.b16 %v1148, %v1084
  %v2109 = vpack.c.b16 %v1149, %v1085
  %v2110 = vpack.c.b16 %v1150, %v1086
  %v2111 = vpack.c.b16 %v1151, %v1087
  %v2112 = vpack.c.b16 %v1152, %v1088
  %v2113 = vpack.c.b16 %v1153, %v1089
  %v2114 = vpack.c.b16 %v1154, %v1090
  %v2115 = vpack.c.b16 %v1155, %v1091
  %v2116 = vpack.c.b16 %v1156, %v1092
  %v2117 = vpack.c.b16 %v1157, %v1093
  %v2118 = vpack.c.b16 %v1158, %v1094
  %v2119 = vpack.c.b16 %v1159, %v1095
  %v2120 = vpack.c.b16 %v1160, %v1096
  %v2121 = vpack.c.b16 %v1161, %v1097
  %v2122 = vpack.c.b16 %v1162, %v1098
  %v2123 = vpack.c.b16 %v1163, %v1099
  %v2124 = vpack.c.b16 %v1228, %v1164
  %v2125 = vpack.c.b16 %v1229, %v1165
  %v2126 = vpack.c.b16 %v1230, %v1166
  %v2127 = vpack.c.b16 %v1231, %v1167
  %v2128 = vpack.c.b16 %v1232, %v1168
  %v2129 = vpack.c.b16 %v1233, %v1169
  %v2130 = vpack.c.b16 %v1234, %v1170
  %v2131 = vpack.c.b16 %v1235, %v1171
  %v2132 = vpack.c.b16 %v1236, %v1172
  %v2133 = vpack.c.b16 %v1237, %v1173
  %v2134 = vpack.c.b16 %v1238, %v1174
  %v2135 = vpack.c.b16 %v1239, %v1175
  %v2136 = vpack.c.b16 %v1240, %v1176
  %v2137 = vpack.c.b16 %v1241, %v1177
  %v2138 = vpack.c.b16 %v1242, %v1178
  %v2139 = vpack.c.b16 %v1243, %v1179
  %v2140 = vpack.c.b16 %v1244, %v1180
  %v2141 = vpack.c.b16 %v1245, %v1181
  %v2142 = vpack.c.b16 %v1246, %v1182
  %v2143 = vpack.c.b16 %v1247, %v1183
  %v2144 = vpack.c.b16 %v1248, %v1184
  %v2145 = vpack.c.b16 %v1249, %v1185
  %v2146 = vpack.c.b16 %v1250, %v1186
  %v2147 = vpack.c.b16 %v1251, %v1187
  %v2148 = vpack.c.b16 %v1252, %v1188
  %v2149 = vpack.c.b16 %v1253, %v1189
  %v2150 = vpack.c.b16 %v1254, %v1190
  %v2151 = vpack.c.b16 %v1255, %v1191
  %v2152 = vpack.c.b16 %v1256, %v1192
  %v2153 = vpack.c.b16 %v1257, %v1193
  %v2154 = vpack.c.b16 %v1258, %v1194
  %v2155 = vpack.c.b16 %v1259, %v1195
  %v2156 = vpack.c.b16 %v1260, %v1196
  %v2157 = vpack.c.b16 %v1261, %v1197
  %v2158 = vpack.c.b16 %v1262, %v1198
  %v2159 = vpack.c.b16 %v1263, %v1199
  %v2160 = vpack.c.b16 %v1264, %v1200
  %v2161 = vpack.c.b16 %v1265, %v1201
  %v2162 = vpack.c.b16 %v1266, %v1202
  %v2163 = vpack.c.b16 %v1267, %v1203
  %v2164 = vpack.c.b16 %v1268, %v1204
  %v2165 = vpack.c.b16 %v1269, %v1205
  %v2166 = vpack.c.b16 %v1270, %v1206
  %v2167 = vpack.c.b16 %v1271, %v1207
  %v2168 = vpack.c.b16 %v1272, %v1208
  %v2169 = vpack.c.b16 %v1273, %v1209
  %v2170 = vpack.c.b16 %v1274, %v1210
  %v2171 = vpack.c.b16 %v1275, %v1211
  %v2172 = vpack.c.b16 %v1276, %v1212
  %v2173 = vpack.c.b16 %v1277, %v1213
  %v2174 = vpack.c.b16 %v1278, %v1214
  %v2175 = vpack.c.b16 %v1279, %v1215
  %v2176 = vpack.c.b16 %v1280, %v1216
  %v2177 = vpack.c.b16 %v1281, %v1217
  %v2178 = vpack.c.b16 %v1282, %v1218
  %v2179 = vpack.c.b16 %v1283, %v1219
  %v2180 = vpack.c.b16 %v1284, %v1220
  %v2181 = vpack.c.b16 %v1285, %v1221
  %v2182 = vpack.c.b16 %v1286, %v1222
  %v2183 = vpack.c.b16 %v1287, %v1223
  %v2184 = vpack.c.b16 %v1288, %v1224
  %v2185 = vpack.c.b16 %v1289, %v1225
  %v2186 = vpack.c.b16 %v1290, %v1226
  %v2187 = vpack.c.b16 %v1291, %v1227
  %v2188 = vpack.c.b16 %v1356, %v1292
  %v2189 = vpack.c.b16 %v1357, %v1293
  %v2190 = vpack.c.b16 %v1358, %v1294
  %v2191 = vpack.c.b16 %v1359, %v1295
  %v2192 = vpack.c.b16 %v1360, %v1296
  %v2193 = vpack.c.b16 %v1361, %v1297
  %v2194 = vpack.c.b16 %v1362, %v1298
  %v2195 = vpack.c.b16 %v1363, %v1299
  %v2196 = vpack.c.b16 %v1364, %v1300
  %v2197 = vpack.c.b16 %v1365, %v1301
  %v2198 = vpack.c.b16 %v1366, %v1302
  %v2199 = vpack.c.b16 %v1367, %v1303
  %v2200 = vpack.c.b16 %v1368, %v1304
  %v2201 = vpack.c.b16 %v1369, %v1305
  %v2202 = vpack.c.b16 %v1370, %v1306
  %v2203 = vpack.c.b16 %v1371, %v1307
  %v2204 = vpack.c.b16 %v1372, %v1308
  %v2205 = vpack.c.b16 %v1373, %v1309
  %v2206 = vpack.c.b16 %v1374, %v1310
  %v2207 = vpack.c.b16 %v1375, %v1311
  %v2208 = vpack.c.b16 %v1376, %v1312
  %v2209 = vpack.c.b16 %v1377, %v1313
  %v2210 = vpack.c.b16 %v1378, %v1314
  %v2211 = vpack.c.b16 %v1379, %v1315
  %v2212 = vpack.c.b16 %v1380, %v1316
  %v2213 = vpack.c.b16 %v1381, %v1317
  %v2214 = vpack.c.b16 %v1382, %v1318
  %v2215 = vpack.c.b16 %v1383, %v1319
  %v2216 = vpack.c.b16 %v1384, %v1320
  %v2217 = vpack.c.b16 %v1385, %v1321
  %v2218 = vpack.c.b16 %v1386, %v1322
  %v2219 = vpack.c.b16 %v1387, %v1323
  %v2220 = vpack.c.b16 %v1388, %v1324
  %v2221 = vpack.c.b16 %v1389, %v1325
  %v2222 = vpack.c.b16 %v1390, %v1326
  %v2223 = vpack.c.b16 %v1391, %v1327
  %v2224 = vpack.c.b16 %v1392, %v1328
  %v2225 = vpack.c.b16 %v1393, %v1329
  %v2226 = vpack.c.b16 %v1394, %v1330
  %v2227 = vpack.c.b16 %v1395, %v1331
  %v2228 = vpack.c.b16 %v1396, %v1332
  %v2229 = vpack.c.b16 %v1397, %v1333
  %v2230 = vpack.c.b16 %v1398, %v1334
  %v2231 = vpack.c.b16 %v1399, %v1335
  %v2232 = vpack.c.b16 %v1400, %v1336
  %v2233 = vpack.c.b16 %v1401, %v1337
  %v2234 = vpack.c.b16 %v1402, %v1338
  %v2235 = vpack.c.b16 %v1403, %v1339
  %v2236 = vpack.c.b16 %v1404, %v1340
  %v2237 = vpack.c.b16 %v1405, %v1341
  %v2238 = vpack.c.b16 %v1406, %v1342
  %v2239 = vpack.c.b16 %v1407, %v1343
  %v2240 = vpack.c.b16 %v1408, %v1344
  %v2241 = vpack.c.b16 %v1409, %v1345
  %v2242 = vpack.c.b16 %v1410, %v1346
  %v2243 = vpack.c.b16 %v1411, %v1347
  %v2244 = vpack.c.b16 %v1412, %v1348
  %v2245 = vpack.c.b16 %v1413, %v1349
  %v2246 = vpack.c.b16 %v1414, %v1350
  %v2247 = vpack.c.b16 %v1415, %v1351
  %v2248 = vpack.c.b16 %v1416, %v1352
  %v2249 = vpack.c.b16 %v1417, %v1353
  %v2250 = vpack.c.b16 %v1418, %v1354
  %v2251 = vpack.c.b16 %v1419, %v1355
  %v2252 = vpack.c.b16 %v1484, %v1420
  %v2253 = vpack.c.b16 %v1485, %v1421
  %v2254 = vpack.c.b16 %v1486, %v1422
  %v2255 = vpack.c.b16 %v1487, %v1423
  %v2256 = vpack.c.b16 %v1488, %v1424
  %v2257 = vpack.c.b16 %v1489, %v1425
  %v2258 = vpack.c.b16 %v1490, %v1426
  %v2259 = vpack.c.b16 %v1491, %v1427
  %v2260 = vpack.c.b16 %v1492, %v1428
  %v2261 = vpack.c.b16 %v1493, %v1429
  %v2262 = vpack.c.b16 %v1494, %v1430
  %v2263 = vpack.c.b16 %v1495, %v1431
  %v2264 = vpack.c.b16 %v1496, %v1432
  %v2265 = vpack.c.b16 %v1497, %v1433
  %v2266 = vpack.c.b16 %v1498, %v1434
  %v2267 = vpack.c.b16 %v1499, %v1435
  %v2268 = vpack.c.b16 %v1500, %v1436
  %v2269 = vpack.c.b16 %v1501, %v1437
  %v2270 = vpack.c.b16 %v1502, %v1438
  %v2271 = vpack.c.b16 %v1503, %v1439
  %v2272 = vpack.c.b16 %v1504, %v1440
  %v2273 = vpack.c.b16 %v1505, %v1441
  %v2274 = vpack.c.b16 %v1506, %v1442
  %v2275 = vpack.c.b16 %v1507, %v1443
  %v2276 = vpack.c.b16 %v1508, %v1444
  %v2277 = vpack.c.b16 %v1509, %v1445
  %v2278 = vpack.c.b16 %v1510, %v1446
  %v2279 = vpack.c.b16 %v1511, %v1447
  %v2280 = vpack.c.b16 %v1512, %v1448
  %v2281 = vpack.c.b16 %v1513, %v1449
  %v2282 = vpack.c.b16 %v1514, %v1450
  %v2283 = vpack.c.b16 %v1515, %v1451
  %v2284 = vpack.c.b16 %v1516, %v1452
  %v2285 = vpack.c.b16 %v1517, %v1453
  %v2286 = vpack.c.b16 %v1518, %v1454
  %v2287 = vpack.c.b16 %v1519, %v1455
  %v2288 = vpack.c.b16 %v1520, %v1456
  %v2289 = vpack.c.b16 %v1521, %v1457
  %v2290 = vpack.c.b16 %v1522, %v1458
  %v2291 = vpack.c.b16 %v1523, %v1459
  %v2292 = vpack.c.b16 %v1524, %v1460
  %v2293 = vpack.c.b16 %v1525, %v1461
  %v2294 = vpack.c.b16 %v1526, %v1462
  %v2295 = vpack.c.b16 %v1527, %v1463
  %v2296 = vpack.c.b16 %v1528, %v1464
  %v2297 = vpack.c.b16 %v1529, %v1465
  %v2298 = vpack.c.b16 %v1530, %v1466
  %v2299 = vpack.c.b16 %v1531, %v1467
  %v2300 = vpack.c.b16 %v1532, %v1468
  %v2301 = vpack.c.b16 %v1533, %v1469
  %v2302 = vpack.c.b16 %v1534, %v1470
  %v2303 = vpack.c.b16 %v1535, %v1471
  %v2304 = vpack.c.b16 %v1536, %v1472
  %v2305 = vpack.c.b16 %v1537, %v1473
  %v2306 = vpack.c.b16 %v1538, %v1474
  %v2307 = vpack.c.b16 %v1539, %v1475
  %v2308 = vpack.c.b16 %v1540, %v1476
  %v2309 = vpack.c.b16 %v1541, %v1477
  %v2310 = vpack.c.b16 %v1542, %v1478
  %v2311 = vpack.c.b16 %v1543, %v1479
  %v2312 = vpack.c.b16 %v1544, %v1480
  %v2313 = vpack.c.b16 %v1545, %v1481
  %v2314 = vpack.c.b16 %v1546, %v1482
  %v2315 = vpack.c.b16 %v1547, %v1483
  %v2316 = vpack.c.b16 %v1612, %v1548
  %v2317 = vpack.c.b16 %v1613, %v1549
  %v2318 = vpack.c.b16 %v1614, %v1550
  %v2319 = vpack.c.b16 %v1615, %v1551
  %v2320 = vpack.c.b16 %v1616, %v1552
  %v2321 = vpack.c.b16 %v1617, %v1553
  %v2322 = vpack.c.b16 %v1618, %v1554
  %v2323 = vpack.c.b16 %v1619, %v1555
  %v2324 = vpack.c.b16 %v1620, %v1556
  %v2325 = vpack.c.b16 %v1621, %v1557
  %v2326 = vpack.c.b16 %v1622, %v1558
  %v2327 = vpack.c.b16 %v1623, %v1559
  %v2328 = vpack.c.b16 %v1624, %v1560
  %v2329 = vpack.c.b16 %v1625, %v1561
  %v2330 = vpack.c.b16 %v1626, %v1562
  %v2331 = vpack.c.b16 %v1627, %v1563
  %v2332 = vpack.c.b16 %v1628, %v1564
  %v2333 = vpack.c.b16 %v1629, %v1565
  %v2334 = vpack.c.b16 %v1630, %v1566
  %v2335 = vpack.c.b16 %v1631, %v1567
  %v2336 = vpack.c.b16 %v1632, %v1568
  %v2337 = vpack.c.b16 %v1633, %v1569
  %v2338 = vpack.c.b16 %v1634, %v1570
  %v2339 = vpack.c.b16 %v1635, %v1571
  %v2340 = vpack.c.b16 %v1636, %v1572
  %v2341 = vpack.c.b16 %v1637, %v1573
  %v2342 = vpack.c.b16 %v1638, %v1574
  %v2343 = vpack.c.b16 %v1639, %v1575
  %v2344 = vpack.c.b16 %v1640, %v1576
  %v2345 = vpack.c.b16 %v1641, %v1577
  %v2346 = vpack.c.b16 %v1642, %v1578
  %v2347 = vpack.c.b16 %v1643, %v1579
  %v2348 = vpack.c.b16 %v1644, %v1580
  %v2349 = vpack.c.b16 %v1645, %v1581
  %v2350 = vpack.c.b16 %v1646, %v1582
  %v2351 = vpack.c.b16 %v1647, %v1583
  %v2352 = vpack.c.b16 %v1648, %v1584
  %v2353 = vpack.c.b16 %v1649, %v1585
  %v2354 = vpack.c.b16 %v1650, %v1586
  %v2355 = vpack.c.b16 %v1651, %v1587
  %v2356 = vpack.c.b16 %v1652, %v1588
  %v2357 = vpack.c.b16 %v1653, %v1589
  %v2358 = vpack.c.b16 %v1654, %v1590
  %v2359 = vpack.c.b16 %v1655, %v1591
  %v2360 = vpack.c.b16 %v1656, %v1592
  %v2361 = vpack.c.b16 %v1657, %v1593
  %v2362 = vpack.c.b16 %v1658, %v1594
  %v2363 = vpack.c.b16 %v1659, %v1595
  %v2364 = vpack.c.b16 %v1660, %v1596
  %v2365 = vpack.c.b16 %v1661, %v1597
  %v2366 = vpack.c.b16 %v1662, %v1598
  %v2367 = vpack.c.b16 %v1663, %v1599
  %v2368 = vpack.c.b16 %v1664, %v1600
  %v2369 = vpack.c.b16 %v1665, %v1601
  %v2370 = vpack.c.b16 %v1666, %v1602
  %v2371 = vpack.c.b16 %v1667, %v1603
  %v2372 = vpack.c.b16 %v1668, %v1604
  %v2373 = vpack.c.b16 %v1669, %v1605
  %v2374 = vpack.c.b16 %v1670, %v1606
  %v2375 = vpack.c.b16 %v1671, %v1607
  %v2376 = vpack.c.b16 %v1672, %v1608
  %v2377 = vpack.c.b16 %v1673, %v1609
  %v2378 = vpack.c.b16 %v1674, %v1610
  %v2379 = vpack.c.b16 %v1675, %v1611
  %v2380 = vpack.c.b16 %v1740, %v1676
  %v2381 = vpack.c.b16 %v1741, %v1677
  %v2382 = vpack.c.b16 %v1742, %v1678
  %v2383 = vpack.c.b16 %v1743, %v1679
  %v2384 = vpack.c.b16 %v1744, %v1680
  %v2385 = vpack.c.b16 %v1745, %v1681
  %v2386 = vpack.c.b16 %v1746, %v1682
  %v2387 = vpack.c.b16 %v1747, %v1683
  %v2388 = vpack.c.b16 %v1748, %v1684
  %v2389 = vpack.c.b16 %v1749, %v1685
  %v2390 = vpack.c.b16 %v1750, %v1686
  %v2391 = vpack.c.b16 %v1751, %v1687
  %v2392 = vpack.c.b16 %v1752, %v1688
  %v2393 = vpack.c.b16 %v1753, %v1689
  %v2394 = vpack.c.b16 %v1754, %v1690
  %v2395 = vpack.c.b16 %v1755, %v1691
  %v2396 = vpack.c.b16 %v1756, %v1692
  %v2397 = vpack.c.b16 %v1757, %v1693
  %v2398 = vpack.c.b16 %v1758, %v1694
  %v2399 = vpack.c.b16 %v1759, %v1695
  %v2400 = vpack.c.b16 %v1760, %v1696
  %v2401 = vpack.c.b16 %v1761, %v1697
  %v2402 = vpack.c.b16 %v1762, %v1698
  %v2403 = vpack.c.b16 %v1763, %v1699
  %v2404 = vpack.c.b16 %v1764, %v1700
  %v2405 = vpack.c.b16 %v1765, %v1701
  %v2406 = vpack.c.b16 %v1766, %v1702
  %v2407 = vpack.c.b16 %v1767, %v1703
  %v2408 = vpack.c.b16 %v1768, %v1704
  %v2409 = vpack.c.b16 %v1769, %v1705
  %v2410 = vpack.c.b16 %v1770, %v1706
  %v2411 = vpack.c.b16 %v1771, %v1707
  %v2412 = vpack.c.b16 %v1772, %v1708
  %v2413 = vpack.c.b16 %v1773, %v1709
  %v2414 = vpack.c.b16 %v1774, %v1710
  %v2415 = vpack.c.b16 %v1775, %v1711
  %v2416 = vpack.c.b16 %v1776, %v1712
  %v2417 = vpack.c.b16 %v1777, %v1713
  %v2418 = vpack.c.b16 %v1778, %v1714
  %v2419 = vpack.c.b16 %v1779, %v1715
  %v2420 = vpack.c.b16 %v1780, %v1716
  %v2421 = vpack.c.b16 %v1781, %v1717
  %v2422 = vpack.c.b16 %v1782, %v1718
  %v2423 = vpack.c.b16 %v1783, %v1719
  %v2424 = vpack.c.b16 %v1784, %v1720
  %v2425 = vpack.c.b16 %v1785, %v1721
  %v2426 = vpack.c.b16 %v1786, %v1722
  %v2427 = vpack.c.b16 %v1787, %v1723
  %v2428 = vpack.c.b16 %v1788, %v1724
  %v2429 = vpack.c.b16 %v1789, %v1725
  %v2430 = vpack.c.b16 %v1790, %v1726
  %v2431 = vpack.c.b16 %v1791, %v1727
  %v2432 = vpack.c.b16 %v1792, %v1728
  %v2433 = vpack.c.b16 %v1793, %v1729
  %v2434 = vpack.c.b16 %v1794, %v1730
  %v2435 = vpack.c.b16 %v1795, %v1731
  %v2436 = vpack.c.b16 %v1796, %v1732
  %v2437 = vpack.c.b16 %v1797, %v1733
  %v2438 = vpack.c.b16 %v1798, %v1734
  %v2439 = vpack.c.b16 %v1799, %v1735
  %v2440 = vpack.c.b16 %v1800, %v1736
  %v2441 = vpack.c.b16 %v1801, %v1737
  %v2442 = vpack.c.b16 %v1802, %v1738
  %v2443 = vpack.c.b16 %v1803, %v1739
  %v2444 = vpack.c.b16 %v1868, %v1804
  %v2445 = vpack.c.b16 %v1869, %v1805
  %v2446 = vpack.c.b16 %v1870, %v1806
  %v2447 = vpack.c.b16 %v1871, %v1807
  %v2448 = vpack.c.b16 %v1872, %v1808
  %v2449 = vpack.c.b16 %v1873, %v1809
  %v2450 = vpack.c.b16 %v1874, %v1810
  %v2451 = vpack.c.b16 %v1875, %v1811
  %v2452 = vpack.c.b16 %v1876, %v1812
  %v2453 = vpack.c.b16 %v1877, %v1813
  %v2454 = vpack.c.b16 %v1878, %v1814
  %v2455 = vpack.c.b16 %v1879, %v1815
  %v2456 = vpack.c.b16 %v1880, %v1816
  %v2457 = vpack.c.b16 %v1881, %v1817
  %v2458 = vpack.c.b16 %v1882, %v1818
  %v2459 = vpack.c.b16 %v1883, %v1819
  %v2460 = vpack.c.b16 %v1884, %v1820
  %v2461 = vpack.c.b16 %v1885, %v1821
  %v2462 = vpack.c.b16 %v1886, %v1822
  %v2463 = vpack.c.b16 %v1887, %v1823
  %v2464 = vpack.c.b16 %v1888, %v1824
  %v2465 = vpack.c.b16 %v1889, %v1825
  %v2466 = vpack.c.b16 %v1890, %v1826
  %v2467 = vpack.c.b16 %v1891, %v1827
  %v2468 = vpack.c.b16 %v1892, %v1828
  %v2469 = vpack.c.b16 %v1893, %v1829
  %v2470 = vpack.c.b16 %v1894, %v1830
  %v2471 = vpack.c.b16 %v1895, %v1831
  %v2472 = vpack.c.b16 %v1896, %v1832
  %v2473 = vpack.c.b16 %v1897, %v1833
  %v2474 = vpack.c.b16 %v1898, %v1834
  %v2475 = vpack.c.b16 %v1899, %v1835
  %v2476 = vpack.c.b16 %v1900, %v1836
  %v2477 = vpack.c.b16 %v1901, %v1837
  %v2478 = vpack.c.b16 %v1902, %v1838
  %v2479 = vpack.c.b16 %v1903, %v1839
  %v2480 = vpack.c.b16 %v1904, %v1840
  %v2481 = vpack.c.b16 %v1905, %v1841
  %v2482 = vpack.c.b16 %v1906, %v1842
  %v2483 = vpack.c.b16 %v1907, %v1843
  %v2484 = vpack.c.b16 %v1908, %v1844
  %v2485 = vpack.c.b16 %v1909, %v1845
  %v2486 = vpack.c.b16 %v1910, %v1846
  %v2487 = vpack.c.b16 %v1911, %v1847
  %v2488 = vpack.c.b16 %v1912, %v1848
  %v2489 = vpack.c.b16 %v1913, %v1849
  %v2490 = vpack.c.b16 %v1914, %v1850
  %v2491 = vpack.c.b16 %v1915, %v1851
  %v2492 = vpack.c.b16 %v1916, %v1852
  %v2493 = vpack.c.b16 %v1917, %v1853
  %v2494 = vpack.c.b16 %v1918, %v1854
  %v2495 = vpack.c.b16 %v1919, %v1855
  %v2496 = vpack.c.b16 %v1920, %v1856
  %v2497 = vpack.c.b16 %v1921, %v1857
  %v2498 = vpack.c.b16 %v1922, %v1858
  %v2499 = vpack.c.b16 %v1923, %v1859
  %v2500 = vpack.c.b16 %v1924, %v1860
  %v2501 = vpack.c.b16 %v1925, %v1861
  %v2502 = vpack.c.b16 %v1926, %v1862
  %v2503 = vpack.c.b16 %v1927, %v1863
  %v2504 = vpack.c.b16 %v1928, %v1864
  %v2505 = vpack.c.b16 %v1929, %v1865
  %v2506 = vpack.c.b16 %v1930, %v1866
  %v2507 = vpack.c.b16 %v1931, %v1867
  %v2508 = vpack.c.b16 %v1996, %v1932
  %v2509 = vpack.c.b16 %v1997, %v1933
  %v2510 = vpack.c.b16 %v1998, %v1934
  %v2511 = vpack.c.b16 %v1999, %v1935
  %v2512 = vpack.c.b16 %v2000, %v1936
  %v2513 = vpack.c.b16 %v2001, %v1937
  %v2514 = vpack.c.b16 %v2002, %v1938
  %v2515 = vpack.c.b16 %v2003, %v1939
  %v2516 = vpack.c.b16 %v2004, %v1940
  %v2517 = vpack.c.b16 %v2005, %v1941
  %v2518 = vpack.c.b16 %v2006, %v1942
  %v2519 = vpack.c.b16 %v2007, %v1943
  %v2520 = vpack.c.b16 %v2008, %v1944
  %v2521 = vpack.c.b16 %v2009, %v1945
  %v2522 = vpack.c.b16 %v2010, %v1946
  %v2523 = vpack.c.b16 %v2011, %v1947
  %v2524 = vpack.c.b16 %v2012, %v1948
  %v2525 = vpack.c.b16 %v2013, %v1949
  %v2526 = vpack.c.b16 %v2014, %v1950
  %v2527 = vpack.c.b16 %v2015, %v1951
  %v2528 = vpack.c.b16 %v2016, %v1952
  %v2529 = vpack.c.b16 %v2017, %v1953
  %v2530 = vpack.c.b16 %v2018, %v1954
  %v2531 = vpack.c.b16 %v2019, %v1955
  %v2532 = vpack.c.b16 %v2020, %v1956
  %v2533 = vpack.c.b16 %v2021, %v1957
  %v2534 = vpack.c.b16 %v2022, %v1958
  %v2535 = vpack.c.b16 %v2023, %v1959
  %v2536 = vpack.c.b16 %v2024, %v1960
  %v2537 = vpack.c.b16 %v2025, %v1961
  %v2538 = vpack.c.b16 %v2026, %v1962
  %v2539 = vpack.c.b16 %v2027, %v1963
  %v2540 = vpack.c.b16 %v2028, %v1964
  %v2541 = vpack.c.b16 %v2029, %v1965
  %v2542 = vpack.c.b16 %v2030, %v1966
  %v2543 = vpack.c.b16 %v2031, %v1967
  %v2544 = vpack.c.b16 %v2032, %v1968
  %v2545 = vpack.c.b16 %v2033, %v1969
  %v2546 = vpack.c.b16 %v2034, %v1970
  %v2547 = vpack.c.b16 %v2035, %v1971
  %v2548 = vpack.c.b16 %v2036, %v1972
  %v2549 = vpack.c.b16 %v2037, %v1973
  %v2550 = vpack.c.b16 %v2038, %v1974
  %v2551 = vpack.c.b16 %v2039, %v1975
  %v2552 = vpack.c.b16 %v2040, %v1976
  %v2553 = vpack.c.b16 %v2041, %v1977
  %v2554 = vpack.c.b16 %v2042, %v1978
  %v2555 = vpack.c.b16 %v2043, %v1979
  %v2556 = vpack.c.b16 %v2044, %v1980
  %v2557 = vpack.c.b16 %v2045, %v1981
  %v2558 = vpack.c.b16 %v2046, %v1982
  %v2559 = vpack.c.b16 %v2047, %v1983
  %v2560 = vpack.c.b16 %v2048, %v1984
  %v2561 = vpack.c.b16 %v2049, %v1985
  %v2562 = vpack.c.b16 %v2050, %v1986
  %v2563 = vpack.c.b16 %v2051, %v1987
  %v2564 = vpack.c.b16 %v2052, %v1988
  %v2565 = vpack.c.b16 %v2053, %v1989
  %v2566 = vpack.c.b16 %v2054, %v1990
  %v2567 = vpack.c.b16 %v2055, %v1991
  %v2568 = vpack.c.b16 %v2056, %v1992
  %v2569 = vpack.c.b16 %v2057, %v1993
  %v2570 = vpack.c.b16 %v2058, %v1994
  %v2571 = vpack.c.b16 %v2059, %v1995
  %3084 = vmatpush.bf16.msra.mxu0 %v2508
  %3085 = vmatpush.bf16.msra.mxu0 %v2444
  %3086 = vmatpush.bf16.msra.mxu0 %v2380
  %3087 = vmatpush.bf16.msra.mxu0 %v2316
  %3088 = vmatpush.bf16.msra.mxu0 %v2252
  %3089 = vmatpush.bf16.msra.mxu0 %v2188
  %3090 = vmatpush.bf16.msra.mxu0 %v2124
  %3091 = vmatpush.bf16.msra.mxu0 %v2060
  %3092 = vmatmul.bf16.gmra.mxu0 %v11
  %v3093 = vpop.f32.mrf.mxu0
  %v3094 = vadd.f32 0.0, %v3093
  %v3095 = vpop.f32.mrf.mxu0
  %3096 = vdwg.mxu0
  %3097 = vmatpush.bf16.msra.mxu0 %v2509
  %3098 = vmatpush.bf16.msra.mxu0 %v2445
  %3099 = vmatpush.bf16.msra.mxu0 %v2381
  %3100 = vmatpush.bf16.msra.mxu0 %v2317
  %3101 = vmatpush.bf16.msra.mxu0 %v2253
  %3102 = vmatpush.bf16.msra.mxu0 %v2189
  %3103 = vmatpush.bf16.msra.mxu0 %v2125
  %3104 = vmatpush.bf16.msra.mxu0 %v2061
  %3105 = vmatmul.bf16.gmra.mxu0 %v11
  %v3106 = vpop.f32.mrf.mxu0
  %v3107 = vadd.f32 0.0, %v3106
  %v3108 = vpop.f32.mrf.mxu0
  %3109 = vdwg.mxu0
  %3110 = vmatpush.bf16.msra.mxu0 %v2510
  %3111 = vmatpush.bf16.msra.mxu0 %v2446
  %3112 = vmatpush.bf16.msra.mxu0 %v2382
  %3113 = vmatpush.bf16.msra.mxu0 %v2318
  %3114 = vmatpush.bf16.msra.mxu0 %v2254
  %3115 = vmatpush.bf16.msra.mxu0 %v2190
  %3116 = vmatpush.bf16.msra.mxu0 %v2126
  %3117 = vmatpush.bf16.msra.mxu0 %v2062
  %3118 = vmatmul.bf16.gmra.mxu0 %v11
  %v3119 = vpop.f32.mrf.mxu0
  %v3120 = vadd.f32 0.0, %v3119
  %v3121 = vpop.f32.mrf.mxu0
  %3122 = vdwg.mxu0
  %3123 = vmatpush.bf16.msra.mxu0 %v2511
  %3124 = vmatpush.bf16.msra.mxu0 %v2447
  %3125 = vmatpush.bf16.msra.mxu0 %v2383
  %3126 = vmatpush.bf16.msra.mxu0 %v2319
  %3127 = vmatpush.bf16.msra.mxu0 %v2255
  %3128 = vmatpush.bf16.msra.mxu0 %v2191
  %3129 = vmatpush.bf16.msra.mxu0 %v2127
  %3130 = vmatpush.bf16.msra.mxu0 %v2063
  %3131 = vmatmul.bf16.gmra.mxu0 %v11
  %v3132 = vpop.f32.mrf.mxu0
  %v3133 = vadd.f32 0.0, %v3132
  %v3134 = vpop.f32.mrf.mxu0
  %3135 = vdwg.mxu0
  %3136 = vmatpush.bf16.msra.mxu0 %v2512
  %3137 = vmatpush.bf16.msra.mxu0 %v2448
  %3138 = vmatpush.bf16.msra.mxu0 %v2384
  %3139 = vmatpush.bf16.msra.mxu0 %v2320
  %3140 = vmatpush.bf16.msra.mxu0 %v2256
  %3141 = vmatpush.bf16.msra.mxu0 %v2192
  %3142 = vmatpush.bf16.msra.mxu0 %v2128
  %3143 = vmatpush.bf16.msra.mxu0 %v2064
  %3144 = vmatmul.bf16.gmra.mxu0 %v11
  %v3145 = vpop.f32.mrf.mxu0
  %v3146 = vadd.f32 0.0, %v3145
  %v3147 = vpop.f32.mrf.mxu0
  %3148 = vdwg.mxu0
  %3149 = vmatpush.bf16.msra.mxu0 %v2513
  %3150 = vmatpush.bf16.msra.mxu0 %v2449
  %3151 = vmatpush.bf16.msra.mxu0 %v2385
  %3152 = vmatpush.bf16.msra.mxu0 %v2321
  %3153 = vmatpush.bf16.msra.mxu0 %v2257
  %3154 = vmatpush.bf16.msra.mxu0 %v2193
  %3155 = vmatpush.bf16.msra.mxu0 %v2129
  %3156 = vmatpush.bf16.msra.mxu0 %v2065
  %3157 = vmatmul.bf16.gmra.mxu0 %v11
  %v3158 = vpop.f32.mrf.mxu0
  %v3159 = vadd.f32 0.0, %v3158
  %v3160 = vpop.f32.mrf.mxu0
  %3161 = vdwg.mxu0
  %3162 = vmatpush.bf16.msra.mxu0 %v2514
  %3163 = vmatpush.bf16.msra.mxu0 %v2450
  %3164 = vmatpush.bf16.msra.mxu0 %v2386
  %3165 = vmatpush.bf16.msra.mxu0 %v2322
  %3166 = vmatpush.bf16.msra.mxu0 %v2258
  %3167 = vmatpush.bf16.msra.mxu0 %v2194
  %3168 = vmatpush.bf16.msra.mxu0 %v2130
  %3169 = vmatpush.bf16.msra.mxu0 %v2066
  %3170 = vmatmul.bf16.gmra.mxu0 %v11
  %v3171 = vpop.f32.mrf.mxu0
  %v3172 = vadd.f32 0.0, %v3171
  %v3173 = vpop.f32.mrf.mxu0
  %3174 = vdwg.mxu0
  %3175 = vmatpush.bf16.msra.mxu0 %v2515
  %3176 = vmatpush.bf16.msra.mxu0 %v2451
  %3177 = vmatpush.bf16.msra.mxu0 %v2387
  %3178 = vmatpush.bf16.msra.mxu0 %v2323
  %3179 = vmatpush.bf16.msra.mxu0 %v2259
  %3180 = vmatpush.bf16.msra.mxu0 %v2195
  %3181 = vmatpush.bf16.msra.mxu0 %v2131
  %3182 = vmatpush.bf16.msra.mxu0 %v2067
  %3183 = vmatmul.bf16.gmra.mxu0 %v11
  %v3184 = vpop.f32.mrf.mxu0
  %v3185 = vadd.f32 0.0, %v3184
  %v3186 = vpop.f32.mrf.mxu0
  %3187 = vdwg.mxu0
  %3188 = vmatpush.bf16.msra.mxu0 %v2516
  %3189 = vmatpush.bf16.msra.mxu0 %v2452
  %3190 = vmatpush.bf16.msra.mxu0 %v2388
  %3191 = vmatpush.bf16.msra.mxu0 %v2324
  %3192 = vmatpush.bf16.msra.mxu0 %v2260
  %3193 = vmatpush.bf16.msra.mxu0 %v2196
  %3194 = vmatpush.bf16.msra.mxu0 %v2132
  %3195 = vmatpush.bf16.msra.mxu0 %v2068
  %3196 = vmatmul.bf16.gmra.mxu0 %v11
  %v3197 = vpop.f32.mrf.mxu0
  %v3198 = vadd.f32 0.0, %v3197
  %v3199 = vpop.f32.mrf.mxu0
  %3200 = vdwg.mxu0
  %3201 = vmatpush.bf16.msra.mxu0 %v2517
  %3202 = vmatpush.bf16.msra.mxu0 %v2453
  %3203 = vmatpush.bf16.msra.mxu0 %v2389
  %3204 = vmatpush.bf16.msra.mxu0 %v2325
  %3205 = vmatpush.bf16.msra.mxu0 %v2261
  %3206 = vmatpush.bf16.msra.mxu0 %v2197
  %3207 = vmatpush.bf16.msra.mxu0 %v2133
  %3208 = vmatpush.bf16.msra.mxu0 %v2069
  %3209 = vmatmul.bf16.gmra.mxu0 %v11
  %v3210 = vpop.f32.mrf.mxu0
  %v3211 = vadd.f32 0.0, %v3210
  %v3212 = vpop.f32.mrf.mxu0
  %3213 = vdwg.mxu0
  %3214 = vmatpush.bf16.msra.mxu0 %v2518
  %3215 = vmatpush.bf16.msra.mxu0 %v2454
  %3216 = vmatpush.bf16.msra.mxu0 %v2390
  %3217 = vmatpush.bf16.msra.mxu0 %v2326
  %3218 = vmatpush.bf16.msra.mxu0 %v2262
  %3219 = vmatpush.bf16.msra.mxu0 %v2198
  %3220 = vmatpush.bf16.msra.mxu0 %v2134
  %3221 = vmatpush.bf16.msra.mxu0 %v2070
  %3222 = vmatmul.bf16.gmra.mxu0 %v11
  %v3223 = vpop.f32.mrf.mxu0
  %v3224 = vadd.f32 0.0, %v3223
  %v3225 = vpop.f32.mrf.mxu0
  %3226 = vdwg.mxu0
  %3227 = vmatpush.bf16.msra.mxu0 %v2519
  %3228 = vmatpush.bf16.msra.mxu0 %v2455
  %3229 = vmatpush.bf16.msra.mxu0 %v2391
  %3230 = vmatpush.bf16.msra.mxu0 %v2327
  %3231 = vmatpush.bf16.msra.mxu0 %v2263
  %3232 = vmatpush.bf16.msra.mxu0 %v2199
  %3233 = vmatpush.bf16.msra.mxu0 %v2135
  %3234 = vmatpush.bf16.msra.mxu0 %v2071
  %3235 = vmatmul.bf16.gmra.mxu0 %v11
  %v3236 = vpop.f32.mrf.mxu0
  %v3237 = vadd.f32 0.0, %v3236
  %v3238 = vpop.f32.mrf.mxu0
  %3239 = vdwg.mxu0
  %3240 = vmatpush.bf16.msra.mxu0 %v2520
  %3241 = vmatpush.bf16.msra.mxu0 %v2456
  %3242 = vmatpush.bf16.msra.mxu0 %v2392
  %3243 = vmatpush.bf16.msra.mxu0 %v2328
  %3244 = vmatpush.bf16.msra.mxu0 %v2264
  %3245 = vmatpush.bf16.msra.mxu0 %v2200
  %3246 = vmatpush.bf16.msra.mxu0 %v2136
  %3247 = vmatpush.bf16.msra.mxu0 %v2072
  %3248 = vmatmul.bf16.gmra.mxu0 %v11
  %v3249 = vpop.f32.mrf.mxu0
  %v3250 = vadd.f32 0.0, %v3249
  %v3251 = vpop.f32.mrf.mxu0
  %3252 = vdwg.mxu0
  %3253 = vmatpush.bf16.msra.mxu0 %v2521
  %3254 = vmatpush.bf16.msra.mxu0 %v2457
  %3255 = vmatpush.bf16.msra.mxu0 %v2393
  %3256 = vmatpush.bf16.msra.mxu0 %v2329
  %3257 = vmatpush.bf16.msra.mxu0 %v2265
  %3258 = vmatpush.bf16.msra.mxu0 %v2201
  %3259 = vmatpush.bf16.msra.mxu0 %v2137
  %3260 = vmatpush.bf16.msra.mxu0 %v2073
  %3261 = vmatmul.bf16.gmra.mxu0 %v11
  %v3262 = vpop.f32.mrf.mxu0
  %v3263 = vadd.f32 0.0, %v3262
  %v3264 = vpop.f32.mrf.mxu0
  %3265 = vdwg.mxu0
  %3266 = vmatpush.bf16.msra.mxu0 %v2522
  %3267 = vmatpush.bf16.msra.mxu0 %v2458
  %3268 = vmatpush.bf16.msra.mxu0 %v2394
  %3269 = vmatpush.bf16.msra.mxu0 %v2330
  %3270 = vmatpush.bf16.msra.mxu0 %v2266
  %3271 = vmatpush.bf16.msra.mxu0 %v2202
  %3272 = vmatpush.bf16.msra.mxu0 %v2138
  %3273 = vmatpush.bf16.msra.mxu0 %v2074
  %3274 = vmatmul.bf16.gmra.mxu0 %v11
  %v3275 = vpop.f32.mrf.mxu0
  %v3276 = vadd.f32 0.0, %v3275
  %v3277 = vpop.f32.mrf.mxu0
  %3278 = vdwg.mxu0
  %3279 = vmatpush.bf16.msra.mxu0 %v2523
  %3280 = vmatpush.bf16.msra.mxu0 %v2459
  %3281 = vmatpush.bf16.msra.mxu0 %v2395
  %3282 = vmatpush.bf16.msra.mxu0 %v2331
  %3283 = vmatpush.bf16.msra.mxu0 %v2267
  %3284 = vmatpush.bf16.msra.mxu0 %v2203
  %3285 = vmatpush.bf16.msra.mxu0 %v2139
  %3286 = vmatpush.bf16.msra.mxu0 %v2075
  %3287 = vmatmul.bf16.gmra.mxu0 %v11
  %v3288 = vpop.f32.mrf.mxu0
  %v3289 = vadd.f32 0.0, %v3288
  %v3290 = vpop.f32.mrf.mxu0
  %3291 = vdwg.mxu0
  %3292 = vmatpush.bf16.msra.mxu0 %v2524
  %3293 = vmatpush.bf16.msra.mxu0 %v2460
  %3294 = vmatpush.bf16.msra.mxu0 %v2396
  %3295 = vmatpush.bf16.msra.mxu0 %v2332
  %3296 = vmatpush.bf16.msra.mxu0 %v2268
  %3297 = vmatpush.bf16.msra.mxu0 %v2204
  %3298 = vmatpush.bf16.msra.mxu0 %v2140
  %3299 = vmatpush.bf16.msra.mxu0 %v2076
  %3300 = vmatmul.bf16.gmra.mxu0 %v11
  %v3301 = vpop.f32.mrf.mxu0
  %v3302 = vadd.f32 0.0, %v3301
  %v3303 = vpop.f32.mrf.mxu0
  %3304 = vdwg.mxu0
  %3305 = vmatpush.bf16.msra.mxu0 %v2525
  %3306 = vmatpush.bf16.msra.mxu0 %v2461
  %3307 = vmatpush.bf16.msra.mxu0 %v2397
  %3308 = vmatpush.bf16.msra.mxu0 %v2333
  %3309 = vmatpush.bf16.msra.mxu0 %v2269
  %3310 = vmatpush.bf16.msra.mxu0 %v2205
  %3311 = vmatpush.bf16.msra.mxu0 %v2141
  %3312 = vmatpush.bf16.msra.mxu0 %v2077
  %3313 = vmatmul.bf16.gmra.mxu0 %v11
  %v3314 = vpop.f32.mrf.mxu0
  %v3315 = vadd.f32 0.0, %v3314
  %v3316 = vpop.f32.mrf.mxu0
  %3317 = vdwg.mxu0
  %3318 = vmatpush.bf16.msra.mxu0 %v2526
  %3319 = vmatpush.bf16.msra.mxu0 %v2462
  %3320 = vmatpush.bf16.msra.mxu0 %v2398
  %3321 = vmatpush.bf16.msra.mxu0 %v2334
  %3322 = vmatpush.bf16.msra.mxu0 %v2270
  %3323 = vmatpush.bf16.msra.mxu0 %v2206
  %3324 = vmatpush.bf16.msra.mxu0 %v2142
  %3325 = vmatpush.bf16.msra.mxu0 %v2078
  %3326 = vmatmul.bf16.gmra.mxu0 %v11
  %v3327 = vpop.f32.mrf.mxu0
  %v3328 = vadd.f32 0.0, %v3327
  %v3329 = vpop.f32.mrf.mxu0
  %3330 = vdwg.mxu0
  %3331 = vmatpush.bf16.msra.mxu0 %v2527
  %3332 = vmatpush.bf16.msra.mxu0 %v2463
  %3333 = vmatpush.bf16.msra.mxu0 %v2399
  %3334 = vmatpush.bf16.msra.mxu0 %v2335
  %3335 = vmatpush.bf16.msra.mxu0 %v2271
  %3336 = vmatpush.bf16.msra.mxu0 %v2207
  %3337 = vmatpush.bf16.msra.mxu0 %v2143
  %3338 = vmatpush.bf16.msra.mxu0 %v2079
  %3339 = vmatmul.bf16.gmra.mxu0 %v11
  %v3340 = vpop.f32.mrf.mxu0
  %v3341 = vadd.f32 0.0, %v3340
  %v3342 = vpop.f32.mrf.mxu0
  %3343 = vdwg.mxu0
  %3344 = vmatpush.bf16.msra.mxu0 %v2528
  %3345 = vmatpush.bf16.msra.mxu0 %v2464
  %3346 = vmatpush.bf16.msra.mxu0 %v2400
  %3347 = vmatpush.bf16.msra.mxu0 %v2336
  %3348 = vmatpush.bf16.msra.mxu0 %v2272
  %3349 = vmatpush.bf16.msra.mxu0 %v2208
  %3350 = vmatpush.bf16.msra.mxu0 %v2144
  %3351 = vmatpush.bf16.msra.mxu0 %v2080
  %3352 = vmatmul.bf16.gmra.mxu0 %v11
  %v3353 = vpop.f32.mrf.mxu0
  %v3354 = vadd.f32 0.0, %v3353
  %v3355 = vpop.f32.mrf.mxu0
  %3356 = vdwg.mxu0
  %3357 = vmatpush.bf16.msra.mxu0 %v2529
  %3358 = vmatpush.bf16.msra.mxu0 %v2465
  %3359 = vmatpush.bf16.msra.mxu0 %v2401
  %3360 = vmatpush.bf16.msra.mxu0 %v2337
  %3361 = vmatpush.bf16.msra.mxu0 %v2273
  %3362 = vmatpush.bf16.msra.mxu0 %v2209
  %3363 = vmatpush.bf16.msra.mxu0 %v2145
  %3364 = vmatpush.bf16.msra.mxu0 %v2081
  %3365 = vmatmul.bf16.gmra.mxu0 %v11
  %v3366 = vpop.f32.mrf.mxu0
  %v3367 = vadd.f32 0.0, %v3366
  %v3368 = vpop.f32.mrf.mxu0
  %3369 = vdwg.mxu0
  %3370 = vmatpush.bf16.msra.mxu0 %v2530
  %3371 = vmatpush.bf16.msra.mxu0 %v2466
  %3372 = vmatpush.bf16.msra.mxu0 %v2402
  %3373 = vmatpush.bf16.msra.mxu0 %v2338
  %3374 = vmatpush.bf16.msra.mxu0 %v2274
  %3375 = vmatpush.bf16.msra.mxu0 %v2210
  %3376 = vmatpush.bf16.msra.mxu0 %v2146
  %3377 = vmatpush.bf16.msra.mxu0 %v2082
  %3378 = vmatmul.bf16.gmra.mxu0 %v11
  %v3379 = vpop.f32.mrf.mxu0
  %v3380 = vadd.f32 0.0, %v3379
  %v3381 = vpop.f32.mrf.mxu0
  %3382 = vdwg.mxu0
  %3383 = vmatpush.bf16.msra.mxu0 %v2531
  %3384 = vmatpush.bf16.msra.mxu0 %v2467
  %3385 = vmatpush.bf16.msra.mxu0 %v2403
  %3386 = vmatpush.bf16.msra.mxu0 %v2339
  %3387 = vmatpush.bf16.msra.mxu0 %v2275
  %3388 = vmatpush.bf16.msra.mxu0 %v2211
  %3389 = vmatpush.bf16.msra.mxu0 %v2147
  %3390 = vmatpush.bf16.msra.mxu0 %v2083
  %3391 = vmatmul.bf16.gmra.mxu0 %v11
  %v3392 = vpop.f32.mrf.mxu0
  %v3393 = vadd.f32 0.0, %v3392
  %v3394 = vpop.f32.mrf.mxu0
  %3395 = vdwg.mxu0
  %3396 = vmatpush.bf16.msra.mxu0 %v2532
  %3397 = vmatpush.bf16.msra.mxu0 %v2468
  %3398 = vmatpush.bf16.msra.mxu0 %v2404
  %3399 = vmatpush.bf16.msra.mxu0 %v2340
  %3400 = vmatpush.bf16.msra.mxu0 %v2276
  %3401 = vmatpush.bf16.msra.mxu0 %v2212
  %3402 = vmatpush.bf16.msra.mxu0 %v2148
  %3403 = vmatpush.bf16.msra.mxu0 %v2084
  %3404 = vmatmul.bf16.gmra.mxu0 %v11
  %v3405 = vpop.f32.mrf.mxu0
  %v3406 = vadd.f32 0.0, %v3405
  %v3407 = vpop.f32.mrf.mxu0
  %3408 = vdwg.mxu0
  %3409 = vmatpush.bf16.msra.mxu0 %v2533
  %3410 = vmatpush.bf16.msra.mxu0 %v2469
  %3411 = vmatpush.bf16.msra.mxu0 %v2405
  %3412 = vmatpush.bf16.msra.mxu0 %v2341
  %3413 = vmatpush.bf16.msra.mxu0 %v2277
  %3414 = vmatpush.bf16.msra.mxu0 %v2213
  %3415 = vmatpush.bf16.msra.mxu0 %v2149
  %3416 = vmatpush.bf16.msra.mxu0 %v2085
  %3417 = vmatmul.bf16.gmra.mxu0 %v11
  %v3418 = vpop.f32.mrf.mxu0
  %v3419 = vadd.f32 0.0, %v3418
  %v3420 = vpop.f32.mrf.mxu0
  %3421 = vdwg.mxu0
  %3422 = vmatpush.bf16.msra.mxu0 %v2534
  %3423 = vmatpush.bf16.msra.mxu0 %v2470
  %3424 = vmatpush.bf16.msra.mxu0 %v2406
  %3425 = vmatpush.bf16.msra.mxu0 %v2342
  %3426 = vmatpush.bf16.msra.mxu0 %v2278
  %3427 = vmatpush.bf16.msra.mxu0 %v2214
  %3428 = vmatpush.bf16.msra.mxu0 %v2150
  %3429 = vmatpush.bf16.msra.mxu0 %v2086
  %3430 = vmatmul.bf16.gmra.mxu0 %v11
  %v3431 = vpop.f32.mrf.mxu0
  %v3432 = vadd.f32 0.0, %v3431
  %v3433 = vpop.f32.mrf.mxu0
  %3434 = vdwg.mxu0
  %3435 = vmatpush.bf16.msra.mxu0 %v2535
  %3436 = vmatpush.bf16.msra.mxu0 %v2471
  %3437 = vmatpush.bf16.msra.mxu0 %v2407
  %3438 = vmatpush.bf16.msra.mxu0 %v2343
  %3439 = vmatpush.bf16.msra.mxu0 %v2279
  %3440 = vmatpush.bf16.msra.mxu0 %v2215
  %3441 = vmatpush.bf16.msra.mxu0 %v2151
  %3442 = vmatpush.bf16.msra.mxu0 %v2087
  %3443 = vmatmul.bf16.gmra.mxu0 %v11
  %v3444 = vpop.f32.mrf.mxu0
  %v3445 = vadd.f32 0.0, %v3444
  %v3446 = vpop.f32.mrf.mxu0
  %3447 = vdwg.mxu0
  %3448 = vmatpush.bf16.msra.mxu0 %v2536
  %3449 = vmatpush.bf16.msra.mxu0 %v2472
  %3450 = vmatpush.bf16.msra.mxu0 %v2408
  %3451 = vmatpush.bf16.msra.mxu0 %v2344
  %3452 = vmatpush.bf16.msra.mxu0 %v2280
  %3453 = vmatpush.bf16.msra.mxu0 %v2216
  %3454 = vmatpush.bf16.msra.mxu0 %v2152
  %3455 = vmatpush.bf16.msra.mxu0 %v2088
  %3456 = vmatmul.bf16.gmra.mxu0 %v11
  %v3457 = vpop.f32.mrf.mxu0
  %v3458 = vadd.f32 0.0, %v3457
  %v3459 = vpop.f32.mrf.mxu0
  %3460 = vdwg.mxu0
  %3461 = vmatpush.bf16.msra.mxu0 %v2537
  %3462 = vmatpush.bf16.msra.mxu0 %v2473
  %3463 = vmatpush.bf16.msra.mxu0 %v2409
  %3464 = vmatpush.bf16.msra.mxu0 %v2345
  %3465 = vmatpush.bf16.msra.mxu0 %v2281
  %3466 = vmatpush.bf16.msra.mxu0 %v2217
  %3467 = vmatpush.bf16.msra.mxu0 %v2153
  %3468 = vmatpush.bf16.msra.mxu0 %v2089
  %3469 = vmatmul.bf16.gmra.mxu0 %v11
  %v3470 = vpop.f32.mrf.mxu0
  %v3471 = vadd.f32 0.0, %v3470
  %v3472 = vpop.f32.mrf.mxu0
  %3473 = vdwg.mxu0
  %3474 = vmatpush.bf16.msra.mxu0 %v2538
  %3475 = vmatpush.bf16.msra.mxu0 %v2474
  %3476 = vmatpush.bf16.msra.mxu0 %v2410
  %3477 = vmatpush.bf16.msra.mxu0 %v2346
  %3478 = vmatpush.bf16.msra.mxu0 %v2282
  %3479 = vmatpush.bf16.msra.mxu0 %v2218
  %3480 = vmatpush.bf16.msra.mxu0 %v2154
  %3481 = vmatpush.bf16.msra.mxu0 %v2090
  %3482 = vmatmul.bf16.gmra.mxu0 %v11
  %v3483 = vpop.f32.mrf.mxu0
  %v3484 = vadd.f32 0.0, %v3483
  %v3485 = vpop.f32.mrf.mxu0
  %3486 = vdwg.mxu0
  %3487 = vmatpush.bf16.msra.mxu0 %v2539
  %3488 = vmatpush.bf16.msra.mxu0 %v2475
  %3489 = vmatpush.bf16.msra.mxu0 %v2411
  %3490 = vmatpush.bf16.msra.mxu0 %v2347
  %3491 = vmatpush.bf16.msra.mxu0 %v2283
  %3492 = vmatpush.bf16.msra.mxu0 %v2219
  %3493 = vmatpush.bf16.msra.mxu0 %v2155
  %3494 = vmatpush.bf16.msra.mxu0 %v2091
  %3495 = vmatmul.bf16.gmra.mxu0 %v11
  %v3496 = vpop.f32.mrf.mxu0
  %v3497 = vadd.f32 0.0, %v3496
  %v3498 = vpop.f32.mrf.mxu0
  %3499 = vdwg.mxu0
  %3500 = vmatpush.bf16.msra.mxu0 %v2540
  %3501 = vmatpush.bf16.msra.mxu0 %v2476
  %3502 = vmatpush.bf16.msra.mxu0 %v2412
  %3503 = vmatpush.bf16.msra.mxu0 %v2348
  %3504 = vmatpush.bf16.msra.mxu0 %v2284
  %3505 = vmatpush.bf16.msra.mxu0 %v2220
  %3506 = vmatpush.bf16.msra.mxu0 %v2156
  %3507 = vmatpush.bf16.msra.mxu0 %v2092
  %3508 = vmatmul.bf16.gmra.mxu0 %v11
  %v3509 = vpop.f32.mrf.mxu0
  %v3510 = vadd.f32 0.0, %v3509
  %v3511 = vpop.f32.mrf.mxu0
  %3512 = vdwg.mxu0
  %3513 = vmatpush.bf16.msra.mxu0 %v2541
  %3514 = vmatpush.bf16.msra.mxu0 %v2477
  %3515 = vmatpush.bf16.msra.mxu0 %v2413
  %3516 = vmatpush.bf16.msra.mxu0 %v2349
  %3517 = vmatpush.bf16.msra.mxu0 %v2285
  %3518 = vmatpush.bf16.msra.mxu0 %v2221
  %3519 = vmatpush.bf16.msra.mxu0 %v2157
  %3520 = vmatpush.bf16.msra.mxu0 %v2093
  %3521 = vmatmul.bf16.gmra.mxu0 %v11
  %v3522 = vpop.f32.mrf.mxu0
  %v3523 = vadd.f32 0.0, %v3522
  %v3524 = vpop.f32.mrf.mxu0
  %3525 = vdwg.mxu0
  %3526 = vmatpush.bf16.msra.mxu0 %v2542
  %3527 = vmatpush.bf16.msra.mxu0 %v2478
  %3528 = vmatpush.bf16.msra.mxu0 %v2414
  %3529 = vmatpush.bf16.msra.mxu0 %v2350
  %3530 = vmatpush.bf16.msra.mxu0 %v2286
  %3531 = vmatpush.bf16.msra.mxu0 %v2222
  %3532 = vmatpush.bf16.msra.mxu0 %v2158
  %3533 = vmatpush.bf16.msra.mxu0 %v2094
  %3534 = vmatmul.bf16.gmra.mxu0 %v11
  %v3535 = vpop.f32.mrf.mxu0
  %v3536 = vadd.f32 0.0, %v3535
  %v3537 = vpop.f32.mrf.mxu0
  %3538 = vdwg.mxu0
  %3539 = vmatpush.bf16.msra.mxu0 %v2543
  %3540 = vmatpush.bf16.msra.mxu0 %v2479
  %3541 = vmatpush.bf16.msra.mxu0 %v2415
  %3542 = vmatpush.bf16.msra.mxu0 %v2351
  %3543 = vmatpush.bf16.msra.mxu0 %v2287
  %3544 = vmatpush.bf16.msra.mxu0 %v2223
  %3545 = vmatpush.bf16.msra.mxu0 %v2159
  %3546 = vmatpush.bf16.msra.mxu0 %v2095
  %3547 = vmatmul.bf16.gmra.mxu0 %v11
  %v3548 = vpop.f32.mrf.mxu0
  %v3549 = vadd.f32 0.0, %v3548
  %v3550 = vpop.f32.mrf.mxu0
  %3551 = vdwg.mxu0
  %3552 = vmatpush.bf16.msra.mxu0 %v2544
  %3553 = vmatpush.bf16.msra.mxu0 %v2480
  %3554 = vmatpush.bf16.msra.mxu0 %v2416
  %3555 = vmatpush.bf16.msra.mxu0 %v2352
  %3556 = vmatpush.bf16.msra.mxu0 %v2288
  %3557 = vmatpush.bf16.msra.mxu0 %v2224
  %3558 = vmatpush.bf16.msra.mxu0 %v2160
  %3559 = vmatpush.bf16.msra.mxu0 %v2096
  %3560 = vmatmul.bf16.gmra.mxu0 %v11
  %v3561 = vpop.f32.mrf.mxu0
  %v3562 = vadd.f32 0.0, %v3561
  %v3563 = vpop.f32.mrf.mxu0
  %3564 = vdwg.mxu0
  %3565 = vmatpush.bf16.msra.mxu0 %v2545
  %3566 = vmatpush.bf16.msra.mxu0 %v2481
  %3567 = vmatpush.bf16.msra.mxu0 %v2417
  %3568 = vmatpush.bf16.msra.mxu0 %v2353
  %3569 = vmatpush.bf16.msra.mxu0 %v2289
  %3570 = vmatpush.bf16.msra.mxu0 %v2225
  %3571 = vmatpush.bf16.msra.mxu0 %v2161
  %3572 = vmatpush.bf16.msra.mxu0 %v2097
  %3573 = vmatmul.bf16.gmra.mxu0 %v11
  %v3574 = vpop.f32.mrf.mxu0
  %v3575 = vadd.f32 0.0, %v3574
  %v3576 = vpop.f32.mrf.mxu0
  %3577 = vdwg.mxu0
  %3578 = vmatpush.bf16.msra.mxu0 %v2546
  %3579 = vmatpush.bf16.msra.mxu0 %v2482
  %3580 = vmatpush.bf16.msra.mxu0 %v2418
  %3581 = vmatpush.bf16.msra.mxu0 %v2354
  %3582 = vmatpush.bf16.msra.mxu0 %v2290
  %3583 = vmatpush.bf16.msra.mxu0 %v2226
  %3584 = vmatpush.bf16.msra.mxu0 %v2162
  %3585 = vmatpush.bf16.msra.mxu0 %v2098
  %3586 = vmatmul.bf16.gmra.mxu0 %v11
  %v3587 = vpop.f32.mrf.mxu0
  %v3588 = vadd.f32 0.0, %v3587
  %v3589 = vpop.f32.mrf.mxu0
  %3590 = vdwg.mxu0
  %3591 = vmatpush.bf16.msra.mxu0 %v2547
  %3592 = vmatpush.bf16.msra.mxu0 %v2483
  %3593 = vmatpush.bf16.msra.mxu0 %v2419
  %3594 = vmatpush.bf16.msra.mxu0 %v2355
  %3595 = vmatpush.bf16.msra.mxu0 %v2291
  %3596 = vmatpush.bf16.msra.mxu0 %v2227
  %3597 = vmatpush.bf16.msra.mxu0 %v2163
  %3598 = vmatpush.bf16.msra.mxu0 %v2099
  %3599 = vmatmul.bf16.gmra.mxu0 %v11
  %v3600 = vpop.f32.mrf.mxu0
  %v3601 = vadd.f32 0.0, %v3600
  %v3602 = vpop.f32.mrf.mxu0
  %3603 = vdwg.mxu0
  %3604 = vmatpush.bf16.msra.mxu0 %v2548
  %3605 = vmatpush.bf16.msra.mxu0 %v2484
  %3606 = vmatpush.bf16.msra.mxu0 %v2420
  %3607 = vmatpush.bf16.msra.mxu0 %v2356
  %3608 = vmatpush.bf16.msra.mxu0 %v2292
  %3609 = vmatpush.bf16.msra.mxu0 %v2228
  %3610 = vmatpush.bf16.msra.mxu0 %v2164
  %3611 = vmatpush.bf16.msra.mxu0 %v2100
  %3612 = vmatmul.bf16.gmra.mxu0 %v11
  %v3613 = vpop.f32.mrf.mxu0
  %v3614 = vadd.f32 0.0, %v3613
  %v3615 = vpop.f32.mrf.mxu0
  %3616 = vdwg.mxu0
  %3617 = vmatpush.bf16.msra.mxu0 %v2549
  %3618 = vmatpush.bf16.msra.mxu0 %v2485
  %3619 = vmatpush.bf16.msra.mxu0 %v2421
  %3620 = vmatpush.bf16.msra.mxu0 %v2357
  %3621 = vmatpush.bf16.msra.mxu0 %v2293
  %3622 = vmatpush.bf16.msra.mxu0 %v2229
  %3623 = vmatpush.bf16.msra.mxu0 %v2165
  %3624 = vmatpush.bf16.msra.mxu0 %v2101
  %3625 = vmatmul.bf16.gmra.mxu0 %v11
  %v3626 = vpop.f32.mrf.mxu0
  %v3627 = vadd.f32 0.0, %v3626
  %v3628 = vpop.f32.mrf.mxu0
  %3629 = vdwg.mxu0
  %3630 = vmatpush.bf16.msra.mxu0 %v2550
  %3631 = vmatpush.bf16.msra.mxu0 %v2486
  %3632 = vmatpush.bf16.msra.mxu0 %v2422
  %3633 = vmatpush.bf16.msra.mxu0 %v2358
  %3634 = vmatpush.bf16.msra.mxu0 %v2294
  %3635 = vmatpush.bf16.msra.mxu0 %v2230
  %3636 = vmatpush.bf16.msra.mxu0 %v2166
  %3637 = vmatpush.bf16.msra.mxu0 %v2102
  %3638 = vmatmul.bf16.gmra.mxu0 %v11
  %v3639 = vpop.f32.mrf.mxu0
  %v3640 = vadd.f32 0.0, %v3639
  %v3641 = vpop.f32.mrf.mxu0
  %3642 = vdwg.mxu0
  %3643 = vmatpush.bf16.msra.mxu0 %v2551
  %3644 = vmatpush.bf16.msra.mxu0 %v2487
  %3645 = vmatpush.bf16.msra.mxu0 %v2423
  %3646 = vmatpush.bf16.msra.mxu0 %v2359
  %3647 = vmatpush.bf16.msra.mxu0 %v2295
  %3648 = vmatpush.bf16.msra.mxu0 %v2231
  %3649 = vmatpush.bf16.msra.mxu0 %v2167
  %3650 = vmatpush.bf16.msra.mxu0 %v2103
  %3651 = vmatmul.bf16.gmra.mxu0 %v11
  %v3652 = vpop.f32.mrf.mxu0
  %v3653 = vadd.f32 0.0, %v3652
  %v3654 = vpop.f32.mrf.mxu0
  %3655 = vdwg.mxu0
  %3656 = vmatpush.bf16.msra.mxu0 %v2552
  %3657 = vmatpush.bf16.msra.mxu0 %v2488
  %3658 = vmatpush.bf16.msra.mxu0 %v2424
  %3659 = vmatpush.bf16.msra.mxu0 %v2360
  %3660 = vmatpush.bf16.msra.mxu0 %v2296
  %3661 = vmatpush.bf16.msra.mxu0 %v2232
  %3662 = vmatpush.bf16.msra.mxu0 %v2168
  %3663 = vmatpush.bf16.msra.mxu0 %v2104
  %3664 = vmatmul.bf16.gmra.mxu0 %v11
  %v3665 = vpop.f32.mrf.mxu0
  %v3666 = vadd.f32 0.0, %v3665
  %v3667 = vpop.f32.mrf.mxu0
  %3668 = vdwg.mxu0
  %3669 = vmatpush.bf16.msra.mxu0 %v2553
  %3670 = vmatpush.bf16.msra.mxu0 %v2489
  %3671 = vmatpush.bf16.msra.mxu0 %v2425
  %3672 = vmatpush.bf16.msra.mxu0 %v2361
  %3673 = vmatpush.bf16.msra.mxu0 %v2297
  %3674 = vmatpush.bf16.msra.mxu0 %v2233
  %3675 = vmatpush.bf16.msra.mxu0 %v2169
  %3676 = vmatpush.bf16.msra.mxu0 %v2105
  %3677 = vmatmul.bf16.gmra.mxu0 %v11
  %v3678 = vpop.f32.mrf.mxu0
  %v3679 = vadd.f32 0.0, %v3678
  %v3680 = vpop.f32.mrf.mxu0
  %3681 = vdwg.mxu0
  %3682 = vmatpush.bf16.msra.mxu0 %v2554
  %3683 = vmatpush.bf16.msra.mxu0 %v2490
  %3684 = vmatpush.bf16.msra.mxu0 %v2426
  %3685 = vmatpush.bf16.msra.mxu0 %v2362
  %3686 = vmatpush.bf16.msra.mxu0 %v2298
  %3687 = vmatpush.bf16.msra.mxu0 %v2234
  %3688 = vmatpush.bf16.msra.mxu0 %v2170
  %3689 = vmatpush.bf16.msra.mxu0 %v2106
  %3690 = vmatmul.bf16.gmra.mxu0 %v11
  %v3691 = vpop.f32.mrf.mxu0
  %v3692 = vadd.f32 0.0, %v3691
  %v3693 = vpop.f32.mrf.mxu0
  %3694 = vdwg.mxu0
  %3695 = vmatpush.bf16.msra.mxu0 %v2555
  %3696 = vmatpush.bf16.msra.mxu0 %v2491
  %3697 = vmatpush.bf16.msra.mxu0 %v2427
  %3698 = vmatpush.bf16.msra.mxu0 %v2363
  %3699 = vmatpush.bf16.msra.mxu0 %v2299
  %3700 = vmatpush.bf16.msra.mxu0 %v2235
  %3701 = vmatpush.bf16.msra.mxu0 %v2171
  %3702 = vmatpush.bf16.msra.mxu0 %v2107
  %3703 = vmatmul.bf16.gmra.mxu0 %v11
  %v3704 = vpop.f32.mrf.mxu0
  %v3705 = vadd.f32 0.0, %v3704
  %v3706 = vpop.f32.mrf.mxu0
  %3707 = vdwg.mxu0
  %3708 = vmatpush.bf16.msra.mxu0 %v2556
  %3709 = vmatpush.bf16.msra.mxu0 %v2492
  %3710 = vmatpush.bf16.msra.mxu0 %v2428
  %3711 = vmatpush.bf16.msra.mxu0 %v2364
  %3712 = vmatpush.bf16.msra.mxu0 %v2300
  %3713 = vmatpush.bf16.msra.mxu0 %v2236
  %3714 = vmatpush.bf16.msra.mxu0 %v2172
  %3715 = vmatpush.bf16.msra.mxu0 %v2108
  %3716 = vmatmul.bf16.gmra.mxu0 %v11
  %v3717 = vpop.f32.mrf.mxu0
  %v3718 = vadd.f32 0.0, %v3717
  %v3719 = vpop.f32.mrf.mxu0
  %3720 = vdwg.mxu0
  %3721 = vmatpush.bf16.msra.mxu0 %v2557
  %3722 = vmatpush.bf16.msra.mxu0 %v2493
  %3723 = vmatpush.bf16.msra.mxu0 %v2429
  %3724 = vmatpush.bf16.msra.mxu0 %v2365
  %3725 = vmatpush.bf16.msra.mxu0 %v2301
  %3726 = vmatpush.bf16.msra.mxu0 %v2237
  %3727 = vmatpush.bf16.msra.mxu0 %v2173
  %3728 = vmatpush.bf16.msra.mxu0 %v2109
  %3729 = vmatmul.bf16.gmra.mxu0 %v11
  %v3730 = vpop.f32.mrf.mxu0
  %v3731 = vadd.f32 0.0, %v3730
  %v3732 = vpop.f32.mrf.mxu0
  %3733 = vdwg.mxu0
  %3734 = vmatpush.bf16.msra.mxu0 %v2558
  %3735 = vmatpush.bf16.msra.mxu0 %v2494
  %3736 = vmatpush.bf16.msra.mxu0 %v2430
  %3737 = vmatpush.bf16.msra.mxu0 %v2366
  %3738 = vmatpush.bf16.msra.mxu0 %v2302
  %3739 = vmatpush.bf16.msra.mxu0 %v2238
  %3740 = vmatpush.bf16.msra.mxu0 %v2174
  %3741 = vmatpush.bf16.msra.mxu0 %v2110
  %3742 = vmatmul.bf16.gmra.mxu0 %v11
  %v3743 = vpop.f32.mrf.mxu0
  %v3744 = vadd.f32 0.0, %v3743
  %v3745 = vpop.f32.mrf.mxu0
  %3746 = vdwg.mxu0
  %3747 = vmatpush.bf16.msra.mxu0 %v2559
  %3748 = vmatpush.bf16.msra.mxu0 %v2495
  %3749 = vmatpush.bf16.msra.mxu0 %v2431
  %3750 = vmatpush.bf16.msra.mxu0 %v2367
  %3751 = vmatpush.bf16.msra.mxu0 %v2303
  %3752 = vmatpush.bf16.msra.mxu0 %v2239
  %3753 = vmatpush.bf16.msra.mxu0 %v2175
  %3754 = vmatpush.bf16.msra.mxu0 %v2111
  %3755 = vmatmul.bf16.gmra.mxu0 %v11
  %v3756 = vpop.f32.mrf.mxu0
  %v3757 = vadd.f32 0.0, %v3756
  %v3758 = vpop.f32.mrf.mxu0
  %3759 = vdwg.mxu0
  %3760 = vmatpush.bf16.msra.mxu0 %v2560
  %3761 = vmatpush.bf16.msra.mxu0 %v2496
  %3762 = vmatpush.bf16.msra.mxu0 %v2432
  %3763 = vmatpush.bf16.msra.mxu0 %v2368
  %3764 = vmatpush.bf16.msra.mxu0 %v2304
  %3765 = vmatpush.bf16.msra.mxu0 %v2240
  %3766 = vmatpush.bf16.msra.mxu0 %v2176
  %3767 = vmatpush.bf16.msra.mxu0 %v2112
  %3768 = vmatmul.bf16.gmra.mxu0 %v11
  %v3769 = vpop.f32.mrf.mxu0
  %v3770 = vadd.f32 0.0, %v3769
  %v3771 = vpop.f32.mrf.mxu0
  %3772 = vdwg.mxu0
  %3773 = vmatpush.bf16.msra.mxu0 %v2561
  %3774 = vmatpush.bf16.msra.mxu0 %v2497
  %3775 = vmatpush.bf16.msra.mxu0 %v2433
  %3776 = vmatpush.bf16.msra.mxu0 %v2369
  %3777 = vmatpush.bf16.msra.mxu0 %v2305
  %3778 = vmatpush.bf16.msra.mxu0 %v2241
  %3779 = vmatpush.bf16.msra.mxu0 %v2177
  %3780 = vmatpush.bf16.msra.mxu0 %v2113
  %3781 = vmatmul.bf16.gmra.mxu0 %v11
  %v3782 = vpop.f32.mrf.mxu0
  %v3783 = vadd.f32 0.0, %v3782
  %v3784 = vpop.f32.mrf.mxu0
  %3785 = vdwg.mxu0
  %3786 = vmatpush.bf16.msra.mxu0 %v2562
  %3787 = vmatpush.bf16.msra.mxu0 %v2498
  %3788 = vmatpush.bf16.msra.mxu0 %v2434
  %3789 = vmatpush.bf16.msra.mxu0 %v2370
  %3790 = vmatpush.bf16.msra.mxu0 %v2306
  %3791 = vmatpush.bf16.msra.mxu0 %v2242
  %3792 = vmatpush.bf16.msra.mxu0 %v2178
  %3793 = vmatpush.bf16.msra.mxu0 %v2114
  %3794 = vmatmul.bf16.gmra.mxu0 %v11
  %v3795 = vpop.f32.mrf.mxu0
  %v3796 = vadd.f32 0.0, %v3795
  %v3797 = vpop.f32.mrf.mxu0
  %3798 = vdwg.mxu0
  %3799 = vmatpush.bf16.msra.mxu0 %v2563
  %3800 = vmatpush.bf16.msra.mxu0 %v2499
  %3801 = vmatpush.bf16.msra.mxu0 %v2435
  %3802 = vmatpush.bf16.msra.mxu0 %v2371
  %3803 = vmatpush.bf16.msra.mxu0 %v2307
  %3804 = vmatpush.bf16.msra.mxu0 %v2243
  %3805 = vmatpush.bf16.msra.mxu0 %v2179
  %3806 = vmatpush.bf16.msra.mxu0 %v2115
  %3807 = vmatmul.bf16.gmra.mxu0 %v11
  %v3808 = vpop.f32.mrf.mxu0
  %v3809 = vadd.f32 0.0, %v3808
  %v3810 = vpop.f32.mrf.mxu0
  %3811 = vdwg.mxu0
  %3812 = vmatpush.bf16.msra.mxu0 %v2564
  %3813 = vmatpush.bf16.msra.mxu0 %v2500
  %3814 = vmatpush.bf16.msra.mxu0 %v2436
  %3815 = vmatpush.bf16.msra.mxu0 %v2372
  %3816 = vmatpush.bf16.msra.mxu0 %v2308
  %3817 = vmatpush.bf16.msra.mxu0 %v2244
  %3818 = vmatpush.bf16.msra.mxu0 %v2180
  %3819 = vmatpush.bf16.msra.mxu0 %v2116
  %3820 = vmatmul.bf16.gmra.mxu0 %v11
  %v3821 = vpop.f32.mrf.mxu0
  %v3822 = vadd.f32 0.0, %v3821
  %v3823 = vpop.f32.mrf.mxu0
  %3824 = vdwg.mxu0
  %3825 = vmatpush.bf16.msra.mxu0 %v2565
  %3826 = vmatpush.bf16.msra.mxu0 %v2501
  %3827 = vmatpush.bf16.msra.mxu0 %v2437
  %3828 = vmatpush.bf16.msra.mxu0 %v2373
  %3829 = vmatpush.bf16.msra.mxu0 %v2309
  %3830 = vmatpush.bf16.msra.mxu0 %v2245
  %3831 = vmatpush.bf16.msra.mxu0 %v2181
  %3832 = vmatpush.bf16.msra.mxu0 %v2117
  %3833 = vmatmul.bf16.gmra.mxu0 %v11
  %v3834 = vpop.f32.mrf.mxu0
  %v3835 = vadd.f32 0.0, %v3834
  %v3836 = vpop.f32.mrf.mxu0
  %3837 = vdwg.mxu0
  %3838 = vmatpush.bf16.msra.mxu0 %v2566
  %3839 = vmatpush.bf16.msra.mxu0 %v2502
  %3840 = vmatpush.bf16.msra.mxu0 %v2438
  %3841 = vmatpush.bf16.msra.mxu0 %v2374
  %3842 = vmatpush.bf16.msra.mxu0 %v2310
  %3843 = vmatpush.bf16.msra.mxu0 %v2246
  %3844 = vmatpush.bf16.msra.mxu0 %v2182
  %3845 = vmatpush.bf16.msra.mxu0 %v2118
  %3846 = vmatmul.bf16.gmra.mxu0 %v11
  %v3847 = vpop.f32.mrf.mxu0
  %v3848 = vadd.f32 0.0, %v3847
  %v3849 = vpop.f32.mrf.mxu0
  %3850 = vdwg.mxu0
  %3851 = vmatpush.bf16.msra.mxu0 %v2567
  %3852 = vmatpush.bf16.msra.mxu0 %v2503
  %3853 = vmatpush.bf16.msra.mxu0 %v2439
  %3854 = vmatpush.bf16.msra.mxu0 %v2375
  %3855 = vmatpush.bf16.msra.mxu0 %v2311
  %3856 = vmatpush.bf16.msra.mxu0 %v2247
  %3857 = vmatpush.bf16.msra.mxu0 %v2183
  %3858 = vmatpush.bf16.msra.mxu0 %v2119
  %3859 = vmatmul.bf16.gmra.mxu0 %v11
  %v3860 = vpop.f32.mrf.mxu0
  %v3861 = vadd.f32 0.0, %v3860
  %v3862 = vpop.f32.mrf.mxu0
  %3863 = vdwg.mxu0
  %3864 = vmatpush.bf16.msra.mxu0 %v2568
  %3865 = vmatpush.bf16.msra.mxu0 %v2504
  %3866 = vmatpush.bf16.msra.mxu0 %v2440
  %3867 = vmatpush.bf16.msra.mxu0 %v2376
  %3868 = vmatpush.bf16.msra.mxu0 %v2312
  %3869 = vmatpush.bf16.msra.mxu0 %v2248
  %3870 = vmatpush.bf16.msra.mxu0 %v2184
  %3871 = vmatpush.bf16.msra.mxu0 %v2120
  %3872 = vmatmul.bf16.gmra.mxu0 %v11
  %v3873 = vpop.f32.mrf.mxu0
  %v3874 = vadd.f32 0.0, %v3873
  %v3875 = vpop.f32.mrf.mxu0
  %3876 = vdwg.mxu0
  %3877 = vmatpush.bf16.msra.mxu0 %v2569
  %3878 = vmatpush.bf16.msra.mxu0 %v2505
  %3879 = vmatpush.bf16.msra.mxu0 %v2441
  %3880 = vmatpush.bf16.msra.mxu0 %v2377
  %3881 = vmatpush.bf16.msra.mxu0 %v2313
  %3882 = vmatpush.bf16.msra.mxu0 %v2249
  %3883 = vmatpush.bf16.msra.mxu0 %v2185
  %3884 = vmatpush.bf16.msra.mxu0 %v2121
  %3885 = vmatmul.bf16.gmra.mxu0 %v11
  %v3886 = vpop.f32.mrf.mxu0
  %v3887 = vadd.f32 0.0, %v3886
  %v3888 = vpop.f32.mrf.mxu0
  %3889 = vdwg.mxu0
  %3890 = vmatpush.bf16.msra.mxu0 %v2570
  %3891 = vmatpush.bf16.msra.mxu0 %v2506
  %3892 = vmatpush.bf16.msra.mxu0 %v2442
  %3893 = vmatpush.bf16.msra.mxu0 %v2378
  %3894 = vmatpush.bf16.msra.mxu0 %v2314
  %3895 = vmatpush.bf16.msra.mxu0 %v2250
  %3896 = vmatpush.bf16.msra.mxu0 %v2186
  %3897 = vmatpush.bf16.msra.mxu0 %v2122
  %3898 = vmatmul.bf16.gmra.mxu0 %v11
  %v3899 = vpop.f32.mrf.mxu0
  %v3900 = vadd.f32 0.0, %v3899
  %v3901 = vpop.f32.mrf.mxu0
  %3902 = vdwg.mxu0
  %3903 = vmatpush.bf16.msra.mxu0 %v2571
  %3904 = vmatpush.bf16.msra.mxu0 %v2507
  %3905 = vmatpush.bf16.msra.mxu0 %v2443
  %3906 = vmatpush.bf16.msra.mxu0 %v2379
  %3907 = vmatpush.bf16.msra.mxu0 %v2315
  %3908 = vmatpush.bf16.msra.mxu0 %v2251
  %3909 = vmatpush.bf16.msra.mxu0 %v2187
  %3910 = vmatpush.bf16.msra.mxu0 %v2123
  %3911 = vmatmul.bf16.gmra.mxu0 %v11
  %v3912 = vpop.f32.mrf.mxu0
  %v3913 = vadd.f32 0.0, %v3912
  %v3914 = vpop.f32.mrf.mxu0
  %3915 = vdwg.mxu0
  %v3916 = vtanh.pop %v3094
  %v3917 = vtanh.pop %v3107
  %v3918 = vtanh.pop %v3120
  %v3919 = vtanh.pop %v3133
  %v3920 = vtanh.pop %v3146
  %v3921 = vtanh.pop %v3159
  %v3922 = vtanh.pop %v3172
  %v3923 = vtanh.pop %v3185
  %v3924 = vtanh.pop %v3198
  %v3925 = vtanh.pop %v3211
  %v3926 = vtanh.pop %v3224
  %v3927 = vtanh.pop %v3237
  %v3928 = vtanh.pop %v3250
  %v3929 = vtanh.pop %v3263
  %v3930 = vtanh.pop %v3276
  %v3931 = vtanh.pop %v3289
  %v3932 = vtanh.pop %v3302
  %v3933 = vtanh.pop %v3315
  %v3934 = vtanh.pop %v3328
  %v3935 = vtanh.pop %v3341
  %v3936 = vtanh.pop %v3354
  %v3937 = vtanh.pop %v3367
  %v3938 = vtanh.pop %v3380
  %v3939 = vtanh.pop %v3393
  %v3940 = vtanh.pop %v3406
  %v3941 = vtanh.pop %v3419
  %v3942 = vtanh.pop %v3432
  %v3943 = vtanh.pop %v3445
  %v3944 = vtanh.pop %v3458
  %v3945 = vtanh.pop %v3471
  %v3946 = vtanh.pop %v3484
  %v3947 = vtanh.pop %v3497
  %v3948 = vtanh.pop %v3510
  %v3949 = vtanh.pop %v3523
  %v3950 = vtanh.pop %v3536
  %v3951 = vtanh.pop %v3549
  %v3952 = vtanh.pop %v3562
  %v3953 = vtanh.pop %v3575
  %v3954 = vtanh.pop %v3588
  %v3955 = vtanh.pop %v3601
  %v3956 = vtanh.pop %v3614
  %v3957 = vtanh.pop %v3627
  %v3958 = vtanh.pop %v3640
  %v3959 = vtanh.pop %v3653
  %v3960 = vtanh.pop %v3666
  %v3961 = vtanh.pop %v3679
  %v3962 = vtanh.pop %v3692
  %v3963 = vtanh.pop %v3705
  %v3964 = vtanh.pop %v3718
  %v3965 = vtanh.pop %v3731
  %v3966 = vtanh.pop %v3744
  %v3967 = vtanh.pop %v3757
  %v3968 = vtanh.pop %v3770
  %v3969 = vtanh.pop %v3783
  %v3970 = vtanh.pop %v3796
  %v3971 = vtanh.pop %v3809
  %v3972 = vtanh.pop %v3822
  %v3973 = vtanh.pop %v3835
  %v3974 = vtanh.pop %v3848
  %v3975 = vtanh.pop %v3861
  %v3976 = vtanh.pop %v3874
  %v3977 = vtanh.pop %v3887
  %v3978 = vtanh.pop %v3900
  %v3979 = vtanh.pop %v3913
  %v4044 = vrot.slane %v3917, 7
  %v4045 = vrot.slane %v3918, 6
  %v4046 = vrot.slane %v3919, 5
  %v4047 = vrot.slane %v3920, 4
  %v4048 = vrot.slane %v3921, 3
  %v4049 = vrot.slane %v3922, 2
  %v4050 = vrot.slane %v3923, 1
  %v4051 = vrot.slane %v3925, 7
  %v4052 = vrot.slane %v3926, 6
  %v4053 = vrot.slane %v3927, 5
  %v4054 = vrot.slane %v3928, 4
  %v4055 = vrot.slane %v3929, 3
  %v4056 = vrot.slane %v3930, 2
  %v4057 = vrot.slane %v3931, 1
  %v4058 = vrot.slane %v3933, 7
  %v4059 = vrot.slane %v3934, 6
  %v4060 = vrot.slane %v3935, 5
  %v4061 = vrot.slane %v3936, 4
  %v4062 = vrot.slane %v3937, 3
  %v4063 = vrot.slane %v3938, 2
  %v4064 = vrot.slane %v3939, 1
  %v4065 = vrot.slane %v3941, 7
  %v4066 = vrot.slane %v3942, 6
  %v4067 = vrot.slane %v3943, 5
  %v4068 = vrot.slane %v3944, 4
  %v4069 = vrot.slane %v3945, 3
  %v4070 = vrot.slane %v3946, 2
  %v4071 = vrot.slane %v3947, 1
  %v4072 = vrot.slane %v3949, 7
  %v4073 = vrot.slane %v3950, 6
  %v4074 = vrot.slane %v3951, 5
  %v4075 = vrot.slane %v3952, 4
  %v4076 = vrot.slane %v3953, 3
  %v4077 = vrot.slane %v3954, 2
  %v4078 = vrot.slane %v3955, 1
  %v4079 = vrot.slane %v3957, 7
  %v4080 = vrot.slane %v3958, 6
  %v4081 = vrot.slane %v3959, 5
  %v4082 = vrot.slane %v3960, 4
  %v4083 = vrot.slane %v3961, 3
  %v4084 = vrot.slane %v3962, 2
  %v4085 = vrot.slane %v3963, 1
  %v4086 = vrot.slane %v3965, 7
  %v4087 = vrot.slane %v3966, 6
  %v4088 = vrot.slane %v3967, 5
  %v4089 = vrot.slane %v3968, 4
  %v4090 = vrot.slane %v3969, 3
  %v4091 = vrot.slane %v3970, 2
  %v4092 = vrot.slane %v3971, 1
  %v4093 = vrot.slane %v3973, 7
  %v4094 = vrot.slane %v3974, 6
  %v4095 = vrot.slane %v3975, 5
  %v4096 = vrot.slane %v3976, 4
  %v4097 = vrot.slane %v3977, 3
  %v4098 = vrot.slane %v3978, 2
  %v4099 = vrot.slane %v3979, 1
  %vm4100 = vcmask 1040384
  %v4101 = vsel %vm4100, %v3916, %v4044
  %vm4102 = vcmask 1042434
  %v4103 = vsel %vm4102, %v4045, %v4046
  %vm4104 = vcmask 1041408
  %v4105 = vsel %vm4104, %v4101, %v4103
  %vm4106 = vcmask 1044484
  %v4107 = vsel %vm4106, %v4047, %v4048
  %vm4108 = vcmask 1046534
  %v4109 = vsel %vm4108, %v4049, %v4050
  %vm4110 = vcmask 1045508
  %v4111 = vsel %vm4110, %v4107, %v4109
  %vm4112 = vcmask 1043456
  %v4113 = vsel %vm4112, %v4105, %v4111
  %v4114 = vsel %vm4100, %v3924, %v4051
  %v4115 = vsel %vm4102, %v4052, %v4053
  %v4116 = vsel %vm4104, %v4114, %v4115
  %v4117 = vsel %vm4106, %v4054, %v4055
  %v4118 = vsel %vm4108, %v4056, %v4057
  %v4119 = vsel %vm4110, %v4117, %v4118
  %v4120 = vsel %vm4112, %v4116, %v4119
  %v4121 = vsel %vm4100, %v3932, %v4058
  %v4122 = vsel %vm4102, %v4059, %v4060
  %v4123 = vsel %vm4104, %v4121, %v4122
  %v4124 = vsel %vm4106, %v4061, %v4062
  %v4125 = vsel %vm4108, %v4063, %v4064
  %v4126 = vsel %vm4110, %v4124, %v4125
  %v4127 = vsel %vm4112, %v4123, %v4126
  %v4128 = vsel %vm4100, %v3940, %v4065
  %v4129 = vsel %vm4102, %v4066, %v4067
  %v4130 = vsel %vm4104, %v4128, %v4129
  %v4131 = vsel %vm4106, %v4068, %v4069
  %v4132 = vsel %vm4108, %v4070, %v4071
  %v4133 = vsel %vm4110, %v4131, %v4132
  %v4134 = vsel %vm4112, %v4130, %v4133
  %v4135 = vsel %vm4100, %v3948, %v4072
  %v4136 = vsel %vm4102, %v4073, %v4074
  %v4137 = vsel %vm4104, %v4135, %v4136
  %v4138 = vsel %vm4106, %v4075, %v4076
  %v4139 = vsel %vm4108, %v4077, %v4078
  %v4140 = vsel %vm4110, %v4138, %v4139
  %v4141 = vsel %vm4112, %v4137, %v4140
  %v4142 = vsel %vm4100, %v3956, %v4079
  %v4143 = vsel %vm4102, %v4080, %v4081
  %v4144 = vsel %vm4104, %v4142, %v4143
  %v4145 = vsel %vm4106, %v4082, %v4083
  %v4146 = vsel %vm4108, %v4084, %v4085
  %v4147 = vsel %vm4110, %v4145, %v4146
  %v4148 = vsel %vm4112, %v4144, %v4147
  %v4149 = vsel %vm4100, %v3964, %v4086
  %v4150 = vsel %vm4102, %v4087, %v4088
  %v4151 = vsel %vm4104, %v4149, %v4150
  %v4152 = vsel %vm4106, %v4089, %v4090
  %v4153 = vsel %vm4108, %v4091, %v4092
  %v4154 = vsel %vm4110, %v4152, %v4153
  %v4155 = vsel %vm4112, %v4151, %v4154
  %v4156 = vsel %vm4100, %v3972, %v4093
  %v4157 = vsel %vm4102, %v4094, %v4095
  %v4158 = vsel %vm4104, %v4156, %v4157
  %v4159 = vsel %vm4106, %v4096, %v4097
  %v4160 = vsel %vm4108, %v4098, %v4099
  %v4161 = vsel %vm4110, %v4159, %v4160
  %v4162 = vsel %vm4112, %v4158, %v4161
  %4171 = vst [vmem:[%s2] sm:$0xff] %v4113
  %4172 = vst [vmem:[%s2 + $0x8] sm:$0xff] %v4120
  %4173 = vst [vmem:[%s2 + $0x10] sm:$0xff] %v4127
  %4174 = vst [vmem:[%s2 + $0x18] sm:$0xff] %v4134
  %4175 = vst [vmem:[%s2 + $0x20] sm:$0xff] %v4141
  %4176 = vst [vmem:[%s2 + $0x28] sm:$0xff] %v4148
  %4177 = vst [vmem:[%s2 + $0x30] sm:$0xff] %v4155
  %4178 = vst [vmem:[%s2 + $0x38] sm:$0xff] %v4162
  // Predicated region
  $region10: #{generator_forward.9} parent=0 // pred_check
    _
  $region11: #{generator_forward.9} parent=0 // pred_check_branch
    %4180 = sbr.rel (0) target = $region13
  $region12: #{generator_forward.9} parent=0 // pred_region
    _
  $region13: #{generator_forward.9} parent=0 // pred_fallthru
    _
  // Predicated region
  $region14: #{generator_forward.9} parent=0 // pred_check
    _
  $region15: #{generator_forward.9} parent=0 // pred_check_branch
    %4182 = sbr.rel (0) target = $region17
  $region16: #{generator_forward.9} parent=0 // pred_region
    _
  $region17: #{generator_forward.9} parent=0 // pred_fallthru
    _

</llo_original>
